<compile_context>
chip_gen: v6e
topology: v6e:2x2x1
jax: 0.10.0
libtpu: 0.0.40
codegen_flags: <defaults>
</compile_context>

<pallas_src>
import functools

import jax
import jax.numpy as jnp
from jax.experimental import pallas as pl
from jax.experimental.pallas import tpu as pltpu

BN_EPS = 1e-5
COMPUTE_DTYPE = jnp.bfloat16   # MXU operand dtype; accumulation / BN / add in f32
PAD_LEFT = 8                   # sublane-aligned interior column offset in scratches


# ----------------------------------------------------------------------------
# Fused BasicBlock kernel
# ----------------------------------------------------------------------------
def _make_block_kernel(B, H, W, Ho, Wo, stride, CGin, CGout, has_proj):
    k = 3
    c0 = PAD_LEFT - 1            # leftmost column any conv tap reads

    def zero_halo(ref, Hi, Wi, C):
        """Zero only the 1-wide halo ring around the (Hi, Wi) interior."""
        z_row = jnp.zeros((B, 1, Wi + 2, C), ref.dtype)
        z_col = jnp.zeros((B, Hi, 1, C), ref.dtype)
        ref[:, 0:1, c0:c0 + Wi + 2, :] = z_row                       # top
        ref[:, Hi + 1:Hi + 2, c0:c0 + Wi + 2, :] = z_row             # bottom
        ref[:, 1:Hi + 1, c0:c0 + 1, :] = z_col                       # left
        ref[:, 1:Hi + 1, PAD_LEFT + Wi:PAD_LEFT + Wi + 1, :] = z_col  # right

    def conv_taps(src_ref, w_ref, Cin_, s):
        """3x3 conv as nine accumulating MXU dots (K = Cin_ each)."""
        acc = None
        for ky in range(k):
            for kx in range(k):
                if s == 1:
                    tap = src_ref[:, ky:ky + Ho, c0 + kx:c0 + kx + Wo, :]
                else:
                    tap = src_ref[:, pl.ds(ky, Ho, stride=s),
                                  pl.ds(c0 + kx, Wo, stride=s), :]
                lhs = tap.reshape(B * Ho * Wo, Cin_)
                d = jnp.dot(lhs, w_ref[ky * k + kx],
                            preferred_element_type=jnp.float32)
                acc = d if acc is None else acc + d
        return acc                                   # (B*Ho*Wo, CGout) f32

    def kernel(*refs):
        if has_proj:
            (x_ref, w1_ref, s1_ref, b1_ref, w2_ref, s2_ref, b2_ref,
             ws_ref, ss_ref, bs_ref, out_ref, xp_ref, o1p_ref) = refs
        else:
            (x_ref, w1_ref, s1_ref, b1_ref, w2_ref, s2_ref, b2_ref,
             out_ref, xp_ref, o1p_ref) = refs

        x = x_ref[...].astype(COMPUTE_DTYPE)         # (B, H, W, CGin)

        # Stage the conv1 input interior at a sublane-aligned column offset and
        # zero only the halo ring (no full-buffer memset per step).
        xp_ref[:, 1:1 + H, PAD_LEFT:PAD_LEFT + W, :] = x
        zero_halo(xp_ref, H, W, CGin)

        # ---- conv1 (3x3, pad 1, stride) + bn1 + relu ----
        acc1 = conv_taps(xp_ref, w1_ref, CGin, stride)
        y1 = jnp.maximum(acc1 * s1_ref[0] + b1_ref[0], 0.0)

        # Stage conv1 output for the conv2 halo (never leaves VMEM).
        o1p_ref[:, 1:1 + Ho, PAD_LEFT:PAD_LEFT + Wo, :] = (
            y1.reshape(B, Ho, Wo, CGout).astype(o1p_ref.dtype))
        zero_halo(o1p_ref, Ho, Wo, CGout)

        # ---- shortcut (stays in VMEM) ----
        if has_proj:
            if stride == 1:
                xc = x.reshape(B * Ho * Wo, CGin)
            else:
                xc = xp_ref[:, pl.ds(1, Ho, stride=stride),
                            pl.ds(PAD_LEFT, Wo, stride=stride), :
                            ].reshape(B * Ho * Wo, CGin)
            sc = (jnp.dot(xc, ws_ref[...], preferred_element_type=jnp.float32)
                  * ss_ref[0] + bs_ref[0])           # 1x1 conv + bn (f32)
        else:
            sc = x.reshape(B * Ho * Wo, CGout).astype(jnp.float32)

        # ---- conv2 (3x3, pad 1, stride 1) + bn2 + residual + relu ----
        acc2 = conv_taps(o1p_ref, w2_ref, CGout, 1)
        y2 = jnp.maximum(acc2 * s2_ref[0] + b2_ref[0] + sc, 0.0)
        # Lane-dense unmasked store when CGout % 128 == 0 (real ResNet widths).
        out_ref[...] = y2.reshape(B, Ho, Wo, CGout).astype(out_ref.dtype)

    return kernel


def p4_basic_block_pallas(x_f, w1, s1, b1, w2, s2, b2, shortcut, *,
                          stride, batch_per_step=1):
    """x_f: (N, H, W, CGin) folded NHWC' bf16.  w1/w2: (9, CGin, CGout) bf16
    tap-major expanded P4ConvP4 weights.  shortcut: None (identity) or
    (ws, ss, bs) for the folded 1x1 projection path."""
    N, H, W, CGin = x_f.shape
    CGout = w1.shape[-1]
    Ho = (H - 1) // stride + 1       # k=3, pad=1 (PyTorch floor arithmetic)
    Wo = (W - 1) // stride + 1
    B = batch_per_step
    assert N % B == 0, (N, B)
    has_proj = shortcut is not None
    if not has_proj:
        assert stride == 1 and CGin == CGout

    kernel = _make_block_kernel(B, H, W, Ho, Wo, stride, CGin, CGout, has_proj)

    def vec_spec():
        return pl.BlockSpec((1, CGout), lambda i: (0, 0))

    in_specs = [
        pl.BlockSpec((B, H, W, CGin), lambda i: (i, 0, 0, 0)),
        pl.BlockSpec((9, CGin, CGout), lambda i: (0, 0, 0)),
        vec_spec(), vec_spec(),
        pl.BlockSpec((9, CGout, CGout), lambda i: (0, 0, 0)),
        vec_spec(), vec_spec(),
    ]
    args = [x_f, w1, s1, b1, w2, s2, b2]
    if has_proj:
        ws, ss, bs = shortcut
        in_specs += [pl.BlockSpec((CGin, CGout), lambda i: (0, 0)),
                     vec_spec(), vec_spec()]
        args += [ws, ss, bs]

    wpad_in = W + PAD_LEFT + 1
    wpad_o1 = Wo + PAD_LEFT + 1
    return pl.pallas_call(
        kernel,
        out_shape=jax.ShapeDtypeStruct((N, Ho, Wo, CGout), x_f.dtype),
        grid=(N // B,),
        in_specs=in_specs,
        out_specs=pl.BlockSpec((B, Ho, Wo, CGout), lambda i: (i, 0, 0, 0)),
        scratch_shapes=[pltpu.VMEM((B, H + 2, wpad_in, CGin), COMPUTE_DTYPE),
                        pltpu.VMEM((B, Ho + 2, wpad_o1, CGout), COMPUTE_DTYPE)],
        compiler_params=pltpu.CompilerParams(
            dimension_semantics=("parallel",),
            vmem_limit_bytes=32 * 1024 * 1024),   # fits v7x (64 MiB) with headroom
    )(*args)


# ----------------------------------------------------------------------------
# Glue: P4ConvP4 filter expansion, BN folding, layout plumbing
# ----------------------------------------------------------------------------
def expand_p4p4(w):
    """w: (Cout, Cin, 4, k, k) -> (k*k, Cin*4, Cout*4) tap-major weight slab.
    For output rotation s: w'[s][o,i,r] = rot90(w[o,i,(r-s)%4], k=s)."""
    Cout, Cin, _, k, _ = w.shape
    ws = []
    for s in range(4):
        w_shift = jnp.roll(w, shift=s, axis=2)          # index r <- (r - s) % 4
        w_rot = jnp.rot90(w_shift, k=s, axes=(3, 4))    # spatial rotation s*90
        ws.append(w_rot)
    wt = jnp.stack(ws, axis=1)                          # (Cout, 4s, Cin, 4r, k, k)
    wt = wt.reshape(Cout * 4, Cin * 4, k, k)            # channel-major, rot-minor
    wt = wt.transpose(2, 3, 1, 0)                       # (k, k, Cin*4, Cout*4)
    return wt.reshape(k * k, Cin * 4, Cout * 4)         # tap index = ky*k + kx


def fold_bn(gamma, beta, mean, var):
    scale = gamma / jnp.sqrt(var + BN_EPS)
    bias = beta - mean * scale
    return (jnp.repeat(scale, 4).reshape(1, -1),        # per folded channel c*4+g
            jnp.repeat(bias, 4).reshape(1, -1))


def prepare_block_params(params, *, in_planes, planes, stride):
    w1 = expand_p4p4(params["w1"]).astype(COMPUTE_DTYPE)
    s1, b1 = fold_bn(*params["bn1"])
    w2 = expand_p4p4(params["w2"]).astype(COMPUTE_DTYPE)
    s2, b2 = fold_bn(*params["bn2"])
    if stride != 1 or in_planes != planes:
        ws = expand_p4p4(params["ws"]).astype(COMPUTE_DTYPE)[0]   # (CGin, CGout)
        ss, bs = fold_bn(*params["bns"])
        shortcut = (ws, ss, bs)
    else:
        shortcut = None
    return w1, s1, b1, w2, s2, b2, shortcut


def fold_input(x):
    """(N, C, 4, H, W) -> folded bf16 NHWC' (N, H, W, C*4)."""
    N, C, G, H, W = x.shape
    return x.transpose(0, 3, 4, 1, 2).reshape(N, H, W, C * G).astype(COMPUTE_DTYPE)


def basic_block_forward(x, params, *, in_planes, planes, stride, batch_per_step=1):
    """PyTorch-facing: x (N, in_planes, 4, H, W) f32 -> (N, planes, 4, Ho, Wo) f32.
    When stacking blocks, keep activations in the folded bf16 NHWC' layout and
    convert only at the network boundary."""
    N, Cin, G, H, W = x.shape
    assert Cin == in_planes and G == 4
    prep = prepare_block_params(params, in_planes=in_planes, planes=planes,
                                stride=stride)
    out_f = p4_basic_block_pallas(fold_input(x), *prep, stride=stride,
                                  batch_per_step=batch_per_step)
    Ho, Wo = out_f.shape[1], out_f.shape[2]
    out = out_f.reshape(N, Ho, Wo, planes, 4).transpose(0, 3, 4, 1, 2)
    return out.astype(jnp.float32)


# ----------------------------------------------------------------------------
# Pure-JAX reference (same folded layout, same precision choices)
# ----------------------------------------------------------------------------
def p4_basic_block_reference(x_f, w1, s1, b1, w2, s2, b2, shortcut, *, stride):
    f32 = jnp.float32
    hi = jax.lax.Precision.HIGHEST

    def conv3x3(x, w, s):
        wk = w.reshape(3, 3, w.shape[1], w.shape[2]).astype(f32)
        return jax.lax.conv_general_dilated(
            x.astype(f32), wk, window_strides=(s, s), padding=((1, 1), (1, 1)),
            dimension_numbers=("NHWC", "HWIO", "NHWC"), precision=hi)

    y1 = jnp.maximum(conv3x3(x_f, w1, stride) * s1[0] + b1[0], 0.0)
    y1 = y1.astype(COMPUTE_DTYPE)                    # kernel stages conv1 out in bf16
    y2 = conv3x3(y1, w2, 1) * s2[0] + b2[0]
    if shortcut is None:
        sc = x_f.astype(f32)
    else:
        ws, ss, bs = shortcut
        xs = x_f[:, ::stride, ::stride, :].astype(f32)
        sc = jnp.einsum("nhwc,cd->nhwd", xs, ws.astype(f32), precision=hi)
        sc = sc * ss[0] + bs[0]
    return jnp.maximum(y2 + sc, 0.0)


# ----------------------------------------------------------------------------
# Demo / validation
# ----------------------------------------------------------------------------
def init_params(key, in_planes, planes, stride):
    ks = jax.random.split(key, 8)

    def bn_params(k, c):
        k1, k2, k3, k4 = jax.random.split(k, 4)
        gamma = 1.0 + 0.1 * jax.random.normal(k1, (c,), jnp.float32)
        beta = 0.1 * jax.random.normal(k2, (c,), jnp.float32)
        mean = 0.1 * jax.random.normal(k3, (c,), jnp.float32)
        var = 1.0 + 0.1 * jax.random.uniform(k4, (c,), jnp.float32)
        return (gamma, beta, mean, var)

    params = {
        "w1": 0.1 * jax.random.normal(ks[0], (planes, in_planes, 4, 3, 3), jnp.float32),
        "bn1": bn_params(ks[1], planes),
        "w2": 0.1 * jax.random.normal(ks[2], (planes, planes, 4, 3, 3), jnp.float32),
        "bn2": bn_params(ks[3], planes),
    }
    if stride != 1 or in_planes != planes:
        params["ws"] = 0.1 * jax.random.normal(ks[4], (planes, in_planes, 4, 1, 1), jnp.float32)
        params["bns"] = bn_params(ks[5], planes)
    return params


def _check(name, out, ref, atol=5e-2, rtol=5e-2):
    out = out.astype(jnp.float32)
    assert bool(jnp.all(jnp.isfinite(out))), name
    err = jnp.abs(out - ref)
    tol = atol + rtol * jnp.abs(ref)
    assert bool(jnp.all(err <= tol)), (name, float(jnp.max(err)))


if __name__ == "__main__":
    root = jax.random.PRNGKey(0)
    N = 2

    # (name, in_planes, planes, H, W, stride, images-per-grid-step)
    # Wide configs have folded C'out = planes*4 = 128 -> lane-dense output
    # stores; the small config matches the tiny example scale.
    configs = [
        ("small_proj_s1", 4, 8, 16, 16, 1, 1),
        ("wide_proj_s1", 16, 32, 16, 16, 1, 1),
        ("wide_id_s1_b1", 32, 32, 16, 16, 1, 1),
        ("wide_id_s1_b2", 32, 32, 16, 16, 1, 2),   # batched grid step
        ("wide_proj_s2", 16, 32, 16, 16, 2, 1),    # strided-tap path
    ]

    for idx, (name, inp, planes_, H, W, strd, bsz) in enumerate(configs):
        k_x, k_p = jax.random.split(jax.random.fold_in(root, idx))
        x = jax.random.normal(k_x, (N, inp, 4, H, W), jnp.float32)
        params = init_params(k_p, inp, planes_, strd)
        w1, s1, b1, w2, s2, b2, shortcut = prepare_block_params(
            params, in_planes=inp, planes=planes_, stride=strd)
        x_f = fold_input(x)

        run = jax.jit(functools.partial(p4_basic_block_pallas,
                                        stride=strd, batch_per_step=bsz))
        out_f = jax.block_until_ready(run(x_f, w1, s1, b1, w2, s2, b2, shortcut))

        Ho = (H - 1) // strd + 1
        Wo = (W - 1) // strd + 1
        assert out_f.shape == (N, Ho, Wo, planes_ * 4), (name, out_f.shape)

        ref_f = p4_basic_block_reference(x_f, w1, s1, b1, w2, s2, b2, shortcut,
                                         stride=strd)
        _check(name, out_f, ref_f)

    # PyTorch-facing layout wrapper smoke test (small config).
    k_x, k_p = jax.random.split(jax.random.fold_in(root, 100))
    x = jax.random.normal(k_x, (N, 4, 4, 16, 16), jnp.float32)
    params = init_params(k_p, 4, 8, 1)
    fwd = jax.jit(functools.partial(basic_block_forward,
                                    in_planes=4, planes=8, stride=1))
    out = jax.block_until_ready(fwd(x, params))
    assert out.shape == (N, 8, 4, 16, 16), out.shape
    assert bool(jnp.all(jnp.isfinite(out)))

    print("KERNEL_OK")
</pallas_src>

<mosaic_0001>
module attributes {stable_mosaic.version = 11 : i64} {
  func.func @kernel(%arg0: i32, %arg1: memref<1x16x16x16xbf16, #tpu.memory_space<vmem>>, %arg2: memref<9x16x32xbf16, #tpu.memory_space<vmem>>, %arg3: memref<1x32xf32, #tpu.memory_space<vmem>>, %arg4: memref<1x32xf32, #tpu.memory_space<vmem>>, %arg5: memref<9x32x32xbf16, #tpu.memory_space<vmem>>, %arg6: memref<1x32xf32, #tpu.memory_space<vmem>>, %arg7: memref<1x32xf32, #tpu.memory_space<vmem>>, %arg8: memref<16x32xbf16, #tpu.memory_space<vmem>>, %arg9: memref<1x32xf32, #tpu.memory_space<vmem>>, %arg10: memref<1x32xf32, #tpu.memory_space<vmem>>, %arg11: memref<1x16x16x32xbf16, #tpu.memory_space<vmem>>, %arg12: memref<1x18x25x16xbf16, #tpu.memory_space<vmem>>, %arg13: memref<1x18x25x32xbf16, #tpu.memory_space<vmem>>) attributes {dimension_semantics = [#tpu.dimension_semantics<parallel>], iteration_bounds = array<i64: 2>, scalar_prefetch = 0 : i64, scratch_operands = 2 : i64, tpu.core_type = #tpu.core_type<tc>, window_params = [{transform_indices = @transform_0, window_bounds = array<i64: 1, 16, 16, 16>}, {pipeline_mode = #tpu.pipeline_mode<synchronous>, transform_indices = @transform_1, window_bounds = array<i64: 9, 16, 32>}, {pipeline_mode = #tpu.pipeline_mode<synchronous>, transform_indices = @transform_2, window_bounds = array<i64: 1, 32>}, {pipeline_mode = #tpu.pipeline_mode<synchronous>, transform_indices = @transform_3, window_bounds = array<i64: 1, 32>}, {pipeline_mode = #tpu.pipeline_mode<synchronous>, transform_indices = @transform_4, window_bounds = array<i64: 9, 32, 32>}, {pipeline_mode = #tpu.pipeline_mode<synchronous>, transform_indices = @transform_5, window_bounds = array<i64: 1, 32>}, {pipeline_mode = #tpu.pipeline_mode<synchronous>, transform_indices = @transform_6, window_bounds = array<i64: 1, 32>}, {pipeline_mode = #tpu.pipeline_mode<synchronous>, transform_indices = @transform_7, window_bounds = array<i64: 16, 32>}, {pipeline_mode = #tpu.pipeline_mode<synchronous>, transform_indices = @transform_8, window_bounds = array<i64: 1, 32>}, {pipeline_mode = #tpu.pipeline_mode<synchronous>, transform_indices = @transform_9, window_bounds = array<i64: 1, 32>}, {transform_indices = @transform_10, window_bounds = array<i64: 1, 16, 16, 32>}]} {
    %c0 = arith.constant 0 : index
    %c0_0 = arith.constant 0 : index
    %c0_1 = arith.constant 0 : index
    %c0_2 = arith.constant 0 : index
    %0 = vector.load %arg1[%c0, %c0_0, %c0_1, %c0_2] : memref<1x16x16x16xbf16, #tpu.memory_space<vmem>>, vector<1x16x16x16xbf16>
    %c0_3 = arith.constant 0 : index
    %c1 = arith.constant 1 : index
    %c8 = arith.constant 8 : index
    %c0_4 = arith.constant 0 : index
    %1 = vector.load %arg12[%c0_3, %c1, %c8, %c0_4] : memref<1x18x25x16xbf16, #tpu.memory_space<vmem>>, vector<1x16x16x16xbf16>
    tpu.vector_store %arg12[%c0_3, %c1, %c8, %c0_4], %0 {strides = array<i32>} : memref<1x18x25x16xbf16, #tpu.memory_space<vmem>>, vector<1x16x16x16xbf16>,
    %cst = arith.constant 0.000000e+00 : bf16
    %2 = vector.broadcast %cst : bf16 to vector<1x1x18x16xbf16>
    %cst_5 = arith.constant 0.000000e+00 : bf16
    %3 = vector.broadcast %cst_5 : bf16 to vector<1x16x1x16xbf16>
    %c0_6 = arith.constant 0 : index
    %c0_7 = arith.constant 0 : index
    %c7 = arith.constant 7 : index
    %c0_8 = arith.constant 0 : index
    %4 = vector.load %arg12[%c0_6, %c0_7, %c7, %c0_8] : memref<1x18x25x16xbf16, #tpu.memory_space<vmem>>, vector<1x1x18x16xbf16>
    tpu.vector_store %arg12[%c0_6, %c0_7, %c7, %c0_8], %2 {strides = array<i32>} : memref<1x18x25x16xbf16, #tpu.memory_space<vmem>>, vector<1x1x18x16xbf16>,
    %c0_9 = arith.constant 0 : index
    %c17 = arith.constant 17 : index
    %c7_10 = arith.constant 7 : index
    %c0_11 = arith.constant 0 : index
    %5 = vector.load %arg12[%c0_9, %c17, %c7_10, %c0_11] : memref<1x18x25x16xbf16, #tpu.memory_space<vmem>>, vector<1x1x18x16xbf16>
    tpu.vector_store %arg12[%c0_9, %c17, %c7_10, %c0_11], %2 {strides = array<i32>} : memref<1x18x25x16xbf16, #tpu.memory_space<vmem>>, vector<1x1x18x16xbf16>,
    %c0_12 = arith.constant 0 : index
    %c1_13 = arith.constant 1 : index
    %c7_14 = arith.constant 7 : index
    %c0_15 = arith.constant 0 : index
    %6 = vector.load %arg12[%c0_12, %c1_13, %c7_14, %c0_15] : memref<1x18x25x16xbf16, #tpu.memory_space<vmem>>, vector<1x16x1x16xbf16>
    tpu.vector_store %arg12[%c0_12, %c1_13, %c7_14, %c0_15], %3 {strides = array<i32>} : memref<1x18x25x16xbf16, #tpu.memory_space<vmem>>, vector<1x16x1x16xbf16>,
    %c0_16 = arith.constant 0 : index
    %c1_17 = arith.constant 1 : index
    %c24 = arith.constant 24 : index
    %c0_18 = arith.constant 0 : index
    %7 = vector.load %arg12[%c0_16, %c1_17, %c24, %c0_18] : memref<1x18x25x16xbf16, #tpu.memory_space<vmem>>, vector<1x16x1x16xbf16>
    tpu.vector_store %arg12[%c0_16, %c1_17, %c24, %c0_18], %3 {strides = array<i32>} : memref<1x18x25x16xbf16, #tpu.memory_space<vmem>>, vector<1x16x1x16xbf16>,
    %c0_19 = arith.constant 0 : index
    %c0_20 = arith.constant 0 : index
    %c7_21 = arith.constant 7 : index
    %c0_22 = arith.constant 0 : index
    %8 = vector.load %arg12[%c0_19, %c0_20, %c7_21, %c0_22] : memref<1x18x25x16xbf16, #tpu.memory_space<vmem>>, vector<1x16x16x16xbf16>
    %9 = vector.shape_cast %8 : vector<1x16x16x16xbf16> to vector<256x16xbf16>
    %c0_23 = arith.constant 0 : index
    %c0_24 = arith.constant 0 : index
    %c0_25 = arith.constant 0 : index
    %10 = vector.load %arg2[%c0_23, %c0_24, %c0_25] : memref<9x16x32xbf16, #tpu.memory_space<vmem>>, vector<1x16x32xbf16>
    %11 = vector.shape_cast %10 : vector<1x16x32xbf16> to vector<16x32xbf16>
    %cst_26 = arith.constant dense<0.000000e+00> : vector<256x32xf32>
    %12 = tpu.matmul %9, %11, %cst_26 {dimension_numbers = #tpu.dot_dimension_numbers<[1], [0], [0], [1], [0, 0, 1, 1], [], []>} : vector<256x16xbf16>, vector<16x32xbf16>, vector<256x32xf32> -> vector<256x32xf32>
    %c0_27 = arith.constant 0 : index
    %c0_28 = arith.constant 0 : index
    %c8_29 = arith.constant 8 : index
    %c0_30 = arith.constant 0 : index
    %13 = vector.load %arg12[%c0_27, %c0_28, %c8_29, %c0_30] : memref<1x18x25x16xbf16, #tpu.memory_space<vmem>>, vector<1x16x16x16xbf16>
    %14 = vector.shape_cast %13 : vector<1x16x16x16xbf16> to vector<256x16xbf16>
    %c1_31 = arith.constant 1 : index
    %c0_32 = arith.constant 0 : index
    %c0_33 = arith.constant 0 : index
    %15 = vector.load %arg2[%c1_31, %c0_32, %c0_33] : memref<9x16x32xbf16, #tpu.memory_space<vmem>>, vector<1x16x32xbf16>
    %16 = vector.shape_cast %15 : vector<1x16x32xbf16> to vector<16x32xbf16>
    %cst_34 = arith.constant dense<0.000000e+00> : vector<256x32xf32>
    %17 = tpu.matmul %14, %16, %cst_34 {dimension_numbers = #tpu.dot_dimension_numbers<[1], [0], [0], [1], [0, 0, 1, 1], [], []>} : vector<256x16xbf16>, vector<16x32xbf16>, vector<256x32xf32> -> vector<256x32xf32>
    %18 = arith.addf %12, %17 : vector<256x32xf32>
    %c0_35 = arith.constant 0 : index
    %c0_36 = arith.constant 0 : index
    %c9 = arith.constant 9 : index
    %c0_37 = arith.constant 0 : index
    %19 = vector.load %arg12[%c0_35, %c0_36, %c9, %c0_37] : memref<1x18x25x16xbf16, #tpu.memory_space<vmem>>, vector<1x16x16x16xbf16>
    %20 = vector.shape_cast %19 : vector<1x16x16x16xbf16> to vector<256x16xbf16>
    %c2 = arith.constant 2 : index
    %c0_38 = arith.constant 0 : index
    %c0_39 = arith.constant 0 : index
    %21 = vector.load %arg2[%c2, %c0_38, %c0_39] : memref<9x16x32xbf16, #tpu.memory_space<vmem>>, vector<1x16x32xbf16>
    %22 = vector.shape_cast %21 : vector<1x16x32xbf16> to vector<16x32xbf16>
    %cst_40 = arith.constant dense<0.000000e+00> : vector<256x32xf32>
    %23 = tpu.matmul %20, %22, %cst_40 {dimension_numbers = #tpu.dot_dimension_numbers<[1], [0], [0], [1], [0, 0, 1, 1], [], []>} : vector<256x16xbf16>, vector<16x32xbf16>, vector<256x32xf32> -> vector<256x32xf32>
    %24 = arith.addf %18, %23 : vector<256x32xf32>
    %c0_41 = arith.constant 0 : index
    %c1_42 = arith.constant 1 : index
    %c7_43 = arith.constant 7 : index
    %c0_44 = arith.constant 0 : index
    %25 = vector.load %arg12[%c0_41, %c1_42, %c7_43, %c0_44] : memref<1x18x25x16xbf16, #tpu.memory_space<vmem>>, vector<1x16x16x16xbf16>
    %26 = vector.shape_cast %25 : vector<1x16x16x16xbf16> to vector<256x16xbf16>
    %c3 = arith.constant 3 : index
    %c0_45 = arith.constant 0 : index
    %c0_46 = arith.constant 0 : index
    %27 = vector.load %arg2[%c3, %c0_45, %c0_46] : memref<9x16x32xbf16, #tpu.memory_space<vmem>>, vector<1x16x32xbf16>
    %28 = vector.shape_cast %27 : vector<1x16x32xbf16> to vector<16x32xbf16>
    %cst_47 = arith.constant dense<0.000000e+00> : vector<256x32xf32>
    %29 = tpu.matmul %26, %28, %cst_47 {dimension_numbers = #tpu.dot_dimension_numbers<[1], [0], [0], [1], [0, 0, 1, 1], [], []>} : vector<256x16xbf16>, vector<16x32xbf16>, vector<256x32xf32> -> vector<256x32xf32>
    %30 = arith.addf %24, %29 : vector<256x32xf32>
    %c0_48 = arith.constant 0 : index
    %c1_49 = arith.constant 1 : index
    %c8_50 = arith.constant 8 : index
    %c0_51 = arith.constant 0 : index
    %31 = vector.load %arg12[%c0_48, %c1_49, %c8_50, %c0_51] : memref<1x18x25x16xbf16, #tpu.memory_space<vmem>>, vector<1x16x16x16xbf16>
    %32 = vector.shape_cast %31 : vector<1x16x16x16xbf16> to vector<256x16xbf16>
    %c4 = arith.constant 4 : index
    %c0_52 = arith.constant 0 : index
    %c0_53 = arith.constant 0 : index
    %33 = vector.load %arg2[%c4, %c0_52, %c0_53] : memref<9x16x32xbf16, #tpu.memory_space<vmem>>, vector<1x16x32xbf16>
    %34 = vector.shape_cast %33 : vector<1x16x32xbf16> to vector<16x32xbf16>
    %cst_54 = arith.constant dense<0.000000e+00> : vector<256x32xf32>
    %35 = tpu.matmul %32, %34, %cst_54 {dimension_numbers = #tpu.dot_dimension_numbers<[1], [0], [0], [1], [0, 0, 1, 1], [], []>} : vector<256x16xbf16>, vector<16x32xbf16>, vector<256x32xf32> -> vector<256x32xf32>
    %36 = arith.addf %30, %35 : vector<256x32xf32>
    %c0_55 = arith.constant 0 : index
    %c1_56 = arith.constant 1 : index
    %c9_57 = arith.constant 9 : index
    %c0_58 = arith.constant 0 : index
    %37 = vector.load %arg12[%c0_55, %c1_56, %c9_57, %c0_58] : memref<1x18x25x16xbf16, #tpu.memory_space<vmem>>, vector<1x16x16x16xbf16>
    %38 = vector.shape_cast %37 : vector<1x16x16x16xbf16> to vector<256x16xbf16>
    %c5 = arith.constant 5 : index
    %c0_59 = arith.constant 0 : index
    %c0_60 = arith.constant 0 : index
    %39 = vector.load %arg2[%c5, %c0_59, %c0_60] : memref<9x16x32xbf16, #tpu.memory_space<vmem>>, vector<1x16x32xbf16>
    %40 = vector.shape_cast %39 : vector<1x16x32xbf16> to vector<16x32xbf16>
    %cst_61 = arith.constant dense<0.000000e+00> : vector<256x32xf32>
    %41 = tpu.matmul %38, %40, %cst_61 {dimension_numbers = #tpu.dot_dimension_numbers<[1], [0], [0], [1], [0, 0, 1, 1], [], []>} : vector<256x16xbf16>, vector<16x32xbf16>, vector<256x32xf32> -> vector<256x32xf32>
    %42 = arith.addf %36, %41 : vector<256x32xf32>
    %c0_62 = arith.constant 0 : index
    %c2_63 = arith.constant 2 : index
    %c7_64 = arith.constant 7 : index
    %c0_65 = arith.constant 0 : index
    %43 = vector.load %arg12[%c0_62, %c2_63, %c7_64, %c0_65] : memref<1x18x25x16xbf16, #tpu.memory_space<vmem>>, vector<1x16x16x16xbf16>
    %44 = vector.shape_cast %43 : vector<1x16x16x16xbf16> to vector<256x16xbf16>
    %c6 = arith.constant 6 : index
    %c0_66 = arith.constant 0 : index
    %c0_67 = arith.constant 0 : index
    %45 = vector.load %arg2[%c6, %c0_66, %c0_67] : memref<9x16x32xbf16, #tpu.memory_space<vmem>>, vector<1x16x32xbf16>
    %46 = vector.shape_cast %45 : vector<1x16x32xbf16> to vector<16x32xbf16>
    %cst_68 = arith.constant dense<0.000000e+00> : vector<256x32xf32>
    %47 = tpu.matmul %44, %46, %cst_68 {dimension_numbers = #tpu.dot_dimension_numbers<[1], [0], [0], [1], [0, 0, 1, 1], [], []>} : vector<256x16xbf16>, vector<16x32xbf16>, vector<256x32xf32> -> vector<256x32xf32>
    %48 = arith.addf %42, %47 : vector<256x32xf32>
    %c0_69 = arith.constant 0 : index
    %c2_70 = arith.constant 2 : index
    %c8_71 = arith.constant 8 : index
    %c0_72 = arith.constant 0 : index
    %49 = vector.load %arg12[%c0_69, %c2_70, %c8_71, %c0_72] : memref<1x18x25x16xbf16, #tpu.memory_space<vmem>>, vector<1x16x16x16xbf16>
    %50 = vector.shape_cast %49 : vector<1x16x16x16xbf16> to vector<256x16xbf16>
    %c7_73 = arith.constant 7 : index
    %c0_74 = arith.constant 0 : index
    %c0_75 = arith.constant 0 : index
    %51 = vector.load %arg2[%c7_73, %c0_74, %c0_75] : memref<9x16x32xbf16, #tpu.memory_space<vmem>>, vector<1x16x32xbf16>
    %52 = vector.shape_cast %51 : vector<1x16x32xbf16> to vector<16x32xbf16>
    %cst_76 = arith.constant dense<0.000000e+00> : vector<256x32xf32>
    %53 = tpu.matmul %50, %52, %cst_76 {dimension_numbers = #tpu.dot_dimension_numbers<[1], [0], [0], [1], [0, 0, 1, 1], [], []>} : vector<256x16xbf16>, vector<16x32xbf16>, vector<256x32xf32> -> vector<256x32xf32>
    %54 = arith.addf %48, %53 : vector<256x32xf32>
    %c0_77 = arith.constant 0 : index
    %c2_78 = arith.constant 2 : index
    %c9_79 = arith.constant 9 : index
    %c0_80 = arith.constant 0 : index
    %55 = vector.load %arg12[%c0_77, %c2_78, %c9_79, %c0_80] : memref<1x18x25x16xbf16, #tpu.memory_space<vmem>>, vector<1x16x16x16xbf16>
    %56 = vector.shape_cast %55 : vector<1x16x16x16xbf16> to vector<256x16xbf16>
    %c8_81 = arith.constant 8 : index
    %c0_82 = arith.constant 0 : index
    %c0_83 = arith.constant 0 : index
    %57 = vector.load %arg2[%c8_81, %c0_82, %c0_83] : memref<9x16x32xbf16, #tpu.memory_space<vmem>>, vector<1x16x32xbf16>
    %58 = vector.shape_cast %57 : vector<1x16x32xbf16> to vector<16x32xbf16>
    %cst_84 = arith.constant dense<0.000000e+00> : vector<256x32xf32>
    %59 = tpu.matmul %56, %58, %cst_84 {dimension_numbers = #tpu.dot_dimension_numbers<[1], [0], [0], [1], [0, 0, 1, 1], [], []>} : vector<256x16xbf16>, vector<16x32xbf16>, vector<256x32xf32> -> vector<256x32xf32>
    %60 = arith.addf %54, %59 : vector<256x32xf32>
    %c0_85 = arith.constant 0 : index
    %c0_86 = arith.constant 0 : index
    %61 = vector.load %arg3[%c0_85, %c0_86] : memref<1x32xf32, #tpu.memory_space<vmem>>, vector<1x32xf32>
    %62 = vector.shape_cast %61 : vector<1x32xf32> to vector<32xf32>
    %63 = vector.shape_cast %62 : vector<32xf32> to vector<1x32xf32>
    %64 = vector.broadcast %63 : vector<1x32xf32> to vector<256x32xf32>
    %65 = arith.mulf %60, %64 : vector<256x32xf32>
    %c0_87 = arith.constant 0 : index
    %c0_88 = arith.constant 0 : index
    %66 = vector.load %arg4[%c0_87, %c0_88] : memref<1x32xf32, #tpu.memory_space<vmem>>, vector<1x32xf32>
    %67 = vector.shape_cast %66 : vector<1x32xf32> to vector<32xf32>
    %68 = vector.shape_cast %67 : vector<32xf32> to vector<1x32xf32>
    %69 = vector.broadcast %68 : vector<1x32xf32> to vector<256x32xf32>
    %70 = arith.addf %65, %69 : vector<256x32xf32>
    %cst_89 = arith.constant 0.000000e+00 : f32
    %71 = vector.broadcast %cst_89 : f32 to vector<256x32xf32>
    %72 = arith.maximumf %70, %71 : vector<256x32xf32>
    %73 = vector.shape_cast %72 : vector<256x32xf32> to vector<1x16x16x32xf32>
    %74 = arith.truncf %73 : vector<1x16x16x32xf32> to vector<1x16x16x32xbf16>
    %c0_90 = arith.constant 0 : index
    %c1_91 = arith.constant 1 : index
    %c8_92 = arith.constant 8 : index
    %c0_93 = arith.constant 0 : index
    %75 = vector.load %arg13[%c0_90, %c1_91, %c8_92, %c0_93] : memref<1x18x25x32xbf16, #tpu.memory_space<vmem>>, vector<1x16x16x32xbf16>
    tpu.vector_store %arg13[%c0_90, %c1_91, %c8_92, %c0_93], %74 {strides = array<i32>} : memref<1x18x25x32xbf16, #tpu.memory_space<vmem>>, vector<1x16x16x32xbf16>,
    %cst_94 = arith.constant 0.000000e+00 : bf16
    %76 = vector.broadcast %cst_94 : bf16 to vector<1x1x18x32xbf16>
    %cst_95 = arith.constant 0.000000e+00 : bf16
    %77 = vector.broadcast %cst_95 : bf16 to vector<1x16x1x32xbf16>
    %c0_96 = arith.constant 0 : index
    %c0_97 = arith.constant 0 : index
    %c7_98 = arith.constant 7 : index
    %c0_99 = arith.constant 0 : index
    %78 = vector.load %arg13[%c0_96, %c0_97, %c7_98, %c0_99] : memref<1x18x25x32xbf16, #tpu.memory_space<vmem>>, vector<1x1x18x32xbf16>
    tpu.vector_store %arg13[%c0_96, %c0_97, %c7_98, %c0_99], %76 {strides = array<i32>} : memref<1x18x25x32xbf16, #tpu.memory_space<vmem>>, vector<1x1x18x32xbf16>,
    %c0_100 = arith.constant 0 : index
    %c17_101 = arith.constant 17 : index
    %c7_102 = arith.constant 7 : index
    %c0_103 = arith.constant 0 : index
    %79 = vector.load %arg13[%c0_100, %c17_101, %c7_102, %c0_103] : memref<1x18x25x32xbf16, #tpu.memory_space<vmem>>, vector<1x1x18x32xbf16>
    tpu.vector_store %arg13[%c0_100, %c17_101, %c7_102, %c0_103], %76 {strides = array<i32>} : memref<1x18x25x32xbf16, #tpu.memory_space<vmem>>, vector<1x1x18x32xbf16>,
    %c0_104 = arith.constant 0 : index
    %c1_105 = arith.constant 1 : index
    %c7_106 = arith.constant 7 : index
    %c0_107 = arith.constant 0 : index
    %80 = vector.load %arg13[%c0_104, %c1_105, %c7_106, %c0_107] : memref<1x18x25x32xbf16, #tpu.memory_space<vmem>>, vector<1x16x1x32xbf16>
    tpu.vector_store %arg13[%c0_104, %c1_105, %c7_106, %c0_107], %77 {strides = array<i32>} : memref<1x18x25x32xbf16, #tpu.memory_space<vmem>>, vector<1x16x1x32xbf16>,
    %c0_108 = arith.constant 0 : index
    %c1_109 = arith.constant 1 : index
    %c24_110 = arith.constant 24 : index
    %c0_111 = arith.constant 0 : index
    %81 = vector.load %arg13[%c0_108, %c1_109, %c24_110, %c0_111] : memref<1x18x25x32xbf16, #tpu.memory_space<vmem>>, vector<1x16x1x32xbf16>
    tpu.vector_store %arg13[%c0_108, %c1_109, %c24_110, %c0_111], %77 {strides = array<i32>} : memref<1x18x25x32xbf16, #tpu.memory_space<vmem>>, vector<1x16x1x32xbf16>,
    %82 = vector.shape_cast %0 : vector<1x16x16x16xbf16> to vector<256x16xbf16>
    %c0_112 = arith.constant 0 : index
    %c0_113 = arith.constant 0 : index
    %83 = vector.load %arg8[%c0_112, %c0_113] : memref<16x32xbf16, #tpu.memory_space<vmem>>, vector<16x32xbf16>
    %cst_114 = arith.constant dense<0.000000e+00> : vector<256x32xf32>
    %84 = tpu.matmul %82, %83, %cst_114 {dimension_numbers = #tpu.dot_dimension_numbers<[1], [0], [0], [1], [0, 0, 1, 1], [], []>} : vector<256x16xbf16>, vector<16x32xbf16>, vector<256x32xf32> -> vector<256x32xf32>
    %c0_115 = arith.constant 0 : index
    %c0_116 = arith.constant 0 : index
    %85 = vector.load %arg9[%c0_115, %c0_116] : memref<1x32xf32, #tpu.memory_space<vmem>>, vector<1x32xf32>
    %86 = vector.shape_cast %85 : vector<1x32xf32> to vector<32xf32>
    %87 = vector.shape_cast %86 : vector<32xf32> to vector<1x32xf32>
    %88 = vector.broadcast %87 : vector<1x32xf32> to vector<256x32xf32>
    %89 = arith.mulf %84, %88 : vector<256x32xf32>
    %c0_117 = arith.constant 0 : index
    %c0_118 = arith.constant 0 : index
    %90 = vector.load %arg10[%c0_117, %c0_118] : memref<1x32xf32, #tpu.memory_space<vmem>>, vector<1x32xf32>
    %91 = vector.shape_cast %90 : vector<1x32xf32> to vector<32xf32>
    %92 = vector.shape_cast %91 : vector<32xf32> to vector<1x32xf32>
    %93 = vector.broadcast %92 : vector<1x32xf32> to vector<256x32xf32>
    %94 = arith.addf %89, %93 : vector<256x32xf32>
    %c0_119 = arith.constant 0 : index
    %c0_120 = arith.constant 0 : index
    %c7_121 = arith.constant 7 : index
    %c0_122 = arith.constant 0 : index
    %95 = vector.load %arg13[%c0_119, %c0_120, %c7_121, %c0_122] : memref<1x18x25x32xbf16, #tpu.memory_space<vmem>>, vector<1x16x16x32xbf16>
    %96 = vector.shape_cast %95 : vector<1x16x16x32xbf16> to vector<256x32xbf16>
    %c0_123 = arith.constant 0 : index
    %c0_124 = arith.constant 0 : index
    %c0_125 = arith.constant 0 : index
    %97 = vector.load %arg5[%c0_123, %c0_124, %c0_125] : memref<9x32x32xbf16, #tpu.memory_space<vmem>>, vector<1x32x32xbf16>
    %98 = vector.shape_cast %97 : vector<1x32x32xbf16> to vector<32x32xbf16>
    %cst_126 = arith.constant dense<0.000000e+00> : vector<256x32xf32>
    %99 = tpu.matmul %96, %98, %cst_126 {dimension_numbers = #tpu.dot_dimension_numbers<[1], [0], [0], [1], [0, 0, 1, 1], [], []>} : vector<256x32xbf16>, vector<32x32xbf16>, vector<256x32xf32> -> vector<256x32xf32>
    %c0_127 = arith.constant 0 : index
    %c0_128 = arith.constant 0 : index
    %c8_129 = arith.constant 8 : index
    %c0_130 = arith.constant 0 : index
    %100 = vector.load %arg13[%c0_127, %c0_128, %c8_129, %c0_130] : memref<1x18x25x32xbf16, #tpu.memory_space<vmem>>, vector<1x16x16x32xbf16>
    %101 = vector.shape_cast %100 : vector<1x16x16x32xbf16> to vector<256x32xbf16>
    %c1_131 = arith.constant 1 : index
    %c0_132 = arith.constant 0 : index
    %c0_133 = arith.constant 0 : index
    %102 = vector.load %arg5[%c1_131, %c0_132, %c0_133] : memref<9x32x32xbf16, #tpu.memory_space<vmem>>, vector<1x32x32xbf16>
    %103 = vector.shape_cast %102 : vector<1x32x32xbf16> to vector<32x32xbf16>
    %cst_134 = arith.constant dense<0.000000e+00> : vector<256x32xf32>
    %104 = tpu.matmul %101, %103, %cst_134 {dimension_numbers = #tpu.dot_dimension_numbers<[1], [0], [0], [1], [0, 0, 1, 1], [], []>} : vector<256x32xbf16>, vector<32x32xbf16>, vector<256x32xf32> -> vector<256x32xf32>
    %105 = arith.addf %99, %104 : vector<256x32xf32>
    %c0_135 = arith.constant 0 : index
    %c0_136 = arith.constant 0 : index
    %c9_137 = arith.constant 9 : index
    %c0_138 = arith.constant 0 : index
    %106 = vector.load %arg13[%c0_135, %c0_136, %c9_137, %c0_138] : memref<1x18x25x32xbf16, #tpu.memory_space<vmem>>, vector<1x16x16x32xbf16>
    %107 = vector.shape_cast %106 : vector<1x16x16x32xbf16> to vector<256x32xbf16>
    %c2_139 = arith.constant 2 : index
    %c0_140 = arith.constant 0 : index
    %c0_141 = arith.constant 0 : index
    %108 = vector.load %arg5[%c2_139, %c0_140, %c0_141] : memref<9x32x32xbf16, #tpu.memory_space<vmem>>, vector<1x32x32xbf16>
    %109 = vector.shape_cast %108 : vector<1x32x32xbf16> to vector<32x32xbf16>
    %cst_142 = arith.constant dense<0.000000e+00> : vector<256x32xf32>
    %110 = tpu.matmul %107, %109, %cst_142 {dimension_numbers = #tpu.dot_dimension_numbers<[1], [0], [0], [1], [0, 0, 1, 1], [], []>} : vector<256x32xbf16>, vector<32x32xbf16>, vector<256x32xf32> -> vector<256x32xf32>
    %111 = arith.addf %105, %110 : vector<256x32xf32>
    %c0_143 = arith.constant 0 : index
    %c1_144 = arith.constant 1 : index
    %c7_145 = arith.constant 7 : index
    %c0_146 = arith.constant 0 : index
    %112 = vector.load %arg13[%c0_143, %c1_144, %c7_145, %c0_146] : memref<1x18x25x32xbf16, #tpu.memory_space<vmem>>, vector<1x16x16x32xbf16>
    %113 = vector.shape_cast %112 : vector<1x16x16x32xbf16> to vector<256x32xbf16>
    %c3_147 = arith.constant 3 : index
    %c0_148 = arith.constant 0 : index
    %c0_149 = arith.constant 0 : index
    %114 = vector.load %arg5[%c3_147, %c0_148, %c0_149] : memref<9x32x32xbf16, #tpu.memory_space<vmem>>, vector<1x32x32xbf16>
    %115 = vector.shape_cast %114 : vector<1x32x32xbf16> to vector<32x32xbf16>
    %cst_150 = arith.constant dense<0.000000e+00> : vector<256x32xf32>
    %116 = tpu.matmul %113, %115, %cst_150 {dimension_numbers = #tpu.dot_dimension_numbers<[1], [0], [0], [1], [0, 0, 1, 1], [], []>} : vector<256x32xbf16>, vector<32x32xbf16>, vector<256x32xf32> -> vector<256x32xf32>
    %117 = arith.addf %111, %116 : vector<256x32xf32>
    %c0_151 = arith.constant 0 : index
    %c1_152 = arith.constant 1 : index
    %c8_153 = arith.constant 8 : index
    %c0_154 = arith.constant 0 : index
    %118 = vector.load %arg13[%c0_151, %c1_152, %c8_153, %c0_154] : memref<1x18x25x32xbf16, #tpu.memory_space<vmem>>, vector<1x16x16x32xbf16>
    %119 = vector.shape_cast %118 : vector<1x16x16x32xbf16> to vector<256x32xbf16>
    %c4_155 = arith.constant 4 : index
    %c0_156 = arith.constant 0 : index
    %c0_157 = arith.constant 0 : index
    %120 = vector.load %arg5[%c4_155, %c0_156, %c0_157] : memref<9x32x32xbf16, #tpu.memory_space<vmem>>, vector<1x32x32xbf16>
    %121 = vector.shape_cast %120 : vector<1x32x32xbf16> to vector<32x32xbf16>
    %cst_158 = arith.constant dense<0.000000e+00> : vector<256x32xf32>
    %122 = tpu.matmul %119, %121, %cst_158 {dimension_numbers = #tpu.dot_dimension_numbers<[1], [0], [0], [1], [0, 0, 1, 1], [], []>} : vector<256x32xbf16>, vector<32x32xbf16>, vector<256x32xf32> -> vector<256x32xf32>
    %123 = arith.addf %117, %122 : vector<256x32xf32>
    %c0_159 = arith.constant 0 : index
    %c1_160 = arith.constant 1 : index
    %c9_161 = arith.constant 9 : index
    %c0_162 = arith.constant 0 : index
    %124 = vector.load %arg13[%c0_159, %c1_160, %c9_161, %c0_162] : memref<1x18x25x32xbf16, #tpu.memory_space<vmem>>, vector<1x16x16x32xbf16>
    %125 = vector.shape_cast %124 : vector<1x16x16x32xbf16> to vector<256x32xbf16>
    %c5_163 = arith.constant 5 : index
    %c0_164 = arith.constant 0 : index
    %c0_165 = arith.constant 0 : index
    %126 = vector.load %arg5[%c5_163, %c0_164, %c0_165] : memref<9x32x32xbf16, #tpu.memory_space<vmem>>, vector<1x32x32xbf16>
    %127 = vector.shape_cast %126 : vector<1x32x32xbf16> to vector<32x32xbf16>
    %cst_166 = arith.constant dense<0.000000e+00> : vector<256x32xf32>
    %128 = tpu.matmul %125, %127, %cst_166 {dimension_numbers = #tpu.dot_dimension_numbers<[1], [0], [0], [1], [0, 0, 1, 1], [], []>} : vector<256x32xbf16>, vector<32x32xbf16>, vector<256x32xf32> -> vector<256x32xf32>
    %129 = arith.addf %123, %128 : vector<256x32xf32>
    %c0_167 = arith.constant 0 : index
    %c2_168 = arith.constant 2 : index
    %c7_169 = arith.constant 7 : index
    %c0_170 = arith.constant 0 : index
    %130 = vector.load %arg13[%c0_167, %c2_168, %c7_169, %c0_170] : memref<1x18x25x32xbf16, #tpu.memory_space<vmem>>, vector<1x16x16x32xbf16>
    %131 = vector.shape_cast %130 : vector<1x16x16x32xbf16> to vector<256x32xbf16>
    %c6_171 = arith.constant 6 : index
    %c0_172 = arith.constant 0 : index
    %c0_173 = arith.constant 0 : index
    %132 = vector.load %arg5[%c6_171, %c0_172, %c0_173] : memref<9x32x32xbf16, #tpu.memory_space<vmem>>, vector<1x32x32xbf16>
    %133 = vector.shape_cast %132 : vector<1x32x32xbf16> to vector<32x32xbf16>
    %cst_174 = arith.constant dense<0.000000e+00> : vector<256x32xf32>
    %134 = tpu.matmul %131, %133, %cst_174 {dimension_numbers = #tpu.dot_dimension_numbers<[1], [0], [0], [1], [0, 0, 1, 1], [], []>} : vector<256x32xbf16>, vector<32x32xbf16>, vector<256x32xf32> -> vector<256x32xf32>
    %135 = arith.addf %129, %134 : vector<256x32xf32>
    %c0_175 = arith.constant 0 : index
    %c2_176 = arith.constant 2 : index
    %c8_177 = arith.constant 8 : index
    %c0_178 = arith.constant 0 : index
    %136 = vector.load %arg13[%c0_175, %c2_176, %c8_177, %c0_178] : memref<1x18x25x32xbf16, #tpu.memory_space<vmem>>, vector<1x16x16x32xbf16>
    %137 = vector.shape_cast %136 : vector<1x16x16x32xbf16> to vector<256x32xbf16>
    %c7_179 = arith.constant 7 : index
    %c0_180 = arith.constant 0 : index
    %c0_181 = arith.constant 0 : index
    %138 = vector.load %arg5[%c7_179, %c0_180, %c0_181] : memref<9x32x32xbf16, #tpu.memory_space<vmem>>, vector<1x32x32xbf16>
    %139 = vector.shape_cast %138 : vector<1x32x32xbf16> to vector<32x32xbf16>
    %cst_182 = arith.constant dense<0.000000e+00> : vector<256x32xf32>
    %140 = tpu.matmul %137, %139, %cst_182 {dimension_numbers = #tpu.dot_dimension_numbers<[1], [0], [0], [1], [0, 0, 1, 1], [], []>} : vector<256x32xbf16>, vector<32x32xbf16>, vector<256x32xf32> -> vector<256x32xf32>
    %141 = arith.addf %135, %140 : vector<256x32xf32>
    %c0_183 = arith.constant 0 : index
    %c2_184 = arith.constant 2 : index
    %c9_185 = arith.constant 9 : index
    %c0_186 = arith.constant 0 : index
    %142 = vector.load %arg13[%c0_183, %c2_184, %c9_185, %c0_186] : memref<1x18x25x32xbf16, #tpu.memory_space<vmem>>, vector<1x16x16x32xbf16>
    %143 = vector.shape_cast %142 : vector<1x16x16x32xbf16> to vector<256x32xbf16>
    %c8_187 = arith.constant 8 : index
    %c0_188 = arith.constant 0 : index
    %c0_189 = arith.constant 0 : index
    %144 = vector.load %arg5[%c8_187, %c0_188, %c0_189] : memref<9x32x32xbf16, #tpu.memory_space<vmem>>, vector<1x32x32xbf16>
    %145 = vector.shape_cast %144 : vector<1x32x32xbf16> to vector<32x32xbf16>
    %cst_190 = arith.constant dense<0.000000e+00> : vector<256x32xf32>
    %146 = tpu.matmul %143, %145, %cst_190 {dimension_numbers = #tpu.dot_dimension_numbers<[1], [0], [0], [1], [0, 0, 1, 1], [], []>} : vector<256x32xbf16>, vector<32x32xbf16>, vector<256x32xf32> -> vector<256x32xf32>
    %147 = arith.addf %141, %146 : vector<256x32xf32>
    %c0_191 = arith.constant 0 : index
    %c0_192 = arith.constant 0 : index
    %148 = vector.load %arg6[%c0_191, %c0_192] : memref<1x32xf32, #tpu.memory_space<vmem>>, vector<1x32xf32>
    %149 = vector.shape_cast %148 : vector<1x32xf32> to vector<32xf32>
    %150 = vector.shape_cast %149 : vector<32xf32> to vector<1x32xf32>
    %151 = vector.broadcast %150 : vector<1x32xf32> to vector<256x32xf32>
    %152 = arith.mulf %147, %151 : vector<256x32xf32>
    %c0_193 = arith.constant 0 : index
    %c0_194 = arith.constant 0 : index
    %153 = vector.load %arg7[%c0_193, %c0_194] : memref<1x32xf32, #tpu.memory_space<vmem>>, vector<1x32xf32>
    %154 = vector.shape_cast %153 : vector<1x32xf32> to vector<32xf32>
    %155 = vector.shape_cast %154 : vector<32xf32> to vector<1x32xf32>
    %156 = vector.broadcast %155 : vector<1x32xf32> to vector<256x32xf32>
    %157 = arith.addf %152, %156 : vector<256x32xf32>
    %158 = arith.addf %157, %94 : vector<256x32xf32>
    %cst_195 = arith.constant 0.000000e+00 : f32
    %159 = vector.broadcast %cst_195 : f32 to vector<256x32xf32>
    %160 = arith.maximumf %158, %159 : vector<256x32xf32>
    %161 = vector.shape_cast %160 : vector<256x32xf32> to vector<1x16x16x32xf32>
    %162 = arith.truncf %161 : vector<1x16x16x32xf32> to vector<1x16x16x32xbf16>
    %c0_196 = arith.constant 0 : index
    %c0_197 = arith.constant 0 : index
    %c0_198 = arith.constant 0 : index
    %c0_199 = arith.constant 0 : index
    %163 = vector.load %arg11[%c0_196, %c0_197, %c0_198, %c0_199] : memref<1x16x16x32xbf16, #tpu.memory_space<vmem>>, vector<1x16x16x32xbf16>
    tpu.vector_store %arg11[%c0_196, %c0_197, %c0_198, %c0_199], %162 {strides = array<i32>} : memref<1x16x16x32xbf16, #tpu.memory_space<vmem>>, vector<1x16x16x32xbf16>,
    return
  }
  func.func @transform_0(%arg0: i32) -> (i32, i32, i32, i32) {
    %c0_i32 = arith.constant 0 : i32
    %c0_i32_0 = arith.constant 0 : i32
    %c0_i32_1 = arith.constant 0 : i32
    %c0_i32_2 = arith.constant 0 : i32
    return %arg0, %c0_i32, %c0_i32_0, %c0_i32_1 : i32, i32, i32, i32
  }
  func.func @transform_1(%arg0: i32) -> (i32, i32, i32) {
    %c0_i32 = arith.constant 0 : i32
    %c0_i32_0 = arith.constant 0 : i32
    %c0_i32_1 = arith.constant 0 : i32
    %c0_i32_2 = arith.constant 0 : i32
    return %c0_i32, %c0_i32_0, %c0_i32_1 : i32, i32, i32
  }
  func.func @transform_2(%arg0: i32) -> (i32, i32) {
    %c0_i32 = arith.constant 0 : i32
    %c0_i32_0 = arith.constant 0 : i32
    %c0_i32_1 = arith.constant 0 : i32
    return %c0_i32, %c0_i32_0 : i32, i32
  }
  func.func @transform_3(%arg0: i32) -> (i32, i32) {
    %c0_i32 = arith.constant 0 : i32
    %c0_i32_0 = arith.constant 0 : i32
    %c0_i32_1 = arith.constant 0 : i32
    return %c0_i32, %c0_i32_0 : i32, i32
  }
  func.func @transform_4(%arg0: i32) -> (i32, i32, i32) {
    %c0_i32 = arith.constant 0 : i32
    %c0_i32_0 = arith.constant 0 : i32
    %c0_i32_1 = arith.constant 0 : i32
    %c0_i32_2 = arith.constant 0 : i32
    return %c0_i32, %c0_i32_0, %c0_i32_1 : i32, i32, i32
  }
  func.func @transform_5(%arg0: i32) -> (i32, i32) {
    %c0_i32 = arith.constant 0 : i32
    %c0_i32_0 = arith.constant 0 : i32
    %c0_i32_1 = arith.constant 0 : i32
    return %c0_i32, %c0_i32_0 : i32, i32
  }
  func.func @transform_6(%arg0: i32) -> (i32, i32) {
    %c0_i32 = arith.constant 0 : i32
    %c0_i32_0 = arith.constant 0 : i32
    %c0_i32_1 = arith.constant 0 : i32
    return %c0_i32, %c0_i32_0 : i32, i32
  }
  func.func @transform_7(%arg0: i32) -> (i32, i32) {
    %c0_i32 = arith.constant 0 : i32
    %c0_i32_0 = arith.constant 0 : i32
    %c0_i32_1 = arith.constant 0 : i32
    return %c0_i32, %c0_i32_0 : i32, i32
  }
  func.func @transform_8(%arg0: i32) -> (i32, i32) {
    %c0_i32 = arith.constant 0 : i32
    %c0_i32_0 = arith.constant 0 : i32
    %c0_i32_1 = arith.constant 0 : i32
    return %c0_i32, %c0_i32_0 : i32, i32
  }
  func.func @transform_9(%arg0: i32) -> (i32, i32) {
    %c0_i32 = arith.constant 0 : i32
    %c0_i32_0 = arith.constant 0 : i32
    %c0_i32_1 = arith.constant 0 : i32
    return %c0_i32, %c0_i32_0 : i32, i32
  }
  func.func @transform_10(%arg0: i32) -> (i32, i32, i32, i32) {
    %c0_i32 = arith.constant 0 : i32
    %c0_i32_0 = arith.constant 0 : i32
    %c0_i32_1 = arith.constant 0 : i32
    %c0_i32_2 = arith.constant 0 : i32
    return %arg0, %c0_i32, %c0_i32_0, %c0_i32_1 : i32, i32, i32, i32
  }
}

</mosaic_0001>

<llo_original>
// kernel: p4_basic_block_pallas.1
$region0: #{p4_basic_block_pallas.1}
  #allocation0 [shape = 'u32[]', space=smem, size = 0x4, offset = 0x4, fixed_abs, tag = 'smem constant byte address 0x4 - core index']
  #allocation1 [shape = 'u32[144,128]{1,0:T(1,128)}', space=vmem, size = 0x12000, scoped, tag = 'internal scratch']
  #allocation2 [shape = 'bf16[1,18,25,16]{3,2,1,0:T(8,128)(2,1)}', space=vmem, size = 0x24000, scoped, tag = 'scratch operand']
  #allocation3 [shape = 'bf16[1,18,25,32]{3,2,1,0:T(8,128)(2,1)}', space=vmem, size = 0x24000, scoped, tag = 'scratch operand']
  %s0 = inlined_call_operand.hbm [shape: bf16[2,16,16,16], index: 0, kind: input, shape index: {}]
  %s1 = inlined_call_operand.hbm [shape: bf16[9,16,32], index: 1, kind: input, shape index: {}]
  %s2 = inlined_call_operand.vmem [shape: f32[1,32], index: 2, kind: input, shape index: {}]
  %s3 = inlined_call_operand.vmem [shape: f32[1,32], index: 3, kind: input, shape index: {}]
  %s4 = inlined_call_operand.hbm [shape: bf16[9,32,32], index: 4, kind: input, shape index: {}]
  %s5 = inlined_call_operand.vmem [shape: f32[1,32], index: 5, kind: input, shape index: {}]
  %s6 = inlined_call_operand.vmem [shape: f32[1,32], index: 6, kind: input, shape index: {}]
  %s7 = inlined_call_operand.vmem [shape: bf16[16,32], index: 7, kind: input, shape index: {}]
  %s8 = inlined_call_operand.vmem [shape: f32[1,32], index: 8, kind: input, shape index: {}]
  %s9 = inlined_call_operand.vmem [shape: f32[1,32], index: 9, kind: input, shape index: {}]
  %s10 = inlined_call_operand.hbm [shape: bf16[2,16,16,32], index: 10, kind: output, shape index: {}]
  %s11 = sld [smem:[#allocation0]]
  $region85: #{p4_basic_block_pallas.1} parent=0
    _
  %s13 = ssub.s32 1, %s11
  %s14 = scalar_select 0, %s13, %s11
  $region1: #{p4_basic_block_pallas.1} parent=0
    #allocation4 [shape = 'u8[131072]{0}', space=vmem, size = 0x20000, scoped, tag = 'input window, operand 0']
    #allocation5 [shape = 's32[2]{0}', space=sflag, size = 0x8, scoped, tag = 'scoped memory for p4_basic_block_pallas.1']
    #allocation6 [shape = 's32[2]{0}', space=sflag, size = 0x8, scoped, tag = 'scoped memory for p4_basic_block_pallas.1']
    #allocation7 [shape = 'u8[36864]{0}', space=vmem, size = 0x9000, scoped, tag = 'input window, operand 1, single buffered']
    #allocation8 [shape = 's32[1]{0}', space=sflag, size = 0x4, scoped, tag = 'scoped memory for p4_basic_block_pallas.1']
    #allocation9 [shape = 'u8[73728]{0}', space=vmem, size = 0x12000, scoped, tag = 'input window, operand 4, single buffered']
    #allocation10 [shape = 'u8[131072]{0}', space=vmem, size = 0x20000, scoped, tag = 'output window, operand 0']
    %15 = vsyncpa [#allocation5], 0
    %s16 = scalar_lea.sflag [#allocation5], 1
    %17 = vsyncpa %s16, 0
    %18 = vsyncpa [#allocation8], 0
    %19 = vsyncpa [#allocation6], 0
    %s20 = scalar_lea.sflag [#allocation6], 1
    %21 = vsyncpa %s20, 0
    loop: start=0, step=1, limit=4
    $region2: #{p4_basic_block_pallas.1} parent=1 // loop_pre_header
      _
    $region3: #{p4_basic_block_pallas.1} parent=1 // loop_header
      %s23 = sphi 0, %s27
      %p24 = scmp.ge.s32.totalorder %s23, 4
      %s33 = sphi 0, %s35
      %s36 = sphi 0, %s33
      %s37 = sphi 0, %s36
      %s53 = sphi 0, %s37
      %s57 = sphi 0, %s57
      %s59 = sphi 0, %s57
      %s60 = sphi 0, %s59
      %s74 = sphi 0, %s60
      %s78 = sphi 0, %s78
      %s80 = sphi 0, %s78
      %s81 = sphi 0, %s80
      %s95 = sphi 0, %s81
      %s99 = sphi 0, %s99
      %s101 = sphi 0, %s99
      %s102 = sphi 0, %s101
      %s116 = sphi 0, %s102
      %s120 = sphi 0, %s120
      %s122 = sphi 0, %s120
      %s123 = sphi 0, %s122
      %s137 = sphi 0, %s123
      %s141 = sphi 0, %s141
      %s143 = sphi 0, %s141
      %s144 = sphi 0, %s143
      %s158 = sphi 0, %s144
      %s162 = sphi 0, %s162
      %s164 = sphi 0, %s162
      %s165 = sphi 0, %s164
      %s179 = sphi 0, %s165
      %s183 = sphi 0, %s183
      %s185 = sphi 0, %s183
      %s186 = sphi 0, %s185
      %s200 = sphi 0, %s186
      %s204 = sphi 0, %s204
      %s206 = sphi 0, %s204
      %s207 = sphi 0, %s206
      %s221 = sphi 0, %s207
      %s225 = sphi 0, %s225
      %s227 = sphi 0, %s225
      %s228 = sphi 0, %s227
      %s242 = sphi 0, %s228
      %s248 = sphi 0, %s250
      %s251 = sphi 0, %s248
      %s252 = sphi 0, %s251
      %s268 = sphi 0, %s252
    $region4: #{p4_basic_block_pallas.1} parent=1 // loop_header_branch
      %26 = sbr.rel (%p24) target = $region8
    $region5: #{p4_basic_block_pallas.1} parent=1 // loop_body
      %s28 = ssub.s32 %s23, 1
      %s29 = ssub.s32 %s23, 2
      %s30 = sadd.s32 %s23, 1
      %s31 = ssub.s32 %s23, %s30
      %p32 = scmp.eq.s32.totalorder %s31, 0
      %s34 = sadd.s32 %s33, 1
      %s35 = scalar_select %p32, %s33, %s34
      %p38 = pneg %p32
      %p39 = scmp.eq.s32.totalorder %s23, 1
      %p40 = por %p38, %p39
      %p41 = scmp.ne.s32.totalorder %s33, %s36
      %p42 = scmp.eq.s32.totalorder %s23, 0
      %p43 = por %p41, %p42
      %p44 = scmp.ne.s32.totalorder %s33, %s36
      %p45 = scmp.eq.s32.totalorder %s28, 1
      %p46 = por %p44, %p45
      %p47 = scmp.ne.s32.totalorder %s36, %s37
      %p48 = scmp.eq.s32.totalorder %s28, 0
      %p49 = por %p47, %p48
      %p50 = scmp.ne.s32.totalorder %s36, %s37
      %p51 = scmp.eq.s32.totalorder %s29, 1
      %p52 = por %p50, %p51
      %p54 = scmp.ne.s32.totalorder %s37, %s53
      %p55 = scmp.eq.s32.totalorder %s29, 0
      %p56 = por %p54, %p55
      %s58 = sadd.s32 %s57, 1
      %p61 = scmp.eq.s32.totalorder %s23, 1
      %p62 = scmp.ne.s32.totalorder %s57, %s59
      %p63 = scmp.eq.s32.totalorder %s23, 0
      %p64 = por %p62, %p63
      %p65 = scmp.ne.s32.totalorder %s57, %s59
      %p66 = scmp.eq.s32.totalorder %s28, 1
      %p67 = por %p65, %p66
      %p68 = scmp.ne.s32.totalorder %s59, %s60
      %p69 = scmp.eq.s32.totalorder %s28, 0
      %p70 = por %p68, %p69
      %p71 = scmp.ne.s32.totalorder %s59, %s60
      %p72 = scmp.eq.s32.totalorder %s29, 1
      %p73 = por %p71, %p72
      %p75 = scmp.ne.s32.totalorder %s60, %s74
      %p76 = scmp.eq.s32.totalorder %s29, 0
      %p77 = por %p75, %p76
      %s79 = sadd.s32 %s78, 1
      %p82 = scmp.eq.s32.totalorder %s23, 1
      %p83 = scmp.ne.s32.totalorder %s78, %s80
      %p84 = scmp.eq.s32.totalorder %s23, 0
      %p85 = por %p83, %p84
      %p86 = scmp.ne.s32.totalorder %s78, %s80
      %p87 = scmp.eq.s32.totalorder %s28, 1
      %p88 = por %p86, %p87
      %p89 = scmp.ne.s32.totalorder %s80, %s81
      %p90 = scmp.eq.s32.totalorder %s28, 0
      %p91 = por %p89, %p90
      %p92 = scmp.ne.s32.totalorder %s80, %s81
      %p93 = scmp.eq.s32.totalorder %s29, 1
      %p94 = por %p92, %p93
      %p96 = scmp.ne.s32.totalorder %s81, %s95
      %p97 = scmp.eq.s32.totalorder %s29, 0
      %p98 = por %p96, %p97
      %s100 = sadd.s32 %s99, 1
      %p103 = scmp.eq.s32.totalorder %s23, 1
      %p104 = scmp.ne.s32.totalorder %s99, %s101
      %p105 = scmp.eq.s32.totalorder %s23, 0
      %p106 = por %p104, %p105
      %p107 = scmp.ne.s32.totalorder %s99, %s101
      %p108 = scmp.eq.s32.totalorder %s28, 1
      %p109 = por %p107, %p108
      %p110 = scmp.ne.s32.totalorder %s101, %s102
      %p111 = scmp.eq.s32.totalorder %s28, 0
      %p112 = por %p110, %p111
      %p113 = scmp.ne.s32.totalorder %s101, %s102
      %p114 = scmp.eq.s32.totalorder %s29, 1
      %p115 = por %p113, %p114
      %p117 = scmp.ne.s32.totalorder %s102, %s116
      %p118 = scmp.eq.s32.totalorder %s29, 0
      %p119 = por %p117, %p118
      %s121 = sadd.s32 %s120, 1
      %p124 = scmp.eq.s32.totalorder %s23, 1
      %p125 = scmp.ne.s32.totalorder %s120, %s122
      %p126 = scmp.eq.s32.totalorder %s23, 0
      %p127 = por %p125, %p126
      %p128 = scmp.ne.s32.totalorder %s120, %s122
      %p129 = scmp.eq.s32.totalorder %s28, 1
      %p130 = por %p128, %p129
      %p131 = scmp.ne.s32.totalorder %s122, %s123
      %p132 = scmp.eq.s32.totalorder %s28, 0
      %p133 = por %p131, %p132
      %p134 = scmp.ne.s32.totalorder %s122, %s123
      %p135 = scmp.eq.s32.totalorder %s29, 1
      %p136 = por %p134, %p135
      %p138 = scmp.ne.s32.totalorder %s123, %s137
      %p139 = scmp.eq.s32.totalorder %s29, 0
      %p140 = por %p138, %p139
      %s142 = sadd.s32 %s141, 1
      %p145 = scmp.eq.s32.totalorder %s23, 1
      %p146 = scmp.ne.s32.totalorder %s141, %s143
      %p147 = scmp.eq.s32.totalorder %s23, 0
      %p148 = por %p146, %p147
      %p149 = scmp.ne.s32.totalorder %s141, %s143
      %p150 = scmp.eq.s32.totalorder %s28, 1
      %p151 = por %p149, %p150
      %p152 = scmp.ne.s32.totalorder %s143, %s144
      %p153 = scmp.eq.s32.totalorder %s28, 0
      %p154 = por %p152, %p153
      %p155 = scmp.ne.s32.totalorder %s143, %s144
      %p156 = scmp.eq.s32.totalorder %s29, 1
      %p157 = por %p155, %p156
      %p159 = scmp.ne.s32.totalorder %s144, %s158
      %p160 = scmp.eq.s32.totalorder %s29, 0
      %p161 = por %p159, %p160
      %s163 = sadd.s32 %s162, 1
      %p166 = scmp.eq.s32.totalorder %s23, 1
      %p167 = scmp.ne.s32.totalorder %s162, %s164
      %p168 = scmp.eq.s32.totalorder %s23, 0
      %p169 = por %p167, %p168
      %p170 = scmp.ne.s32.totalorder %s162, %s164
      %p171 = scmp.eq.s32.totalorder %s28, 1
      %p172 = por %p170, %p171
      %p173 = scmp.ne.s32.totalorder %s164, %s165
      %p174 = scmp.eq.s32.totalorder %s28, 0
      %p175 = por %p173, %p174
      %p176 = scmp.ne.s32.totalorder %s164, %s165
      %p177 = scmp.eq.s32.totalorder %s29, 1
      %p178 = por %p176, %p177
      %p180 = scmp.ne.s32.totalorder %s165, %s179
      %p181 = scmp.eq.s32.totalorder %s29, 0
      %p182 = por %p180, %p181
      %s184 = sadd.s32 %s183, 1
      %p187 = scmp.eq.s32.totalorder %s23, 1
      %p188 = scmp.ne.s32.totalorder %s183, %s185
      %p189 = scmp.eq.s32.totalorder %s23, 0
      %p190 = por %p188, %p189
      %p191 = scmp.ne.s32.totalorder %s183, %s185
      %p192 = scmp.eq.s32.totalorder %s28, 1
      %p193 = por %p191, %p192
      %p194 = scmp.ne.s32.totalorder %s185, %s186
      %p195 = scmp.eq.s32.totalorder %s28, 0
      %p196 = por %p194, %p195
      %p197 = scmp.ne.s32.totalorder %s185, %s186
      %p198 = scmp.eq.s32.totalorder %s29, 1
      %p199 = por %p197, %p198
      %p201 = scmp.ne.s32.totalorder %s186, %s200
      %p202 = scmp.eq.s32.totalorder %s29, 0
      %p203 = por %p201, %p202
      %s205 = sadd.s32 %s204, 1
      %p208 = scmp.eq.s32.totalorder %s23, 1
      %p209 = scmp.ne.s32.totalorder %s204, %s206
      %p210 = scmp.eq.s32.totalorder %s23, 0
      %p211 = por %p209, %p210
      %p212 = scmp.ne.s32.totalorder %s204, %s206
      %p213 = scmp.eq.s32.totalorder %s28, 1
      %p214 = por %p212, %p213
      %p215 = scmp.ne.s32.totalorder %s206, %s207
      %p216 = scmp.eq.s32.totalorder %s28, 0
      %p217 = por %p215, %p216
      %p218 = scmp.ne.s32.totalorder %s206, %s207
      %p219 = scmp.eq.s32.totalorder %s29, 1
      %p220 = por %p218, %p219
      %p222 = scmp.ne.s32.totalorder %s207, %s221
      %p223 = scmp.eq.s32.totalorder %s29, 0
      %p224 = por %p222, %p223
      %s226 = sadd.s32 %s225, 1
      %p229 = scmp.eq.s32.totalorder %s23, 1
      %p230 = scmp.ne.s32.totalorder %s225, %s227
      %p231 = scmp.eq.s32.totalorder %s23, 0
      %p232 = por %p230, %p231
      %p233 = scmp.ne.s32.totalorder %s225, %s227
      %p234 = scmp.eq.s32.totalorder %s28, 1
      %p235 = por %p233, %p234
      %p236 = scmp.ne.s32.totalorder %s227, %s228
      %p237 = scmp.eq.s32.totalorder %s28, 0
      %p238 = por %p236, %p237
      %p239 = scmp.ne.s32.totalorder %s227, %s228
      %p240 = scmp.eq.s32.totalorder %s29, 1
      %p241 = por %p239, %p240
      %p243 = scmp.ne.s32.totalorder %s228, %s242
      %p244 = scmp.eq.s32.totalorder %s29, 0
      %p245 = por %p243, %p244
      %s246 = ssub.s32 %s23, %s30
      %p247 = scmp.eq.s32.totalorder %s246, 0
      %s249 = sadd.s32 %s248, 1
      %s250 = scalar_select %p247, %s248, %s249
      %p253 = pneg %p247
      %p254 = scmp.eq.s32.totalorder %s23, 1
      %p255 = por %p253, %p254
      %p256 = scmp.ne.s32.totalorder %s248, %s251
      %p257 = scmp.eq.s32.totalorder %s23, 0
      %p258 = por %p256, %p257
      %p259 = scmp.ne.s32.totalorder %s248, %s251
      %p260 = scmp.eq.s32.totalorder %s28, 1
      %p261 = por %p259, %p260
      %p262 = scmp.ne.s32.totalorder %s251, %s252
      %p263 = scmp.eq.s32.totalorder %s28, 0
      %p264 = por %p262, %p263
      %p265 = scmp.ne.s32.totalorder %s251, %s252
      %p266 = scmp.eq.s32.totalorder %s29, 1
      %p267 = por %p265, %p266
      %p269 = scmp.ne.s32.totalorder %s252, %s268
      %p270 = scmp.eq.s32.totalorder %s29, 0
      %p271 = por %p269, %p270
      %p272 = scmp.le.s32.totalorder 1, %s23
      %p273 = scmp.lt.s32.totalorder %s23, 3
      %p274 = pnand %p272, %p273
      %p275 = pneg %p274
      // Predicated region
      $region9: #{p4_basic_block_pallas.1} parent=5 // pred_check
        _
      $region10: #{p4_basic_block_pallas.1} parent=5 // pred_check_branch
        %277 = sbr.rel (%p274) target = $region12
      $region11: #{p4_basic_block_pallas.1} parent=5 // pred_region
        %s278 = ssub.s32 %s23, 1
        // Predicated region
        $region13: #{p4_basic_block_pallas.1} parent=11 // pred_check
          %p279 = pneg %p70
        $region14: #{p4_basic_block_pallas.1} parent=11 // pred_check_branch
          %281 = sbr.rel (%p279) target = $region16
        $region15: #{p4_basic_block_pallas.1} parent=11 // pred_region
          %s283 = ssub.s32 1152, 1152
          %284 = vsyncadd [#allocation8], %s283
          %s285 = sshll.u32 [#allocation7], 4
          %s286 = int_to_ptr.vmem [resolvable:$true] %s285
          %291 = dma.hbm_to_vmem [thread:$0]  %s1, 1152, %s286, [#allocation8], 64, 64, 4
        $region16: #{p4_basic_block_pallas.1} parent=11 // pred_fallthru
          _
        // Predicated region
        $region17: #{p4_basic_block_pallas.1} parent=11 // pred_check
          %p292 = pneg %p91
        $region18: #{p4_basic_block_pallas.1} parent=11 // pred_check_branch
          %294 = sbr.rel (%p292) target = $region20
        $region19: #{p4_basic_block_pallas.1} parent=11 // pred_region
          _
        $region20: #{p4_basic_block_pallas.1} parent=11 // pred_fallthru
          _
        // Predicated region
        $region21: #{p4_basic_block_pallas.1} parent=11 // pred_check
          %p295 = pneg %p112
        $region22: #{p4_basic_block_pallas.1} parent=11 // pred_check_branch
          %297 = sbr.rel (%p295) target = $region24
        $region23: #{p4_basic_block_pallas.1} parent=11 // pred_region
          _
        $region24: #{p4_basic_block_pallas.1} parent=11 // pred_fallthru
          _
        // Predicated region
        $region25: #{p4_basic_block_pallas.1} parent=11 // pred_check
          %p298 = pneg %p133
        $region26: #{p4_basic_block_pallas.1} parent=11 // pred_check_branch
          %300 = sbr.rel (%p298) target = $region28
        $region27: #{p4_basic_block_pallas.1} parent=11 // pred_region
          %s302 = ssub.s32 2304, 2304
          %303 = vsyncadd [#allocation8], %s302
          %s304 = sshll.u32 [#allocation9], 4
          %s305 = int_to_ptr.vmem [resolvable:$true] %s304
          %310 = dma.hbm_to_vmem [thread:$0]  %s4, 2304, %s305, [#allocation8], 64, 64, 4
        $region28: #{p4_basic_block_pallas.1} parent=11 // pred_fallthru
          _
        // Predicated region
        $region29: #{p4_basic_block_pallas.1} parent=11 // pred_check
          %p311 = pneg %p154
        $region30: #{p4_basic_block_pallas.1} parent=11 // pred_check_branch
          %313 = sbr.rel (%p311) target = $region32
        $region31: #{p4_basic_block_pallas.1} parent=11 // pred_region
          _
        $region32: #{p4_basic_block_pallas.1} parent=11 // pred_fallthru
          _
        // Predicated region
        $region33: #{p4_basic_block_pallas.1} parent=11 // pred_check
          %p314 = pneg %p175
        $region34: #{p4_basic_block_pallas.1} parent=11 // pred_check_branch
          %316 = sbr.rel (%p314) target = $region36
        $region35: #{p4_basic_block_pallas.1} parent=11 // pred_region
          _
        $region36: #{p4_basic_block_pallas.1} parent=11 // pred_fallthru
          _
        // Predicated region
        $region37: #{p4_basic_block_pallas.1} parent=11 // pred_check
          %p317 = pneg %p196
        $region38: #{p4_basic_block_pallas.1} parent=11 // pred_check_branch
          %319 = sbr.rel (%p317) target = $region40
        $region39: #{p4_basic_block_pallas.1} parent=11 // pred_region
          _
        $region40: #{p4_basic_block_pallas.1} parent=11 // pred_fallthru
          _
        // Predicated region
        $region41: #{p4_basic_block_pallas.1} parent=11 // pred_check
          %p320 = pneg %p217
        $region42: #{p4_basic_block_pallas.1} parent=11 // pred_check_branch
          %322 = sbr.rel (%p320) target = $region44
        $region43: #{p4_basic_block_pallas.1} parent=11 // pred_region
          _
        $region44: #{p4_basic_block_pallas.1} parent=11 // pred_fallthru
          _
        // Predicated region
        $region45: #{p4_basic_block_pallas.1} parent=11 // pred_check
          %p323 = pneg %p238
        $region46: #{p4_basic_block_pallas.1} parent=11 // pred_check_branch
          %325 = sbr.rel (%p323) target = $region48
        $region47: #{p4_basic_block_pallas.1} parent=11 // pred_region
          _
        $region48: #{p4_basic_block_pallas.1} parent=11 // pred_fallthru
          _
      $region12: #{p4_basic_block_pallas.1} parent=5 // pred_fallthru
        _
      %p326 = scmp.lt.s32.totalorder %s23, 2
      // Predicated region
      $region49: #{p4_basic_block_pallas.1} parent=5 // pred_check
        %p327 = pneg %p326
      $region50: #{p4_basic_block_pallas.1} parent=5 // pred_check_branch
        %329 = sbr.rel (%p327) target = $region52
      $region51: #{p4_basic_block_pallas.1} parent=5 // pred_region
        // Predicated region
        $region53: #{p4_basic_block_pallas.1} parent=51 // pred_check
          %p330 = pneg %p43
        $region54: #{p4_basic_block_pallas.1} parent=51 // pred_check_branch
          %332 = sbr.rel (%p330) target = $region56
        $region55: #{p4_basic_block_pallas.1} parent=51 // pred_region
          %s333 = sand.u32 %s33, 1
          %s334 = scalar_lea.sflag [#allocation5], %s333
          %s335 = sand.u32 %s33, 1
          %s336 = smul.addr %s335, 128
          %s337 = scalar_lea.vmem [#allocation4], %s336
          %s339 = ssub.s32 2048, 2048
          %340 = vsyncadd %s334, %s339
          %s341 = smul.addr %s23, 32
          %s342 = smul.addr %s341, 64
          %s343 = scalar_lea.hbm %s0, %s342
          %s344 = sshll.u32 %s337, 4
          %s345 = int_to_ptr.vmem [resolvable:$true] %s344
          %350 = dma.hbm_to_vmem [thread:$0]  %s343, 2048, %s345, %s334, 64, 64, 4
        $region56: #{p4_basic_block_pallas.1} parent=51 // pred_fallthru
          _
      $region52: #{p4_basic_block_pallas.1} parent=5 // pred_fallthru
        _
      %p351 = scmp.le.s32.totalorder 1, %s23
      %p352 = scmp.lt.s32.totalorder %s23, 3
      %p353 = pnand %p351, %p352
      %p354 = pneg %p353
      // Predicated region
      $region57: #{p4_basic_block_pallas.1} parent=5 // pred_check
        _
      $region58: #{p4_basic_block_pallas.1} parent=5 // pred_check_branch
        %356 = sbr.rel (%p353) target = $region60
      $region59: #{p4_basic_block_pallas.1} parent=5 // pred_region
        %s357 = ssub.s32 %s23, 1
        %s358 = sand.u32 %s36, 1
        %s359 = scalar_lea.sflag [#allocation5], %s358
        %s360 = sand.u32 %s36, 1
        %s361 = smul.addr %s360, 128
        %s362 = scalar_lea.vmem [#allocation4], %s361
        // Predicated region
        $region61: #{p4_basic_block_pallas.1} parent=59 // pred_check
          %p363 = pneg %p49
        $region62: #{p4_basic_block_pallas.1} parent=59 // pred_check_branch
          %365 = sbr.rel (%p363) target = $region64
        $region63: #{p4_basic_block_pallas.1} parent=59 // pred_region
          %366 = dma.done %s359, 2048
        $region64: #{p4_basic_block_pallas.1} parent=59 // pred_fallthru
          _
        // Predicated region
        $region65: #{p4_basic_block_pallas.1} parent=59 // pred_check
          %p367 = pneg %p70
        $region66: #{p4_basic_block_pallas.1} parent=59 // pred_check_branch
          %369 = sbr.rel (%p367) target = $region68
        $region67: #{p4_basic_block_pallas.1} parent=59 // pred_region
          %370 = dma.done [#allocation8], 1152
        $region68: #{p4_basic_block_pallas.1} parent=59 // pred_fallthru
          _
        // Predicated region
        $region69: #{p4_basic_block_pallas.1} parent=59 // pred_check
          %p371 = pneg %p133
        $region70: #{p4_basic_block_pallas.1} parent=59 // pred_check_branch
          %373 = sbr.rel (%p371) target = $region72
        $region71: #{p4_basic_block_pallas.1} parent=59 // pred_region
          %374 = dma.done [#allocation8], 2304
        $region72: #{p4_basic_block_pallas.1} parent=59 // pred_fallthru
          _
        %s375 = sand.u32 %s36, 1
        %s376 = scalar_lea.sflag [#allocation5], %s375
        %s377 = sand.u32 %s36, 1
        %s378 = smul.addr %s377, 128
        %s379 = scalar_lea.vmem [#allocation4], %s378
        %p380 = pneg %p49
        %p381 = pneg %p46
        %p382 = pneg %p70
        %p383 = pneg %p67
        %p384 = pneg %p91
        %p385 = pneg %p88
        %p386 = pneg %p112
        %p387 = pneg %p109
        %p388 = pneg %p133
        %p389 = pneg %p130
        %p390 = pneg %p154
        %p391 = pneg %p151
        %p392 = pneg %p175
        %p393 = pneg %p172
        %p394 = pneg %p196
        %p395 = pneg %p193
        %p396 = pneg %p217
        %p397 = pneg %p214
        %p398 = pneg %p238
        %p399 = pneg %p235
        %p400 = pneg %p264
        %p401 = pneg %p261
        %s402 = sand.u32 %s251, 1
        %s403 = scalar_lea.sflag [#allocation6], %s402
        %s404 = sand.u32 %s251, 1
        %s405 = smul.addr %s404, 128
        %s406 = scalar_lea.vmem [#allocation10], %s405
        %v408 = vld [vmem:[%s362] sm:$0xf]
        %v409 = vld [vmem:[%s362 + $0x4] sm:$0xf]
        %v410 = vld [vmem:[%s362 + $0x8] sm:$0xf]
        %v411 = vld [vmem:[%s362 + $0xc] sm:$0xf]
        %v412 = vld [vmem:[%s362 + $0x10] sm:$0xf]
        %v413 = vld [vmem:[%s362 + $0x14] sm:$0xf]
        %v414 = vld [vmem:[%s362 + $0x18] sm:$0xf]
        %v415 = vld [vmem:[%s362 + $0x1c] sm:$0xf]
        %v416 = vld [vmem:[%s362 + $0x20] sm:$0xf]
        %v417 = vld [vmem:[%s362 + $0x24] sm:$0xf]
        %v418 = vld [vmem:[%s362 + $0x28] sm:$0xf]
        %v419 = vld [vmem:[%s362 + $0x2c] sm:$0xf]
        %v420 = vld [vmem:[%s362 + $0x30] sm:$0xf]
        %v421 = vld [vmem:[%s362 + $0x34] sm:$0xf]
        %v422 = vld [vmem:[%s362 + $0x38] sm:$0xf]
        %v423 = vld [vmem:[%s362 + $0x3c] sm:$0xf]
        %v424 = vld [vmem:[%s362 + $0x40] sm:$0xf]
        %v425 = vld [vmem:[%s362 + $0x44] sm:$0xf]
        %v426 = vld [vmem:[%s362 + $0x48] sm:$0xf]
        %v427 = vld [vmem:[%s362 + $0x4c] sm:$0xf]
        %v428 = vld [vmem:[%s362 + $0x50] sm:$0xf]
        %v429 = vld [vmem:[%s362 + $0x54] sm:$0xf]
        %v430 = vld [vmem:[%s362 + $0x58] sm:$0xf]
        %v431 = vld [vmem:[%s362 + $0x5c] sm:$0xf]
        %v432 = vld [vmem:[%s362 + $0x60] sm:$0xf]
        %v433 = vld [vmem:[%s362 + $0x64] sm:$0xf]
        %v434 = vld [vmem:[%s362 + $0x68] sm:$0xf]
        %v435 = vld [vmem:[%s362 + $0x6c] sm:$0xf]
        %v436 = vld [vmem:[%s362 + $0x70] sm:$0xf]
        %v437 = vld [vmem:[%s362 + $0x74] sm:$0xf]
        %v438 = vld [vmem:[%s362 + $0x78] sm:$0xf]
        %v439 = vld [vmem:[%s362 + $0x7c] sm:$0xf]
        %s440 = scalar_lea.vmem [#allocation2], 16
        %vm441 = vcmask 125952
        %442 = vst.msk [vmem:[%s440 + $0x4] sm:$0xf] %vm441, %v408
        %443 = vst.msk [vmem:[%s440 + $0x8] sm:$0xf] %vm441, %v409
        %444 = vst.msk [vmem:[%s440 + $0x14] sm:$0xf] %vm441, %v410
        %445 = vst.msk [vmem:[%s440 + $0x18] sm:$0xf] %vm441, %v411
        %446 = vst.msk [vmem:[%s440 + $0x24] sm:$0xf] %vm441, %v412
        %447 = vst.msk [vmem:[%s440 + $0x28] sm:$0xf] %vm441, %v413
        %448 = vst.msk [vmem:[%s440 + $0x34] sm:$0xf] %vm441, %v414
        %449 = vst.msk [vmem:[%s440 + $0x38] sm:$0xf] %vm441, %v415
        %450 = vst.msk [vmem:[%s440 + $0x44] sm:$0xf] %vm441, %v416
        %451 = vst.msk [vmem:[%s440 + $0x48] sm:$0xf] %vm441, %v417
        %452 = vst.msk [vmem:[%s440 + $0x54] sm:$0xf] %vm441, %v418
        %453 = vst.msk [vmem:[%s440 + $0x58] sm:$0xf] %vm441, %v419
        %454 = vst.msk [vmem:[%s440 + $0x64] sm:$0xf] %vm441, %v420
        %455 = vst.msk [vmem:[%s440 + $0x68] sm:$0xf] %vm441, %v421
        %456 = vst.msk [vmem:[%s440 + $0x74] sm:$0xf] %vm441, %v422
        %457 = vst.msk [vmem:[%s440 + $0x78] sm:$0xf] %vm441, %v423
        %458 = vst.msk [vmem:[%s440 + $0x84] sm:$0xf] %vm441, %v424
        %459 = vst.msk [vmem:[%s440 + $0x88] sm:$0xf] %vm441, %v425
        %460 = vst.msk [vmem:[%s440 + $0x94] sm:$0xf] %vm441, %v426
        %461 = vst.msk [vmem:[%s440 + $0x98] sm:$0xf] %vm441, %v427
        %462 = vst.msk [vmem:[%s440 + $0xa4] sm:$0xf] %vm441, %v428
        %463 = vst.msk [vmem:[%s440 + $0xa8] sm:$0xf] %vm441, %v429
        %464 = vst.msk [vmem:[%s440 + $0xb4] sm:$0xf] %vm441, %v430
        %465 = vst.msk [vmem:[%s440 + $0xb8] sm:$0xf] %vm441, %v431
        %466 = vst.msk [vmem:[%s440 + $0xc4] sm:$0xf] %vm441, %v432
        %467 = vst.msk [vmem:[%s440 + $0xc8] sm:$0xf] %vm441, %v433
        %468 = vst.msk [vmem:[%s440 + $0xd4] sm:$0xf] %vm441, %v434
        %469 = vst.msk [vmem:[%s440 + $0xd8] sm:$0xf] %vm441, %v435
        %470 = vst.msk [vmem:[%s440 + $0xe4] sm:$0xf] %vm441, %v436
        %471 = vst.msk [vmem:[%s440 + $0xe8] sm:$0xf] %vm441, %v437
        %472 = vst.msk [vmem:[%s440 + $0xf4] sm:$0xf] %vm441, %v438
        %473 = vst.msk [vmem:[%s440 + $0xf8] sm:$0xf] %vm441, %v439
        %vm474 = vcmask 125955
        %vm475 = vsmask.f32 7950
        %vm476 = vmand %vm474, %vm475
        %v477 = vld [vmem:[#allocation2] sm:$0x8]
        %v478 = vsel %vm476, 0, %v477
        %479 = vst [vmem:[#allocation2] sm:$0x8] %v478
        %480 = vst.msk [vmem:[#allocation2 + $0x4] sm:$0xf] %vm441, 0
        %481 = vst.msk [vmem:[#allocation2 + $0x8] sm:$0xf] %vm441, 0
        %vm482 = vcmask 122880
        %vm483 = vsmask.f32 256
        %vm484 = vmand %vm482, %vm483
        %v485 = vld [vmem:[#allocation2 + $0xc] sm:$0x1]
        %v486 = vsel %vm484, 0, %v485
        %487 = vst [vmem:[#allocation2 + $0xc] sm:$0x1] %v486
        %s488 = scalar_lea.vmem [#allocation2], 272
        %v489 = vld [vmem:[%s488] sm:$0x8]
        %v490 = vsel %vm476, 0, %v489
        %491 = vst [vmem:[%s488] sm:$0x8] %v490
        %492 = vst.msk [vmem:[%s488 + $0x4] sm:$0xf] %vm441, 0
        %493 = vst.msk [vmem:[%s488 + $0x8] sm:$0xf] %vm441, 0
        %v494 = vld [vmem:[%s488 + $0xc] sm:$0x1]
        %v495 = vsel %vm484, 0, %v494
        %496 = vst [vmem:[%s488 + $0xc] sm:$0x1] %v495
        %v497 = vld [vmem:[%s440] sm:$0x8]
        %v498 = vsel %vm476, 0, %v497
        %499 = vst [vmem:[%s440] sm:$0x8] %v498
        %v500 = vld [vmem:[%s440 + $0x10] sm:$0x8]
        %v501 = vsel %vm476, 0, %v500
        %502 = vst [vmem:[%s440 + $0x10] sm:$0x8] %v501
        %v503 = vld [vmem:[%s440 + $0x20] sm:$0x8]
        %v504 = vsel %vm476, 0, %v503
        %505 = vst [vmem:[%s440 + $0x20] sm:$0x8] %v504
        %v506 = vld [vmem:[%s440 + $0x30] sm:$0x8]
        %v507 = vsel %vm476, 0, %v506
        %508 = vst [vmem:[%s440 + $0x30] sm:$0x8] %v507
        %v509 = vld [vmem:[%s440 + $0x40] sm:$0x8]
        %v510 = vsel %vm476, 0, %v509
        %511 = vst [vmem:[%s440 + $0x40] sm:$0x8] %v510
        %v512 = vld [vmem:[%s440 + $0x50] sm:$0x8]
        %v513 = vsel %vm476, 0, %v512
        %514 = vst [vmem:[%s440 + $0x50] sm:$0x8] %v513
        %v515 = vld [vmem:[%s440 + $0x60] sm:$0x8]
        %v516 = vsel %vm476, 0, %v515
        %517 = vst [vmem:[%s440 + $0x60] sm:$0x8] %v516
        %v518 = vld [vmem:[%s440 + $0x70] sm:$0x8]
        %v519 = vsel %vm476, 0, %v518
        %520 = vst [vmem:[%s440 + $0x70] sm:$0x8] %v519
        %v521 = vld [vmem:[%s440 + $0x80] sm:$0x8]
        %v522 = vsel %vm476, 0, %v521
        %523 = vst [vmem:[%s440 + $0x80] sm:$0x8] %v522
        %v524 = vld [vmem:[%s440 + $0x90] sm:$0x8]
        %v525 = vsel %vm476, 0, %v524
        %526 = vst [vmem:[%s440 + $0x90] sm:$0x8] %v525
        %v527 = vld [vmem:[%s440 + $0xa0] sm:$0x8]
        %v528 = vsel %vm476, 0, %v527
        %529 = vst [vmem:[%s440 + $0xa0] sm:$0x8] %v528
        %v530 = vld [vmem:[%s440 + $0xb0] sm:$0x8]
        %v531 = vsel %vm476, 0, %v530
        %532 = vst [vmem:[%s440 + $0xb0] sm:$0x8] %v531
        %v533 = vld [vmem:[%s440 + $0xc0] sm:$0x8]
        %v534 = vsel %vm476, 0, %v533
        %535 = vst [vmem:[%s440 + $0xc0] sm:$0x8] %v534
        %v536 = vld [vmem:[%s440 + $0xd0] sm:$0x8]
        %v537 = vsel %vm476, 0, %v536
        %538 = vst [vmem:[%s440 + $0xd0] sm:$0x8] %v537
        %v539 = vld [vmem:[%s440 + $0xe0] sm:$0x8]
        %v540 = vsel %vm476, 0, %v539
        %541 = vst [vmem:[%s440 + $0xe0] sm:$0x8] %v540
        %v542 = vld [vmem:[%s440 + $0xf0] sm:$0x8]
        %v543 = vsel %vm476, 0, %v542
        %544 = vst [vmem:[%s440 + $0xf0] sm:$0x8] %v543
        %v545 = vld [vmem:[%s440 + $0xc] sm:$0x1]
        %v546 = vsel %vm484, 0, %v545
        %547 = vst [vmem:[%s440 + $0xc] sm:$0x1] %v546
        %v548 = vld [vmem:[%s440 + $0x1c] sm:$0x1]
        %v549 = vsel %vm484, 0, %v548
        %550 = vst [vmem:[%s440 + $0x1c] sm:$0x1] %v549
        %v551 = vld [vmem:[%s440 + $0x2c] sm:$0x1]
        %v552 = vsel %vm484, 0, %v551
        %553 = vst [vmem:[%s440 + $0x2c] sm:$0x1] %v552
        %v554 = vld [vmem:[%s440 + $0x3c] sm:$0x1]
        %v555 = vsel %vm484, 0, %v554
        %556 = vst [vmem:[%s440 + $0x3c] sm:$0x1] %v555
        %v557 = vld [vmem:[%s440 + $0x4c] sm:$0x1]
        %v558 = vsel %vm484, 0, %v557
        %559 = vst [vmem:[%s440 + $0x4c] sm:$0x1] %v558
        %v560 = vld [vmem:[%s440 + $0x5c] sm:$0x1]
        %v561 = vsel %vm484, 0, %v560
        %562 = vst [vmem:[%s440 + $0x5c] sm:$0x1] %v561
        %v563 = vld [vmem:[%s440 + $0x6c] sm:$0x1]
        %v564 = vsel %vm484, 0, %v563
        %565 = vst [vmem:[%s440 + $0x6c] sm:$0x1] %v564
        %v566 = vld [vmem:[%s440 + $0x7c] sm:$0x1]
        %v567 = vsel %vm484, 0, %v566
        %568 = vst [vmem:[%s440 + $0x7c] sm:$0x1] %v567
        %v569 = vld [vmem:[%s440 + $0x8c] sm:$0x1]
        %v570 = vsel %vm484, 0, %v569
        %571 = vst [vmem:[%s440 + $0x8c] sm:$0x1] %v570
        %v572 = vld [vmem:[%s440 + $0x9c] sm:$0x1]
        %v573 = vsel %vm484, 0, %v572
        %574 = vst [vmem:[%s440 + $0x9c] sm:$0x1] %v573
        %v575 = vld [vmem:[%s440 + $0xac] sm:$0x1]
        %v576 = vsel %vm484, 0, %v575
        %577 = vst [vmem:[%s440 + $0xac] sm:$0x1] %v576
        %v578 = vld [vmem:[%s440 + $0xbc] sm:$0x1]
        %v579 = vsel %vm484, 0, %v578
        %580 = vst [vmem:[%s440 + $0xbc] sm:$0x1] %v579
        %v581 = vld [vmem:[%s440 + $0xcc] sm:$0x1]
        %v582 = vsel %vm484, 0, %v581
        %583 = vst [vmem:[%s440 + $0xcc] sm:$0x1] %v582
        %v584 = vld [vmem:[%s440 + $0xdc] sm:$0x1]
        %v585 = vsel %vm484, 0, %v584
        %586 = vst [vmem:[%s440 + $0xdc] sm:$0x1] %v585
        %v587 = vld [vmem:[%s440 + $0xec] sm:$0x1]
        %v588 = vsel %vm484, 0, %v587
        %589 = vst [vmem:[%s440 + $0xec] sm:$0x1] %v588
        %v590 = vld [vmem:[%s440 + $0xfc] sm:$0x1]
        %v591 = vsel %vm484, 0, %v590
        %592 = vst [vmem:[%s440 + $0xfc] sm:$0x1] %v591
        %v593 = vld [vmem:[#allocation2] sm:$0x8]
        %v594 = vld [vmem:[#allocation2 + $0x4] sm:$0xf]
        %v595 = vld [vmem:[#allocation2 + $0x8] sm:$0xf]
        %v596 = vld [vmem:[#allocation2 + $0x10] sm:$0x8]
        %v597 = vld [vmem:[#allocation2 + $0x14] sm:$0xf]
        %v598 = vld [vmem:[#allocation2 + $0x18] sm:$0xf]
        %v599 = vld [vmem:[#allocation2 + $0x20] sm:$0x8]
        %v600 = vld [vmem:[#allocation2 + $0x24] sm:$0xf]
        %v601 = vld [vmem:[#allocation2 + $0x28] sm:$0xf]
        %v602 = vld [vmem:[#allocation2 + $0x30] sm:$0x8]
        %v603 = vld [vmem:[#allocation2 + $0x34] sm:$0xf]
        %v604 = vld [vmem:[#allocation2 + $0x38] sm:$0xf]
        %v605 = vld [vmem:[#allocation2 + $0x40] sm:$0x8]
        %v606 = vld [vmem:[#allocation2 + $0x44] sm:$0xf]
        %v607 = vld [vmem:[#allocation2 + $0x48] sm:$0xf]
        %v608 = vld [vmem:[#allocation2 + $0x50] sm:$0x8]
        %v609 = vld [vmem:[#allocation2 + $0x54] sm:$0xf]
        %v610 = vld [vmem:[#allocation2 + $0x58] sm:$0xf]
        %v611 = vld [vmem:[#allocation2 + $0x60] sm:$0x8]
        %v612 = vld [vmem:[#allocation2 + $0x64] sm:$0xf]
        %v613 = vld [vmem:[#allocation2 + $0x68] sm:$0xf]
        %v614 = vld [vmem:[#allocation2 + $0x70] sm:$0x8]
        %v615 = vld [vmem:[#allocation2 + $0x74] sm:$0xf]
        %v616 = vld [vmem:[#allocation2 + $0x78] sm:$0xf]
        %v617 = vld [vmem:[#allocation2 + $0x80] sm:$0x8]
        %v618 = vld [vmem:[#allocation2 + $0x84] sm:$0xf]
        %v619 = vld [vmem:[#allocation2 + $0x88] sm:$0xf]
        %v620 = vld [vmem:[#allocation2 + $0x90] sm:$0x8]
        %v621 = vld [vmem:[#allocation2 + $0x94] sm:$0xf]
        %v622 = vld [vmem:[#allocation2 + $0x98] sm:$0xf]
        %v623 = vld [vmem:[#allocation2 + $0xa0] sm:$0x8]
        %v624 = vld [vmem:[#allocation2 + $0xa4] sm:$0xf]
        %v625 = vld [vmem:[#allocation2 + $0xa8] sm:$0xf]
        %v626 = vld [vmem:[#allocation2 + $0xb0] sm:$0x8]
        %v627 = vld [vmem:[#allocation2 + $0xb4] sm:$0xf]
        %v628 = vld [vmem:[#allocation2 + $0xb8] sm:$0xf]
        %v629 = vld [vmem:[#allocation2 + $0xc0] sm:$0x8]
        %v630 = vld [vmem:[#allocation2 + $0xc4] sm:$0xf]
        %v631 = vld [vmem:[#allocation2 + $0xc8] sm:$0xf]
        %v632 = vld [vmem:[#allocation2 + $0xd0] sm:$0x8]
        %v633 = vld [vmem:[#allocation2 + $0xd4] sm:$0xf]
        %v634 = vld [vmem:[#allocation2 + $0xd8] sm:$0xf]
        %v635 = vld [vmem:[#allocation2 + $0xe0] sm:$0x8]
        %v636 = vld [vmem:[#allocation2 + $0xe4] sm:$0xf]
        %v637 = vld [vmem:[#allocation2 + $0xe8] sm:$0xf]
        %v638 = vld [vmem:[#allocation2 + $0xf0] sm:$0x8]
        %v639 = vld [vmem:[#allocation2 + $0xf4] sm:$0xf]
        %v640 = vld [vmem:[#allocation2 + $0xf8] sm:$0xf]
        %vm641 = vsmask.f32 4368
        %vm642 = vmor %vm483, %vm641
        %v644 = vshrl.u32 %v593, 16
        %v646 = vrot.slane %v644, 7
        %v647 = vrot.slane %v646, 4
        %v649 = vshrl.u32 %v594, 16
        %v651 = vrot.slane %v649, 7
        %v652 = vshll.u32 %v594, 16
        %v654 = vor.u32 %v651, %v652
        %v655 = vsel %vm642, %v647, %v654
        %v656 = vrot.slane %v651, 4
        %v658 = vshrl.u32 %v595, 16
        %v660 = vrot.slane %v658, 7
        %v661 = vshll.u32 %v595, 16
        %v663 = vor.u32 %v660, %v661
        %v664 = vsel %vm642, %v656, %v663
        %v666 = vshrl.u32 %v596, 16
        %v668 = vrot.slane %v666, 7
        %v669 = vrot.slane %v668, 4
        %v671 = vshrl.u32 %v597, 16
        %v673 = vrot.slane %v671, 7
        %v674 = vshll.u32 %v597, 16
        %v676 = vor.u32 %v673, %v674
        %v677 = vsel %vm642, %v669, %v676
        %v678 = vrot.slane %v673, 4
        %v680 = vshrl.u32 %v598, 16
        %v682 = vrot.slane %v680, 7
        %v683 = vshll.u32 %v598, 16
        %v685 = vor.u32 %v682, %v683
        %v686 = vsel %vm642, %v678, %v685
        %v688 = vshrl.u32 %v599, 16
        %v690 = vrot.slane %v688, 7
        %v691 = vrot.slane %v690, 4
        %v693 = vshrl.u32 %v600, 16
        %v695 = vrot.slane %v693, 7
        %v696 = vshll.u32 %v600, 16
        %v698 = vor.u32 %v695, %v696
        %v699 = vsel %vm642, %v691, %v698
        %v700 = vrot.slane %v695, 4
        %v702 = vshrl.u32 %v601, 16
        %v704 = vrot.slane %v702, 7
        %v705 = vshll.u32 %v601, 16
        %v707 = vor.u32 %v704, %v705
        %v708 = vsel %vm642, %v700, %v707
        %v710 = vshrl.u32 %v602, 16
        %v712 = vrot.slane %v710, 7
        %v713 = vrot.slane %v712, 4
        %v715 = vshrl.u32 %v603, 16
        %v717 = vrot.slane %v715, 7
        %v718 = vshll.u32 %v603, 16
        %v720 = vor.u32 %v717, %v718
        %v721 = vsel %vm642, %v713, %v720
        %v722 = vrot.slane %v717, 4
        %v724 = vshrl.u32 %v604, 16
        %v726 = vrot.slane %v724, 7
        %v727 = vshll.u32 %v604, 16
        %v729 = vor.u32 %v726, %v727
        %v730 = vsel %vm642, %v722, %v729
        %v732 = vshrl.u32 %v605, 16
        %v734 = vrot.slane %v732, 7
        %v735 = vrot.slane %v734, 4
        %v737 = vshrl.u32 %v606, 16
        %v739 = vrot.slane %v737, 7
        %v740 = vshll.u32 %v606, 16
        %v742 = vor.u32 %v739, %v740
        %v743 = vsel %vm642, %v735, %v742
        %v744 = vrot.slane %v739, 4
        %v746 = vshrl.u32 %v607, 16
        %v748 = vrot.slane %v746, 7
        %v749 = vshll.u32 %v607, 16
        %v751 = vor.u32 %v748, %v749
        %v752 = vsel %vm642, %v744, %v751
        %v754 = vshrl.u32 %v608, 16
        %v756 = vrot.slane %v754, 7
        %v757 = vrot.slane %v756, 4
        %v759 = vshrl.u32 %v609, 16
        %v761 = vrot.slane %v759, 7
        %v762 = vshll.u32 %v609, 16
        %v764 = vor.u32 %v761, %v762
        %v765 = vsel %vm642, %v757, %v764
        %v766 = vrot.slane %v761, 4
        %v768 = vshrl.u32 %v610, 16
        %v770 = vrot.slane %v768, 7
        %v771 = vshll.u32 %v610, 16
        %v773 = vor.u32 %v770, %v771
        %v774 = vsel %vm642, %v766, %v773
        %v776 = vshrl.u32 %v611, 16
        %v778 = vrot.slane %v776, 7
        %v779 = vrot.slane %v778, 4
        %v781 = vshrl.u32 %v612, 16
        %v783 = vrot.slane %v781, 7
        %v784 = vshll.u32 %v612, 16
        %v786 = vor.u32 %v783, %v784
        %v787 = vsel %vm642, %v779, %v786
        %v788 = vrot.slane %v783, 4
        %v790 = vshrl.u32 %v613, 16
        %v792 = vrot.slane %v790, 7
        %v793 = vshll.u32 %v613, 16
        %v795 = vor.u32 %v792, %v793
        %v796 = vsel %vm642, %v788, %v795
        %v798 = vshrl.u32 %v614, 16
        %v800 = vrot.slane %v798, 7
        %v801 = vrot.slane %v800, 4
        %v803 = vshrl.u32 %v615, 16
        %v805 = vrot.slane %v803, 7
        %v806 = vshll.u32 %v615, 16
        %v808 = vor.u32 %v805, %v806
        %v809 = vsel %vm642, %v801, %v808
        %v810 = vrot.slane %v805, 4
        %v812 = vshrl.u32 %v616, 16
        %v814 = vrot.slane %v812, 7
        %v815 = vshll.u32 %v616, 16
        %v817 = vor.u32 %v814, %v815
        %v818 = vsel %vm642, %v810, %v817
        %v820 = vshrl.u32 %v617, 16
        %v822 = vrot.slane %v820, 7
        %v823 = vrot.slane %v822, 4
        %v825 = vshrl.u32 %v618, 16
        %v827 = vrot.slane %v825, 7
        %v828 = vshll.u32 %v618, 16
        %v830 = vor.u32 %v827, %v828
        %v831 = vsel %vm642, %v823, %v830
        %v832 = vrot.slane %v827, 4
        %v834 = vshrl.u32 %v619, 16
        %v836 = vrot.slane %v834, 7
        %v837 = vshll.u32 %v619, 16
        %v839 = vor.u32 %v836, %v837
        %v840 = vsel %vm642, %v832, %v839
        %v842 = vshrl.u32 %v620, 16
        %v844 = vrot.slane %v842, 7
        %v845 = vrot.slane %v844, 4
        %v847 = vshrl.u32 %v621, 16
        %v849 = vrot.slane %v847, 7
        %v850 = vshll.u32 %v621, 16
        %v852 = vor.u32 %v849, %v850
        %v853 = vsel %vm642, %v845, %v852
        %v854 = vrot.slane %v849, 4
        %v856 = vshrl.u32 %v622, 16
        %v858 = vrot.slane %v856, 7
        %v859 = vshll.u32 %v622, 16
        %v861 = vor.u32 %v858, %v859
        %v862 = vsel %vm642, %v854, %v861
        %v864 = vshrl.u32 %v623, 16
        %v866 = vrot.slane %v864, 7
        %v867 = vrot.slane %v866, 4
        %v869 = vshrl.u32 %v624, 16
        %v871 = vrot.slane %v869, 7
        %v872 = vshll.u32 %v624, 16
        %v874 = vor.u32 %v871, %v872
        %v875 = vsel %vm642, %v867, %v874
        %v876 = vrot.slane %v871, 4
        %v878 = vshrl.u32 %v625, 16
        %v880 = vrot.slane %v878, 7
        %v881 = vshll.u32 %v625, 16
        %v883 = vor.u32 %v880, %v881
        %v884 = vsel %vm642, %v876, %v883
        %v886 = vshrl.u32 %v626, 16
        %v888 = vrot.slane %v886, 7
        %v889 = vrot.slane %v888, 4
        %v891 = vshrl.u32 %v627, 16
        %v893 = vrot.slane %v891, 7
        %v894 = vshll.u32 %v627, 16
        %v896 = vor.u32 %v893, %v894
        %v897 = vsel %vm642, %v889, %v896
        %v898 = vrot.slane %v893, 4
        %v900 = vshrl.u32 %v628, 16
        %v902 = vrot.slane %v900, 7
        %v903 = vshll.u32 %v628, 16
        %v905 = vor.u32 %v902, %v903
        %v906 = vsel %vm642, %v898, %v905
        %v908 = vshrl.u32 %v629, 16
        %v910 = vrot.slane %v908, 7
        %v911 = vrot.slane %v910, 4
        %v913 = vshrl.u32 %v630, 16
        %v915 = vrot.slane %v913, 7
        %v916 = vshll.u32 %v630, 16
        %v918 = vor.u32 %v915, %v916
        %v919 = vsel %vm642, %v911, %v918
        %v920 = vrot.slane %v915, 4
        %v922 = vshrl.u32 %v631, 16
        %v924 = vrot.slane %v922, 7
        %v925 = vshll.u32 %v631, 16
        %v927 = vor.u32 %v924, %v925
        %v928 = vsel %vm642, %v920, %v927
        %v930 = vshrl.u32 %v632, 16
        %v932 = vrot.slane %v930, 7
        %v933 = vrot.slane %v932, 4
        %v935 = vshrl.u32 %v633, 16
        %v937 = vrot.slane %v935, 7
        %v938 = vshll.u32 %v633, 16
        %v940 = vor.u32 %v937, %v938
        %v941 = vsel %vm642, %v933, %v940
        %v942 = vrot.slane %v937, 4
        %v944 = vshrl.u32 %v634, 16
        %v946 = vrot.slane %v944, 7
        %v947 = vshll.u32 %v634, 16
        %v949 = vor.u32 %v946, %v947
        %v950 = vsel %vm642, %v942, %v949
        %v952 = vshrl.u32 %v635, 16
        %v954 = vrot.slane %v952, 7
        %v955 = vrot.slane %v954, 4
        %v957 = vshrl.u32 %v636, 16
        %v959 = vrot.slane %v957, 7
        %v960 = vshll.u32 %v636, 16
        %v962 = vor.u32 %v959, %v960
        %v963 = vsel %vm642, %v955, %v962
        %v964 = vrot.slane %v959, 4
        %v966 = vshrl.u32 %v637, 16
        %v968 = vrot.slane %v966, 7
        %v969 = vshll.u32 %v637, 16
        %v971 = vor.u32 %v968, %v969
        %v972 = vsel %vm642, %v964, %v971
        %v974 = vshrl.u32 %v638, 16
        %v976 = vrot.slane %v974, 7
        %v977 = vrot.slane %v976, 4
        %v979 = vshrl.u32 %v639, 16
        %v981 = vrot.slane %v979, 7
        %v982 = vshll.u32 %v639, 16
        %v984 = vor.u32 %v981, %v982
        %v985 = vsel %vm642, %v977, %v984
        %v986 = vrot.slane %v981, 4
        %v988 = vshrl.u32 %v640, 16
        %v990 = vrot.slane %v988, 7
        %v991 = vshll.u32 %v640, 16
        %v993 = vor.u32 %v990, %v991
        %v994 = vsel %vm642, %v986, %v993
        %v995 = vld [vmem:[#allocation7] sm:$0xf]
        %v996 = vld [vmem:[#allocation7 + $0x4] sm:$0xf]
        %s997 = scalar_lea.vmem [#allocation7], 8
        %v998 = vld [vmem:[%s997] sm:$0xf]
        %v999 = vld [vmem:[%s997 + $0x4] sm:$0xf]
        %v1032 = vunpack.c.l.b16 %v594
        %v1033 = vunpack.c.l.b16 %v595
        %v1034 = vunpack.c.l.b16 %v597
        %v1035 = vunpack.c.l.b16 %v598
        %v1036 = vunpack.c.l.b16 %v600
        %v1037 = vunpack.c.l.b16 %v601
        %v1038 = vunpack.c.l.b16 %v603
        %v1039 = vunpack.c.l.b16 %v604
        %v1040 = vunpack.c.l.b16 %v606
        %v1041 = vunpack.c.l.b16 %v607
        %v1042 = vunpack.c.l.b16 %v609
        %v1043 = vunpack.c.l.b16 %v610
        %v1044 = vunpack.c.l.b16 %v612
        %v1045 = vunpack.c.l.b16 %v613
        %v1046 = vunpack.c.l.b16 %v615
        %v1047 = vunpack.c.l.b16 %v616
        %v1048 = vunpack.c.l.b16 %v618
        %v1049 = vunpack.c.l.b16 %v619
        %v1050 = vunpack.c.l.b16 %v621
        %v1051 = vunpack.c.l.b16 %v622
        %v1052 = vunpack.c.l.b16 %v624
        %v1053 = vunpack.c.l.b16 %v625
        %v1054 = vunpack.c.l.b16 %v627
        %v1055 = vunpack.c.l.b16 %v628
        %v1056 = vunpack.c.l.b16 %v630
        %v1057 = vunpack.c.l.b16 %v631
        %v1058 = vunpack.c.l.b16 %v633
        %v1059 = vunpack.c.l.b16 %v634
        %v1060 = vunpack.c.l.b16 %v636
        %v1061 = vunpack.c.l.b16 %v637
        %v1062 = vunpack.c.l.b16 %v639
        %v1063 = vunpack.c.l.b16 %v640
        %v1064 = vpack.c.b16 %v1033, %v1032
        %v1065 = vpack.c.b16 %v1035, %v1034
        %v1066 = vpack.c.b16 %v1037, %v1036
        %v1067 = vpack.c.b16 %v1039, %v1038
        %v1068 = vpack.c.b16 %v1041, %v1040
        %v1069 = vpack.c.b16 %v1043, %v1042
        %v1070 = vpack.c.b16 %v1045, %v1044
        %v1071 = vpack.c.b16 %v1047, %v1046
        %v1072 = vpack.c.b16 %v1049, %v1048
        %v1073 = vpack.c.b16 %v1051, %v1050
        %v1074 = vpack.c.b16 %v1053, %v1052
        %v1075 = vpack.c.b16 %v1055, %v1054
        %v1076 = vpack.c.b16 %v1057, %v1056
        %v1077 = vpack.c.b16 %v1059, %v1058
        %v1078 = vpack.c.b16 %v1061, %v1060
        %v1079 = vpack.c.b16 %v1063, %v1062
        %v1082 = vunpack.c.l.b16 %v998
        %v1083 = vunpack.c.l.b16 %v999
        %v1084 = vpack.c.b16 %v1083, %v1082
        %vm1086 = vcmask 130048
        %v1088 = vsel %vm1086, %v1064, 0
        %v1091 = vsel %vm1086, %v1065, 0
        %v1094 = vsel %vm1086, %v1066, 0
        %v1097 = vsel %vm1086, %v1067, 0
        %v1100 = vsel %vm1086, %v1068, 0
        %v1103 = vsel %vm1086, %v1069, 0
        %v1106 = vsel %vm1086, %v1070, 0
        %v1109 = vsel %vm1086, %v1071, 0
        %v1112 = vsel %vm1086, %v1072, 0
        %v1115 = vsel %vm1086, %v1073, 0
        %v1118 = vsel %vm1086, %v1074, 0
        %v1121 = vsel %vm1086, %v1075, 0
        %v1124 = vsel %vm1086, %v1076, 0
        %v1127 = vsel %vm1086, %v1077, 0
        %v1130 = vsel %vm1086, %v1078, 0
        %v1133 = vsel %vm1086, %v1079, 0
        %1135 = vmatprep.subr.bf16.mxu0 0
        %1136 = vmatpush1.bf16.msra.mxu0 0
        %1137 = vmatprep.subr.bf16.mxu0 0
        %1138 = vmatpush1.bf16.msra.mxu0 0
        %1139 = vmatprep.subr.bf16.mxu0 0
        %1140 = vmatpush1.bf16.msra.mxu0 0
        %1141 = vmatprep.subr.bf16.mxu0 0
        %1142 = vmatpush1.bf16.msra.mxu0 0
        %1143 = vmatprep.subr.bf16.mxu0 0
        %1144 = vmatpush1.bf16.msra.mxu0 0
        %1145 = vmatprep.subr.bf16.mxu0 0
        %1146 = vmatpush1.bf16.msra.mxu0 0
        %1147 = vmatprep.subr.bf16.mxu0 0
        %1148 = vmatpush1.bf16.msra.mxu0 0
        %1149 = vmatprep.subr.bf16.mxu0 0
        %1150 = vmatpush1.bf16.msra.mxu0 %v1084
        %1151 = vmatprep.subr.bf16.mxu0 0
        %1152 = vmatpush2.bf16.msra.mxu0 0
        %1153 = vmatprep.subr.bf16.mxu0 0
        %1154 = vmatpush2.bf16.msra.mxu0 0
        %1155 = vmatprep.subr.bf16.mxu0 0
        %1156 = vmatpush2.bf16.msra.mxu0 0
        %1157 = vmatprep.subr.bf16.mxu0 0
        %1158 = vmatpush2.bf16.msra.mxu0 0
        %1159 = vmatprep.subr.bf16.mxu0 0
        %1160 = vmatpush2.bf16.msra.mxu0 0
        %1161 = vmatprep.subr.bf16.mxu0 0
        %1162 = vmatpush2.bf16.msra.mxu0 0
        %1163 = vmatprep.subr.bf16.mxu0 0
        %1164 = vmatpush2.bf16.msra.mxu0 0
        %1165 = vmatprep.subr.bf16.mxu0 0
        %1166 = vmatpush2.bf16.msra.mxu0 0
        %1167 = vmatprep.mubr.bf16.mxu0 0
        %1168 = vmatmul.mubr.bf16.gmra.mxu0 %v1088
        %v1169 = vpop.f32.mrf.mxu0
        %v1170 = vadd.f32 0.0, %v1169
        %v1171 = vpop.f32.mrf.mxu0
        %v1172 = vpop.f32.mrf.mxu0
        %v1173 = vadd.f32 0.0, %v1172
        %v1174 = vpop.f32.mrf.mxu0
        %1175 = vmatprep.mubr.bf16.mxu0 0
        %1176 = vmatmul.mubr.bf16.gmra.mxu0 %v1091
        %v1177 = vpop.f32.mrf.mxu0
        %v1178 = vadd.f32 0.0, %v1177
        %v1179 = vpop.f32.mrf.mxu0
        %v1180 = vpop.f32.mrf.mxu0
        %v1181 = vadd.f32 0.0, %v1180
        %v1182 = vpop.f32.mrf.mxu0
        %1183 = vmatprep.mubr.bf16.mxu0 0
        %1184 = vmatmul.mubr.bf16.gmra.mxu0 %v1094
        %v1185 = vpop.f32.mrf.mxu0
        %v1186 = vadd.f32 0.0, %v1185
        %v1187 = vpop.f32.mrf.mxu0
        %v1188 = vpop.f32.mrf.mxu0
        %v1189 = vadd.f32 0.0, %v1188
        %v1190 = vpop.f32.mrf.mxu0
        %1191 = vmatprep.mubr.bf16.mxu0 0
        %1192 = vmatmul.mubr.bf16.gmra.mxu0 %v1097
        %v1193 = vpop.f32.mrf.mxu0
        %v1194 = vadd.f32 0.0, %v1193
        %v1195 = vpop.f32.mrf.mxu0
        %v1196 = vpop.f32.mrf.mxu0
        %v1197 = vadd.f32 0.0, %v1196
        %v1198 = vpop.f32.mrf.mxu0
        %1199 = vmatprep.mubr.bf16.mxu0 0
        %1200 = vmatmul.mubr.bf16.gmra.mxu0 %v1100
        %v1201 = vpop.f32.mrf.mxu0
        %v1202 = vadd.f32 0.0, %v1201
        %v1203 = vpop.f32.mrf.mxu0
        %v1204 = vpop.f32.mrf.mxu0
        %v1205 = vadd.f32 0.0, %v1204
        %v1206 = vpop.f32.mrf.mxu0
        %1207 = vmatprep.mubr.bf16.mxu0 0
        %1208 = vmatmul.mubr.bf16.gmra.mxu0 %v1103
        %v1209 = vpop.f32.mrf.mxu0
        %v1210 = vadd.f32 0.0, %v1209
        %v1211 = vpop.f32.mrf.mxu0
        %v1212 = vpop.f32.mrf.mxu0
        %v1213 = vadd.f32 0.0, %v1212
        %v1214 = vpop.f32.mrf.mxu0
        %1215 = vmatprep.mubr.bf16.mxu0 0
        %1216 = vmatmul.mubr.bf16.gmra.mxu0 %v1106
        %v1217 = vpop.f32.mrf.mxu0
        %v1218 = vadd.f32 0.0, %v1217
        %v1219 = vpop.f32.mrf.mxu0
        %v1220 = vpop.f32.mrf.mxu0
        %v1221 = vadd.f32 0.0, %v1220
        %v1222 = vpop.f32.mrf.mxu0
        %1223 = vmatprep.mubr.bf16.mxu0 0
        %1224 = vmatmul.mubr.bf16.gmra.mxu0 %v1109
        %v1225 = vpop.f32.mrf.mxu0
        %v1226 = vadd.f32 0.0, %v1225
        %v1227 = vpop.f32.mrf.mxu0
        %v1228 = vpop.f32.mrf.mxu0
        %v1229 = vadd.f32 0.0, %v1228
        %v1230 = vpop.f32.mrf.mxu0
        %1231 = vmatprep.mubr.bf16.mxu0 0
        %1232 = vmatmul.mubr.bf16.gmra.mxu0 %v1112
        %v1233 = vpop.f32.mrf.mxu0
        %v1234 = vadd.f32 0.0, %v1233
        %v1235 = vpop.f32.mrf.mxu0
        %v1236 = vpop.f32.mrf.mxu0
        %v1237 = vadd.f32 0.0, %v1236
        %v1238 = vpop.f32.mrf.mxu0
        %1239 = vmatprep.mubr.bf16.mxu0 0
        %1240 = vmatmul.mubr.bf16.gmra.mxu0 %v1115
        %v1241 = vpop.f32.mrf.mxu0
        %v1242 = vadd.f32 0.0, %v1241
        %v1243 = vpop.f32.mrf.mxu0
        %v1244 = vpop.f32.mrf.mxu0
        %v1245 = vadd.f32 0.0, %v1244
        %v1246 = vpop.f32.mrf.mxu0
        %1247 = vmatprep.mubr.bf16.mxu0 0
        %1248 = vmatmul.mubr.bf16.gmra.mxu0 %v1118
        %v1249 = vpop.f32.mrf.mxu0
        %v1250 = vadd.f32 0.0, %v1249
        %v1251 = vpop.f32.mrf.mxu0
        %v1252 = vpop.f32.mrf.mxu0
        %v1253 = vadd.f32 0.0, %v1252
        %v1254 = vpop.f32.mrf.mxu0
        %1255 = vmatprep.mubr.bf16.mxu0 0
        %1256 = vmatmul.mubr.bf16.gmra.mxu0 %v1121
        %v1257 = vpop.f32.mrf.mxu0
        %v1258 = vadd.f32 0.0, %v1257
        %v1259 = vpop.f32.mrf.mxu0
        %v1260 = vpop.f32.mrf.mxu0
        %v1261 = vadd.f32 0.0, %v1260
        %v1262 = vpop.f32.mrf.mxu0
        %1263 = vmatprep.mubr.bf16.mxu0 0
        %1264 = vmatmul.mubr.bf16.gmra.mxu0 %v1124
        %v1265 = vpop.f32.mrf.mxu0
        %v1266 = vadd.f32 0.0, %v1265
        %v1267 = vpop.f32.mrf.mxu0
        %v1268 = vpop.f32.mrf.mxu0
        %v1269 = vadd.f32 0.0, %v1268
        %v1270 = vpop.f32.mrf.mxu0
        %1271 = vmatprep.mubr.bf16.mxu0 0
        %1272 = vmatmul.mubr.bf16.gmra.mxu0 %v1127
        %v1273 = vpop.f32.mrf.mxu0
        %v1274 = vadd.f32 0.0, %v1273
        %v1275 = vpop.f32.mrf.mxu0
        %v1276 = vpop.f32.mrf.mxu0
        %v1277 = vadd.f32 0.0, %v1276
        %v1278 = vpop.f32.mrf.mxu0
        %1279 = vmatprep.mubr.bf16.mxu0 0
        %1280 = vmatmul.mubr.bf16.gmra.mxu0 %v1130
        %v1281 = vpop.f32.mrf.mxu0
        %v1282 = vadd.f32 0.0, %v1281
        %v1283 = vpop.f32.mrf.mxu0
        %v1284 = vpop.f32.mrf.mxu0
        %v1285 = vadd.f32 0.0, %v1284
        %v1286 = vpop.f32.mrf.mxu0
        %1287 = vmatprep.mubr.bf16.mxu0 0
        %1288 = vmatmul.mubr.bf16.gmra.mxu0 %v1133
        %v1289 = vpop.f32.mrf.mxu0
        %v1290 = vadd.f32 0.0, %v1289
        %v1291 = vpop.f32.mrf.mxu0
        %v1292 = vpop.f32.mrf.mxu0
        %v1293 = vadd.f32 0.0, %v1292
        %v1294 = vpop.f32.mrf.mxu0
        %1295 = vdwg.mxu0
        %v1296 = vunpack.c.l.b16 %v655
        %v1297 = vunpack.c.l.b16 %v664
        %v1298 = vunpack.c.l.b16 %v677
        %v1299 = vunpack.c.l.b16 %v686
        %v1300 = vunpack.c.l.b16 %v699
        %v1301 = vunpack.c.l.b16 %v708
        %v1302 = vunpack.c.l.b16 %v721
        %v1303 = vunpack.c.l.b16 %v730
        %v1304 = vunpack.c.l.b16 %v743
        %v1305 = vunpack.c.l.b16 %v752
        %v1306 = vunpack.c.l.b16 %v765
        %v1307 = vunpack.c.l.b16 %v774
        %v1308 = vunpack.c.l.b16 %v787
        %v1309 = vunpack.c.l.b16 %v796
        %v1310 = vunpack.c.l.b16 %v809
        %v1311 = vunpack.c.l.b16 %v818
        %v1312 = vunpack.c.l.b16 %v831
        %v1313 = vunpack.c.l.b16 %v840
        %v1314 = vunpack.c.l.b16 %v853
        %v1315 = vunpack.c.l.b16 %v862
        %v1316 = vunpack.c.l.b16 %v875
        %v1317 = vunpack.c.l.b16 %v884
        %v1318 = vunpack.c.l.b16 %v897
        %v1319 = vunpack.c.l.b16 %v906
        %v1320 = vunpack.c.l.b16 %v919
        %v1321 = vunpack.c.l.b16 %v928
        %v1322 = vunpack.c.l.b16 %v941
        %v1323 = vunpack.c.l.b16 %v950
        %v1324 = vunpack.c.l.b16 %v963
        %v1325 = vunpack.c.l.b16 %v972
        %v1326 = vunpack.c.l.b16 %v985
        %v1327 = vunpack.c.l.b16 %v994
        %v1328 = vpack.c.b16 %v1297, %v1296
        %v1329 = vpack.c.b16 %v1299, %v1298
        %v1330 = vpack.c.b16 %v1301, %v1300
        %v1331 = vpack.c.b16 %v1303, %v1302
        %v1332 = vpack.c.b16 %v1305, %v1304
        %v1333 = vpack.c.b16 %v1307, %v1306
        %v1334 = vpack.c.b16 %v1309, %v1308
        %v1335 = vpack.c.b16 %v1311, %v1310
        %v1336 = vpack.c.b16 %v1313, %v1312
        %v1337 = vpack.c.b16 %v1315, %v1314
        %v1338 = vpack.c.b16 %v1317, %v1316
        %v1339 = vpack.c.b16 %v1319, %v1318
        %v1340 = vpack.c.b16 %v1321, %v1320
        %v1341 = vpack.c.b16 %v1323, %v1322
        %v1342 = vpack.c.b16 %v1325, %v1324
        %v1343 = vpack.c.b16 %v1327, %v1326
        %v1346 = vunpack.c.l.b16 %v995
        %v1347 = vunpack.c.l.b16 %v996
        %v1348 = vpack.c.b16 %v1347, %v1346
        %v1351 = vsel %vm1086, %v1328, 0
        %v1354 = vsel %vm1086, %v1329, 0
        %v1357 = vsel %vm1086, %v1330, 0
        %v1360 = vsel %vm1086, %v1331, 0
        %v1363 = vsel %vm1086, %v1332, 0
        %v1366 = vsel %vm1086, %v1333, 0
        %v1369 = vsel %vm1086, %v1334, 0
        %v1372 = vsel %vm1086, %v1335, 0
        %v1375 = vsel %vm1086, %v1336, 0
        %v1378 = vsel %vm1086, %v1337, 0
        %v1381 = vsel %vm1086, %v1338, 0
        %v1384 = vsel %vm1086, %v1339, 0
        %v1387 = vsel %vm1086, %v1340, 0
        %v1390 = vsel %vm1086, %v1341, 0
        %v1393 = vsel %vm1086, %v1342, 0
        %v1396 = vsel %vm1086, %v1343, 0
        %1398 = vmatprep.subr.bf16.mxu0 0
        %1399 = vmatpush1.bf16.msra.mxu0 0
        %1400 = vmatprep.subr.bf16.mxu0 0
        %1401 = vmatpush1.bf16.msra.mxu0 0
        %1402 = vmatprep.subr.bf16.mxu0 0
        %1403 = vmatpush1.bf16.msra.mxu0 0
        %1404 = vmatprep.subr.bf16.mxu0 0
        %1405 = vmatpush1.bf16.msra.mxu0 0
        %1406 = vmatprep.subr.bf16.mxu0 0
        %1407 = vmatpush1.bf16.msra.mxu0 0
        %1408 = vmatprep.subr.bf16.mxu0 0
        %1409 = vmatpush1.bf16.msra.mxu0 0
        %1410 = vmatprep.subr.bf16.mxu0 0
        %1411 = vmatpush1.bf16.msra.mxu0 0
        %1412 = vmatprep.subr.bf16.mxu0 0
        %1413 = vmatpush1.bf16.msra.mxu0 %v1348
        %1414 = vmatprep.subr.bf16.mxu0 0
        %1415 = vmatpush2.bf16.msra.mxu0 0
        %1416 = vmatprep.subr.bf16.mxu0 0
        %1417 = vmatpush2.bf16.msra.mxu0 0
        %1418 = vmatprep.subr.bf16.mxu0 0
        %1419 = vmatpush2.bf16.msra.mxu0 0
        %1420 = vmatprep.subr.bf16.mxu0 0
        %1421 = vmatpush2.bf16.msra.mxu0 0
        %1422 = vmatprep.subr.bf16.mxu0 0
        %1423 = vmatpush2.bf16.msra.mxu0 0
        %1424 = vmatprep.subr.bf16.mxu0 0
        %1425 = vmatpush2.bf16.msra.mxu0 0
        %1426 = vmatprep.subr.bf16.mxu0 0
        %1427 = vmatpush2.bf16.msra.mxu0 0
        %1428 = vmatprep.subr.bf16.mxu0 0
        %1429 = vmatpush2.bf16.msra.mxu0 0
        %1430 = vmatprep.mubr.bf16.mxu0 0
        %1431 = vmatmul.mubr.bf16.gmra.mxu0 %v1351
        %v1432 = vpop.f32.mrf.mxu0
        %v1433 = vadd.f32 %v1170, %v1432
        %v1434 = vpop.f32.mrf.mxu0
        %v1435 = vpop.f32.mrf.mxu0
        %v1436 = vadd.f32 %v1173, %v1435
        %v1437 = vpop.f32.mrf.mxu0
        %1438 = vmatprep.mubr.bf16.mxu0 0
        %1439 = vmatmul.mubr.bf16.gmra.mxu0 %v1354
        %v1440 = vpop.f32.mrf.mxu0
        %v1441 = vadd.f32 %v1178, %v1440
        %v1442 = vpop.f32.mrf.mxu0
        %v1443 = vpop.f32.mrf.mxu0
        %v1444 = vadd.f32 %v1181, %v1443
        %v1445 = vpop.f32.mrf.mxu0
        %1446 = vmatprep.mubr.bf16.mxu0 0
        %1447 = vmatmul.mubr.bf16.gmra.mxu0 %v1357
        %v1448 = vpop.f32.mrf.mxu0
        %v1449 = vadd.f32 %v1186, %v1448
        %v1450 = vpop.f32.mrf.mxu0
        %v1451 = vpop.f32.mrf.mxu0
        %v1452 = vadd.f32 %v1189, %v1451
        %v1453 = vpop.f32.mrf.mxu0
        %1454 = vmatprep.mubr.bf16.mxu0 0
        %1455 = vmatmul.mubr.bf16.gmra.mxu0 %v1360
        %v1456 = vpop.f32.mrf.mxu0
        %v1457 = vadd.f32 %v1194, %v1456
        %v1458 = vpop.f32.mrf.mxu0
        %v1459 = vpop.f32.mrf.mxu0
        %v1460 = vadd.f32 %v1197, %v1459
        %v1461 = vpop.f32.mrf.mxu0
        %1462 = vmatprep.mubr.bf16.mxu0 0
        %1463 = vmatmul.mubr.bf16.gmra.mxu0 %v1363
        %v1464 = vpop.f32.mrf.mxu0
        %v1465 = vadd.f32 %v1202, %v1464
        %v1466 = vpop.f32.mrf.mxu0
        %v1467 = vpop.f32.mrf.mxu0
        %v1468 = vadd.f32 %v1205, %v1467
        %v1469 = vpop.f32.mrf.mxu0
        %1470 = vmatprep.mubr.bf16.mxu0 0
        %1471 = vmatmul.mubr.bf16.gmra.mxu0 %v1366
        %v1472 = vpop.f32.mrf.mxu0
        %v1473 = vadd.f32 %v1210, %v1472
        %v1474 = vpop.f32.mrf.mxu0
        %v1475 = vpop.f32.mrf.mxu0
        %v1476 = vadd.f32 %v1213, %v1475
        %v1477 = vpop.f32.mrf.mxu0
        %1478 = vmatprep.mubr.bf16.mxu0 0
        %1479 = vmatmul.mubr.bf16.gmra.mxu0 %v1369
        %v1480 = vpop.f32.mrf.mxu0
        %v1481 = vadd.f32 %v1218, %v1480
        %v1482 = vpop.f32.mrf.mxu0
        %v1483 = vpop.f32.mrf.mxu0
        %v1484 = vadd.f32 %v1221, %v1483
        %v1485 = vpop.f32.mrf.mxu0
        %1486 = vmatprep.mubr.bf16.mxu0 0
        %1487 = vmatmul.mubr.bf16.gmra.mxu0 %v1372
        %v1488 = vpop.f32.mrf.mxu0
        %v1489 = vadd.f32 %v1226, %v1488
        %v1490 = vpop.f32.mrf.mxu0
        %v1491 = vpop.f32.mrf.mxu0
        %v1492 = vadd.f32 %v1229, %v1491
        %v1493 = vpop.f32.mrf.mxu0
        %1494 = vmatprep.mubr.bf16.mxu0 0
        %1495 = vmatmul.mubr.bf16.gmra.mxu0 %v1375
        %v1496 = vpop.f32.mrf.mxu0
        %v1497 = vadd.f32 %v1234, %v1496
        %v1498 = vpop.f32.mrf.mxu0
        %v1499 = vpop.f32.mrf.mxu0
        %v1500 = vadd.f32 %v1237, %v1499
        %v1501 = vpop.f32.mrf.mxu0
        %1502 = vmatprep.mubr.bf16.mxu0 0
        %1503 = vmatmul.mubr.bf16.gmra.mxu0 %v1378
        %v1504 = vpop.f32.mrf.mxu0
        %v1505 = vadd.f32 %v1242, %v1504
        %v1506 = vpop.f32.mrf.mxu0
        %v1507 = vpop.f32.mrf.mxu0
        %v1508 = vadd.f32 %v1245, %v1507
        %v1509 = vpop.f32.mrf.mxu0
        %1510 = vmatprep.mubr.bf16.mxu0 0
        %1511 = vmatmul.mubr.bf16.gmra.mxu0 %v1381
        %v1512 = vpop.f32.mrf.mxu0
        %v1513 = vadd.f32 %v1250, %v1512
        %v1514 = vpop.f32.mrf.mxu0
        %v1515 = vpop.f32.mrf.mxu0
        %v1516 = vadd.f32 %v1253, %v1515
        %v1517 = vpop.f32.mrf.mxu0
        %1518 = vmatprep.mubr.bf16.mxu0 0
        %1519 = vmatmul.mubr.bf16.gmra.mxu0 %v1384
        %v1520 = vpop.f32.mrf.mxu0
        %v1521 = vadd.f32 %v1258, %v1520
        %v1522 = vpop.f32.mrf.mxu0
        %v1523 = vpop.f32.mrf.mxu0
        %v1524 = vadd.f32 %v1261, %v1523
        %v1525 = vpop.f32.mrf.mxu0
        %1526 = vmatprep.mubr.bf16.mxu0 0
        %1527 = vmatmul.mubr.bf16.gmra.mxu0 %v1387
        %v1528 = vpop.f32.mrf.mxu0
        %v1529 = vadd.f32 %v1266, %v1528
        %v1530 = vpop.f32.mrf.mxu0
        %v1531 = vpop.f32.mrf.mxu0
        %v1532 = vadd.f32 %v1269, %v1531
        %v1533 = vpop.f32.mrf.mxu0
        %1534 = vmatprep.mubr.bf16.mxu0 0
        %1535 = vmatmul.mubr.bf16.gmra.mxu0 %v1390
        %v1536 = vpop.f32.mrf.mxu0
        %v1537 = vadd.f32 %v1274, %v1536
        %v1538 = vpop.f32.mrf.mxu0
        %v1539 = vpop.f32.mrf.mxu0
        %v1540 = vadd.f32 %v1277, %v1539
        %v1541 = vpop.f32.mrf.mxu0
        %1542 = vmatprep.mubr.bf16.mxu0 0
        %1543 = vmatmul.mubr.bf16.gmra.mxu0 %v1393
        %v1544 = vpop.f32.mrf.mxu0
        %v1545 = vadd.f32 %v1282, %v1544
        %v1546 = vpop.f32.mrf.mxu0
        %v1547 = vpop.f32.mrf.mxu0
        %v1548 = vadd.f32 %v1285, %v1547
        %v1549 = vpop.f32.mrf.mxu0
        %1550 = vmatprep.mubr.bf16.mxu0 0
        %1551 = vmatmul.mubr.bf16.gmra.mxu0 %v1396
        %v1552 = vpop.f32.mrf.mxu0
        %v1553 = vadd.f32 %v1290, %v1552
        %v1554 = vpop.f32.mrf.mxu0
        %v1555 = vpop.f32.mrf.mxu0
        %v1556 = vadd.f32 %v1293, %v1555
        %v1557 = vpop.f32.mrf.mxu0
        %1558 = vdwg.mxu0
        %v1559 = vld [vmem:[#allocation2 + $0x4] sm:$0xf]
        %v1560 = vld [vmem:[#allocation2 + $0x8] sm:$0xf]
        %v1561 = vld [vmem:[#allocation2 + $0xc] sm:$0x1]
        %v1562 = vld [vmem:[#allocation2 + $0x14] sm:$0xf]
        %v1563 = vld [vmem:[#allocation2 + $0x18] sm:$0xf]
        %v1564 = vld [vmem:[#allocation2 + $0x1c] sm:$0x1]
        %v1565 = vld [vmem:[#allocation2 + $0x24] sm:$0xf]
        %v1566 = vld [vmem:[#allocation2 + $0x28] sm:$0xf]
        %v1567 = vld [vmem:[#allocation2 + $0x2c] sm:$0x1]
        %v1568 = vld [vmem:[#allocation2 + $0x34] sm:$0xf]
        %v1569 = vld [vmem:[#allocation2 + $0x38] sm:$0xf]
        %v1570 = vld [vmem:[#allocation2 + $0x3c] sm:$0x1]
        %v1571 = vld [vmem:[#allocation2 + $0x44] sm:$0xf]
        %v1572 = vld [vmem:[#allocation2 + $0x48] sm:$0xf]
        %v1573 = vld [vmem:[#allocation2 + $0x4c] sm:$0x1]
        %v1574 = vld [vmem:[#allocation2 + $0x54] sm:$0xf]
        %v1575 = vld [vmem:[#allocation2 + $0x58] sm:$0xf]
        %v1576 = vld [vmem:[#allocation2 + $0x5c] sm:$0x1]
        %v1577 = vld [vmem:[#allocation2 + $0x64] sm:$0xf]
        %v1578 = vld [vmem:[#allocation2 + $0x68] sm:$0xf]
        %v1579 = vld [vmem:[#allocation2 + $0x6c] sm:$0x1]
        %v1580 = vld [vmem:[#allocation2 + $0x74] sm:$0xf]
        %v1581 = vld [vmem:[#allocation2 + $0x78] sm:$0xf]
        %v1582 = vld [vmem:[#allocation2 + $0x7c] sm:$0x1]
        %v1583 = vld [vmem:[#allocation2 + $0x84] sm:$0xf]
        %v1584 = vld [vmem:[#allocation2 + $0x88] sm:$0xf]
        %v1585 = vld [vmem:[#allocation2 + $0x8c] sm:$0x1]
        %v1586 = vld [vmem:[#allocation2 + $0x94] sm:$0xf]
        %v1587 = vld [vmem:[#allocation2 + $0x98] sm:$0xf]
        %v1588 = vld [vmem:[#allocation2 + $0x9c] sm:$0x1]
        %v1589 = vld [vmem:[#allocation2 + $0xa4] sm:$0xf]
        %v1590 = vld [vmem:[#allocation2 + $0xa8] sm:$0xf]
        %v1591 = vld [vmem:[#allocation2 + $0xac] sm:$0x1]
        %v1592 = vld [vmem:[#allocation2 + $0xb4] sm:$0xf]
        %v1593 = vld [vmem:[#allocation2 + $0xb8] sm:$0xf]
        %v1594 = vld [vmem:[#allocation2 + $0xbc] sm:$0x1]
        %v1595 = vld [vmem:[#allocation2 + $0xc4] sm:$0xf]
        %v1596 = vld [vmem:[#allocation2 + $0xc8] sm:$0xf]
        %v1597 = vld [vmem:[#allocation2 + $0xcc] sm:$0x1]
        %v1598 = vld [vmem:[#allocation2 + $0xd4] sm:$0xf]
        %v1599 = vld [vmem:[#allocation2 + $0xd8] sm:$0xf]
        %v1600 = vld [vmem:[#allocation2 + $0xdc] sm:$0x1]
        %v1601 = vld [vmem:[#allocation2 + $0xe4] sm:$0xf]
        %v1602 = vld [vmem:[#allocation2 + $0xe8] sm:$0xf]
        %v1603 = vld [vmem:[#allocation2 + $0xec] sm:$0x1]
        %v1604 = vld [vmem:[#allocation2 + $0xf4] sm:$0xf]
        %v1605 = vld [vmem:[#allocation2 + $0xf8] sm:$0xf]
        %v1606 = vld [vmem:[#allocation2 + $0xfc] sm:$0x1]
        %vm1607 = vsmask.f32 3328
        %vm1608 = vsmask.f32 7440
        %vm1609 = vmor %vm1607, %vm1608
        %v1611 = vshrl.u32 %v1559, 16
        %v1613 = vrot.slane %v1611, 4
        %v1614 = vshll.u32 %v1559, 16
        %v1616 = vrot.slane %v1614, 5
        %v1617 = vor.u32 %v1613, %v1616
        %v1618 = vrot.slane %v1617, 4
        %v1620 = vshll.u32 %v1560, 16
        %v1622 = vrot.slane %v1620, 5
        %v1623 = vsel %vm1609, %v1618, %v1622
        %v1624 = vshrl.u32 %v1560, 16
        %v1626 = vrot.slane %v1624, 4
        %v1627 = vor.u32 %v1626, %v1622
        %v1628 = vrot.slane %v1627, 4
        %v1630 = vshll.u32 %v1561, 16
        %v1632 = vrot.slane %v1630, 5
        %v1633 = vsel %vm1609, %v1628, %v1632
        %v1635 = vshrl.u32 %v1562, 16
        %v1637 = vrot.slane %v1635, 4
        %v1638 = vshll.u32 %v1562, 16
        %v1640 = vrot.slane %v1638, 5
        %v1641 = vor.u32 %v1637, %v1640
        %v1642 = vrot.slane %v1641, 4
        %v1644 = vshll.u32 %v1563, 16
        %v1646 = vrot.slane %v1644, 5
        %v1647 = vsel %vm1609, %v1642, %v1646
        %v1648 = vshrl.u32 %v1563, 16
        %v1650 = vrot.slane %v1648, 4
        %v1651 = vor.u32 %v1650, %v1646
        %v1652 = vrot.slane %v1651, 4
        %v1654 = vshll.u32 %v1564, 16
        %v1656 = vrot.slane %v1654, 5
        %v1657 = vsel %vm1609, %v1652, %v1656
        %v1659 = vshrl.u32 %v1565, 16
        %v1661 = vrot.slane %v1659, 4
        %v1662 = vshll.u32 %v1565, 16
        %v1664 = vrot.slane %v1662, 5
        %v1665 = vor.u32 %v1661, %v1664
        %v1666 = vrot.slane %v1665, 4
        %v1668 = vshll.u32 %v1566, 16
        %v1670 = vrot.slane %v1668, 5
        %v1671 = vsel %vm1609, %v1666, %v1670
        %v1672 = vshrl.u32 %v1566, 16
        %v1674 = vrot.slane %v1672, 4
        %v1675 = vor.u32 %v1674, %v1670
        %v1676 = vrot.slane %v1675, 4
        %v1678 = vshll.u32 %v1567, 16
        %v1680 = vrot.slane %v1678, 5
        %v1681 = vsel %vm1609, %v1676, %v1680
        %v1683 = vshrl.u32 %v1568, 16
        %v1685 = vrot.slane %v1683, 4
        %v1686 = vshll.u32 %v1568, 16
        %v1688 = vrot.slane %v1686, 5
        %v1689 = vor.u32 %v1685, %v1688
        %v1690 = vrot.slane %v1689, 4
        %v1692 = vshll.u32 %v1569, 16
        %v1694 = vrot.slane %v1692, 5
        %v1695 = vsel %vm1609, %v1690, %v1694
        %v1696 = vshrl.u32 %v1569, 16
        %v1698 = vrot.slane %v1696, 4
        %v1699 = vor.u32 %v1698, %v1694
        %v1700 = vrot.slane %v1699, 4
        %v1702 = vshll.u32 %v1570, 16
        %v1704 = vrot.slane %v1702, 5
        %v1705 = vsel %vm1609, %v1700, %v1704
        %v1707 = vshrl.u32 %v1571, 16
        %v1709 = vrot.slane %v1707, 4
        %v1710 = vshll.u32 %v1571, 16
        %v1712 = vrot.slane %v1710, 5
        %v1713 = vor.u32 %v1709, %v1712
        %v1714 = vrot.slane %v1713, 4
        %v1716 = vshll.u32 %v1572, 16
        %v1718 = vrot.slane %v1716, 5
        %v1719 = vsel %vm1609, %v1714, %v1718
        %v1720 = vshrl.u32 %v1572, 16
        %v1722 = vrot.slane %v1720, 4
        %v1723 = vor.u32 %v1722, %v1718
        %v1724 = vrot.slane %v1723, 4
        %v1726 = vshll.u32 %v1573, 16
        %v1728 = vrot.slane %v1726, 5
        %v1729 = vsel %vm1609, %v1724, %v1728
        %v1731 = vshrl.u32 %v1574, 16
        %v1733 = vrot.slane %v1731, 4
        %v1734 = vshll.u32 %v1574, 16
        %v1736 = vrot.slane %v1734, 5
        %v1737 = vor.u32 %v1733, %v1736
        %v1738 = vrot.slane %v1737, 4
        %v1740 = vshll.u32 %v1575, 16
        %v1742 = vrot.slane %v1740, 5
        %v1743 = vsel %vm1609, %v1738, %v1742
        %v1744 = vshrl.u32 %v1575, 16
        %v1746 = vrot.slane %v1744, 4
        %v1747 = vor.u32 %v1746, %v1742
        %v1748 = vrot.slane %v1747, 4
        %v1750 = vshll.u32 %v1576, 16
        %v1752 = vrot.slane %v1750, 5
        %v1753 = vsel %vm1609, %v1748, %v1752
        %v1755 = vshrl.u32 %v1577, 16
        %v1757 = vrot.slane %v1755, 4
        %v1758 = vshll.u32 %v1577, 16
        %v1760 = vrot.slane %v1758, 5
        %v1761 = vor.u32 %v1757, %v1760
        %v1762 = vrot.slane %v1761, 4
        %v1764 = vshll.u32 %v1578, 16
        %v1766 = vrot.slane %v1764, 5
        %v1767 = vsel %vm1609, %v1762, %v1766
        %v1768 = vshrl.u32 %v1578, 16
        %v1770 = vrot.slane %v1768, 4
        %v1771 = vor.u32 %v1770, %v1766
        %v1772 = vrot.slane %v1771, 4
        %v1774 = vshll.u32 %v1579, 16
        %v1776 = vrot.slane %v1774, 5
        %v1777 = vsel %vm1609, %v1772, %v1776
        %v1779 = vshrl.u32 %v1580, 16
        %v1781 = vrot.slane %v1779, 4
        %v1782 = vshll.u32 %v1580, 16
        %v1784 = vrot.slane %v1782, 5
        %v1785 = vor.u32 %v1781, %v1784
        %v1786 = vrot.slane %v1785, 4
        %v1788 = vshll.u32 %v1581, 16
        %v1790 = vrot.slane %v1788, 5
        %v1791 = vsel %vm1609, %v1786, %v1790
        %v1792 = vshrl.u32 %v1581, 16
        %v1794 = vrot.slane %v1792, 4
        %v1795 = vor.u32 %v1794, %v1790
        %v1796 = vrot.slane %v1795, 4
        %v1798 = vshll.u32 %v1582, 16
        %v1800 = vrot.slane %v1798, 5
        %v1801 = vsel %vm1609, %v1796, %v1800
        %v1803 = vshrl.u32 %v1583, 16
        %v1805 = vrot.slane %v1803, 4
        %v1806 = vshll.u32 %v1583, 16
        %v1808 = vrot.slane %v1806, 5
        %v1809 = vor.u32 %v1805, %v1808
        %v1810 = vrot.slane %v1809, 4
        %v1812 = vshll.u32 %v1584, 16
        %v1814 = vrot.slane %v1812, 5
        %v1815 = vsel %vm1609, %v1810, %v1814
        %v1816 = vshrl.u32 %v1584, 16
        %v1818 = vrot.slane %v1816, 4
        %v1819 = vor.u32 %v1818, %v1814
        %v1820 = vrot.slane %v1819, 4
        %v1822 = vshll.u32 %v1585, 16
        %v1824 = vrot.slane %v1822, 5
        %v1825 = vsel %vm1609, %v1820, %v1824
        %v1827 = vshrl.u32 %v1586, 16
        %v1829 = vrot.slane %v1827, 4
        %v1830 = vshll.u32 %v1586, 16
        %v1832 = vrot.slane %v1830, 5
        %v1833 = vor.u32 %v1829, %v1832
        %v1834 = vrot.slane %v1833, 4
        %v1836 = vshll.u32 %v1587, 16
        %v1838 = vrot.slane %v1836, 5
        %v1839 = vsel %vm1609, %v1834, %v1838
        %v1840 = vshrl.u32 %v1587, 16
        %v1842 = vrot.slane %v1840, 4
        %v1843 = vor.u32 %v1842, %v1838
        %v1844 = vrot.slane %v1843, 4
        %v1846 = vshll.u32 %v1588, 16
        %v1848 = vrot.slane %v1846, 5
        %v1849 = vsel %vm1609, %v1844, %v1848
        %v1851 = vshrl.u32 %v1589, 16
        %v1853 = vrot.slane %v1851, 4
        %v1854 = vshll.u32 %v1589, 16
        %v1856 = vrot.slane %v1854, 5
        %v1857 = vor.u32 %v1853, %v1856
        %v1858 = vrot.slane %v1857, 4
        %v1860 = vshll.u32 %v1590, 16
        %v1862 = vrot.slane %v1860, 5
        %v1863 = vsel %vm1609, %v1858, %v1862
        %v1864 = vshrl.u32 %v1590, 16
        %v1866 = vrot.slane %v1864, 4
        %v1867 = vor.u32 %v1866, %v1862
        %v1868 = vrot.slane %v1867, 4
        %v1870 = vshll.u32 %v1591, 16
        %v1872 = vrot.slane %v1870, 5
        %v1873 = vsel %vm1609, %v1868, %v1872
        %v1875 = vshrl.u32 %v1592, 16
        %v1877 = vrot.slane %v1875, 4
        %v1878 = vshll.u32 %v1592, 16
        %v1880 = vrot.slane %v1878, 5
        %v1881 = vor.u32 %v1877, %v1880
        %v1882 = vrot.slane %v1881, 4
        %v1884 = vshll.u32 %v1593, 16
        %v1886 = vrot.slane %v1884, 5
        %v1887 = vsel %vm1609, %v1882, %v1886
        %v1888 = vshrl.u32 %v1593, 16
        %v1890 = vrot.slane %v1888, 4
        %v1891 = vor.u32 %v1890, %v1886
        %v1892 = vrot.slane %v1891, 4
        %v1894 = vshll.u32 %v1594, 16
        %v1896 = vrot.slane %v1894, 5
        %v1897 = vsel %vm1609, %v1892, %v1896
        %v1899 = vshrl.u32 %v1595, 16
        %v1901 = vrot.slane %v1899, 4
        %v1902 = vshll.u32 %v1595, 16
        %v1904 = vrot.slane %v1902, 5
        %v1905 = vor.u32 %v1901, %v1904
        %v1906 = vrot.slane %v1905, 4
        %v1908 = vshll.u32 %v1596, 16
        %v1910 = vrot.slane %v1908, 5
        %v1911 = vsel %vm1609, %v1906, %v1910
        %v1912 = vshrl.u32 %v1596, 16
        %v1914 = vrot.slane %v1912, 4
        %v1915 = vor.u32 %v1914, %v1910
        %v1916 = vrot.slane %v1915, 4
        %v1918 = vshll.u32 %v1597, 16
        %v1920 = vrot.slane %v1918, 5
        %v1921 = vsel %vm1609, %v1916, %v1920
        %v1923 = vshrl.u32 %v1598, 16
        %v1925 = vrot.slane %v1923, 4
        %v1926 = vshll.u32 %v1598, 16
        %v1928 = vrot.slane %v1926, 5
        %v1929 = vor.u32 %v1925, %v1928
        %v1930 = vrot.slane %v1929, 4
        %v1932 = vshll.u32 %v1599, 16
        %v1934 = vrot.slane %v1932, 5
        %v1935 = vsel %vm1609, %v1930, %v1934
        %v1936 = vshrl.u32 %v1599, 16
        %v1938 = vrot.slane %v1936, 4
        %v1939 = vor.u32 %v1938, %v1934
        %v1940 = vrot.slane %v1939, 4
        %v1942 = vshll.u32 %v1600, 16
        %v1944 = vrot.slane %v1942, 5
        %v1945 = vsel %vm1609, %v1940, %v1944
        %v1947 = vshrl.u32 %v1601, 16
        %v1949 = vrot.slane %v1947, 4
        %v1950 = vshll.u32 %v1601, 16
        %v1952 = vrot.slane %v1950, 5
        %v1953 = vor.u32 %v1949, %v1952
        %v1954 = vrot.slane %v1953, 4
        %v1956 = vshll.u32 %v1602, 16
        %v1958 = vrot.slane %v1956, 5
        %v1959 = vsel %vm1609, %v1954, %v1958
        %v1960 = vshrl.u32 %v1602, 16
        %v1962 = vrot.slane %v1960, 4
        %v1963 = vor.u32 %v1962, %v1958
        %v1964 = vrot.slane %v1963, 4
        %v1966 = vshll.u32 %v1603, 16
        %v1968 = vrot.slane %v1966, 5
        %v1969 = vsel %vm1609, %v1964, %v1968
        %v1971 = vshrl.u32 %v1604, 16
        %v1973 = vrot.slane %v1971, 4
        %v1974 = vshll.u32 %v1604, 16
        %v1976 = vrot.slane %v1974, 5
        %v1977 = vor.u32 %v1973, %v1976
        %v1978 = vrot.slane %v1977, 4
        %v1980 = vshll.u32 %v1605, 16
        %v1982 = vrot.slane %v1980, 5
        %v1983 = vsel %vm1609, %v1978, %v1982
        %v1984 = vshrl.u32 %v1605, 16
        %v1986 = vrot.slane %v1984, 4
        %v1987 = vor.u32 %v1986, %v1982
        %v1988 = vrot.slane %v1987, 4
        %v1990 = vshll.u32 %v1606, 16
        %v1992 = vrot.slane %v1990, 5
        %v1993 = vsel %vm1609, %v1988, %v1992
        %s1994 = scalar_lea.vmem [#allocation7], 16
        %v1995 = vld [vmem:[%s1994] sm:$0xf]
        %v1996 = vld [vmem:[%s1994 + $0x4] sm:$0xf]
        %v1997 = vunpack.c.l.b16 %v1623
        %v1998 = vunpack.c.l.b16 %v1633
        %v1999 = vunpack.c.l.b16 %v1647
        %v2000 = vunpack.c.l.b16 %v1657
        %v2001 = vunpack.c.l.b16 %v1671
        %v2002 = vunpack.c.l.b16 %v1681
        %v2003 = vunpack.c.l.b16 %v1695
        %v2004 = vunpack.c.l.b16 %v1705
        %v2005 = vunpack.c.l.b16 %v1719
        %v2006 = vunpack.c.l.b16 %v1729
        %v2007 = vunpack.c.l.b16 %v1743
        %v2008 = vunpack.c.l.b16 %v1753
        %v2009 = vunpack.c.l.b16 %v1767
        %v2010 = vunpack.c.l.b16 %v1777
        %v2011 = vunpack.c.l.b16 %v1791
        %v2012 = vunpack.c.l.b16 %v1801
        %v2013 = vunpack.c.l.b16 %v1815
        %v2014 = vunpack.c.l.b16 %v1825
        %v2015 = vunpack.c.l.b16 %v1839
        %v2016 = vunpack.c.l.b16 %v1849
        %v2017 = vunpack.c.l.b16 %v1863
        %v2018 = vunpack.c.l.b16 %v1873
        %v2019 = vunpack.c.l.b16 %v1887
        %v2020 = vunpack.c.l.b16 %v1897
        %v2021 = vunpack.c.l.b16 %v1911
        %v2022 = vunpack.c.l.b16 %v1921
        %v2023 = vunpack.c.l.b16 %v1935
        %v2024 = vunpack.c.l.b16 %v1945
        %v2025 = vunpack.c.l.b16 %v1959
        %v2026 = vunpack.c.l.b16 %v1969
        %v2027 = vunpack.c.l.b16 %v1983
        %v2028 = vunpack.c.l.b16 %v1993
        %v2029 = vpack.c.b16 %v1998, %v1997
        %v2030 = vpack.c.b16 %v2000, %v1999
        %v2031 = vpack.c.b16 %v2002, %v2001
        %v2032 = vpack.c.b16 %v2004, %v2003
        %v2033 = vpack.c.b16 %v2006, %v2005
        %v2034 = vpack.c.b16 %v2008, %v2007
        %v2035 = vpack.c.b16 %v2010, %v2009
        %v2036 = vpack.c.b16 %v2012, %v2011
        %v2037 = vpack.c.b16 %v2014, %v2013
        %v2038 = vpack.c.b16 %v2016, %v2015
        %v2039 = vpack.c.b16 %v2018, %v2017
        %v2040 = vpack.c.b16 %v2020, %v2019
        %v2041 = vpack.c.b16 %v2022, %v2021
        %v2042 = vpack.c.b16 %v2024, %v2023
        %v2043 = vpack.c.b16 %v2026, %v2025
        %v2044 = vpack.c.b16 %v2028, %v2027
        %v2047 = vunpack.c.l.b16 %v1995
        %v2048 = vunpack.c.l.b16 %v1996
        %v2049 = vpack.c.b16 %v2048, %v2047
        %v2052 = vsel %vm1086, %v2029, 0
        %v2055 = vsel %vm1086, %v2030, 0
        %v2058 = vsel %vm1086, %v2031, 0
        %v2061 = vsel %vm1086, %v2032, 0
        %v2064 = vsel %vm1086, %v2033, 0
        %v2067 = vsel %vm1086, %v2034, 0
        %v2070 = vsel %vm1086, %v2035, 0
        %v2073 = vsel %vm1086, %v2036, 0
        %v2076 = vsel %vm1086, %v2037, 0
        %v2079 = vsel %vm1086, %v2038, 0
        %v2082 = vsel %vm1086, %v2039, 0
        %v2085 = vsel %vm1086, %v2040, 0
        %v2088 = vsel %vm1086, %v2041, 0
        %v2091 = vsel %vm1086, %v2042, 0
        %v2094 = vsel %vm1086, %v2043, 0
        %v2097 = vsel %vm1086, %v2044, 0
        %2099 = vmatprep.subr.bf16.mxu0 0
        %2100 = vmatpush1.bf16.msra.mxu0 0
        %2101 = vmatprep.subr.bf16.mxu0 0
        %2102 = vmatpush1.bf16.msra.mxu0 0
        %2103 = vmatprep.subr.bf16.mxu0 0
        %2104 = vmatpush1.bf16.msra.mxu0 0
        %2105 = vmatprep.subr.bf16.mxu0 0
        %2106 = vmatpush1.bf16.msra.mxu0 0
        %2107 = vmatprep.subr.bf16.mxu0 0
        %2108 = vmatpush1.bf16.msra.mxu0 0
        %2109 = vmatprep.subr.bf16.mxu0 0
        %2110 = vmatpush1.bf16.msra.mxu0 0
        %2111 = vmatprep.subr.bf16.mxu0 0
        %2112 = vmatpush1.bf16.msra.mxu0 0
        %2113 = vmatprep.subr.bf16.mxu0 0
        %2114 = vmatpush1.bf16.msra.mxu0 %v2049
        %2115 = vmatprep.subr.bf16.mxu0 0
        %2116 = vmatpush2.bf16.msra.mxu0 0
        %2117 = vmatprep.subr.bf16.mxu0 0
        %2118 = vmatpush2.bf16.msra.mxu0 0
        %2119 = vmatprep.subr.bf16.mxu0 0
        %2120 = vmatpush2.bf16.msra.mxu0 0
        %2121 = vmatprep.subr.bf16.mxu0 0
        %2122 = vmatpush2.bf16.msra.mxu0 0
        %2123 = vmatprep.subr.bf16.mxu0 0
        %2124 = vmatpush2.bf16.msra.mxu0 0
        %2125 = vmatprep.subr.bf16.mxu0 0
        %2126 = vmatpush2.bf16.msra.mxu0 0
        %2127 = vmatprep.subr.bf16.mxu0 0
        %2128 = vmatpush2.bf16.msra.mxu0 0
        %2129 = vmatprep.subr.bf16.mxu0 0
        %2130 = vmatpush2.bf16.msra.mxu0 0
        %2131 = vmatprep.mubr.bf16.mxu0 0
        %2132 = vmatmul.mubr.bf16.gmra.mxu0 %v2052
        %v2133 = vpop.f32.mrf.mxu0
        %v2134 = vadd.f32 0.0, %v2133
        %v2135 = vpop.f32.mrf.mxu0
        %v2136 = vpop.f32.mrf.mxu0
        %v2137 = vadd.f32 0.0, %v2136
        %v2138 = vpop.f32.mrf.mxu0
        %2139 = vmatprep.mubr.bf16.mxu0 0
        %2140 = vmatmul.mubr.bf16.gmra.mxu0 %v2055
        %v2141 = vpop.f32.mrf.mxu0
        %v2142 = vadd.f32 0.0, %v2141
        %v2143 = vpop.f32.mrf.mxu0
        %v2144 = vpop.f32.mrf.mxu0
        %v2145 = vadd.f32 0.0, %v2144
        %v2146 = vpop.f32.mrf.mxu0
        %2147 = vmatprep.mubr.bf16.mxu0 0
        %2148 = vmatmul.mubr.bf16.gmra.mxu0 %v2058
        %v2149 = vpop.f32.mrf.mxu0
        %v2150 = vadd.f32 0.0, %v2149
        %v2151 = vpop.f32.mrf.mxu0
        %v2152 = vpop.f32.mrf.mxu0
        %v2153 = vadd.f32 0.0, %v2152
        %v2154 = vpop.f32.mrf.mxu0
        %2155 = vmatprep.mubr.bf16.mxu0 0
        %2156 = vmatmul.mubr.bf16.gmra.mxu0 %v2061
        %v2157 = vpop.f32.mrf.mxu0
        %v2158 = vadd.f32 0.0, %v2157
        %v2159 = vpop.f32.mrf.mxu0
        %v2160 = vpop.f32.mrf.mxu0
        %v2161 = vadd.f32 0.0, %v2160
        %v2162 = vpop.f32.mrf.mxu0
        %2163 = vmatprep.mubr.bf16.mxu0 0
        %2164 = vmatmul.mubr.bf16.gmra.mxu0 %v2064
        %v2165 = vpop.f32.mrf.mxu0
        %v2166 = vadd.f32 0.0, %v2165
        %v2167 = vpop.f32.mrf.mxu0
        %v2168 = vpop.f32.mrf.mxu0
        %v2169 = vadd.f32 0.0, %v2168
        %v2170 = vpop.f32.mrf.mxu0
        %2171 = vmatprep.mubr.bf16.mxu0 0
        %2172 = vmatmul.mubr.bf16.gmra.mxu0 %v2067
        %v2173 = vpop.f32.mrf.mxu0
        %v2174 = vadd.f32 0.0, %v2173
        %v2175 = vpop.f32.mrf.mxu0
        %v2176 = vpop.f32.mrf.mxu0
        %v2177 = vadd.f32 0.0, %v2176
        %v2178 = vpop.f32.mrf.mxu0
        %2179 = vmatprep.mubr.bf16.mxu0 0
        %2180 = vmatmul.mubr.bf16.gmra.mxu0 %v2070
        %v2181 = vpop.f32.mrf.mxu0
        %v2182 = vadd.f32 0.0, %v2181
        %v2183 = vpop.f32.mrf.mxu0
        %v2184 = vpop.f32.mrf.mxu0
        %v2185 = vadd.f32 0.0, %v2184
        %v2186 = vpop.f32.mrf.mxu0
        %2187 = vmatprep.mubr.bf16.mxu0 0
        %2188 = vmatmul.mubr.bf16.gmra.mxu0 %v2073
        %v2189 = vpop.f32.mrf.mxu0
        %v2190 = vadd.f32 0.0, %v2189
        %v2191 = vpop.f32.mrf.mxu0
        %v2192 = vpop.f32.mrf.mxu0
        %v2193 = vadd.f32 0.0, %v2192
        %v2194 = vpop.f32.mrf.mxu0
        %2195 = vmatprep.mubr.bf16.mxu0 0
        %2196 = vmatmul.mubr.bf16.gmra.mxu0 %v2076
        %v2197 = vpop.f32.mrf.mxu0
        %v2198 = vadd.f32 0.0, %v2197
        %v2199 = vpop.f32.mrf.mxu0
        %v2200 = vpop.f32.mrf.mxu0
        %v2201 = vadd.f32 0.0, %v2200
        %v2202 = vpop.f32.mrf.mxu0
        %2203 = vmatprep.mubr.bf16.mxu0 0
        %2204 = vmatmul.mubr.bf16.gmra.mxu0 %v2079
        %v2205 = vpop.f32.mrf.mxu0
        %v2206 = vadd.f32 0.0, %v2205
        %v2207 = vpop.f32.mrf.mxu0
        %v2208 = vpop.f32.mrf.mxu0
        %v2209 = vadd.f32 0.0, %v2208
        %v2210 = vpop.f32.mrf.mxu0
        %2211 = vmatprep.mubr.bf16.mxu0 0
        %2212 = vmatmul.mubr.bf16.gmra.mxu0 %v2082
        %v2213 = vpop.f32.mrf.mxu0
        %v2214 = vadd.f32 0.0, %v2213
        %v2215 = vpop.f32.mrf.mxu0
        %v2216 = vpop.f32.mrf.mxu0
        %v2217 = vadd.f32 0.0, %v2216
        %v2218 = vpop.f32.mrf.mxu0
        %2219 = vmatprep.mubr.bf16.mxu0 0
        %2220 = vmatmul.mubr.bf16.gmra.mxu0 %v2085
        %v2221 = vpop.f32.mrf.mxu0
        %v2222 = vadd.f32 0.0, %v2221
        %v2223 = vpop.f32.mrf.mxu0
        %v2224 = vpop.f32.mrf.mxu0
        %v2225 = vadd.f32 0.0, %v2224
        %v2226 = vpop.f32.mrf.mxu0
        %2227 = vmatprep.mubr.bf16.mxu0 0
        %2228 = vmatmul.mubr.bf16.gmra.mxu0 %v2088
        %v2229 = vpop.f32.mrf.mxu0
        %v2230 = vadd.f32 0.0, %v2229
        %v2231 = vpop.f32.mrf.mxu0
        %v2232 = vpop.f32.mrf.mxu0
        %v2233 = vadd.f32 0.0, %v2232
        %v2234 = vpop.f32.mrf.mxu0
        %2235 = vmatprep.mubr.bf16.mxu0 0
        %2236 = vmatmul.mubr.bf16.gmra.mxu0 %v2091
        %v2237 = vpop.f32.mrf.mxu0
        %v2238 = vadd.f32 0.0, %v2237
        %v2239 = vpop.f32.mrf.mxu0
        %v2240 = vpop.f32.mrf.mxu0
        %v2241 = vadd.f32 0.0, %v2240
        %v2242 = vpop.f32.mrf.mxu0
        %2243 = vmatprep.mubr.bf16.mxu0 0
        %2244 = vmatmul.mubr.bf16.gmra.mxu0 %v2094
        %v2245 = vpop.f32.mrf.mxu0
        %v2246 = vadd.f32 0.0, %v2245
        %v2247 = vpop.f32.mrf.mxu0
        %v2248 = vpop.f32.mrf.mxu0
        %v2249 = vadd.f32 0.0, %v2248
        %v2250 = vpop.f32.mrf.mxu0
        %2251 = vmatprep.mubr.bf16.mxu0 0
        %2252 = vmatmul.mubr.bf16.gmra.mxu0 %v2097
        %v2253 = vpop.f32.mrf.mxu0
        %v2254 = vadd.f32 0.0, %v2253
        %v2255 = vpop.f32.mrf.mxu0
        %v2256 = vpop.f32.mrf.mxu0
        %v2257 = vadd.f32 0.0, %v2256
        %v2258 = vpop.f32.mrf.mxu0
        %2259 = vdwg.mxu0
        %v2260 = vadd.f32 %v1433, %v2134
        %v2261 = vadd.f32 %v1436, %v2137
        %v2262 = vadd.f32 %v1441, %v2142
        %v2263 = vadd.f32 %v1444, %v2145
        %v2264 = vadd.f32 %v1449, %v2150
        %v2265 = vadd.f32 %v1452, %v2153
        %v2266 = vadd.f32 %v1457, %v2158
        %v2267 = vadd.f32 %v1460, %v2161
        %v2268 = vadd.f32 %v1465, %v2166
        %v2269 = vadd.f32 %v1468, %v2169
        %v2270 = vadd.f32 %v1473, %v2174
        %v2271 = vadd.f32 %v1476, %v2177
        %v2272 = vadd.f32 %v1481, %v2182
        %v2273 = vadd.f32 %v1484, %v2185
        %v2274 = vadd.f32 %v1489, %v2190
        %v2275 = vadd.f32 %v1492, %v2193
        %v2276 = vadd.f32 %v1497, %v2198
        %v2277 = vadd.f32 %v1500, %v2201
        %v2278 = vadd.f32 %v1505, %v2206
        %v2279 = vadd.f32 %v1508, %v2209
        %v2280 = vadd.f32 %v1513, %v2214
        %v2281 = vadd.f32 %v1516, %v2217
        %v2282 = vadd.f32 %v1521, %v2222
        %v2283 = vadd.f32 %v1524, %v2225
        %v2284 = vadd.f32 %v1529, %v2230
        %v2285 = vadd.f32 %v1532, %v2233
        %v2286 = vadd.f32 %v1537, %v2238
        %v2287 = vadd.f32 %v1540, %v2241
        %v2288 = vadd.f32 %v1545, %v2246
        %v2289 = vadd.f32 %v1548, %v2249
        %v2290 = vadd.f32 %v1553, %v2254
        %v2291 = vadd.f32 %v1556, %v2257
        %v2292 = vld [vmem:[%s440] sm:$0x8]
        %v2293 = vld [vmem:[%s440 + $0x4] sm:$0xf]
        %v2294 = vld [vmem:[%s440 + $0x8] sm:$0xf]
        %v2295 = vld [vmem:[%s440 + $0x10] sm:$0x8]
        %v2296 = vld [vmem:[%s440 + $0x14] sm:$0xf]
        %v2297 = vld [vmem:[%s440 + $0x18] sm:$0xf]
        %v2298 = vld [vmem:[%s440 + $0x20] sm:$0x8]
        %v2299 = vld [vmem:[%s440 + $0x24] sm:$0xf]
        %v2300 = vld [vmem:[%s440 + $0x28] sm:$0xf]
        %v2301 = vld [vmem:[%s440 + $0x30] sm:$0x8]
        %v2302 = vld [vmem:[%s440 + $0x34] sm:$0xf]
        %v2303 = vld [vmem:[%s440 + $0x38] sm:$0xf]
        %v2304 = vld [vmem:[%s440 + $0x40] sm:$0x8]
        %v2305 = vld [vmem:[%s440 + $0x44] sm:$0xf]
        %v2306 = vld [vmem:[%s440 + $0x48] sm:$0xf]
        %v2307 = vld [vmem:[%s440 + $0x50] sm:$0x8]
        %v2308 = vld [vmem:[%s440 + $0x54] sm:$0xf]
        %v2309 = vld [vmem:[%s440 + $0x58] sm:$0xf]
        %v2310 = vld [vmem:[%s440 + $0x60] sm:$0x8]
        %v2311 = vld [vmem:[%s440 + $0x64] sm:$0xf]
        %v2312 = vld [vmem:[%s440 + $0x68] sm:$0xf]
        %v2313 = vld [vmem:[%s440 + $0x70] sm:$0x8]
        %v2314 = vld [vmem:[%s440 + $0x74] sm:$0xf]
        %v2315 = vld [vmem:[%s440 + $0x78] sm:$0xf]
        %v2316 = vld [vmem:[%s440 + $0x80] sm:$0x8]
        %v2317 = vld [vmem:[%s440 + $0x84] sm:$0xf]
        %v2318 = vld [vmem:[%s440 + $0x88] sm:$0xf]
        %v2319 = vld [vmem:[%s440 + $0x90] sm:$0x8]
        %v2320 = vld [vmem:[%s440 + $0x94] sm:$0xf]
        %v2321 = vld [vmem:[%s440 + $0x98] sm:$0xf]
        %v2322 = vld [vmem:[%s440 + $0xa0] sm:$0x8]
        %v2323 = vld [vmem:[%s440 + $0xa4] sm:$0xf]
        %v2324 = vld [vmem:[%s440 + $0xa8] sm:$0xf]
        %v2325 = vld [vmem:[%s440 + $0xb0] sm:$0x8]
        %v2326 = vld [vmem:[%s440 + $0xb4] sm:$0xf]
        %v2327 = vld [vmem:[%s440 + $0xb8] sm:$0xf]
        %v2328 = vld [vmem:[%s440 + $0xc0] sm:$0x8]
        %v2329 = vld [vmem:[%s440 + $0xc4] sm:$0xf]
        %v2330 = vld [vmem:[%s440 + $0xc8] sm:$0xf]
        %v2331 = vld [vmem:[%s440 + $0xd0] sm:$0x8]
        %v2332 = vld [vmem:[%s440 + $0xd4] sm:$0xf]
        %v2333 = vld [vmem:[%s440 + $0xd8] sm:$0xf]
        %v2334 = vld [vmem:[%s440 + $0xe0] sm:$0x8]
        %v2335 = vld [vmem:[%s440 + $0xe4] sm:$0xf]
        %v2336 = vld [vmem:[%s440 + $0xe8] sm:$0xf]
        %v2337 = vld [vmem:[%s440 + $0xf0] sm:$0x8]
        %v2338 = vld [vmem:[%s440 + $0xf4] sm:$0xf]
        %v2339 = vld [vmem:[%s440 + $0xf8] sm:$0xf]
        %v2341 = vshrl.u32 %v2292, 16
        %v2343 = vrot.slane %v2341, 7
        %v2344 = vrot.slane %v2343, 4
        %v2346 = vshrl.u32 %v2293, 16
        %v2348 = vrot.slane %v2346, 7
        %v2349 = vshll.u32 %v2293, 16
        %v2351 = vor.u32 %v2348, %v2349
        %v2352 = vsel %vm642, %v2344, %v2351
        %v2353 = vrot.slane %v2348, 4
        %v2355 = vshrl.u32 %v2294, 16
        %v2357 = vrot.slane %v2355, 7
        %v2358 = vshll.u32 %v2294, 16
        %v2360 = vor.u32 %v2357, %v2358
        %v2361 = vsel %vm642, %v2353, %v2360
        %v2363 = vshrl.u32 %v2295, 16
        %v2365 = vrot.slane %v2363, 7
        %v2366 = vrot.slane %v2365, 4
        %v2368 = vshrl.u32 %v2296, 16
        %v2370 = vrot.slane %v2368, 7
        %v2371 = vshll.u32 %v2296, 16
        %v2373 = vor.u32 %v2370, %v2371
        %v2374 = vsel %vm642, %v2366, %v2373
        %v2375 = vrot.slane %v2370, 4
        %v2377 = vshrl.u32 %v2297, 16
        %v2379 = vrot.slane %v2377, 7
        %v2380 = vshll.u32 %v2297, 16
        %v2382 = vor.u32 %v2379, %v2380
        %v2383 = vsel %vm642, %v2375, %v2382
        %v2385 = vshrl.u32 %v2298, 16
        %v2387 = vrot.slane %v2385, 7
        %v2388 = vrot.slane %v2387, 4
        %v2390 = vshrl.u32 %v2299, 16
        %v2392 = vrot.slane %v2390, 7
        %v2393 = vshll.u32 %v2299, 16
        %v2395 = vor.u32 %v2392, %v2393
        %v2396 = vsel %vm642, %v2388, %v2395
        %v2397 = vrot.slane %v2392, 4
        %v2399 = vshrl.u32 %v2300, 16
        %v2401 = vrot.slane %v2399, 7
        %v2402 = vshll.u32 %v2300, 16
        %v2404 = vor.u32 %v2401, %v2402
        %v2405 = vsel %vm642, %v2397, %v2404
        %v2407 = vshrl.u32 %v2301, 16
        %v2409 = vrot.slane %v2407, 7
        %v2410 = vrot.slane %v2409, 4
        %v2412 = vshrl.u32 %v2302, 16
        %v2414 = vrot.slane %v2412, 7
        %v2415 = vshll.u32 %v2302, 16
        %v2417 = vor.u32 %v2414, %v2415
        %v2418 = vsel %vm642, %v2410, %v2417
        %v2419 = vrot.slane %v2414, 4
        %v2421 = vshrl.u32 %v2303, 16
        %v2423 = vrot.slane %v2421, 7
        %v2424 = vshll.u32 %v2303, 16
        %v2426 = vor.u32 %v2423, %v2424
        %v2427 = vsel %vm642, %v2419, %v2426
        %v2429 = vshrl.u32 %v2304, 16
        %v2431 = vrot.slane %v2429, 7
        %v2432 = vrot.slane %v2431, 4
        %v2434 = vshrl.u32 %v2305, 16
        %v2436 = vrot.slane %v2434, 7
        %v2437 = vshll.u32 %v2305, 16
        %v2439 = vor.u32 %v2436, %v2437
        %v2440 = vsel %vm642, %v2432, %v2439
        %v2441 = vrot.slane %v2436, 4
        %v2443 = vshrl.u32 %v2306, 16
        %v2445 = vrot.slane %v2443, 7
        %v2446 = vshll.u32 %v2306, 16
        %v2448 = vor.u32 %v2445, %v2446
        %v2449 = vsel %vm642, %v2441, %v2448
        %v2451 = vshrl.u32 %v2307, 16
        %v2453 = vrot.slane %v2451, 7
        %v2454 = vrot.slane %v2453, 4
        %v2456 = vshrl.u32 %v2308, 16
        %v2458 = vrot.slane %v2456, 7
        %v2459 = vshll.u32 %v2308, 16
        %v2461 = vor.u32 %v2458, %v2459
        %v2462 = vsel %vm642, %v2454, %v2461
        %v2463 = vrot.slane %v2458, 4
        %v2465 = vshrl.u32 %v2309, 16
        %v2467 = vrot.slane %v2465, 7
        %v2468 = vshll.u32 %v2309, 16
        %v2470 = vor.u32 %v2467, %v2468
        %v2471 = vsel %vm642, %v2463, %v2470
        %v2473 = vshrl.u32 %v2310, 16
        %v2475 = vrot.slane %v2473, 7
        %v2476 = vrot.slane %v2475, 4
        %v2478 = vshrl.u32 %v2311, 16
        %v2480 = vrot.slane %v2478, 7
        %v2481 = vshll.u32 %v2311, 16
        %v2483 = vor.u32 %v2480, %v2481
        %v2484 = vsel %vm642, %v2476, %v2483
        %v2485 = vrot.slane %v2480, 4
        %v2487 = vshrl.u32 %v2312, 16
        %v2489 = vrot.slane %v2487, 7
        %v2490 = vshll.u32 %v2312, 16
        %v2492 = vor.u32 %v2489, %v2490
        %v2493 = vsel %vm642, %v2485, %v2492
        %v2495 = vshrl.u32 %v2313, 16
        %v2497 = vrot.slane %v2495, 7
        %v2498 = vrot.slane %v2497, 4
        %v2500 = vshrl.u32 %v2314, 16
        %v2502 = vrot.slane %v2500, 7
        %v2503 = vshll.u32 %v2314, 16
        %v2505 = vor.u32 %v2502, %v2503
        %v2506 = vsel %vm642, %v2498, %v2505
        %v2507 = vrot.slane %v2502, 4
        %v2509 = vshrl.u32 %v2315, 16
        %v2511 = vrot.slane %v2509, 7
        %v2512 = vshll.u32 %v2315, 16
        %v2514 = vor.u32 %v2511, %v2512
        %v2515 = vsel %vm642, %v2507, %v2514
        %v2517 = vshrl.u32 %v2316, 16
        %v2519 = vrot.slane %v2517, 7
        %v2520 = vrot.slane %v2519, 4
        %v2522 = vshrl.u32 %v2317, 16
        %v2524 = vrot.slane %v2522, 7
        %v2525 = vshll.u32 %v2317, 16
        %v2527 = vor.u32 %v2524, %v2525
        %v2528 = vsel %vm642, %v2520, %v2527
        %v2529 = vrot.slane %v2524, 4
        %v2531 = vshrl.u32 %v2318, 16
        %v2533 = vrot.slane %v2531, 7
        %v2534 = vshll.u32 %v2318, 16
        %v2536 = vor.u32 %v2533, %v2534
        %v2537 = vsel %vm642, %v2529, %v2536
        %v2539 = vshrl.u32 %v2319, 16
        %v2541 = vrot.slane %v2539, 7
        %v2542 = vrot.slane %v2541, 4
        %v2544 = vshrl.u32 %v2320, 16
        %v2546 = vrot.slane %v2544, 7
        %v2547 = vshll.u32 %v2320, 16
        %v2549 = vor.u32 %v2546, %v2547
        %v2550 = vsel %vm642, %v2542, %v2549
        %v2551 = vrot.slane %v2546, 4
        %v2553 = vshrl.u32 %v2321, 16
        %v2555 = vrot.slane %v2553, 7
        %v2556 = vshll.u32 %v2321, 16
        %v2558 = vor.u32 %v2555, %v2556
        %v2559 = vsel %vm642, %v2551, %v2558
        %v2561 = vshrl.u32 %v2322, 16
        %v2563 = vrot.slane %v2561, 7
        %v2564 = vrot.slane %v2563, 4
        %v2566 = vshrl.u32 %v2323, 16
        %v2568 = vrot.slane %v2566, 7
        %v2569 = vshll.u32 %v2323, 16
        %v2571 = vor.u32 %v2568, %v2569
        %v2572 = vsel %vm642, %v2564, %v2571
        %v2573 = vrot.slane %v2568, 4
        %v2575 = vshrl.u32 %v2324, 16
        %v2577 = vrot.slane %v2575, 7
        %v2578 = vshll.u32 %v2324, 16
        %v2580 = vor.u32 %v2577, %v2578
        %v2581 = vsel %vm642, %v2573, %v2580
        %v2583 = vshrl.u32 %v2325, 16
        %v2585 = vrot.slane %v2583, 7
        %v2586 = vrot.slane %v2585, 4
        %v2588 = vshrl.u32 %v2326, 16
        %v2590 = vrot.slane %v2588, 7
        %v2591 = vshll.u32 %v2326, 16
        %v2593 = vor.u32 %v2590, %v2591
        %v2594 = vsel %vm642, %v2586, %v2593
        %v2595 = vrot.slane %v2590, 4
        %v2597 = vshrl.u32 %v2327, 16
        %v2599 = vrot.slane %v2597, 7
        %v2600 = vshll.u32 %v2327, 16
        %v2602 = vor.u32 %v2599, %v2600
        %v2603 = vsel %vm642, %v2595, %v2602
        %v2605 = vshrl.u32 %v2328, 16
        %v2607 = vrot.slane %v2605, 7
        %v2608 = vrot.slane %v2607, 4
        %v2610 = vshrl.u32 %v2329, 16
        %v2612 = vrot.slane %v2610, 7
        %v2613 = vshll.u32 %v2329, 16
        %v2615 = vor.u32 %v2612, %v2613
        %v2616 = vsel %vm642, %v2608, %v2615
        %v2617 = vrot.slane %v2612, 4
        %v2619 = vshrl.u32 %v2330, 16
        %v2621 = vrot.slane %v2619, 7
        %v2622 = vshll.u32 %v2330, 16
        %v2624 = vor.u32 %v2621, %v2622
        %v2625 = vsel %vm642, %v2617, %v2624
        %v2627 = vshrl.u32 %v2331, 16
        %v2629 = vrot.slane %v2627, 7
        %v2630 = vrot.slane %v2629, 4
        %v2632 = vshrl.u32 %v2332, 16
        %v2634 = vrot.slane %v2632, 7
        %v2635 = vshll.u32 %v2332, 16
        %v2637 = vor.u32 %v2634, %v2635
        %v2638 = vsel %vm642, %v2630, %v2637
        %v2639 = vrot.slane %v2634, 4
        %v2641 = vshrl.u32 %v2333, 16
        %v2643 = vrot.slane %v2641, 7
        %v2644 = vshll.u32 %v2333, 16
        %v2646 = vor.u32 %v2643, %v2644
        %v2647 = vsel %vm642, %v2639, %v2646
        %v2649 = vshrl.u32 %v2334, 16
        %v2651 = vrot.slane %v2649, 7
        %v2652 = vrot.slane %v2651, 4
        %v2654 = vshrl.u32 %v2335, 16
        %v2656 = vrot.slane %v2654, 7
        %v2657 = vshll.u32 %v2335, 16
        %v2659 = vor.u32 %v2656, %v2657
        %v2660 = vsel %vm642, %v2652, %v2659
        %v2661 = vrot.slane %v2656, 4
        %v2663 = vshrl.u32 %v2336, 16
        %v2665 = vrot.slane %v2663, 7
        %v2666 = vshll.u32 %v2336, 16
        %v2668 = vor.u32 %v2665, %v2666
        %v2669 = vsel %vm642, %v2661, %v2668
        %v2671 = vshrl.u32 %v2337, 16
        %v2673 = vrot.slane %v2671, 7
        %v2674 = vrot.slane %v2673, 4
        %v2676 = vshrl.u32 %v2338, 16
        %v2678 = vrot.slane %v2676, 7
        %v2679 = vshll.u32 %v2338, 16
        %v2681 = vor.u32 %v2678, %v2679
        %v2682 = vsel %vm642, %v2674, %v2681
        %v2683 = vrot.slane %v2678, 4
        %v2685 = vshrl.u32 %v2339, 16
        %v2687 = vrot.slane %v2685, 7
        %v2688 = vshll.u32 %v2339, 16
        %v2690 = vor.u32 %v2687, %v2688
        %v2691 = vsel %vm642, %v2683, %v2690
        %s2692 = scalar_lea.vmem [#allocation7], 24
        %v2693 = vld [vmem:[%s2692] sm:$0xf]
        %v2694 = vld [vmem:[%s2692 + $0x4] sm:$0xf]
        %v2695 = vunpack.c.l.b16 %v2352
        %v2696 = vunpack.c.l.b16 %v2361
        %v2697 = vunpack.c.l.b16 %v2374
        %v2698 = vunpack.c.l.b16 %v2383
        %v2699 = vunpack.c.l.b16 %v2396
        %v2700 = vunpack.c.l.b16 %v2405
        %v2701 = vunpack.c.l.b16 %v2418
        %v2702 = vunpack.c.l.b16 %v2427
        %v2703 = vunpack.c.l.b16 %v2440
        %v2704 = vunpack.c.l.b16 %v2449
        %v2705 = vunpack.c.l.b16 %v2462
        %v2706 = vunpack.c.l.b16 %v2471
        %v2707 = vunpack.c.l.b16 %v2484
        %v2708 = vunpack.c.l.b16 %v2493
        %v2709 = vunpack.c.l.b16 %v2506
        %v2710 = vunpack.c.l.b16 %v2515
        %v2711 = vunpack.c.l.b16 %v2528
        %v2712 = vunpack.c.l.b16 %v2537
        %v2713 = vunpack.c.l.b16 %v2550
        %v2714 = vunpack.c.l.b16 %v2559
        %v2715 = vunpack.c.l.b16 %v2572
        %v2716 = vunpack.c.l.b16 %v2581
        %v2717 = vunpack.c.l.b16 %v2594
        %v2718 = vunpack.c.l.b16 %v2603
        %v2719 = vunpack.c.l.b16 %v2616
        %v2720 = vunpack.c.l.b16 %v2625
        %v2721 = vunpack.c.l.b16 %v2638
        %v2722 = vunpack.c.l.b16 %v2647
        %v2723 = vunpack.c.l.b16 %v2660
        %v2724 = vunpack.c.l.b16 %v2669
        %v2725 = vunpack.c.l.b16 %v2682
        %v2726 = vunpack.c.l.b16 %v2691
        %v2727 = vpack.c.b16 %v2696, %v2695
        %v2728 = vpack.c.b16 %v2698, %v2697
        %v2729 = vpack.c.b16 %v2700, %v2699
        %v2730 = vpack.c.b16 %v2702, %v2701
        %v2731 = vpack.c.b16 %v2704, %v2703
        %v2732 = vpack.c.b16 %v2706, %v2705
        %v2733 = vpack.c.b16 %v2708, %v2707
        %v2734 = vpack.c.b16 %v2710, %v2709
        %v2735 = vpack.c.b16 %v2712, %v2711
        %v2736 = vpack.c.b16 %v2714, %v2713
        %v2737 = vpack.c.b16 %v2716, %v2715
        %v2738 = vpack.c.b16 %v2718, %v2717
        %v2739 = vpack.c.b16 %v2720, %v2719
        %v2740 = vpack.c.b16 %v2722, %v2721
        %v2741 = vpack.c.b16 %v2724, %v2723
        %v2742 = vpack.c.b16 %v2726, %v2725
        %v2745 = vunpack.c.l.b16 %v2693
        %v2746 = vunpack.c.l.b16 %v2694
        %v2747 = vpack.c.b16 %v2746, %v2745
        %v2750 = vsel %vm1086, %v2727, 0
        %v2753 = vsel %vm1086, %v2728, 0
        %v2756 = vsel %vm1086, %v2729, 0
        %v2759 = vsel %vm1086, %v2730, 0
        %v2762 = vsel %vm1086, %v2731, 0
        %v2765 = vsel %vm1086, %v2732, 0
        %v2768 = vsel %vm1086, %v2733, 0
        %v2771 = vsel %vm1086, %v2734, 0
        %v2774 = vsel %vm1086, %v2735, 0
        %v2777 = vsel %vm1086, %v2736, 0
        %v2780 = vsel %vm1086, %v2737, 0
        %v2783 = vsel %vm1086, %v2738, 0
        %v2786 = vsel %vm1086, %v2739, 0
        %v2789 = vsel %vm1086, %v2740, 0
        %v2792 = vsel %vm1086, %v2741, 0
        %v2795 = vsel %vm1086, %v2742, 0
        %2797 = vmatprep.subr.bf16.mxu0 0
        %2798 = vmatpush1.bf16.msra.mxu0 0
        %2799 = vmatprep.subr.bf16.mxu0 0
        %2800 = vmatpush1.bf16.msra.mxu0 0
        %2801 = vmatprep.subr.bf16.mxu0 0
        %2802 = vmatpush1.bf16.msra.mxu0 0
        %2803 = vmatprep.subr.bf16.mxu0 0
        %2804 = vmatpush1.bf16.msra.mxu0 0
        %2805 = vmatprep.subr.bf16.mxu0 0
        %2806 = vmatpush1.bf16.msra.mxu0 0
        %2807 = vmatprep.subr.bf16.mxu0 0
        %2808 = vmatpush1.bf16.msra.mxu0 0
        %2809 = vmatprep.subr.bf16.mxu0 0
        %2810 = vmatpush1.bf16.msra.mxu0 0
        %2811 = vmatprep.subr.bf16.mxu0 0
        %2812 = vmatpush1.bf16.msra.mxu0 %v2747
        %2813 = vmatprep.subr.bf16.mxu0 0
        %2814 = vmatpush2.bf16.msra.mxu0 0
        %2815 = vmatprep.subr.bf16.mxu0 0
        %2816 = vmatpush2.bf16.msra.mxu0 0
        %2817 = vmatprep.subr.bf16.mxu0 0
        %2818 = vmatpush2.bf16.msra.mxu0 0
        %2819 = vmatprep.subr.bf16.mxu0 0
        %2820 = vmatpush2.bf16.msra.mxu0 0
        %2821 = vmatprep.subr.bf16.mxu0 0
        %2822 = vmatpush2.bf16.msra.mxu0 0
        %2823 = vmatprep.subr.bf16.mxu0 0
        %2824 = vmatpush2.bf16.msra.mxu0 0
        %2825 = vmatprep.subr.bf16.mxu0 0
        %2826 = vmatpush2.bf16.msra.mxu0 0
        %2827 = vmatprep.subr.bf16.mxu0 0
        %2828 = vmatpush2.bf16.msra.mxu0 0
        %2829 = vmatprep.mubr.bf16.mxu0 0
        %2830 = vmatmul.mubr.bf16.gmra.mxu0 %v2750
        %v2831 = vpop.f32.mrf.mxu0
        %v2832 = vadd.f32 0.0, %v2831
        %v2833 = vpop.f32.mrf.mxu0
        %v2834 = vpop.f32.mrf.mxu0
        %v2835 = vadd.f32 0.0, %v2834
        %v2836 = vpop.f32.mrf.mxu0
        %2837 = vmatprep.mubr.bf16.mxu0 0
        %2838 = vmatmul.mubr.bf16.gmra.mxu0 %v2753
        %v2839 = vpop.f32.mrf.mxu0
        %v2840 = vadd.f32 0.0, %v2839
        %v2841 = vpop.f32.mrf.mxu0
        %v2842 = vpop.f32.mrf.mxu0
        %v2843 = vadd.f32 0.0, %v2842
        %v2844 = vpop.f32.mrf.mxu0
        %2845 = vmatprep.mubr.bf16.mxu0 0
        %2846 = vmatmul.mubr.bf16.gmra.mxu0 %v2756
        %v2847 = vpop.f32.mrf.mxu0
        %v2848 = vadd.f32 0.0, %v2847
        %v2849 = vpop.f32.mrf.mxu0
        %v2850 = vpop.f32.mrf.mxu0
        %v2851 = vadd.f32 0.0, %v2850
        %v2852 = vpop.f32.mrf.mxu0
        %2853 = vmatprep.mubr.bf16.mxu0 0
        %2854 = vmatmul.mubr.bf16.gmra.mxu0 %v2759
        %v2855 = vpop.f32.mrf.mxu0
        %v2856 = vadd.f32 0.0, %v2855
        %v2857 = vpop.f32.mrf.mxu0
        %v2858 = vpop.f32.mrf.mxu0
        %v2859 = vadd.f32 0.0, %v2858
        %v2860 = vpop.f32.mrf.mxu0
        %2861 = vmatprep.mubr.bf16.mxu0 0
        %2862 = vmatmul.mubr.bf16.gmra.mxu0 %v2762
        %v2863 = vpop.f32.mrf.mxu0
        %v2864 = vadd.f32 0.0, %v2863
        %v2865 = vpop.f32.mrf.mxu0
        %v2866 = vpop.f32.mrf.mxu0
        %v2867 = vadd.f32 0.0, %v2866
        %v2868 = vpop.f32.mrf.mxu0
        %2869 = vmatprep.mubr.bf16.mxu0 0
        %2870 = vmatmul.mubr.bf16.gmra.mxu0 %v2765
        %v2871 = vpop.f32.mrf.mxu0
        %v2872 = vadd.f32 0.0, %v2871
        %v2873 = vpop.f32.mrf.mxu0
        %v2874 = vpop.f32.mrf.mxu0
        %v2875 = vadd.f32 0.0, %v2874
        %v2876 = vpop.f32.mrf.mxu0
        %2877 = vmatprep.mubr.bf16.mxu0 0
        %2878 = vmatmul.mubr.bf16.gmra.mxu0 %v2768
        %v2879 = vpop.f32.mrf.mxu0
        %v2880 = vadd.f32 0.0, %v2879
        %v2881 = vpop.f32.mrf.mxu0
        %v2882 = vpop.f32.mrf.mxu0
        %v2883 = vadd.f32 0.0, %v2882
        %v2884 = vpop.f32.mrf.mxu0
        %2885 = vmatprep.mubr.bf16.mxu0 0
        %2886 = vmatmul.mubr.bf16.gmra.mxu0 %v2771
        %v2887 = vpop.f32.mrf.mxu0
        %v2888 = vadd.f32 0.0, %v2887
        %v2889 = vpop.f32.mrf.mxu0
        %v2890 = vpop.f32.mrf.mxu0
        %v2891 = vadd.f32 0.0, %v2890
        %v2892 = vpop.f32.mrf.mxu0
        %2893 = vmatprep.mubr.bf16.mxu0 0
        %2894 = vmatmul.mubr.bf16.gmra.mxu0 %v2774
        %v2895 = vpop.f32.mrf.mxu0
        %v2896 = vadd.f32 0.0, %v2895
        %v2897 = vpop.f32.mrf.mxu0
        %v2898 = vpop.f32.mrf.mxu0
        %v2899 = vadd.f32 0.0, %v2898
        %v2900 = vpop.f32.mrf.mxu0
        %2901 = vmatprep.mubr.bf16.mxu0 0
        %2902 = vmatmul.mubr.bf16.gmra.mxu0 %v2777
        %v2903 = vpop.f32.mrf.mxu0
        %v2904 = vadd.f32 0.0, %v2903
        %v2905 = vpop.f32.mrf.mxu0
        %v2906 = vpop.f32.mrf.mxu0
        %v2907 = vadd.f32 0.0, %v2906
        %v2908 = vpop.f32.mrf.mxu0
        %2909 = vmatprep.mubr.bf16.mxu0 0
        %2910 = vmatmul.mubr.bf16.gmra.mxu0 %v2780
        %v2911 = vpop.f32.mrf.mxu0
        %v2912 = vadd.f32 0.0, %v2911
        %v2913 = vpop.f32.mrf.mxu0
        %v2914 = vpop.f32.mrf.mxu0
        %v2915 = vadd.f32 0.0, %v2914
        %v2916 = vpop.f32.mrf.mxu0
        %2917 = vmatprep.mubr.bf16.mxu0 0
        %2918 = vmatmul.mubr.bf16.gmra.mxu0 %v2783
        %v2919 = vpop.f32.mrf.mxu0
        %v2920 = vadd.f32 0.0, %v2919
        %v2921 = vpop.f32.mrf.mxu0
        %v2922 = vpop.f32.mrf.mxu0
        %v2923 = vadd.f32 0.0, %v2922
        %v2924 = vpop.f32.mrf.mxu0
        %2925 = vmatprep.mubr.bf16.mxu0 0
        %2926 = vmatmul.mubr.bf16.gmra.mxu0 %v2786
        %v2927 = vpop.f32.mrf.mxu0
        %v2928 = vadd.f32 0.0, %v2927
        %v2929 = vpop.f32.mrf.mxu0
        %v2930 = vpop.f32.mrf.mxu0
        %v2931 = vadd.f32 0.0, %v2930
        %v2932 = vpop.f32.mrf.mxu0
        %2933 = vmatprep.mubr.bf16.mxu0 0
        %2934 = vmatmul.mubr.bf16.gmra.mxu0 %v2789
        %v2935 = vpop.f32.mrf.mxu0
        %v2936 = vadd.f32 0.0, %v2935
        %v2937 = vpop.f32.mrf.mxu0
        %v2938 = vpop.f32.mrf.mxu0
        %v2939 = vadd.f32 0.0, %v2938
        %v2940 = vpop.f32.mrf.mxu0
        %2941 = vmatprep.mubr.bf16.mxu0 0
        %2942 = vmatmul.mubr.bf16.gmra.mxu0 %v2792
        %v2943 = vpop.f32.mrf.mxu0
        %v2944 = vadd.f32 0.0, %v2943
        %v2945 = vpop.f32.mrf.mxu0
        %v2946 = vpop.f32.mrf.mxu0
        %v2947 = vadd.f32 0.0, %v2946
        %v2948 = vpop.f32.mrf.mxu0
        %2949 = vmatprep.mubr.bf16.mxu0 0
        %2950 = vmatmul.mubr.bf16.gmra.mxu0 %v2795
        %v2951 = vpop.f32.mrf.mxu0
        %v2952 = vadd.f32 0.0, %v2951
        %v2953 = vpop.f32.mrf.mxu0
        %v2954 = vpop.f32.mrf.mxu0
        %v2955 = vadd.f32 0.0, %v2954
        %v2956 = vpop.f32.mrf.mxu0
        %2957 = vdwg.mxu0
        %v2958 = vadd.f32 %v2260, %v2832
        %v2959 = vadd.f32 %v2261, %v2835
        %v2960 = vadd.f32 %v2262, %v2840
        %v2961 = vadd.f32 %v2263, %v2843
        %v2962 = vadd.f32 %v2264, %v2848
        %v2963 = vadd.f32 %v2265, %v2851
        %v2964 = vadd.f32 %v2266, %v2856
        %v2965 = vadd.f32 %v2267, %v2859
        %v2966 = vadd.f32 %v2268, %v2864
        %v2967 = vadd.f32 %v2269, %v2867
        %v2968 = vadd.f32 %v2270, %v2872
        %v2969 = vadd.f32 %v2271, %v2875
        %v2970 = vadd.f32 %v2272, %v2880
        %v2971 = vadd.f32 %v2273, %v2883
        %v2972 = vadd.f32 %v2274, %v2888
        %v2973 = vadd.f32 %v2275, %v2891
        %v2974 = vadd.f32 %v2276, %v2896
        %v2975 = vadd.f32 %v2277, %v2899
        %v2976 = vadd.f32 %v2278, %v2904
        %v2977 = vadd.f32 %v2279, %v2907
        %v2978 = vadd.f32 %v2280, %v2912
        %v2979 = vadd.f32 %v2281, %v2915
        %v2980 = vadd.f32 %v2282, %v2920
        %v2981 = vadd.f32 %v2283, %v2923
        %v2982 = vadd.f32 %v2284, %v2928
        %v2983 = vadd.f32 %v2285, %v2931
        %v2984 = vadd.f32 %v2286, %v2936
        %v2985 = vadd.f32 %v2287, %v2939
        %v2986 = vadd.f32 %v2288, %v2944
        %v2987 = vadd.f32 %v2289, %v2947
        %v2988 = vadd.f32 %v2290, %v2952
        %v2989 = vadd.f32 %v2291, %v2955
        %s2990 = scalar_lea.vmem [#allocation7], 32
        %v2991 = vld [vmem:[%s2990] sm:$0xf]
        %v2992 = vld [vmem:[%s2990 + $0x4] sm:$0xf]
        %v3025 = vunpack.c.l.b16 %v2293
        %v3026 = vunpack.c.l.b16 %v2294
        %v3027 = vunpack.c.l.b16 %v2296
        %v3028 = vunpack.c.l.b16 %v2297
        %v3029 = vunpack.c.l.b16 %v2299
        %v3030 = vunpack.c.l.b16 %v2300
        %v3031 = vunpack.c.l.b16 %v2302
        %v3032 = vunpack.c.l.b16 %v2303
        %v3033 = vunpack.c.l.b16 %v2305
        %v3034 = vunpack.c.l.b16 %v2306
        %v3035 = vunpack.c.l.b16 %v2308
        %v3036 = vunpack.c.l.b16 %v2309
        %v3037 = vunpack.c.l.b16 %v2311
        %v3038 = vunpack.c.l.b16 %v2312
        %v3039 = vunpack.c.l.b16 %v2314
        %v3040 = vunpack.c.l.b16 %v2315
        %v3041 = vunpack.c.l.b16 %v2317
        %v3042 = vunpack.c.l.b16 %v2318
        %v3043 = vunpack.c.l.b16 %v2320
        %v3044 = vunpack.c.l.b16 %v2321
        %v3045 = vunpack.c.l.b16 %v2323
        %v3046 = vunpack.c.l.b16 %v2324
        %v3047 = vunpack.c.l.b16 %v2326
        %v3048 = vunpack.c.l.b16 %v2327
        %v3049 = vunpack.c.l.b16 %v2329
        %v3050 = vunpack.c.l.b16 %v2330
        %v3051 = vunpack.c.l.b16 %v2332
        %v3052 = vunpack.c.l.b16 %v2333
        %v3053 = vunpack.c.l.b16 %v2335
        %v3054 = vunpack.c.l.b16 %v2336
        %v3055 = vunpack.c.l.b16 %v2338
        %v3056 = vunpack.c.l.b16 %v2339
        %v3057 = vpack.c.b16 %v3026, %v3025
        %v3058 = vpack.c.b16 %v3028, %v3027
        %v3059 = vpack.c.b16 %v3030, %v3029
        %v3060 = vpack.c.b16 %v3032, %v3031
        %v3061 = vpack.c.b16 %v3034, %v3033
        %v3062 = vpack.c.b16 %v3036, %v3035
        %v3063 = vpack.c.b16 %v3038, %v3037
        %v3064 = vpack.c.b16 %v3040, %v3039
        %v3065 = vpack.c.b16 %v3042, %v3041
        %v3066 = vpack.c.b16 %v3044, %v3043
        %v3067 = vpack.c.b16 %v3046, %v3045
        %v3068 = vpack.c.b16 %v3048, %v3047
        %v3069 = vpack.c.b16 %v3050, %v3049
        %v3070 = vpack.c.b16 %v3052, %v3051
        %v3071 = vpack.c.b16 %v3054, %v3053
        %v3072 = vpack.c.b16 %v3056, %v3055
        %v3075 = vunpack.c.l.b16 %v2991
        %v3076 = vunpack.c.l.b16 %v2992
        %v3077 = vpack.c.b16 %v3076, %v3075
        %v3080 = vsel %vm1086, %v3057, 0
        %v3083 = vsel %vm1086, %v3058, 0
        %v3086 = vsel %vm1086, %v3059, 0
        %v3089 = vsel %vm1086, %v3060, 0
        %v3092 = vsel %vm1086, %v3061, 0
        %v3095 = vsel %vm1086, %v3062, 0
        %v3098 = vsel %vm1086, %v3063, 0
        %v3101 = vsel %vm1086, %v3064, 0
        %v3104 = vsel %vm1086, %v3065, 0
        %v3107 = vsel %vm1086, %v3066, 0
        %v3110 = vsel %vm1086, %v3067, 0
        %v3113 = vsel %vm1086, %v3068, 0
        %v3116 = vsel %vm1086, %v3069, 0
        %v3119 = vsel %vm1086, %v3070, 0
        %v3122 = vsel %vm1086, %v3071, 0
        %v3125 = vsel %vm1086, %v3072, 0
        %3127 = vmatprep.subr.bf16.mxu0 0
        %3128 = vmatpush1.bf16.msra.mxu0 0
        %3129 = vmatprep.subr.bf16.mxu0 0
        %3130 = vmatpush1.bf16.msra.mxu0 0
        %3131 = vmatprep.subr.bf16.mxu0 0
        %3132 = vmatpush1.bf16.msra.mxu0 0
        %3133 = vmatprep.subr.bf16.mxu0 0
        %3134 = vmatpush1.bf16.msra.mxu0 0
        %3135 = vmatprep.subr.bf16.mxu0 0
        %3136 = vmatpush1.bf16.msra.mxu0 0
        %3137 = vmatprep.subr.bf16.mxu0 0
        %3138 = vmatpush1.bf16.msra.mxu0 0
        %3139 = vmatprep.subr.bf16.mxu0 0
        %3140 = vmatpush1.bf16.msra.mxu0 0
        %3141 = vmatprep.subr.bf16.mxu0 0
        %3142 = vmatpush1.bf16.msra.mxu0 %v3077
        %3143 = vmatprep.subr.bf16.mxu0 0
        %3144 = vmatpush2.bf16.msra.mxu0 0
        %3145 = vmatprep.subr.bf16.mxu0 0
        %3146 = vmatpush2.bf16.msra.mxu0 0
        %3147 = vmatprep.subr.bf16.mxu0 0
        %3148 = vmatpush2.bf16.msra.mxu0 0
        %3149 = vmatprep.subr.bf16.mxu0 0
        %3150 = vmatpush2.bf16.msra.mxu0 0
        %3151 = vmatprep.subr.bf16.mxu0 0
        %3152 = vmatpush2.bf16.msra.mxu0 0
        %3153 = vmatprep.subr.bf16.mxu0 0
        %3154 = vmatpush2.bf16.msra.mxu0 0
        %3155 = vmatprep.subr.bf16.mxu0 0
        %3156 = vmatpush2.bf16.msra.mxu0 0
        %3157 = vmatprep.subr.bf16.mxu0 0
        %3158 = vmatpush2.bf16.msra.mxu0 0
        %3159 = vmatprep.mubr.bf16.mxu0 0
        %3160 = vmatmul.mubr.bf16.gmra.mxu0 %v3080
        %v3161 = vpop.f32.mrf.mxu0
        %v3162 = vadd.f32 0.0, %v3161
        %v3163 = vpop.f32.mrf.mxu0
        %v3164 = vpop.f32.mrf.mxu0
        %v3165 = vadd.f32 0.0, %v3164
        %v3166 = vpop.f32.mrf.mxu0
        %3167 = vmatprep.mubr.bf16.mxu0 0
        %3168 = vmatmul.mubr.bf16.gmra.mxu0 %v3083
        %v3169 = vpop.f32.mrf.mxu0
        %v3170 = vadd.f32 0.0, %v3169
        %v3171 = vpop.f32.mrf.mxu0
        %v3172 = vpop.f32.mrf.mxu0
        %v3173 = vadd.f32 0.0, %v3172
        %v3174 = vpop.f32.mrf.mxu0
        %3175 = vmatprep.mubr.bf16.mxu0 0
        %3176 = vmatmul.mubr.bf16.gmra.mxu0 %v3086
        %v3177 = vpop.f32.mrf.mxu0
        %v3178 = vadd.f32 0.0, %v3177
        %v3179 = vpop.f32.mrf.mxu0
        %v3180 = vpop.f32.mrf.mxu0
        %v3181 = vadd.f32 0.0, %v3180
        %v3182 = vpop.f32.mrf.mxu0
        %3183 = vmatprep.mubr.bf16.mxu0 0
        %3184 = vmatmul.mubr.bf16.gmra.mxu0 %v3089
        %v3185 = vpop.f32.mrf.mxu0
        %v3186 = vadd.f32 0.0, %v3185
        %v3187 = vpop.f32.mrf.mxu0
        %v3188 = vpop.f32.mrf.mxu0
        %v3189 = vadd.f32 0.0, %v3188
        %v3190 = vpop.f32.mrf.mxu0
        %3191 = vmatprep.mubr.bf16.mxu0 0
        %3192 = vmatmul.mubr.bf16.gmra.mxu0 %v3092
        %v3193 = vpop.f32.mrf.mxu0
        %v3194 = vadd.f32 0.0, %v3193
        %v3195 = vpop.f32.mrf.mxu0
        %v3196 = vpop.f32.mrf.mxu0
        %v3197 = vadd.f32 0.0, %v3196
        %v3198 = vpop.f32.mrf.mxu0
        %3199 = vmatprep.mubr.bf16.mxu0 0
        %3200 = vmatmul.mubr.bf16.gmra.mxu0 %v3095
        %v3201 = vpop.f32.mrf.mxu0
        %v3202 = vadd.f32 0.0, %v3201
        %v3203 = vpop.f32.mrf.mxu0
        %v3204 = vpop.f32.mrf.mxu0
        %v3205 = vadd.f32 0.0, %v3204
        %v3206 = vpop.f32.mrf.mxu0
        %3207 = vmatprep.mubr.bf16.mxu0 0
        %3208 = vmatmul.mubr.bf16.gmra.mxu0 %v3098
        %v3209 = vpop.f32.mrf.mxu0
        %v3210 = vadd.f32 0.0, %v3209
        %v3211 = vpop.f32.mrf.mxu0
        %v3212 = vpop.f32.mrf.mxu0
        %v3213 = vadd.f32 0.0, %v3212
        %v3214 = vpop.f32.mrf.mxu0
        %3215 = vmatprep.mubr.bf16.mxu0 0
        %3216 = vmatmul.mubr.bf16.gmra.mxu0 %v3101
        %v3217 = vpop.f32.mrf.mxu0
        %v3218 = vadd.f32 0.0, %v3217
        %v3219 = vpop.f32.mrf.mxu0
        %v3220 = vpop.f32.mrf.mxu0
        %v3221 = vadd.f32 0.0, %v3220
        %v3222 = vpop.f32.mrf.mxu0
        %3223 = vmatprep.mubr.bf16.mxu0 0
        %3224 = vmatmul.mubr.bf16.gmra.mxu0 %v3104
        %v3225 = vpop.f32.mrf.mxu0
        %v3226 = vadd.f32 0.0, %v3225
        %v3227 = vpop.f32.mrf.mxu0
        %v3228 = vpop.f32.mrf.mxu0
        %v3229 = vadd.f32 0.0, %v3228
        %v3230 = vpop.f32.mrf.mxu0
        %3231 = vmatprep.mubr.bf16.mxu0 0
        %3232 = vmatmul.mubr.bf16.gmra.mxu0 %v3107
        %v3233 = vpop.f32.mrf.mxu0
        %v3234 = vadd.f32 0.0, %v3233
        %v3235 = vpop.f32.mrf.mxu0
        %v3236 = vpop.f32.mrf.mxu0
        %v3237 = vadd.f32 0.0, %v3236
        %v3238 = vpop.f32.mrf.mxu0
        %3239 = vmatprep.mubr.bf16.mxu0 0
        %3240 = vmatmul.mubr.bf16.gmra.mxu0 %v3110
        %v3241 = vpop.f32.mrf.mxu0
        %v3242 = vadd.f32 0.0, %v3241
        %v3243 = vpop.f32.mrf.mxu0
        %v3244 = vpop.f32.mrf.mxu0
        %v3245 = vadd.f32 0.0, %v3244
        %v3246 = vpop.f32.mrf.mxu0
        %3247 = vmatprep.mubr.bf16.mxu0 0
        %3248 = vmatmul.mubr.bf16.gmra.mxu0 %v3113
        %v3249 = vpop.f32.mrf.mxu0
        %v3250 = vadd.f32 0.0, %v3249
        %v3251 = vpop.f32.mrf.mxu0
        %v3252 = vpop.f32.mrf.mxu0
        %v3253 = vadd.f32 0.0, %v3252
        %v3254 = vpop.f32.mrf.mxu0
        %3255 = vmatprep.mubr.bf16.mxu0 0
        %3256 = vmatmul.mubr.bf16.gmra.mxu0 %v3116
        %v3257 = vpop.f32.mrf.mxu0
        %v3258 = vadd.f32 0.0, %v3257
        %v3259 = vpop.f32.mrf.mxu0
        %v3260 = vpop.f32.mrf.mxu0
        %v3261 = vadd.f32 0.0, %v3260
        %v3262 = vpop.f32.mrf.mxu0
        %3263 = vmatprep.mubr.bf16.mxu0 0
        %3264 = vmatmul.mubr.bf16.gmra.mxu0 %v3119
        %v3265 = vpop.f32.mrf.mxu0
        %v3266 = vadd.f32 0.0, %v3265
        %v3267 = vpop.f32.mrf.mxu0
        %v3268 = vpop.f32.mrf.mxu0
        %v3269 = vadd.f32 0.0, %v3268
        %v3270 = vpop.f32.mrf.mxu0
        %3271 = vmatprep.mubr.bf16.mxu0 0
        %3272 = vmatmul.mubr.bf16.gmra.mxu0 %v3122
        %v3273 = vpop.f32.mrf.mxu0
        %v3274 = vadd.f32 0.0, %v3273
        %v3275 = vpop.f32.mrf.mxu0
        %v3276 = vpop.f32.mrf.mxu0
        %v3277 = vadd.f32 0.0, %v3276
        %v3278 = vpop.f32.mrf.mxu0
        %3279 = vmatprep.mubr.bf16.mxu0 0
        %3280 = vmatmul.mubr.bf16.gmra.mxu0 %v3125
        %v3281 = vpop.f32.mrf.mxu0
        %v3282 = vadd.f32 0.0, %v3281
        %v3283 = vpop.f32.mrf.mxu0
        %v3284 = vpop.f32.mrf.mxu0
        %v3285 = vadd.f32 0.0, %v3284
        %v3286 = vpop.f32.mrf.mxu0
        %3287 = vdwg.mxu0
        %v3288 = vadd.f32 %v2958, %v3162
        %v3289 = vadd.f32 %v2959, %v3165
        %v3290 = vadd.f32 %v2960, %v3170
        %v3291 = vadd.f32 %v2961, %v3173
        %v3292 = vadd.f32 %v2962, %v3178
        %v3293 = vadd.f32 %v2963, %v3181
        %v3294 = vadd.f32 %v2964, %v3186
        %v3295 = vadd.f32 %v2965, %v3189
        %v3296 = vadd.f32 %v2966, %v3194
        %v3297 = vadd.f32 %v2967, %v3197
        %v3298 = vadd.f32 %v2968, %v3202
        %v3299 = vadd.f32 %v2969, %v3205
        %v3300 = vadd.f32 %v2970, %v3210
        %v3301 = vadd.f32 %v2971, %v3213
        %v3302 = vadd.f32 %v2972, %v3218
        %v3303 = vadd.f32 %v2973, %v3221
        %v3304 = vadd.f32 %v2974, %v3226
        %v3305 = vadd.f32 %v2975, %v3229
        %v3306 = vadd.f32 %v2976, %v3234
        %v3307 = vadd.f32 %v2977, %v3237
        %v3308 = vadd.f32 %v2978, %v3242
        %v3309 = vadd.f32 %v2979, %v3245
        %v3310 = vadd.f32 %v2980, %v3250
        %v3311 = vadd.f32 %v2981, %v3253
        %v3312 = vadd.f32 %v2982, %v3258
        %v3313 = vadd.f32 %v2983, %v3261
        %v3314 = vadd.f32 %v2984, %v3266
        %v3315 = vadd.f32 %v2985, %v3269
        %v3316 = vadd.f32 %v2986, %v3274
        %v3317 = vadd.f32 %v2987, %v3277
        %v3318 = vadd.f32 %v2988, %v3282
        %v3319 = vadd.f32 %v2989, %v3285
        %v3320 = vld [vmem:[%s440 + $0x4] sm:$0xf]
        %v3321 = vld [vmem:[%s440 + $0x8] sm:$0xf]
        %v3322 = vld [vmem:[%s440 + $0xc] sm:$0x1]
        %v3323 = vld [vmem:[%s440 + $0x14] sm:$0xf]
        %v3324 = vld [vmem:[%s440 + $0x18] sm:$0xf]
        %v3325 = vld [vmem:[%s440 + $0x1c] sm:$0x1]
        %v3326 = vld [vmem:[%s440 + $0x24] sm:$0xf]
        %v3327 = vld [vmem:[%s440 + $0x28] sm:$0xf]
        %v3328 = vld [vmem:[%s440 + $0x2c] sm:$0x1]
        %v3329 = vld [vmem:[%s440 + $0x34] sm:$0xf]
        %v3330 = vld [vmem:[%s440 + $0x38] sm:$0xf]
        %v3331 = vld [vmem:[%s440 + $0x3c] sm:$0x1]
        %v3332 = vld [vmem:[%s440 + $0x44] sm:$0xf]
        %v3333 = vld [vmem:[%s440 + $0x48] sm:$0xf]
        %v3334 = vld [vmem:[%s440 + $0x4c] sm:$0x1]
        %v3335 = vld [vmem:[%s440 + $0x54] sm:$0xf]
        %v3336 = vld [vmem:[%s440 + $0x58] sm:$0xf]
        %v3337 = vld [vmem:[%s440 + $0x5c] sm:$0x1]
        %v3338 = vld [vmem:[%s440 + $0x64] sm:$0xf]
        %v3339 = vld [vmem:[%s440 + $0x68] sm:$0xf]
        %v3340 = vld [vmem:[%s440 + $0x6c] sm:$0x1]
        %v3341 = vld [vmem:[%s440 + $0x74] sm:$0xf]
        %v3342 = vld [vmem:[%s440 + $0x78] sm:$0xf]
        %v3343 = vld [vmem:[%s440 + $0x7c] sm:$0x1]
        %v3344 = vld [vmem:[%s440 + $0x84] sm:$0xf]
        %v3345 = vld [vmem:[%s440 + $0x88] sm:$0xf]
        %v3346 = vld [vmem:[%s440 + $0x8c] sm:$0x1]
        %v3347 = vld [vmem:[%s440 + $0x94] sm:$0xf]
        %v3348 = vld [vmem:[%s440 + $0x98] sm:$0xf]
        %v3349 = vld [vmem:[%s440 + $0x9c] sm:$0x1]
        %v3350 = vld [vmem:[%s440 + $0xa4] sm:$0xf]
        %v3351 = vld [vmem:[%s440 + $0xa8] sm:$0xf]
        %v3352 = vld [vmem:[%s440 + $0xac] sm:$0x1]
        %v3353 = vld [vmem:[%s440 + $0xb4] sm:$0xf]
        %v3354 = vld [vmem:[%s440 + $0xb8] sm:$0xf]
        %v3355 = vld [vmem:[%s440 + $0xbc] sm:$0x1]
        %v3356 = vld [vmem:[%s440 + $0xc4] sm:$0xf]
        %v3357 = vld [vmem:[%s440 + $0xc8] sm:$0xf]
        %v3358 = vld [vmem:[%s440 + $0xcc] sm:$0x1]
        %v3359 = vld [vmem:[%s440 + $0xd4] sm:$0xf]
        %v3360 = vld [vmem:[%s440 + $0xd8] sm:$0xf]
        %v3361 = vld [vmem:[%s440 + $0xdc] sm:$0x1]
        %v3362 = vld [vmem:[%s440 + $0xe4] sm:$0xf]
        %v3363 = vld [vmem:[%s440 + $0xe8] sm:$0xf]
        %v3364 = vld [vmem:[%s440 + $0xec] sm:$0x1]
        %v3365 = vld [vmem:[%s440 + $0xf4] sm:$0xf]
        %v3366 = vld [vmem:[%s440 + $0xf8] sm:$0xf]
        %v3367 = vld [vmem:[%s440 + $0xfc] sm:$0x1]
        %v3369 = vshrl.u32 %v3320, 16
        %v3371 = vrot.slane %v3369, 4
        %v3372 = vshll.u32 %v3320, 16
        %v3374 = vrot.slane %v3372, 5
        %v3375 = vor.u32 %v3371, %v3374
        %v3376 = vrot.slane %v3375, 4
        %v3378 = vshll.u32 %v3321, 16
        %v3380 = vrot.slane %v3378, 5
        %v3381 = vsel %vm1609, %v3376, %v3380
        %v3382 = vshrl.u32 %v3321, 16
        %v3384 = vrot.slane %v3382, 4
        %v3385 = vor.u32 %v3384, %v3380
        %v3386 = vrot.slane %v3385, 4
        %v3388 = vshll.u32 %v3322, 16
        %v3390 = vrot.slane %v3388, 5
        %v3391 = vsel %vm1609, %v3386, %v3390
        %v3393 = vshrl.u32 %v3323, 16
        %v3395 = vrot.slane %v3393, 4
        %v3396 = vshll.u32 %v3323, 16
        %v3398 = vrot.slane %v3396, 5
        %v3399 = vor.u32 %v3395, %v3398
        %v3400 = vrot.slane %v3399, 4
        %v3402 = vshll.u32 %v3324, 16
        %v3404 = vrot.slane %v3402, 5
        %v3405 = vsel %vm1609, %v3400, %v3404
        %v3406 = vshrl.u32 %v3324, 16
        %v3408 = vrot.slane %v3406, 4
        %v3409 = vor.u32 %v3408, %v3404
        %v3410 = vrot.slane %v3409, 4
        %v3412 = vshll.u32 %v3325, 16
        %v3414 = vrot.slane %v3412, 5
        %v3415 = vsel %vm1609, %v3410, %v3414
        %v3417 = vshrl.u32 %v3326, 16
        %v3419 = vrot.slane %v3417, 4
        %v3420 = vshll.u32 %v3326, 16
        %v3422 = vrot.slane %v3420, 5
        %v3423 = vor.u32 %v3419, %v3422
        %v3424 = vrot.slane %v3423, 4
        %v3426 = vshll.u32 %v3327, 16
        %v3428 = vrot.slane %v3426, 5
        %v3429 = vsel %vm1609, %v3424, %v3428
        %v3430 = vshrl.u32 %v3327, 16
        %v3432 = vrot.slane %v3430, 4
        %v3433 = vor.u32 %v3432, %v3428
        %v3434 = vrot.slane %v3433, 4
        %v3436 = vshll.u32 %v3328, 16
        %v3438 = vrot.slane %v3436, 5
        %v3439 = vsel %vm1609, %v3434, %v3438
        %v3441 = vshrl.u32 %v3329, 16
        %v3443 = vrot.slane %v3441, 4
        %v3444 = vshll.u32 %v3329, 16
        %v3446 = vrot.slane %v3444, 5
        %v3447 = vor.u32 %v3443, %v3446
        %v3448 = vrot.slane %v3447, 4
        %v3450 = vshll.u32 %v3330, 16
        %v3452 = vrot.slane %v3450, 5
        %v3453 = vsel %vm1609, %v3448, %v3452
        %v3454 = vshrl.u32 %v3330, 16
        %v3456 = vrot.slane %v3454, 4
        %v3457 = vor.u32 %v3456, %v3452
        %v3458 = vrot.slane %v3457, 4
        %v3460 = vshll.u32 %v3331, 16
        %v3462 = vrot.slane %v3460, 5
        %v3463 = vsel %vm1609, %v3458, %v3462
        %v3465 = vshrl.u32 %v3332, 16
        %v3467 = vrot.slane %v3465, 4
        %v3468 = vshll.u32 %v3332, 16
        %v3470 = vrot.slane %v3468, 5
        %v3471 = vor.u32 %v3467, %v3470
        %v3472 = vrot.slane %v3471, 4
        %v3474 = vshll.u32 %v3333, 16
        %v3476 = vrot.slane %v3474, 5
        %v3477 = vsel %vm1609, %v3472, %v3476
        %v3478 = vshrl.u32 %v3333, 16
        %v3480 = vrot.slane %v3478, 4
        %v3481 = vor.u32 %v3480, %v3476
        %v3482 = vrot.slane %v3481, 4
        %v3484 = vshll.u32 %v3334, 16
        %v3486 = vrot.slane %v3484, 5
        %v3487 = vsel %vm1609, %v3482, %v3486
        %v3489 = vshrl.u32 %v3335, 16
        %v3491 = vrot.slane %v3489, 4
        %v3492 = vshll.u32 %v3335, 16
        %v3494 = vrot.slane %v3492, 5
        %v3495 = vor.u32 %v3491, %v3494
        %v3496 = vrot.slane %v3495, 4
        %v3498 = vshll.u32 %v3336, 16
        %v3500 = vrot.slane %v3498, 5
        %v3501 = vsel %vm1609, %v3496, %v3500
        %v3502 = vshrl.u32 %v3336, 16
        %v3504 = vrot.slane %v3502, 4
        %v3505 = vor.u32 %v3504, %v3500
        %v3506 = vrot.slane %v3505, 4
        %v3508 = vshll.u32 %v3337, 16
        %v3510 = vrot.slane %v3508, 5
        %v3511 = vsel %vm1609, %v3506, %v3510
        %v3513 = vshrl.u32 %v3338, 16
        %v3515 = vrot.slane %v3513, 4
        %v3516 = vshll.u32 %v3338, 16
        %v3518 = vrot.slane %v3516, 5
        %v3519 = vor.u32 %v3515, %v3518
        %v3520 = vrot.slane %v3519, 4
        %v3522 = vshll.u32 %v3339, 16
        %v3524 = vrot.slane %v3522, 5
        %v3525 = vsel %vm1609, %v3520, %v3524
        %v3526 = vshrl.u32 %v3339, 16
        %v3528 = vrot.slane %v3526, 4
        %v3529 = vor.u32 %v3528, %v3524
        %v3530 = vrot.slane %v3529, 4
        %v3532 = vshll.u32 %v3340, 16
        %v3534 = vrot.slane %v3532, 5
        %v3535 = vsel %vm1609, %v3530, %v3534
        %v3537 = vshrl.u32 %v3341, 16
        %v3539 = vrot.slane %v3537, 4
        %v3540 = vshll.u32 %v3341, 16
        %v3542 = vrot.slane %v3540, 5
        %v3543 = vor.u32 %v3539, %v3542
        %v3544 = vrot.slane %v3543, 4
        %v3546 = vshll.u32 %v3342, 16
        %v3548 = vrot.slane %v3546, 5
        %v3549 = vsel %vm1609, %v3544, %v3548
        %v3550 = vshrl.u32 %v3342, 16
        %v3552 = vrot.slane %v3550, 4
        %v3553 = vor.u32 %v3552, %v3548
        %v3554 = vrot.slane %v3553, 4
        %v3556 = vshll.u32 %v3343, 16
        %v3558 = vrot.slane %v3556, 5
        %v3559 = vsel %vm1609, %v3554, %v3558
        %v3561 = vshrl.u32 %v3344, 16
        %v3563 = vrot.slane %v3561, 4
        %v3564 = vshll.u32 %v3344, 16
        %v3566 = vrot.slane %v3564, 5
        %v3567 = vor.u32 %v3563, %v3566
        %v3568 = vrot.slane %v3567, 4
        %v3570 = vshll.u32 %v3345, 16
        %v3572 = vrot.slane %v3570, 5
        %v3573 = vsel %vm1609, %v3568, %v3572
        %v3574 = vshrl.u32 %v3345, 16
        %v3576 = vrot.slane %v3574, 4
        %v3577 = vor.u32 %v3576, %v3572
        %v3578 = vrot.slane %v3577, 4
        %v3580 = vshll.u32 %v3346, 16
        %v3582 = vrot.slane %v3580, 5
        %v3583 = vsel %vm1609, %v3578, %v3582
        %v3585 = vshrl.u32 %v3347, 16
        %v3587 = vrot.slane %v3585, 4
        %v3588 = vshll.u32 %v3347, 16
        %v3590 = vrot.slane %v3588, 5
        %v3591 = vor.u32 %v3587, %v3590
        %v3592 = vrot.slane %v3591, 4
        %v3594 = vshll.u32 %v3348, 16
        %v3596 = vrot.slane %v3594, 5
        %v3597 = vsel %vm1609, %v3592, %v3596
        %v3598 = vshrl.u32 %v3348, 16
        %v3600 = vrot.slane %v3598, 4
        %v3601 = vor.u32 %v3600, %v3596
        %v3602 = vrot.slane %v3601, 4
        %v3604 = vshll.u32 %v3349, 16
        %v3606 = vrot.slane %v3604, 5
        %v3607 = vsel %vm1609, %v3602, %v3606
        %v3609 = vshrl.u32 %v3350, 16
        %v3611 = vrot.slane %v3609, 4
        %v3612 = vshll.u32 %v3350, 16
        %v3614 = vrot.slane %v3612, 5
        %v3615 = vor.u32 %v3611, %v3614
        %v3616 = vrot.slane %v3615, 4
        %v3618 = vshll.u32 %v3351, 16
        %v3620 = vrot.slane %v3618, 5
        %v3621 = vsel %vm1609, %v3616, %v3620
        %v3622 = vshrl.u32 %v3351, 16
        %v3624 = vrot.slane %v3622, 4
        %v3625 = vor.u32 %v3624, %v3620
        %v3626 = vrot.slane %v3625, 4
        %v3628 = vshll.u32 %v3352, 16
        %v3630 = vrot.slane %v3628, 5
        %v3631 = vsel %vm1609, %v3626, %v3630
        %v3633 = vshrl.u32 %v3353, 16
        %v3635 = vrot.slane %v3633, 4
        %v3636 = vshll.u32 %v3353, 16
        %v3638 = vrot.slane %v3636, 5
        %v3639 = vor.u32 %v3635, %v3638
        %v3640 = vrot.slane %v3639, 4
        %v3642 = vshll.u32 %v3354, 16
        %v3644 = vrot.slane %v3642, 5
        %v3645 = vsel %vm1609, %v3640, %v3644
        %v3646 = vshrl.u32 %v3354, 16
        %v3648 = vrot.slane %v3646, 4
        %v3649 = vor.u32 %v3648, %v3644
        %v3650 = vrot.slane %v3649, 4
        %v3652 = vshll.u32 %v3355, 16
        %v3654 = vrot.slane %v3652, 5
        %v3655 = vsel %vm1609, %v3650, %v3654
        %v3657 = vshrl.u32 %v3356, 16
        %v3659 = vrot.slane %v3657, 4
        %v3660 = vshll.u32 %v3356, 16
        %v3662 = vrot.slane %v3660, 5
        %v3663 = vor.u32 %v3659, %v3662
        %v3664 = vrot.slane %v3663, 4
        %v3666 = vshll.u32 %v3357, 16
        %v3668 = vrot.slane %v3666, 5
        %v3669 = vsel %vm1609, %v3664, %v3668
        %v3670 = vshrl.u32 %v3357, 16
        %v3672 = vrot.slane %v3670, 4
        %v3673 = vor.u32 %v3672, %v3668
        %v3674 = vrot.slane %v3673, 4
        %v3676 = vshll.u32 %v3358, 16
        %v3678 = vrot.slane %v3676, 5
        %v3679 = vsel %vm1609, %v3674, %v3678
        %v3681 = vshrl.u32 %v3359, 16
        %v3683 = vrot.slane %v3681, 4
        %v3684 = vshll.u32 %v3359, 16
        %v3686 = vrot.slane %v3684, 5
        %v3687 = vor.u32 %v3683, %v3686
        %v3688 = vrot.slane %v3687, 4
        %v3690 = vshll.u32 %v3360, 16
        %v3692 = vrot.slane %v3690, 5
        %v3693 = vsel %vm1609, %v3688, %v3692
        %v3694 = vshrl.u32 %v3360, 16
        %v3696 = vrot.slane %v3694, 4
        %v3697 = vor.u32 %v3696, %v3692
        %v3698 = vrot.slane %v3697, 4
        %v3700 = vshll.u32 %v3361, 16
        %v3702 = vrot.slane %v3700, 5
        %v3703 = vsel %vm1609, %v3698, %v3702
        %v3705 = vshrl.u32 %v3362, 16
        %v3707 = vrot.slane %v3705, 4
        %v3708 = vshll.u32 %v3362, 16
        %v3710 = vrot.slane %v3708, 5
        %v3711 = vor.u32 %v3707, %v3710
        %v3712 = vrot.slane %v3711, 4
        %v3714 = vshll.u32 %v3363, 16
        %v3716 = vrot.slane %v3714, 5
        %v3717 = vsel %vm1609, %v3712, %v3716
        %v3718 = vshrl.u32 %v3363, 16
        %v3720 = vrot.slane %v3718, 4
        %v3721 = vor.u32 %v3720, %v3716
        %v3722 = vrot.slane %v3721, 4
        %v3724 = vshll.u32 %v3364, 16
        %v3726 = vrot.slane %v3724, 5
        %v3727 = vsel %vm1609, %v3722, %v3726
        %v3729 = vshrl.u32 %v3365, 16
        %v3731 = vrot.slane %v3729, 4
        %v3732 = vshll.u32 %v3365, 16
        %v3734 = vrot.slane %v3732, 5
        %v3735 = vor.u32 %v3731, %v3734
        %v3736 = vrot.slane %v3735, 4
        %v3738 = vshll.u32 %v3366, 16
        %v3740 = vrot.slane %v3738, 5
        %v3741 = vsel %vm1609, %v3736, %v3740
        %v3742 = vshrl.u32 %v3366, 16
        %v3744 = vrot.slane %v3742, 4
        %v3745 = vor.u32 %v3744, %v3740
        %v3746 = vrot.slane %v3745, 4
        %v3748 = vshll.u32 %v3367, 16
        %v3750 = vrot.slane %v3748, 5
        %v3751 = vsel %vm1609, %v3746, %v3750
        %s3752 = scalar_lea.vmem [#allocation7], 40
        %v3753 = vld [vmem:[%s3752] sm:$0xf]
        %v3754 = vld [vmem:[%s3752 + $0x4] sm:$0xf]
        %v3755 = vunpack.c.l.b16 %v3381
        %v3756 = vunpack.c.l.b16 %v3391
        %v3757 = vunpack.c.l.b16 %v3405
        %v3758 = vunpack.c.l.b16 %v3415
        %v3759 = vunpack.c.l.b16 %v3429
        %v3760 = vunpack.c.l.b16 %v3439
        %v3761 = vunpack.c.l.b16 %v3453
        %v3762 = vunpack.c.l.b16 %v3463
        %v3763 = vunpack.c.l.b16 %v3477
        %v3764 = vunpack.c.l.b16 %v3487
        %v3765 = vunpack.c.l.b16 %v3501
        %v3766 = vunpack.c.l.b16 %v3511
        %v3767 = vunpack.c.l.b16 %v3525
        %v3768 = vunpack.c.l.b16 %v3535
        %v3769 = vunpack.c.l.b16 %v3549
        %v3770 = vunpack.c.l.b16 %v3559
        %v3771 = vunpack.c.l.b16 %v3573
        %v3772 = vunpack.c.l.b16 %v3583
        %v3773 = vunpack.c.l.b16 %v3597
        %v3774 = vunpack.c.l.b16 %v3607
        %v3775 = vunpack.c.l.b16 %v3621
        %v3776 = vunpack.c.l.b16 %v3631
        %v3777 = vunpack.c.l.b16 %v3645
        %v3778 = vunpack.c.l.b16 %v3655
        %v3779 = vunpack.c.l.b16 %v3669
        %v3780 = vunpack.c.l.b16 %v3679
        %v3781 = vunpack.c.l.b16 %v3693
        %v3782 = vunpack.c.l.b16 %v3703
        %v3783 = vunpack.c.l.b16 %v3717
        %v3784 = vunpack.c.l.b16 %v3727
        %v3785 = vunpack.c.l.b16 %v3741
        %v3786 = vunpack.c.l.b16 %v3751
        %v3787 = vpack.c.b16 %v3756, %v3755
        %v3788 = vpack.c.b16 %v3758, %v3757
        %v3789 = vpack.c.b16 %v3760, %v3759
        %v3790 = vpack.c.b16 %v3762, %v3761
        %v3791 = vpack.c.b16 %v3764, %v3763
        %v3792 = vpack.c.b16 %v3766, %v3765
        %v3793 = vpack.c.b16 %v3768, %v3767
        %v3794 = vpack.c.b16 %v3770, %v3769
        %v3795 = vpack.c.b16 %v3772, %v3771
        %v3796 = vpack.c.b16 %v3774, %v3773
        %v3797 = vpack.c.b16 %v3776, %v3775
        %v3798 = vpack.c.b16 %v3778, %v3777
        %v3799 = vpack.c.b16 %v3780, %v3779
        %v3800 = vpack.c.b16 %v3782, %v3781
        %v3801 = vpack.c.b16 %v3784, %v3783
        %v3802 = vpack.c.b16 %v3786, %v3785
        %v3805 = vunpack.c.l.b16 %v3753
        %v3806 = vunpack.c.l.b16 %v3754
        %v3807 = vpack.c.b16 %v3806, %v3805
        %v3810 = vsel %vm1086, %v3787, 0
        %v3813 = vsel %vm1086, %v3788, 0
        %v3816 = vsel %vm1086, %v3789, 0
        %v3819 = vsel %vm1086, %v3790, 0
        %v3822 = vsel %vm1086, %v3791, 0
        %v3825 = vsel %vm1086, %v3792, 0
        %v3828 = vsel %vm1086, %v3793, 0
        %v3831 = vsel %vm1086, %v3794, 0
        %v3834 = vsel %vm1086, %v3795, 0
        %v3837 = vsel %vm1086, %v3796, 0
        %v3840 = vsel %vm1086, %v3797, 0
        %v3843 = vsel %vm1086, %v3798, 0
        %v3846 = vsel %vm1086, %v3799, 0
        %v3849 = vsel %vm1086, %v3800, 0
        %v3852 = vsel %vm1086, %v3801, 0
        %v3855 = vsel %vm1086, %v3802, 0
        %3857 = vmatprep.subr.bf16.mxu0 0
        %3858 = vmatpush1.bf16.msra.mxu0 0
        %3859 = vmatprep.subr.bf16.mxu0 0
        %3860 = vmatpush1.bf16.msra.mxu0 0
        %3861 = vmatprep.subr.bf16.mxu0 0
        %3862 = vmatpush1.bf16.msra.mxu0 0
        %3863 = vmatprep.subr.bf16.mxu0 0
        %3864 = vmatpush1.bf16.msra.mxu0 0
        %3865 = vmatprep.subr.bf16.mxu0 0
        %3866 = vmatpush1.bf16.msra.mxu0 0
        %3867 = vmatprep.subr.bf16.mxu0 0
        %3868 = vmatpush1.bf16.msra.mxu0 0
        %3869 = vmatprep.subr.bf16.mxu0 0
        %3870 = vmatpush1.bf16.msra.mxu0 0
        %3871 = vmatprep.subr.bf16.mxu0 0
        %3872 = vmatpush1.bf16.msra.mxu0 %v3807
        %3873 = vmatprep.subr.bf16.mxu0 0
        %3874 = vmatpush2.bf16.msra.mxu0 0
        %3875 = vmatprep.subr.bf16.mxu0 0
        %3876 = vmatpush2.bf16.msra.mxu0 0
        %3877 = vmatprep.subr.bf16.mxu0 0
        %3878 = vmatpush2.bf16.msra.mxu0 0
        %3879 = vmatprep.subr.bf16.mxu0 0
        %3880 = vmatpush2.bf16.msra.mxu0 0
        %3881 = vmatprep.subr.bf16.mxu0 0
        %3882 = vmatpush2.bf16.msra.mxu0 0
        %3883 = vmatprep.subr.bf16.mxu0 0
        %3884 = vmatpush2.bf16.msra.mxu0 0
        %3885 = vmatprep.subr.bf16.mxu0 0
        %3886 = vmatpush2.bf16.msra.mxu0 0
        %3887 = vmatprep.subr.bf16.mxu0 0
        %3888 = vmatpush2.bf16.msra.mxu0 0
        %3889 = vmatprep.mubr.bf16.mxu0 0
        %3890 = vmatmul.mubr.bf16.gmra.mxu0 %v3810
        %v3891 = vpop.f32.mrf.mxu0
        %v3892 = vadd.f32 0.0, %v3891
        %v3893 = vpop.f32.mrf.mxu0
        %v3894 = vpop.f32.mrf.mxu0
        %v3895 = vadd.f32 0.0, %v3894
        %v3896 = vpop.f32.mrf.mxu0
        %3897 = vmatprep.mubr.bf16.mxu0 0
        %3898 = vmatmul.mubr.bf16.gmra.mxu0 %v3813
        %v3899 = vpop.f32.mrf.mxu0
        %v3900 = vadd.f32 0.0, %v3899
        %v3901 = vpop.f32.mrf.mxu0
        %v3902 = vpop.f32.mrf.mxu0
        %v3903 = vadd.f32 0.0, %v3902
        %v3904 = vpop.f32.mrf.mxu0
        %3905 = vmatprep.mubr.bf16.mxu0 0
        %3906 = vmatmul.mubr.bf16.gmra.mxu0 %v3816
        %v3907 = vpop.f32.mrf.mxu0
        %v3908 = vadd.f32 0.0, %v3907
        %v3909 = vpop.f32.mrf.mxu0
        %v3910 = vpop.f32.mrf.mxu0
        %v3911 = vadd.f32 0.0, %v3910
        %v3912 = vpop.f32.mrf.mxu0
        %3913 = vmatprep.mubr.bf16.mxu0 0
        %3914 = vmatmul.mubr.bf16.gmra.mxu0 %v3819
        %v3915 = vpop.f32.mrf.mxu0
        %v3916 = vadd.f32 0.0, %v3915
        %v3917 = vpop.f32.mrf.mxu0
        %v3918 = vpop.f32.mrf.mxu0
        %v3919 = vadd.f32 0.0, %v3918
        %v3920 = vpop.f32.mrf.mxu0
        %3921 = vmatprep.mubr.bf16.mxu0 0
        %3922 = vmatmul.mubr.bf16.gmra.mxu0 %v3822
        %v3923 = vpop.f32.mrf.mxu0
        %v3924 = vadd.f32 0.0, %v3923
        %v3925 = vpop.f32.mrf.mxu0
        %v3926 = vpop.f32.mrf.mxu0
        %v3927 = vadd.f32 0.0, %v3926
        %v3928 = vpop.f32.mrf.mxu0
        %3929 = vmatprep.mubr.bf16.mxu0 0
        %3930 = vmatmul.mubr.bf16.gmra.mxu0 %v3825
        %v3931 = vpop.f32.mrf.mxu0
        %v3932 = vadd.f32 0.0, %v3931
        %v3933 = vpop.f32.mrf.mxu0
        %v3934 = vpop.f32.mrf.mxu0
        %v3935 = vadd.f32 0.0, %v3934
        %v3936 = vpop.f32.mrf.mxu0
        %3937 = vmatprep.mubr.bf16.mxu0 0
        %3938 = vmatmul.mubr.bf16.gmra.mxu0 %v3828
        %v3939 = vpop.f32.mrf.mxu0
        %v3940 = vadd.f32 0.0, %v3939
        %v3941 = vpop.f32.mrf.mxu0
        %v3942 = vpop.f32.mrf.mxu0
        %v3943 = vadd.f32 0.0, %v3942
        %v3944 = vpop.f32.mrf.mxu0
        %3945 = vmatprep.mubr.bf16.mxu0 0
        %3946 = vmatmul.mubr.bf16.gmra.mxu0 %v3831
        %v3947 = vpop.f32.mrf.mxu0
        %v3948 = vadd.f32 0.0, %v3947
        %v3949 = vpop.f32.mrf.mxu0
        %v3950 = vpop.f32.mrf.mxu0
        %v3951 = vadd.f32 0.0, %v3950
        %v3952 = vpop.f32.mrf.mxu0
        %3953 = vmatprep.mubr.bf16.mxu0 0
        %3954 = vmatmul.mubr.bf16.gmra.mxu0 %v3834
        %v3955 = vpop.f32.mrf.mxu0
        %v3956 = vadd.f32 0.0, %v3955
        %v3957 = vpop.f32.mrf.mxu0
        %v3958 = vpop.f32.mrf.mxu0
        %v3959 = vadd.f32 0.0, %v3958
        %v3960 = vpop.f32.mrf.mxu0
        %3961 = vmatprep.mubr.bf16.mxu0 0
        %3962 = vmatmul.mubr.bf16.gmra.mxu0 %v3837
        %v3963 = vpop.f32.mrf.mxu0
        %v3964 = vadd.f32 0.0, %v3963
        %v3965 = vpop.f32.mrf.mxu0
        %v3966 = vpop.f32.mrf.mxu0
        %v3967 = vadd.f32 0.0, %v3966
        %v3968 = vpop.f32.mrf.mxu0
        %3969 = vmatprep.mubr.bf16.mxu0 0
        %3970 = vmatmul.mubr.bf16.gmra.mxu0 %v3840
        %v3971 = vpop.f32.mrf.mxu0
        %v3972 = vadd.f32 0.0, %v3971
        %v3973 = vpop.f32.mrf.mxu0
        %v3974 = vpop.f32.mrf.mxu0
        %v3975 = vadd.f32 0.0, %v3974
        %v3976 = vpop.f32.mrf.mxu0
        %3977 = vmatprep.mubr.bf16.mxu0 0
        %3978 = vmatmul.mubr.bf16.gmra.mxu0 %v3843
        %v3979 = vpop.f32.mrf.mxu0
        %v3980 = vadd.f32 0.0, %v3979
        %v3981 = vpop.f32.mrf.mxu0
        %v3982 = vpop.f32.mrf.mxu0
        %v3983 = vadd.f32 0.0, %v3982
        %v3984 = vpop.f32.mrf.mxu0
        %3985 = vmatprep.mubr.bf16.mxu0 0
        %3986 = vmatmul.mubr.bf16.gmra.mxu0 %v3846
        %v3987 = vpop.f32.mrf.mxu0
        %v3988 = vadd.f32 0.0, %v3987
        %v3989 = vpop.f32.mrf.mxu0
        %v3990 = vpop.f32.mrf.mxu0
        %v3991 = vadd.f32 0.0, %v3990
        %v3992 = vpop.f32.mrf.mxu0
        %3993 = vmatprep.mubr.bf16.mxu0 0
        %3994 = vmatmul.mubr.bf16.gmra.mxu0 %v3849
        %v3995 = vpop.f32.mrf.mxu0
        %v3996 = vadd.f32 0.0, %v3995
        %v3997 = vpop.f32.mrf.mxu0
        %v3998 = vpop.f32.mrf.mxu0
        %v3999 = vadd.f32 0.0, %v3998
        %v4000 = vpop.f32.mrf.mxu0
        %4001 = vmatprep.mubr.bf16.mxu0 0
        %4002 = vmatmul.mubr.bf16.gmra.mxu0 %v3852
        %v4003 = vpop.f32.mrf.mxu0
        %v4004 = vadd.f32 0.0, %v4003
        %v4005 = vpop.f32.mrf.mxu0
        %v4006 = vpop.f32.mrf.mxu0
        %v4007 = vadd.f32 0.0, %v4006
        %v4008 = vpop.f32.mrf.mxu0
        %4009 = vmatprep.mubr.bf16.mxu0 0
        %4010 = vmatmul.mubr.bf16.gmra.mxu0 %v3855
        %v4011 = vpop.f32.mrf.mxu0
        %v4012 = vadd.f32 0.0, %v4011
        %v4013 = vpop.f32.mrf.mxu0
        %v4014 = vpop.f32.mrf.mxu0
        %v4015 = vadd.f32 0.0, %v4014
        %v4016 = vpop.f32.mrf.mxu0
        %4017 = vdwg.mxu0
        %v4018 = vadd.f32 %v3288, %v3892
        %v4019 = vadd.f32 %v3289, %v3895
        %v4020 = vadd.f32 %v3290, %v3900
        %v4021 = vadd.f32 %v3291, %v3903
        %v4022 = vadd.f32 %v3292, %v3908
        %v4023 = vadd.f32 %v3293, %v3911
        %v4024 = vadd.f32 %v3294, %v3916
        %v4025 = vadd.f32 %v3295, %v3919
        %v4026 = vadd.f32 %v3296, %v3924
        %v4027 = vadd.f32 %v3297, %v3927
        %v4028 = vadd.f32 %v3298, %v3932
        %v4029 = vadd.f32 %v3299, %v3935
        %v4030 = vadd.f32 %v3300, %v3940
        %v4031 = vadd.f32 %v3301, %v3943
        %v4032 = vadd.f32 %v3302, %v3948
        %v4033 = vadd.f32 %v3303, %v3951
        %v4034 = vadd.f32 %v3304, %v3956
        %v4035 = vadd.f32 %v3305, %v3959
        %v4036 = vadd.f32 %v3306, %v3964
        %v4037 = vadd.f32 %v3307, %v3967
        %v4038 = vadd.f32 %v3308, %v3972
        %v4039 = vadd.f32 %v3309, %v3975
        %v4040 = vadd.f32 %v3310, %v3980
        %v4041 = vadd.f32 %v3311, %v3983
        %v4042 = vadd.f32 %v3312, %v3988
        %v4043 = vadd.f32 %v3313, %v3991
        %v4044 = vadd.f32 %v3314, %v3996
        %v4045 = vadd.f32 %v3315, %v3999
        %v4046 = vadd.f32 %v3316, %v4004
        %v4047 = vadd.f32 %v3317, %v4007
        %v4048 = vadd.f32 %v3318, %v4012
        %v4049 = vadd.f32 %v3319, %v4015
        %s4050 = scalar_lea.vmem [#allocation2], 32
        %v4051 = vld [vmem:[%s4050] sm:$0x8]
        %v4052 = vld [vmem:[%s4050 + $0x4] sm:$0xf]
        %v4053 = vld [vmem:[%s4050 + $0x8] sm:$0xf]
        %v4054 = vld [vmem:[%s4050 + $0x10] sm:$0x8]
        %v4055 = vld [vmem:[%s4050 + $0x14] sm:$0xf]
        %v4056 = vld [vmem:[%s4050 + $0x18] sm:$0xf]
        %v4057 = vld [vmem:[%s4050 + $0x20] sm:$0x8]
        %v4058 = vld [vmem:[%s4050 + $0x24] sm:$0xf]
        %v4059 = vld [vmem:[%s4050 + $0x28] sm:$0xf]
        %v4060 = vld [vmem:[%s4050 + $0x30] sm:$0x8]
        %v4061 = vld [vmem:[%s4050 + $0x34] sm:$0xf]
        %v4062 = vld [vmem:[%s4050 + $0x38] sm:$0xf]
        %v4063 = vld [vmem:[%s4050 + $0x40] sm:$0x8]
        %v4064 = vld [vmem:[%s4050 + $0x44] sm:$0xf]
        %v4065 = vld [vmem:[%s4050 + $0x48] sm:$0xf]
        %v4066 = vld [vmem:[%s4050 + $0x50] sm:$0x8]
        %v4067 = vld [vmem:[%s4050 + $0x54] sm:$0xf]
        %v4068 = vld [vmem:[%s4050 + $0x58] sm:$0xf]
        %v4069 = vld [vmem:[%s4050 + $0x60] sm:$0x8]
        %v4070 = vld [vmem:[%s4050 + $0x64] sm:$0xf]
        %v4071 = vld [vmem:[%s4050 + $0x68] sm:$0xf]
        %v4072 = vld [vmem:[%s4050 + $0x70] sm:$0x8]
        %v4073 = vld [vmem:[%s4050 + $0x74] sm:$0xf]
        %v4074 = vld [vmem:[%s4050 + $0x78] sm:$0xf]
        %v4075 = vld [vmem:[%s4050 + $0x80] sm:$0x8]
        %v4076 = vld [vmem:[%s4050 + $0x84] sm:$0xf]
        %v4077 = vld [vmem:[%s4050 + $0x88] sm:$0xf]
        %v4078 = vld [vmem:[%s4050 + $0x90] sm:$0x8]
        %v4079 = vld [vmem:[%s4050 + $0x94] sm:$0xf]
        %v4080 = vld [vmem:[%s4050 + $0x98] sm:$0xf]
        %v4081 = vld [vmem:[%s4050 + $0xa0] sm:$0x8]
        %v4082 = vld [vmem:[%s4050 + $0xa4] sm:$0xf]
        %v4083 = vld [vmem:[%s4050 + $0xa8] sm:$0xf]
        %v4084 = vld [vmem:[%s4050 + $0xb0] sm:$0x8]
        %v4085 = vld [vmem:[%s4050 + $0xb4] sm:$0xf]
        %v4086 = vld [vmem:[%s4050 + $0xb8] sm:$0xf]
        %v4087 = vld [vmem:[%s4050 + $0xc0] sm:$0x8]
        %v4088 = vld [vmem:[%s4050 + $0xc4] sm:$0xf]
        %v4089 = vld [vmem:[%s4050 + $0xc8] sm:$0xf]
        %v4090 = vld [vmem:[%s4050 + $0xd0] sm:$0x8]
        %v4091 = vld [vmem:[%s4050 + $0xd4] sm:$0xf]
        %v4092 = vld [vmem:[%s4050 + $0xd8] sm:$0xf]
        %v4093 = vld [vmem:[%s4050 + $0xe0] sm:$0x8]
        %v4094 = vld [vmem:[%s4050 + $0xe4] sm:$0xf]
        %v4095 = vld [vmem:[%s4050 + $0xe8] sm:$0xf]
        %v4096 = vld [vmem:[%s4050 + $0xf0] sm:$0x8]
        %v4097 = vld [vmem:[%s4050 + $0xf4] sm:$0xf]
        %v4098 = vld [vmem:[%s4050 + $0xf8] sm:$0xf]
        %v4100 = vshrl.u32 %v4051, 16
        %v4102 = vrot.slane %v4100, 7
        %v4103 = vrot.slane %v4102, 4
        %v4105 = vshrl.u32 %v4052, 16
        %v4107 = vrot.slane %v4105, 7
        %v4108 = vshll.u32 %v4052, 16
        %v4110 = vor.u32 %v4107, %v4108
        %v4111 = vsel %vm642, %v4103, %v4110
        %v4112 = vrot.slane %v4107, 4
        %v4114 = vshrl.u32 %v4053, 16
        %v4116 = vrot.slane %v4114, 7
        %v4117 = vshll.u32 %v4053, 16
        %v4119 = vor.u32 %v4116, %v4117
        %v4120 = vsel %vm642, %v4112, %v4119
        %v4122 = vshrl.u32 %v4054, 16
        %v4124 = vrot.slane %v4122, 7
        %v4125 = vrot.slane %v4124, 4
        %v4127 = vshrl.u32 %v4055, 16
        %v4129 = vrot.slane %v4127, 7
        %v4130 = vshll.u32 %v4055, 16
        %v4132 = vor.u32 %v4129, %v4130
        %v4133 = vsel %vm642, %v4125, %v4132
        %v4134 = vrot.slane %v4129, 4
        %v4136 = vshrl.u32 %v4056, 16
        %v4138 = vrot.slane %v4136, 7
        %v4139 = vshll.u32 %v4056, 16
        %v4141 = vor.u32 %v4138, %v4139
        %v4142 = vsel %vm642, %v4134, %v4141
        %v4144 = vshrl.u32 %v4057, 16
        %v4146 = vrot.slane %v4144, 7
        %v4147 = vrot.slane %v4146, 4
        %v4149 = vshrl.u32 %v4058, 16
        %v4151 = vrot.slane %v4149, 7
        %v4152 = vshll.u32 %v4058, 16
        %v4154 = vor.u32 %v4151, %v4152
        %v4155 = vsel %vm642, %v4147, %v4154
        %v4156 = vrot.slane %v4151, 4
        %v4158 = vshrl.u32 %v4059, 16
        %v4160 = vrot.slane %v4158, 7
        %v4161 = vshll.u32 %v4059, 16
        %v4163 = vor.u32 %v4160, %v4161
        %v4164 = vsel %vm642, %v4156, %v4163
        %v4166 = vshrl.u32 %v4060, 16
        %v4168 = vrot.slane %v4166, 7
        %v4169 = vrot.slane %v4168, 4
        %v4171 = vshrl.u32 %v4061, 16
        %v4173 = vrot.slane %v4171, 7
        %v4174 = vshll.u32 %v4061, 16
        %v4176 = vor.u32 %v4173, %v4174
        %v4177 = vsel %vm642, %v4169, %v4176
        %v4178 = vrot.slane %v4173, 4
        %v4180 = vshrl.u32 %v4062, 16
        %v4182 = vrot.slane %v4180, 7
        %v4183 = vshll.u32 %v4062, 16
        %v4185 = vor.u32 %v4182, %v4183
        %v4186 = vsel %vm642, %v4178, %v4185
        %v4188 = vshrl.u32 %v4063, 16
        %v4190 = vrot.slane %v4188, 7
        %v4191 = vrot.slane %v4190, 4
        %v4193 = vshrl.u32 %v4064, 16
        %v4195 = vrot.slane %v4193, 7
        %v4196 = vshll.u32 %v4064, 16
        %v4198 = vor.u32 %v4195, %v4196
        %v4199 = vsel %vm642, %v4191, %v4198
        %v4200 = vrot.slane %v4195, 4
        %v4202 = vshrl.u32 %v4065, 16
        %v4204 = vrot.slane %v4202, 7
        %v4205 = vshll.u32 %v4065, 16
        %v4207 = vor.u32 %v4204, %v4205
        %v4208 = vsel %vm642, %v4200, %v4207
        %v4210 = vshrl.u32 %v4066, 16
        %v4212 = vrot.slane %v4210, 7
        %v4213 = vrot.slane %v4212, 4
        %v4215 = vshrl.u32 %v4067, 16
        %v4217 = vrot.slane %v4215, 7
        %v4218 = vshll.u32 %v4067, 16
        %v4220 = vor.u32 %v4217, %v4218
        %v4221 = vsel %vm642, %v4213, %v4220
        %v4222 = vrot.slane %v4217, 4
        %v4224 = vshrl.u32 %v4068, 16
        %v4226 = vrot.slane %v4224, 7
        %v4227 = vshll.u32 %v4068, 16
        %v4229 = vor.u32 %v4226, %v4227
        %v4230 = vsel %vm642, %v4222, %v4229
        %v4232 = vshrl.u32 %v4069, 16
        %v4234 = vrot.slane %v4232, 7
        %v4235 = vrot.slane %v4234, 4
        %v4237 = vshrl.u32 %v4070, 16
        %v4239 = vrot.slane %v4237, 7
        %v4240 = vshll.u32 %v4070, 16
        %v4242 = vor.u32 %v4239, %v4240
        %v4243 = vsel %vm642, %v4235, %v4242
        %v4244 = vrot.slane %v4239, 4
        %v4246 = vshrl.u32 %v4071, 16
        %v4248 = vrot.slane %v4246, 7
        %v4249 = vshll.u32 %v4071, 16
        %v4251 = vor.u32 %v4248, %v4249
        %v4252 = vsel %vm642, %v4244, %v4251
        %v4254 = vshrl.u32 %v4072, 16
        %v4256 = vrot.slane %v4254, 7
        %v4257 = vrot.slane %v4256, 4
        %v4259 = vshrl.u32 %v4073, 16
        %v4261 = vrot.slane %v4259, 7
        %v4262 = vshll.u32 %v4073, 16
        %v4264 = vor.u32 %v4261, %v4262
        %v4265 = vsel %vm642, %v4257, %v4264
        %v4266 = vrot.slane %v4261, 4
        %v4268 = vshrl.u32 %v4074, 16
        %v4270 = vrot.slane %v4268, 7
        %v4271 = vshll.u32 %v4074, 16
        %v4273 = vor.u32 %v4270, %v4271
        %v4274 = vsel %vm642, %v4266, %v4273
        %v4276 = vshrl.u32 %v4075, 16
        %v4278 = vrot.slane %v4276, 7
        %v4279 = vrot.slane %v4278, 4
        %v4281 = vshrl.u32 %v4076, 16
        %v4283 = vrot.slane %v4281, 7
        %v4284 = vshll.u32 %v4076, 16
        %v4286 = vor.u32 %v4283, %v4284
        %v4287 = vsel %vm642, %v4279, %v4286
        %v4288 = vrot.slane %v4283, 4
        %v4290 = vshrl.u32 %v4077, 16
        %v4292 = vrot.slane %v4290, 7
        %v4293 = vshll.u32 %v4077, 16
        %v4295 = vor.u32 %v4292, %v4293
        %v4296 = vsel %vm642, %v4288, %v4295
        %v4298 = vshrl.u32 %v4078, 16
        %v4300 = vrot.slane %v4298, 7
        %v4301 = vrot.slane %v4300, 4
        %v4303 = vshrl.u32 %v4079, 16
        %v4305 = vrot.slane %v4303, 7
        %v4306 = vshll.u32 %v4079, 16
        %v4308 = vor.u32 %v4305, %v4306
        %v4309 = vsel %vm642, %v4301, %v4308
        %v4310 = vrot.slane %v4305, 4
        %v4312 = vshrl.u32 %v4080, 16
        %v4314 = vrot.slane %v4312, 7
        %v4315 = vshll.u32 %v4080, 16
        %v4317 = vor.u32 %v4314, %v4315
        %v4318 = vsel %vm642, %v4310, %v4317
        %v4320 = vshrl.u32 %v4081, 16
        %v4322 = vrot.slane %v4320, 7
        %v4323 = vrot.slane %v4322, 4
        %v4325 = vshrl.u32 %v4082, 16
        %v4327 = vrot.slane %v4325, 7
        %v4328 = vshll.u32 %v4082, 16
        %v4330 = vor.u32 %v4327, %v4328
        %v4331 = vsel %vm642, %v4323, %v4330
        %v4332 = vrot.slane %v4327, 4
        %v4334 = vshrl.u32 %v4083, 16
        %v4336 = vrot.slane %v4334, 7
        %v4337 = vshll.u32 %v4083, 16
        %v4339 = vor.u32 %v4336, %v4337
        %v4340 = vsel %vm642, %v4332, %v4339
        %v4342 = vshrl.u32 %v4084, 16
        %v4344 = vrot.slane %v4342, 7
        %v4345 = vrot.slane %v4344, 4
        %v4347 = vshrl.u32 %v4085, 16
        %v4349 = vrot.slane %v4347, 7
        %v4350 = vshll.u32 %v4085, 16
        %v4352 = vor.u32 %v4349, %v4350
        %v4353 = vsel %vm642, %v4345, %v4352
        %v4354 = vrot.slane %v4349, 4
        %v4356 = vshrl.u32 %v4086, 16
        %v4358 = vrot.slane %v4356, 7
        %v4359 = vshll.u32 %v4086, 16
        %v4361 = vor.u32 %v4358, %v4359
        %v4362 = vsel %vm642, %v4354, %v4361
        %v4364 = vshrl.u32 %v4087, 16
        %v4366 = vrot.slane %v4364, 7
        %v4367 = vrot.slane %v4366, 4
        %v4369 = vshrl.u32 %v4088, 16
        %v4371 = vrot.slane %v4369, 7
        %v4372 = vshll.u32 %v4088, 16
        %v4374 = vor.u32 %v4371, %v4372
        %v4375 = vsel %vm642, %v4367, %v4374
        %v4376 = vrot.slane %v4371, 4
        %v4378 = vshrl.u32 %v4089, 16
        %v4380 = vrot.slane %v4378, 7
        %v4381 = vshll.u32 %v4089, 16
        %v4383 = vor.u32 %v4380, %v4381
        %v4384 = vsel %vm642, %v4376, %v4383
        %v4386 = vshrl.u32 %v4090, 16
        %v4388 = vrot.slane %v4386, 7
        %v4389 = vrot.slane %v4388, 4
        %v4391 = vshrl.u32 %v4091, 16
        %v4393 = vrot.slane %v4391, 7
        %v4394 = vshll.u32 %v4091, 16
        %v4396 = vor.u32 %v4393, %v4394
        %v4397 = vsel %vm642, %v4389, %v4396
        %v4398 = vrot.slane %v4393, 4
        %v4400 = vshrl.u32 %v4092, 16
        %v4402 = vrot.slane %v4400, 7
        %v4403 = vshll.u32 %v4092, 16
        %v4405 = vor.u32 %v4402, %v4403
        %v4406 = vsel %vm642, %v4398, %v4405
        %v4408 = vshrl.u32 %v4093, 16
        %v4410 = vrot.slane %v4408, 7
        %v4411 = vrot.slane %v4410, 4
        %v4413 = vshrl.u32 %v4094, 16
        %v4415 = vrot.slane %v4413, 7
        %v4416 = vshll.u32 %v4094, 16
        %v4418 = vor.u32 %v4415, %v4416
        %v4419 = vsel %vm642, %v4411, %v4418
        %v4420 = vrot.slane %v4415, 4
        %v4422 = vshrl.u32 %v4095, 16
        %v4424 = vrot.slane %v4422, 7
        %v4425 = vshll.u32 %v4095, 16
        %v4427 = vor.u32 %v4424, %v4425
        %v4428 = vsel %vm642, %v4420, %v4427
        %v4430 = vshrl.u32 %v4096, 16
        %v4432 = vrot.slane %v4430, 7
        %v4433 = vrot.slane %v4432, 4
        %v4435 = vshrl.u32 %v4097, 16
        %v4437 = vrot.slane %v4435, 7
        %v4438 = vshll.u32 %v4097, 16
        %v4440 = vor.u32 %v4437, %v4438
        %v4441 = vsel %vm642, %v4433, %v4440
        %v4442 = vrot.slane %v4437, 4
        %v4444 = vshrl.u32 %v4098, 16
        %v4446 = vrot.slane %v4444, 7
        %v4447 = vshll.u32 %v4098, 16
        %v4449 = vor.u32 %v4446, %v4447
        %v4450 = vsel %vm642, %v4442, %v4449
        %s4451 = scalar_lea.vmem [#allocation7], 48
        %v4452 = vld [vmem:[%s4451] sm:$0xf]
        %v4453 = vld [vmem:[%s4451 + $0x4] sm:$0xf]
        %v4454 = vunpack.c.l.b16 %v4111
        %v4455 = vunpack.c.l.b16 %v4120
        %v4456 = vunpack.c.l.b16 %v4133
        %v4457 = vunpack.c.l.b16 %v4142
        %v4458 = vunpack.c.l.b16 %v4155
        %v4459 = vunpack.c.l.b16 %v4164
        %v4460 = vunpack.c.l.b16 %v4177
        %v4461 = vunpack.c.l.b16 %v4186
        %v4462 = vunpack.c.l.b16 %v4199
        %v4463 = vunpack.c.l.b16 %v4208
        %v4464 = vunpack.c.l.b16 %v4221
        %v4465 = vunpack.c.l.b16 %v4230
        %v4466 = vunpack.c.l.b16 %v4243
        %v4467 = vunpack.c.l.b16 %v4252
        %v4468 = vunpack.c.l.b16 %v4265
        %v4469 = vunpack.c.l.b16 %v4274
        %v4470 = vunpack.c.l.b16 %v4287
        %v4471 = vunpack.c.l.b16 %v4296
        %v4472 = vunpack.c.l.b16 %v4309
        %v4473 = vunpack.c.l.b16 %v4318
        %v4474 = vunpack.c.l.b16 %v4331
        %v4475 = vunpack.c.l.b16 %v4340
        %v4476 = vunpack.c.l.b16 %v4353
        %v4477 = vunpack.c.l.b16 %v4362
        %v4478 = vunpack.c.l.b16 %v4375
        %v4479 = vunpack.c.l.b16 %v4384
        %v4480 = vunpack.c.l.b16 %v4397
        %v4481 = vunpack.c.l.b16 %v4406
        %v4482 = vunpack.c.l.b16 %v4419
        %v4483 = vunpack.c.l.b16 %v4428
        %v4484 = vunpack.c.l.b16 %v4441
        %v4485 = vunpack.c.l.b16 %v4450
        %v4486 = vpack.c.b16 %v4455, %v4454
        %v4487 = vpack.c.b16 %v4457, %v4456
        %v4488 = vpack.c.b16 %v4459, %v4458
        %v4489 = vpack.c.b16 %v4461, %v4460
        %v4490 = vpack.c.b16 %v4463, %v4462
        %v4491 = vpack.c.b16 %v4465, %v4464
        %v4492 = vpack.c.b16 %v4467, %v4466
        %v4493 = vpack.c.b16 %v4469, %v4468
        %v4494 = vpack.c.b16 %v4471, %v4470
        %v4495 = vpack.c.b16 %v4473, %v4472
        %v4496 = vpack.c.b16 %v4475, %v4474
        %v4497 = vpack.c.b16 %v4477, %v4476
        %v4498 = vpack.c.b16 %v4479, %v4478
        %v4499 = vpack.c.b16 %v4481, %v4480
        %v4500 = vpack.c.b16 %v4483, %v4482
        %v4501 = vpack.c.b16 %v4485, %v4484
        %v4504 = vunpack.c.l.b16 %v4452
        %v4505 = vunpack.c.l.b16 %v4453
        %v4506 = vpack.c.b16 %v4505, %v4504
        %v4509 = vsel %vm1086, %v4486, 0
        %v4512 = vsel %vm1086, %v4487, 0
        %v4515 = vsel %vm1086, %v4488, 0
        %v4518 = vsel %vm1086, %v4489, 0
        %v4521 = vsel %vm1086, %v4490, 0
        %v4524 = vsel %vm1086, %v4491, 0
        %v4527 = vsel %vm1086, %v4492, 0
        %v4530 = vsel %vm1086, %v4493, 0
        %v4533 = vsel %vm1086, %v4494, 0
        %v4536 = vsel %vm1086, %v4495, 0
        %v4539 = vsel %vm1086, %v4496, 0
        %v4542 = vsel %vm1086, %v4497, 0
        %v4545 = vsel %vm1086, %v4498, 0
        %v4548 = vsel %vm1086, %v4499, 0
        %v4551 = vsel %vm1086, %v4500, 0
        %v4554 = vsel %vm1086, %v4501, 0
        %4556 = vmatprep.subr.bf16.mxu0 0
        %4557 = vmatpush1.bf16.msra.mxu0 0
        %4558 = vmatprep.subr.bf16.mxu0 0
        %4559 = vmatpush1.bf16.msra.mxu0 0
        %4560 = vmatprep.subr.bf16.mxu0 0
        %4561 = vmatpush1.bf16.msra.mxu0 0
        %4562 = vmatprep.subr.bf16.mxu0 0
        %4563 = vmatpush1.bf16.msra.mxu0 0
        %4564 = vmatprep.subr.bf16.mxu0 0
        %4565 = vmatpush1.bf16.msra.mxu0 0
        %4566 = vmatprep.subr.bf16.mxu0 0
        %4567 = vmatpush1.bf16.msra.mxu0 0
        %4568 = vmatprep.subr.bf16.mxu0 0
        %4569 = vmatpush1.bf16.msra.mxu0 0
        %4570 = vmatprep.subr.bf16.mxu0 0
        %4571 = vmatpush1.bf16.msra.mxu0 %v4506
        %4572 = vmatprep.subr.bf16.mxu0 0
        %4573 = vmatpush2.bf16.msra.mxu0 0
        %4574 = vmatprep.subr.bf16.mxu0 0
        %4575 = vmatpush2.bf16.msra.mxu0 0
        %4576 = vmatprep.subr.bf16.mxu0 0
        %4577 = vmatpush2.bf16.msra.mxu0 0
        %4578 = vmatprep.subr.bf16.mxu0 0
        %4579 = vmatpush2.bf16.msra.mxu0 0
        %4580 = vmatprep.subr.bf16.mxu0 0
        %4581 = vmatpush2.bf16.msra.mxu0 0
        %4582 = vmatprep.subr.bf16.mxu0 0
        %4583 = vmatpush2.bf16.msra.mxu0 0
        %4584 = vmatprep.subr.bf16.mxu0 0
        %4585 = vmatpush2.bf16.msra.mxu0 0
        %4586 = vmatprep.subr.bf16.mxu0 0
        %4587 = vmatpush2.bf16.msra.mxu0 0
        %4588 = vmatprep.mubr.bf16.mxu0 0
        %4589 = vmatmul.mubr.bf16.gmra.mxu0 %v4509
        %v4590 = vpop.f32.mrf.mxu0
        %v4591 = vadd.f32 0.0, %v4590
        %v4592 = vpop.f32.mrf.mxu0
        %v4593 = vpop.f32.mrf.mxu0
        %v4594 = vadd.f32 0.0, %v4593
        %v4595 = vpop.f32.mrf.mxu0
        %4596 = vmatprep.mubr.bf16.mxu0 0
        %4597 = vmatmul.mubr.bf16.gmra.mxu0 %v4512
        %v4598 = vpop.f32.mrf.mxu0
        %v4599 = vadd.f32 0.0, %v4598
        %v4600 = vpop.f32.mrf.mxu0
        %v4601 = vpop.f32.mrf.mxu0
        %v4602 = vadd.f32 0.0, %v4601
        %v4603 = vpop.f32.mrf.mxu0
        %4604 = vmatprep.mubr.bf16.mxu0 0
        %4605 = vmatmul.mubr.bf16.gmra.mxu0 %v4515
        %v4606 = vpop.f32.mrf.mxu0
        %v4607 = vadd.f32 0.0, %v4606
        %v4608 = vpop.f32.mrf.mxu0
        %v4609 = vpop.f32.mrf.mxu0
        %v4610 = vadd.f32 0.0, %v4609
        %v4611 = vpop.f32.mrf.mxu0
        %4612 = vmatprep.mubr.bf16.mxu0 0
        %4613 = vmatmul.mubr.bf16.gmra.mxu0 %v4518
        %v4614 = vpop.f32.mrf.mxu0
        %v4615 = vadd.f32 0.0, %v4614
        %v4616 = vpop.f32.mrf.mxu0
        %v4617 = vpop.f32.mrf.mxu0
        %v4618 = vadd.f32 0.0, %v4617
        %v4619 = vpop.f32.mrf.mxu0
        %4620 = vmatprep.mubr.bf16.mxu0 0
        %4621 = vmatmul.mubr.bf16.gmra.mxu0 %v4521
        %v4622 = vpop.f32.mrf.mxu0
        %v4623 = vadd.f32 0.0, %v4622
        %v4624 = vpop.f32.mrf.mxu0
        %v4625 = vpop.f32.mrf.mxu0
        %v4626 = vadd.f32 0.0, %v4625
        %v4627 = vpop.f32.mrf.mxu0
        %4628 = vmatprep.mubr.bf16.mxu0 0
        %4629 = vmatmul.mubr.bf16.gmra.mxu0 %v4524
        %v4630 = vpop.f32.mrf.mxu0
        %v4631 = vadd.f32 0.0, %v4630
        %v4632 = vpop.f32.mrf.mxu0
        %v4633 = vpop.f32.mrf.mxu0
        %v4634 = vadd.f32 0.0, %v4633
        %v4635 = vpop.f32.mrf.mxu0
        %4636 = vmatprep.mubr.bf16.mxu0 0
        %4637 = vmatmul.mubr.bf16.gmra.mxu0 %v4527
        %v4638 = vpop.f32.mrf.mxu0
        %v4639 = vadd.f32 0.0, %v4638
        %v4640 = vpop.f32.mrf.mxu0
        %v4641 = vpop.f32.mrf.mxu0
        %v4642 = vadd.f32 0.0, %v4641
        %v4643 = vpop.f32.mrf.mxu0
        %4644 = vmatprep.mubr.bf16.mxu0 0
        %4645 = vmatmul.mubr.bf16.gmra.mxu0 %v4530
        %v4646 = vpop.f32.mrf.mxu0
        %v4647 = vadd.f32 0.0, %v4646
        %v4648 = vpop.f32.mrf.mxu0
        %v4649 = vpop.f32.mrf.mxu0
        %v4650 = vadd.f32 0.0, %v4649
        %v4651 = vpop.f32.mrf.mxu0
        %4652 = vmatprep.mubr.bf16.mxu0 0
        %4653 = vmatmul.mubr.bf16.gmra.mxu0 %v4533
        %v4654 = vpop.f32.mrf.mxu0
        %v4655 = vadd.f32 0.0, %v4654
        %v4656 = vpop.f32.mrf.mxu0
        %v4657 = vpop.f32.mrf.mxu0
        %v4658 = vadd.f32 0.0, %v4657
        %v4659 = vpop.f32.mrf.mxu0
        %4660 = vmatprep.mubr.bf16.mxu0 0
        %4661 = vmatmul.mubr.bf16.gmra.mxu0 %v4536
        %v4662 = vpop.f32.mrf.mxu0
        %v4663 = vadd.f32 0.0, %v4662
        %v4664 = vpop.f32.mrf.mxu0
        %v4665 = vpop.f32.mrf.mxu0
        %v4666 = vadd.f32 0.0, %v4665
        %v4667 = vpop.f32.mrf.mxu0
        %4668 = vmatprep.mubr.bf16.mxu0 0
        %4669 = vmatmul.mubr.bf16.gmra.mxu0 %v4539
        %v4670 = vpop.f32.mrf.mxu0
        %v4671 = vadd.f32 0.0, %v4670
        %v4672 = vpop.f32.mrf.mxu0
        %v4673 = vpop.f32.mrf.mxu0
        %v4674 = vadd.f32 0.0, %v4673
        %v4675 = vpop.f32.mrf.mxu0
        %4676 = vmatprep.mubr.bf16.mxu0 0
        %4677 = vmatmul.mubr.bf16.gmra.mxu0 %v4542
        %v4678 = vpop.f32.mrf.mxu0
        %v4679 = vadd.f32 0.0, %v4678
        %v4680 = vpop.f32.mrf.mxu0
        %v4681 = vpop.f32.mrf.mxu0
        %v4682 = vadd.f32 0.0, %v4681
        %v4683 = vpop.f32.mrf.mxu0
        %4684 = vmatprep.mubr.bf16.mxu0 0
        %4685 = vmatmul.mubr.bf16.gmra.mxu0 %v4545
        %v4686 = vpop.f32.mrf.mxu0
        %v4687 = vadd.f32 0.0, %v4686
        %v4688 = vpop.f32.mrf.mxu0
        %v4689 = vpop.f32.mrf.mxu0
        %v4690 = vadd.f32 0.0, %v4689
        %v4691 = vpop.f32.mrf.mxu0
        %4692 = vmatprep.mubr.bf16.mxu0 0
        %4693 = vmatmul.mubr.bf16.gmra.mxu0 %v4548
        %v4694 = vpop.f32.mrf.mxu0
        %v4695 = vadd.f32 0.0, %v4694
        %v4696 = vpop.f32.mrf.mxu0
        %v4697 = vpop.f32.mrf.mxu0
        %v4698 = vadd.f32 0.0, %v4697
        %v4699 = vpop.f32.mrf.mxu0
        %4700 = vmatprep.mubr.bf16.mxu0 0
        %4701 = vmatmul.mubr.bf16.gmra.mxu0 %v4551
        %v4702 = vpop.f32.mrf.mxu0
        %v4703 = vadd.f32 0.0, %v4702
        %v4704 = vpop.f32.mrf.mxu0
        %v4705 = vpop.f32.mrf.mxu0
        %v4706 = vadd.f32 0.0, %v4705
        %v4707 = vpop.f32.mrf.mxu0
        %4708 = vmatprep.mubr.bf16.mxu0 0
        %4709 = vmatmul.mubr.bf16.gmra.mxu0 %v4554
        %v4710 = vpop.f32.mrf.mxu0
        %v4711 = vadd.f32 0.0, %v4710
        %v4712 = vpop.f32.mrf.mxu0
        %v4713 = vpop.f32.mrf.mxu0
        %v4714 = vadd.f32 0.0, %v4713
        %v4715 = vpop.f32.mrf.mxu0
        %4716 = vdwg.mxu0
        %v4717 = vadd.f32 %v4018, %v4591
        %v4718 = vadd.f32 %v4019, %v4594
        %v4719 = vadd.f32 %v4020, %v4599
        %v4720 = vadd.f32 %v4021, %v4602
        %v4721 = vadd.f32 %v4022, %v4607
        %v4722 = vadd.f32 %v4023, %v4610
        %v4723 = vadd.f32 %v4024, %v4615
        %v4724 = vadd.f32 %v4025, %v4618
        %v4725 = vadd.f32 %v4026, %v4623
        %v4726 = vadd.f32 %v4027, %v4626
        %v4727 = vadd.f32 %v4028, %v4631
        %v4728 = vadd.f32 %v4029, %v4634
        %v4729 = vadd.f32 %v4030, %v4639
        %v4730 = vadd.f32 %v4031, %v4642
        %v4731 = vadd.f32 %v4032, %v4647
        %v4732 = vadd.f32 %v4033, %v4650
        %v4733 = vadd.f32 %v4034, %v4655
        %v4734 = vadd.f32 %v4035, %v4658
        %v4735 = vadd.f32 %v4036, %v4663
        %v4736 = vadd.f32 %v4037, %v4666
        %v4737 = vadd.f32 %v4038, %v4671
        %v4738 = vadd.f32 %v4039, %v4674
        %v4739 = vadd.f32 %v4040, %v4679
        %v4740 = vadd.f32 %v4041, %v4682
        %v4741 = vadd.f32 %v4042, %v4687
        %v4742 = vadd.f32 %v4043, %v4690
        %v4743 = vadd.f32 %v4044, %v4695
        %v4744 = vadd.f32 %v4045, %v4698
        %v4745 = vadd.f32 %v4046, %v4703
        %v4746 = vadd.f32 %v4047, %v4706
        %v4747 = vadd.f32 %v4048, %v4711
        %v4748 = vadd.f32 %v4049, %v4714
        %s4749 = scalar_lea.vmem [#allocation7], 56
        %v4750 = vld [vmem:[%s4749] sm:$0xf]
        %v4751 = vld [vmem:[%s4749 + $0x4] sm:$0xf]
        %v4784 = vunpack.c.l.b16 %v4052
        %v4785 = vunpack.c.l.b16 %v4053
        %v4786 = vunpack.c.l.b16 %v4055
        %v4787 = vunpack.c.l.b16 %v4056
        %v4788 = vunpack.c.l.b16 %v4058
        %v4789 = vunpack.c.l.b16 %v4059
        %v4790 = vunpack.c.l.b16 %v4061
        %v4791 = vunpack.c.l.b16 %v4062
        %v4792 = vunpack.c.l.b16 %v4064
        %v4793 = vunpack.c.l.b16 %v4065
        %v4794 = vunpack.c.l.b16 %v4067
        %v4795 = vunpack.c.l.b16 %v4068
        %v4796 = vunpack.c.l.b16 %v4070
        %v4797 = vunpack.c.l.b16 %v4071
        %v4798 = vunpack.c.l.b16 %v4073
        %v4799 = vunpack.c.l.b16 %v4074
        %v4800 = vunpack.c.l.b16 %v4076
        %v4801 = vunpack.c.l.b16 %v4077
        %v4802 = vunpack.c.l.b16 %v4079
        %v4803 = vunpack.c.l.b16 %v4080
        %v4804 = vunpack.c.l.b16 %v4082
        %v4805 = vunpack.c.l.b16 %v4083
        %v4806 = vunpack.c.l.b16 %v4085
        %v4807 = vunpack.c.l.b16 %v4086
        %v4808 = vunpack.c.l.b16 %v4088
        %v4809 = vunpack.c.l.b16 %v4089
        %v4810 = vunpack.c.l.b16 %v4091
        %v4811 = vunpack.c.l.b16 %v4092
        %v4812 = vunpack.c.l.b16 %v4094
        %v4813 = vunpack.c.l.b16 %v4095
        %v4814 = vunpack.c.l.b16 %v4097
        %v4815 = vunpack.c.l.b16 %v4098
        %v4816 = vpack.c.b16 %v4785, %v4784
        %v4817 = vpack.c.b16 %v4787, %v4786
        %v4818 = vpack.c.b16 %v4789, %v4788
        %v4819 = vpack.c.b16 %v4791, %v4790
        %v4820 = vpack.c.b16 %v4793, %v4792
        %v4821 = vpack.c.b16 %v4795, %v4794
        %v4822 = vpack.c.b16 %v4797, %v4796
        %v4823 = vpack.c.b16 %v4799, %v4798
        %v4824 = vpack.c.b16 %v4801, %v4800
        %v4825 = vpack.c.b16 %v4803, %v4802
        %v4826 = vpack.c.b16 %v4805, %v4804
        %v4827 = vpack.c.b16 %v4807, %v4806
        %v4828 = vpack.c.b16 %v4809, %v4808
        %v4829 = vpack.c.b16 %v4811, %v4810
        %v4830 = vpack.c.b16 %v4813, %v4812
        %v4831 = vpack.c.b16 %v4815, %v4814
        %v4834 = vunpack.c.l.b16 %v4750
        %v4835 = vunpack.c.l.b16 %v4751
        %v4836 = vpack.c.b16 %v4835, %v4834
        %v4839 = vsel %vm1086, %v4816, 0
        %v4842 = vsel %vm1086, %v4817, 0
        %v4845 = vsel %vm1086, %v4818, 0
        %v4848 = vsel %vm1086, %v4819, 0
        %v4851 = vsel %vm1086, %v4820, 0
        %v4854 = vsel %vm1086, %v4821, 0
        %v4857 = vsel %vm1086, %v4822, 0
        %v4860 = vsel %vm1086, %v4823, 0
        %v4863 = vsel %vm1086, %v4824, 0
        %v4866 = vsel %vm1086, %v4825, 0
        %v4869 = vsel %vm1086, %v4826, 0
        %v4872 = vsel %vm1086, %v4827, 0
        %v4875 = vsel %vm1086, %v4828, 0
        %v4878 = vsel %vm1086, %v4829, 0
        %v4881 = vsel %vm1086, %v4830, 0
        %v4884 = vsel %vm1086, %v4831, 0
        %4886 = vmatprep.subr.bf16.mxu0 0
        %4887 = vmatpush1.bf16.msra.mxu0 0
        %4888 = vmatprep.subr.bf16.mxu0 0
        %4889 = vmatpush1.bf16.msra.mxu0 0
        %4890 = vmatprep.subr.bf16.mxu0 0
        %4891 = vmatpush1.bf16.msra.mxu0 0
        %4892 = vmatprep.subr.bf16.mxu0 0
        %4893 = vmatpush1.bf16.msra.mxu0 0
        %4894 = vmatprep.subr.bf16.mxu0 0
        %4895 = vmatpush1.bf16.msra.mxu0 0
        %4896 = vmatprep.subr.bf16.mxu0 0
        %4897 = vmatpush1.bf16.msra.mxu0 0
        %4898 = vmatprep.subr.bf16.mxu0 0
        %4899 = vmatpush1.bf16.msra.mxu0 0
        %4900 = vmatprep.subr.bf16.mxu0 0
        %4901 = vmatpush1.bf16.msra.mxu0 %v4836
        %4902 = vmatprep.subr.bf16.mxu0 0
        %4903 = vmatpush2.bf16.msra.mxu0 0
        %4904 = vmatprep.subr.bf16.mxu0 0
        %4905 = vmatpush2.bf16.msra.mxu0 0
        %4906 = vmatprep.subr.bf16.mxu0 0
        %4907 = vmatpush2.bf16.msra.mxu0 0
        %4908 = vmatprep.subr.bf16.mxu0 0
        %4909 = vmatpush2.bf16.msra.mxu0 0
        %4910 = vmatprep.subr.bf16.mxu0 0
        %4911 = vmatpush2.bf16.msra.mxu0 0
        %4912 = vmatprep.subr.bf16.mxu0 0
        %4913 = vmatpush2.bf16.msra.mxu0 0
        %4914 = vmatprep.subr.bf16.mxu0 0
        %4915 = vmatpush2.bf16.msra.mxu0 0
        %4916 = vmatprep.subr.bf16.mxu0 0
        %4917 = vmatpush2.bf16.msra.mxu0 0
        %4918 = vmatprep.mubr.bf16.mxu0 0
        %4919 = vmatmul.mubr.bf16.gmra.mxu0 %v4839
        %v4920 = vpop.f32.mrf.mxu0
        %v4921 = vadd.f32 0.0, %v4920
        %v4922 = vpop.f32.mrf.mxu0
        %v4923 = vpop.f32.mrf.mxu0
        %v4924 = vadd.f32 0.0, %v4923
        %v4925 = vpop.f32.mrf.mxu0
        %4926 = vmatprep.mubr.bf16.mxu0 0
        %4927 = vmatmul.mubr.bf16.gmra.mxu0 %v4842
        %v4928 = vpop.f32.mrf.mxu0
        %v4929 = vadd.f32 0.0, %v4928
        %v4930 = vpop.f32.mrf.mxu0
        %v4931 = vpop.f32.mrf.mxu0
        %v4932 = vadd.f32 0.0, %v4931
        %v4933 = vpop.f32.mrf.mxu0
        %4934 = vmatprep.mubr.bf16.mxu0 0
        %4935 = vmatmul.mubr.bf16.gmra.mxu0 %v4845
        %v4936 = vpop.f32.mrf.mxu0
        %v4937 = vadd.f32 0.0, %v4936
        %v4938 = vpop.f32.mrf.mxu0
        %v4939 = vpop.f32.mrf.mxu0
        %v4940 = vadd.f32 0.0, %v4939
        %v4941 = vpop.f32.mrf.mxu0
        %4942 = vmatprep.mubr.bf16.mxu0 0
        %4943 = vmatmul.mubr.bf16.gmra.mxu0 %v4848
        %v4944 = vpop.f32.mrf.mxu0
        %v4945 = vadd.f32 0.0, %v4944
        %v4946 = vpop.f32.mrf.mxu0
        %v4947 = vpop.f32.mrf.mxu0
        %v4948 = vadd.f32 0.0, %v4947
        %v4949 = vpop.f32.mrf.mxu0
        %4950 = vmatprep.mubr.bf16.mxu0 0
        %4951 = vmatmul.mubr.bf16.gmra.mxu0 %v4851
        %v4952 = vpop.f32.mrf.mxu0
        %v4953 = vadd.f32 0.0, %v4952
        %v4954 = vpop.f32.mrf.mxu0
        %v4955 = vpop.f32.mrf.mxu0
        %v4956 = vadd.f32 0.0, %v4955
        %v4957 = vpop.f32.mrf.mxu0
        %4958 = vmatprep.mubr.bf16.mxu0 0
        %4959 = vmatmul.mubr.bf16.gmra.mxu0 %v4854
        %v4960 = vpop.f32.mrf.mxu0
        %v4961 = vadd.f32 0.0, %v4960
        %v4962 = vpop.f32.mrf.mxu0
        %v4963 = vpop.f32.mrf.mxu0
        %v4964 = vadd.f32 0.0, %v4963
        %v4965 = vpop.f32.mrf.mxu0
        %4966 = vmatprep.mubr.bf16.mxu0 0
        %4967 = vmatmul.mubr.bf16.gmra.mxu0 %v4857
        %v4968 = vpop.f32.mrf.mxu0
        %v4969 = vadd.f32 0.0, %v4968
        %v4970 = vpop.f32.mrf.mxu0
        %v4971 = vpop.f32.mrf.mxu0
        %v4972 = vadd.f32 0.0, %v4971
        %v4973 = vpop.f32.mrf.mxu0
        %4974 = vmatprep.mubr.bf16.mxu0 0
        %4975 = vmatmul.mubr.bf16.gmra.mxu0 %v4860
        %v4976 = vpop.f32.mrf.mxu0
        %v4977 = vadd.f32 0.0, %v4976
        %v4978 = vpop.f32.mrf.mxu0
        %v4979 = vpop.f32.mrf.mxu0
        %v4980 = vadd.f32 0.0, %v4979
        %v4981 = vpop.f32.mrf.mxu0
        %4982 = vmatprep.mubr.bf16.mxu0 0
        %4983 = vmatmul.mubr.bf16.gmra.mxu0 %v4863
        %v4984 = vpop.f32.mrf.mxu0
        %v4985 = vadd.f32 0.0, %v4984
        %v4986 = vpop.f32.mrf.mxu0
        %v4987 = vpop.f32.mrf.mxu0
        %v4988 = vadd.f32 0.0, %v4987
        %v4989 = vpop.f32.mrf.mxu0
        %4990 = vmatprep.mubr.bf16.mxu0 0
        %4991 = vmatmul.mubr.bf16.gmra.mxu0 %v4866
        %v4992 = vpop.f32.mrf.mxu0
        %v4993 = vadd.f32 0.0, %v4992
        %v4994 = vpop.f32.mrf.mxu0
        %v4995 = vpop.f32.mrf.mxu0
        %v4996 = vadd.f32 0.0, %v4995
        %v4997 = vpop.f32.mrf.mxu0
        %4998 = vmatprep.mubr.bf16.mxu0 0
        %4999 = vmatmul.mubr.bf16.gmra.mxu0 %v4869
        %v5000 = vpop.f32.mrf.mxu0
        %v5001 = vadd.f32 0.0, %v5000
        %v5002 = vpop.f32.mrf.mxu0
        %v5003 = vpop.f32.mrf.mxu0
        %v5004 = vadd.f32 0.0, %v5003
        %v5005 = vpop.f32.mrf.mxu0
        %5006 = vmatprep.mubr.bf16.mxu0 0
        %5007 = vmatmul.mubr.bf16.gmra.mxu0 %v4872
        %v5008 = vpop.f32.mrf.mxu0
        %v5009 = vadd.f32 0.0, %v5008
        %v5010 = vpop.f32.mrf.mxu0
        %v5011 = vpop.f32.mrf.mxu0
        %v5012 = vadd.f32 0.0, %v5011
        %v5013 = vpop.f32.mrf.mxu0
        %5014 = vmatprep.mubr.bf16.mxu0 0
        %5015 = vmatmul.mubr.bf16.gmra.mxu0 %v4875
        %v5016 = vpop.f32.mrf.mxu0
        %v5017 = vadd.f32 0.0, %v5016
        %v5018 = vpop.f32.mrf.mxu0
        %v5019 = vpop.f32.mrf.mxu0
        %v5020 = vadd.f32 0.0, %v5019
        %v5021 = vpop.f32.mrf.mxu0
        %5022 = vmatprep.mubr.bf16.mxu0 0
        %5023 = vmatmul.mubr.bf16.gmra.mxu0 %v4878
        %v5024 = vpop.f32.mrf.mxu0
        %v5025 = vadd.f32 0.0, %v5024
        %v5026 = vpop.f32.mrf.mxu0
        %v5027 = vpop.f32.mrf.mxu0
        %v5028 = vadd.f32 0.0, %v5027
        %v5029 = vpop.f32.mrf.mxu0
        %5030 = vmatprep.mubr.bf16.mxu0 0
        %5031 = vmatmul.mubr.bf16.gmra.mxu0 %v4881
        %v5032 = vpop.f32.mrf.mxu0
        %v5033 = vadd.f32 0.0, %v5032
        %v5034 = vpop.f32.mrf.mxu0
        %v5035 = vpop.f32.mrf.mxu0
        %v5036 = vadd.f32 0.0, %v5035
        %v5037 = vpop.f32.mrf.mxu0
        %5038 = vmatprep.mubr.bf16.mxu0 0
        %5039 = vmatmul.mubr.bf16.gmra.mxu0 %v4884
        %v5040 = vpop.f32.mrf.mxu0
        %v5041 = vadd.f32 0.0, %v5040
        %v5042 = vpop.f32.mrf.mxu0
        %v5043 = vpop.f32.mrf.mxu0
        %v5044 = vadd.f32 0.0, %v5043
        %v5045 = vpop.f32.mrf.mxu0
        %5046 = vdwg.mxu0
        %v5047 = vadd.f32 %v4717, %v4921
        %v5048 = vadd.f32 %v4718, %v4924
        %v5049 = vadd.f32 %v4719, %v4929
        %v5050 = vadd.f32 %v4720, %v4932
        %v5051 = vadd.f32 %v4721, %v4937
        %v5052 = vadd.f32 %v4722, %v4940
        %v5053 = vadd.f32 %v4723, %v4945
        %v5054 = vadd.f32 %v4724, %v4948
        %v5055 = vadd.f32 %v4725, %v4953
        %v5056 = vadd.f32 %v4726, %v4956
        %v5057 = vadd.f32 %v4727, %v4961
        %v5058 = vadd.f32 %v4728, %v4964
        %v5059 = vadd.f32 %v4729, %v4969
        %v5060 = vadd.f32 %v4730, %v4972
        %v5061 = vadd.f32 %v4731, %v4977
        %v5062 = vadd.f32 %v4732, %v4980
        %v5063 = vadd.f32 %v4733, %v4985
        %v5064 = vadd.f32 %v4734, %v4988
        %v5065 = vadd.f32 %v4735, %v4993
        %v5066 = vadd.f32 %v4736, %v4996
        %v5067 = vadd.f32 %v4737, %v5001
        %v5068 = vadd.f32 %v4738, %v5004
        %v5069 = vadd.f32 %v4739, %v5009
        %v5070 = vadd.f32 %v4740, %v5012
        %v5071 = vadd.f32 %v4741, %v5017
        %v5072 = vadd.f32 %v4742, %v5020
        %v5073 = vadd.f32 %v4743, %v5025
        %v5074 = vadd.f32 %v4744, %v5028
        %v5075 = vadd.f32 %v4745, %v5033
        %v5076 = vadd.f32 %v4746, %v5036
        %v5077 = vadd.f32 %v4747, %v5041
        %v5078 = vadd.f32 %v4748, %v5044
        %v5079 = vld [vmem:[%s4050 + $0x4] sm:$0xf]
        %v5080 = vld [vmem:[%s4050 + $0x8] sm:$0xf]
        %v5081 = vld [vmem:[%s4050 + $0xc] sm:$0x1]
        %v5082 = vld [vmem:[%s4050 + $0x14] sm:$0xf]
        %v5083 = vld [vmem:[%s4050 + $0x18] sm:$0xf]
        %v5084 = vld [vmem:[%s4050 + $0x1c] sm:$0x1]
        %v5085 = vld [vmem:[%s4050 + $0x24] sm:$0xf]
        %v5086 = vld [vmem:[%s4050 + $0x28] sm:$0xf]
        %v5087 = vld [vmem:[%s4050 + $0x2c] sm:$0x1]
        %v5088 = vld [vmem:[%s4050 + $0x34] sm:$0xf]
        %v5089 = vld [vmem:[%s4050 + $0x38] sm:$0xf]
        %v5090 = vld [vmem:[%s4050 + $0x3c] sm:$0x1]
        %v5091 = vld [vmem:[%s4050 + $0x44] sm:$0xf]
        %v5092 = vld [vmem:[%s4050 + $0x48] sm:$0xf]
        %v5093 = vld [vmem:[%s4050 + $0x4c] sm:$0x1]
        %v5094 = vld [vmem:[%s4050 + $0x54] sm:$0xf]
        %v5095 = vld [vmem:[%s4050 + $0x58] sm:$0xf]
        %v5096 = vld [vmem:[%s4050 + $0x5c] sm:$0x1]
        %v5097 = vld [vmem:[%s4050 + $0x64] sm:$0xf]
        %v5098 = vld [vmem:[%s4050 + $0x68] sm:$0xf]
        %v5099 = vld [vmem:[%s4050 + $0x6c] sm:$0x1]
        %v5100 = vld [vmem:[%s4050 + $0x74] sm:$0xf]
        %v5101 = vld [vmem:[%s4050 + $0x78] sm:$0xf]
        %v5102 = vld [vmem:[%s4050 + $0x7c] sm:$0x1]
        %v5103 = vld [vmem:[%s4050 + $0x84] sm:$0xf]
        %v5104 = vld [vmem:[%s4050 + $0x88] sm:$0xf]
        %v5105 = vld [vmem:[%s4050 + $0x8c] sm:$0x1]
        %v5106 = vld [vmem:[%s4050 + $0x94] sm:$0xf]
        %v5107 = vld [vmem:[%s4050 + $0x98] sm:$0xf]
        %v5108 = vld [vmem:[%s4050 + $0x9c] sm:$0x1]
        %v5109 = vld [vmem:[%s4050 + $0xa4] sm:$0xf]
        %v5110 = vld [vmem:[%s4050 + $0xa8] sm:$0xf]
        %v5111 = vld [vmem:[%s4050 + $0xac] sm:$0x1]
        %v5112 = vld [vmem:[%s4050 + $0xb4] sm:$0xf]
        %v5113 = vld [vmem:[%s4050 + $0xb8] sm:$0xf]
        %v5114 = vld [vmem:[%s4050 + $0xbc] sm:$0x1]
        %v5115 = vld [vmem:[%s4050 + $0xc4] sm:$0xf]
        %v5116 = vld [vmem:[%s4050 + $0xc8] sm:$0xf]
        %v5117 = vld [vmem:[%s4050 + $0xcc] sm:$0x1]
        %v5118 = vld [vmem:[%s4050 + $0xd4] sm:$0xf]
        %v5119 = vld [vmem:[%s4050 + $0xd8] sm:$0xf]
        %v5120 = vld [vmem:[%s4050 + $0xdc] sm:$0x1]
        %v5121 = vld [vmem:[%s4050 + $0xe4] sm:$0xf]
        %v5122 = vld [vmem:[%s4050 + $0xe8] sm:$0xf]
        %v5123 = vld [vmem:[%s4050 + $0xec] sm:$0x1]
        %v5124 = vld [vmem:[%s4050 + $0xf4] sm:$0xf]
        %v5125 = vld [vmem:[%s4050 + $0xf8] sm:$0xf]
        %v5126 = vld [vmem:[%s4050 + $0xfc] sm:$0x1]
        %v5128 = vshrl.u32 %v5079, 16
        %v5130 = vrot.slane %v5128, 4
        %v5131 = vshll.u32 %v5079, 16
        %v5133 = vrot.slane %v5131, 5
        %v5134 = vor.u32 %v5130, %v5133
        %v5135 = vrot.slane %v5134, 4
        %v5137 = vshll.u32 %v5080, 16
        %v5139 = vrot.slane %v5137, 5
        %v5140 = vsel %vm1609, %v5135, %v5139
        %v5141 = vshrl.u32 %v5080, 16
        %v5143 = vrot.slane %v5141, 4
        %v5144 = vor.u32 %v5143, %v5139
        %v5145 = vrot.slane %v5144, 4
        %v5147 = vshll.u32 %v5081, 16
        %v5149 = vrot.slane %v5147, 5
        %v5150 = vsel %vm1609, %v5145, %v5149
        %v5152 = vshrl.u32 %v5082, 16
        %v5154 = vrot.slane %v5152, 4
        %v5155 = vshll.u32 %v5082, 16
        %v5157 = vrot.slane %v5155, 5
        %v5158 = vor.u32 %v5154, %v5157
        %v5159 = vrot.slane %v5158, 4
        %v5161 = vshll.u32 %v5083, 16
        %v5163 = vrot.slane %v5161, 5
        %v5164 = vsel %vm1609, %v5159, %v5163
        %v5165 = vshrl.u32 %v5083, 16
        %v5167 = vrot.slane %v5165, 4
        %v5168 = vor.u32 %v5167, %v5163
        %v5169 = vrot.slane %v5168, 4
        %v5171 = vshll.u32 %v5084, 16
        %v5173 = vrot.slane %v5171, 5
        %v5174 = vsel %vm1609, %v5169, %v5173
        %v5176 = vshrl.u32 %v5085, 16
        %v5178 = vrot.slane %v5176, 4
        %v5179 = vshll.u32 %v5085, 16
        %v5181 = vrot.slane %v5179, 5
        %v5182 = vor.u32 %v5178, %v5181
        %v5183 = vrot.slane %v5182, 4
        %v5185 = vshll.u32 %v5086, 16
        %v5187 = vrot.slane %v5185, 5
        %v5188 = vsel %vm1609, %v5183, %v5187
        %v5189 = vshrl.u32 %v5086, 16
        %v5191 = vrot.slane %v5189, 4
        %v5192 = vor.u32 %v5191, %v5187
        %v5193 = vrot.slane %v5192, 4
        %v5195 = vshll.u32 %v5087, 16
        %v5197 = vrot.slane %v5195, 5
        %v5198 = vsel %vm1609, %v5193, %v5197
        %v5200 = vshrl.u32 %v5088, 16
        %v5202 = vrot.slane %v5200, 4
        %v5203 = vshll.u32 %v5088, 16
        %v5205 = vrot.slane %v5203, 5
        %v5206 = vor.u32 %v5202, %v5205
        %v5207 = vrot.slane %v5206, 4
        %v5209 = vshll.u32 %v5089, 16
        %v5211 = vrot.slane %v5209, 5
        %v5212 = vsel %vm1609, %v5207, %v5211
        %v5213 = vshrl.u32 %v5089, 16
        %v5215 = vrot.slane %v5213, 4
        %v5216 = vor.u32 %v5215, %v5211
        %v5217 = vrot.slane %v5216, 4
        %v5219 = vshll.u32 %v5090, 16
        %v5221 = vrot.slane %v5219, 5
        %v5222 = vsel %vm1609, %v5217, %v5221
        %v5224 = vshrl.u32 %v5091, 16
        %v5226 = vrot.slane %v5224, 4
        %v5227 = vshll.u32 %v5091, 16
        %v5229 = vrot.slane %v5227, 5
        %v5230 = vor.u32 %v5226, %v5229
        %v5231 = vrot.slane %v5230, 4
        %v5233 = vshll.u32 %v5092, 16
        %v5235 = vrot.slane %v5233, 5
        %v5236 = vsel %vm1609, %v5231, %v5235
        %v5237 = vshrl.u32 %v5092, 16
        %v5239 = vrot.slane %v5237, 4
        %v5240 = vor.u32 %v5239, %v5235
        %v5241 = vrot.slane %v5240, 4
        %v5243 = vshll.u32 %v5093, 16
        %v5245 = vrot.slane %v5243, 5
        %v5246 = vsel %vm1609, %v5241, %v5245
        %v5248 = vshrl.u32 %v5094, 16
        %v5250 = vrot.slane %v5248, 4
        %v5251 = vshll.u32 %v5094, 16
        %v5253 = vrot.slane %v5251, 5
        %v5254 = vor.u32 %v5250, %v5253
        %v5255 = vrot.slane %v5254, 4
        %v5257 = vshll.u32 %v5095, 16
        %v5259 = vrot.slane %v5257, 5
        %v5260 = vsel %vm1609, %v5255, %v5259
        %v5261 = vshrl.u32 %v5095, 16
        %v5263 = vrot.slane %v5261, 4
        %v5264 = vor.u32 %v5263, %v5259
        %v5265 = vrot.slane %v5264, 4
        %v5267 = vshll.u32 %v5096, 16
        %v5269 = vrot.slane %v5267, 5
        %v5270 = vsel %vm1609, %v5265, %v5269
        %v5272 = vshrl.u32 %v5097, 16
        %v5274 = vrot.slane %v5272, 4
        %v5275 = vshll.u32 %v5097, 16
        %v5277 = vrot.slane %v5275, 5
        %v5278 = vor.u32 %v5274, %v5277
        %v5279 = vrot.slane %v5278, 4
        %v5281 = vshll.u32 %v5098, 16
        %v5283 = vrot.slane %v5281, 5
        %v5284 = vsel %vm1609, %v5279, %v5283
        %v5285 = vshrl.u32 %v5098, 16
        %v5287 = vrot.slane %v5285, 4
        %v5288 = vor.u32 %v5287, %v5283
        %v5289 = vrot.slane %v5288, 4
        %v5291 = vshll.u32 %v5099, 16
        %v5293 = vrot.slane %v5291, 5
        %v5294 = vsel %vm1609, %v5289, %v5293
        %v5296 = vshrl.u32 %v5100, 16
        %v5298 = vrot.slane %v5296, 4
        %v5299 = vshll.u32 %v5100, 16
        %v5301 = vrot.slane %v5299, 5
        %v5302 = vor.u32 %v5298, %v5301
        %v5303 = vrot.slane %v5302, 4
        %v5305 = vshll.u32 %v5101, 16
        %v5307 = vrot.slane %v5305, 5
        %v5308 = vsel %vm1609, %v5303, %v5307
        %v5309 = vshrl.u32 %v5101, 16
        %v5311 = vrot.slane %v5309, 4
        %v5312 = vor.u32 %v5311, %v5307
        %v5313 = vrot.slane %v5312, 4
        %v5315 = vshll.u32 %v5102, 16
        %v5317 = vrot.slane %v5315, 5
        %v5318 = vsel %vm1609, %v5313, %v5317
        %v5320 = vshrl.u32 %v5103, 16
        %v5322 = vrot.slane %v5320, 4
        %v5323 = vshll.u32 %v5103, 16
        %v5325 = vrot.slane %v5323, 5
        %v5326 = vor.u32 %v5322, %v5325
        %v5327 = vrot.slane %v5326, 4
        %v5329 = vshll.u32 %v5104, 16
        %v5331 = vrot.slane %v5329, 5
        %v5332 = vsel %vm1609, %v5327, %v5331
        %v5333 = vshrl.u32 %v5104, 16
        %v5335 = vrot.slane %v5333, 4
        %v5336 = vor.u32 %v5335, %v5331
        %v5337 = vrot.slane %v5336, 4
        %v5339 = vshll.u32 %v5105, 16
        %v5341 = vrot.slane %v5339, 5
        %v5342 = vsel %vm1609, %v5337, %v5341
        %v5344 = vshrl.u32 %v5106, 16
        %v5346 = vrot.slane %v5344, 4
        %v5347 = vshll.u32 %v5106, 16
        %v5349 = vrot.slane %v5347, 5
        %v5350 = vor.u32 %v5346, %v5349
        %v5351 = vrot.slane %v5350, 4
        %v5353 = vshll.u32 %v5107, 16
        %v5355 = vrot.slane %v5353, 5
        %v5356 = vsel %vm1609, %v5351, %v5355
        %v5357 = vshrl.u32 %v5107, 16
        %v5359 = vrot.slane %v5357, 4
        %v5360 = vor.u32 %v5359, %v5355
        %v5361 = vrot.slane %v5360, 4
        %v5363 = vshll.u32 %v5108, 16
        %v5365 = vrot.slane %v5363, 5
        %v5366 = vsel %vm1609, %v5361, %v5365
        %v5368 = vshrl.u32 %v5109, 16
        %v5370 = vrot.slane %v5368, 4
        %v5371 = vshll.u32 %v5109, 16
        %v5373 = vrot.slane %v5371, 5
        %v5374 = vor.u32 %v5370, %v5373
        %v5375 = vrot.slane %v5374, 4
        %v5377 = vshll.u32 %v5110, 16
        %v5379 = vrot.slane %v5377, 5
        %v5380 = vsel %vm1609, %v5375, %v5379
        %v5381 = vshrl.u32 %v5110, 16
        %v5383 = vrot.slane %v5381, 4
        %v5384 = vor.u32 %v5383, %v5379
        %v5385 = vrot.slane %v5384, 4
        %v5387 = vshll.u32 %v5111, 16
        %v5389 = vrot.slane %v5387, 5
        %v5390 = vsel %vm1609, %v5385, %v5389
        %v5392 = vshrl.u32 %v5112, 16
        %v5394 = vrot.slane %v5392, 4
        %v5395 = vshll.u32 %v5112, 16
        %v5397 = vrot.slane %v5395, 5
        %v5398 = vor.u32 %v5394, %v5397
        %v5399 = vrot.slane %v5398, 4
        %v5401 = vshll.u32 %v5113, 16
        %v5403 = vrot.slane %v5401, 5
        %v5404 = vsel %vm1609, %v5399, %v5403
        %v5405 = vshrl.u32 %v5113, 16
        %v5407 = vrot.slane %v5405, 4
        %v5408 = vor.u32 %v5407, %v5403
        %v5409 = vrot.slane %v5408, 4
        %v5411 = vshll.u32 %v5114, 16
        %v5413 = vrot.slane %v5411, 5
        %v5414 = vsel %vm1609, %v5409, %v5413
        %v5416 = vshrl.u32 %v5115, 16
        %v5418 = vrot.slane %v5416, 4
        %v5419 = vshll.u32 %v5115, 16
        %v5421 = vrot.slane %v5419, 5
        %v5422 = vor.u32 %v5418, %v5421
        %v5423 = vrot.slane %v5422, 4
        %v5425 = vshll.u32 %v5116, 16
        %v5427 = vrot.slane %v5425, 5
        %v5428 = vsel %vm1609, %v5423, %v5427
        %v5429 = vshrl.u32 %v5116, 16
        %v5431 = vrot.slane %v5429, 4
        %v5432 = vor.u32 %v5431, %v5427
        %v5433 = vrot.slane %v5432, 4
        %v5435 = vshll.u32 %v5117, 16
        %v5437 = vrot.slane %v5435, 5
        %v5438 = vsel %vm1609, %v5433, %v5437
        %v5440 = vshrl.u32 %v5118, 16
        %v5442 = vrot.slane %v5440, 4
        %v5443 = vshll.u32 %v5118, 16
        %v5445 = vrot.slane %v5443, 5
        %v5446 = vor.u32 %v5442, %v5445
        %v5447 = vrot.slane %v5446, 4
        %v5449 = vshll.u32 %v5119, 16
        %v5451 = vrot.slane %v5449, 5
        %v5452 = vsel %vm1609, %v5447, %v5451
        %v5453 = vshrl.u32 %v5119, 16
        %v5455 = vrot.slane %v5453, 4
        %v5456 = vor.u32 %v5455, %v5451
        %v5457 = vrot.slane %v5456, 4
        %v5459 = vshll.u32 %v5120, 16
        %v5461 = vrot.slane %v5459, 5
        %v5462 = vsel %vm1609, %v5457, %v5461
        %v5464 = vshrl.u32 %v5121, 16
        %v5466 = vrot.slane %v5464, 4
        %v5467 = vshll.u32 %v5121, 16
        %v5469 = vrot.slane %v5467, 5
        %v5470 = vor.u32 %v5466, %v5469
        %v5471 = vrot.slane %v5470, 4
        %v5473 = vshll.u32 %v5122, 16
        %v5475 = vrot.slane %v5473, 5
        %v5476 = vsel %vm1609, %v5471, %v5475
        %v5477 = vshrl.u32 %v5122, 16
        %v5479 = vrot.slane %v5477, 4
        %v5480 = vor.u32 %v5479, %v5475
        %v5481 = vrot.slane %v5480, 4
        %v5483 = vshll.u32 %v5123, 16
        %v5485 = vrot.slane %v5483, 5
        %v5486 = vsel %vm1609, %v5481, %v5485
        %v5488 = vshrl.u32 %v5124, 16
        %v5490 = vrot.slane %v5488, 4
        %v5491 = vshll.u32 %v5124, 16
        %v5493 = vrot.slane %v5491, 5
        %v5494 = vor.u32 %v5490, %v5493
        %v5495 = vrot.slane %v5494, 4
        %v5497 = vshll.u32 %v5125, 16
        %v5499 = vrot.slane %v5497, 5
        %v5500 = vsel %vm1609, %v5495, %v5499
        %v5501 = vshrl.u32 %v5125, 16
        %v5503 = vrot.slane %v5501, 4
        %v5504 = vor.u32 %v5503, %v5499
        %v5505 = vrot.slane %v5504, 4
        %v5507 = vshll.u32 %v5126, 16
        %v5509 = vrot.slane %v5507, 5
        %v5510 = vsel %vm1609, %v5505, %v5509
        %s5511 = scalar_lea.vmem [#allocation7], 64
        %v5512 = vld [vmem:[%s5511] sm:$0xf]
        %v5513 = vld [vmem:[%s5511 + $0x4] sm:$0xf]
        %v5514 = vunpack.c.l.b16 %v5140
        %v5515 = vunpack.c.l.b16 %v5150
        %v5516 = vunpack.c.l.b16 %v5164
        %v5517 = vunpack.c.l.b16 %v5174
        %v5518 = vunpack.c.l.b16 %v5188
        %v5519 = vunpack.c.l.b16 %v5198
        %v5520 = vunpack.c.l.b16 %v5212
        %v5521 = vunpack.c.l.b16 %v5222
        %v5522 = vunpack.c.l.b16 %v5236
        %v5523 = vunpack.c.l.b16 %v5246
        %v5524 = vunpack.c.l.b16 %v5260
        %v5525 = vunpack.c.l.b16 %v5270
        %v5526 = vunpack.c.l.b16 %v5284
        %v5527 = vunpack.c.l.b16 %v5294
        %v5528 = vunpack.c.l.b16 %v5308
        %v5529 = vunpack.c.l.b16 %v5318
        %v5530 = vunpack.c.l.b16 %v5332
        %v5531 = vunpack.c.l.b16 %v5342
        %v5532 = vunpack.c.l.b16 %v5356
        %v5533 = vunpack.c.l.b16 %v5366
        %v5534 = vunpack.c.l.b16 %v5380
        %v5535 = vunpack.c.l.b16 %v5390
        %v5536 = vunpack.c.l.b16 %v5404
        %v5537 = vunpack.c.l.b16 %v5414
        %v5538 = vunpack.c.l.b16 %v5428
        %v5539 = vunpack.c.l.b16 %v5438
        %v5540 = vunpack.c.l.b16 %v5452
        %v5541 = vunpack.c.l.b16 %v5462
        %v5542 = vunpack.c.l.b16 %v5476
        %v5543 = vunpack.c.l.b16 %v5486
        %v5544 = vunpack.c.l.b16 %v5500
        %v5545 = vunpack.c.l.b16 %v5510
        %v5546 = vpack.c.b16 %v5515, %v5514
        %v5547 = vpack.c.b16 %v5517, %v5516
        %v5548 = vpack.c.b16 %v5519, %v5518
        %v5549 = vpack.c.b16 %v5521, %v5520
        %v5550 = vpack.c.b16 %v5523, %v5522
        %v5551 = vpack.c.b16 %v5525, %v5524
        %v5552 = vpack.c.b16 %v5527, %v5526
        %v5553 = vpack.c.b16 %v5529, %v5528
        %v5554 = vpack.c.b16 %v5531, %v5530
        %v5555 = vpack.c.b16 %v5533, %v5532
        %v5556 = vpack.c.b16 %v5535, %v5534
        %v5557 = vpack.c.b16 %v5537, %v5536
        %v5558 = vpack.c.b16 %v5539, %v5538
        %v5559 = vpack.c.b16 %v5541, %v5540
        %v5560 = vpack.c.b16 %v5543, %v5542
        %v5561 = vpack.c.b16 %v5545, %v5544
        %v5564 = vunpack.c.l.b16 %v5512
        %v5565 = vunpack.c.l.b16 %v5513
        %v5566 = vpack.c.b16 %v5565, %v5564
        %v5569 = vsel %vm1086, %v5546, 0
        %v5572 = vsel %vm1086, %v5547, 0
        %v5575 = vsel %vm1086, %v5548, 0
        %v5578 = vsel %vm1086, %v5549, 0
        %v5581 = vsel %vm1086, %v5550, 0
        %v5584 = vsel %vm1086, %v5551, 0
        %v5587 = vsel %vm1086, %v5552, 0
        %v5590 = vsel %vm1086, %v5553, 0
        %v5593 = vsel %vm1086, %v5554, 0
        %v5596 = vsel %vm1086, %v5555, 0
        %v5599 = vsel %vm1086, %v5556, 0
        %v5602 = vsel %vm1086, %v5557, 0
        %v5605 = vsel %vm1086, %v5558, 0
        %v5608 = vsel %vm1086, %v5559, 0
        %v5611 = vsel %vm1086, %v5560, 0
        %v5614 = vsel %vm1086, %v5561, 0
        %5616 = vmatprep.subr.bf16.mxu0 0
        %5617 = vmatpush1.bf16.msra.mxu0 0
        %5618 = vmatprep.subr.bf16.mxu0 0
        %5619 = vmatpush1.bf16.msra.mxu0 0
        %5620 = vmatprep.subr.bf16.mxu0 0
        %5621 = vmatpush1.bf16.msra.mxu0 0
        %5622 = vmatprep.subr.bf16.mxu0 0
        %5623 = vmatpush1.bf16.msra.mxu0 0
        %5624 = vmatprep.subr.bf16.mxu0 0
        %5625 = vmatpush1.bf16.msra.mxu0 0
        %5626 = vmatprep.subr.bf16.mxu0 0
        %5627 = vmatpush1.bf16.msra.mxu0 0
        %5628 = vmatprep.subr.bf16.mxu0 0
        %5629 = vmatpush1.bf16.msra.mxu0 0
        %5630 = vmatprep.subr.bf16.mxu0 0
        %5631 = vmatpush1.bf16.msra.mxu0 %v5566
        %5632 = vmatprep.subr.bf16.mxu0 0
        %5633 = vmatpush2.bf16.msra.mxu0 0
        %5634 = vmatprep.subr.bf16.mxu0 0
        %5635 = vmatpush2.bf16.msra.mxu0 0
        %5636 = vmatprep.subr.bf16.mxu0 0
        %5637 = vmatpush2.bf16.msra.mxu0 0
        %5638 = vmatprep.subr.bf16.mxu0 0
        %5639 = vmatpush2.bf16.msra.mxu0 0
        %5640 = vmatprep.subr.bf16.mxu0 0
        %5641 = vmatpush2.bf16.msra.mxu0 0
        %5642 = vmatprep.subr.bf16.mxu0 0
        %5643 = vmatpush2.bf16.msra.mxu0 0
        %5644 = vmatprep.subr.bf16.mxu0 0
        %5645 = vmatpush2.bf16.msra.mxu0 0
        %5646 = vmatprep.subr.bf16.mxu0 0
        %5647 = vmatpush2.bf16.msra.mxu0 0
        %5648 = vmatprep.mubr.bf16.mxu0 0
        %5649 = vmatmul.mubr.bf16.gmra.mxu0 %v5569
        %v5650 = vpop.f32.mrf.mxu0
        %v5651 = vadd.f32 0.0, %v5650
        %v5652 = vpop.f32.mrf.mxu0
        %v5653 = vpop.f32.mrf.mxu0
        %v5654 = vadd.f32 0.0, %v5653
        %v5655 = vpop.f32.mrf.mxu0
        %5656 = vmatprep.mubr.bf16.mxu0 0
        %5657 = vmatmul.mubr.bf16.gmra.mxu0 %v5572
        %v5658 = vpop.f32.mrf.mxu0
        %v5659 = vadd.f32 0.0, %v5658
        %v5660 = vpop.f32.mrf.mxu0
        %v5661 = vpop.f32.mrf.mxu0
        %v5662 = vadd.f32 0.0, %v5661
        %v5663 = vpop.f32.mrf.mxu0
        %5664 = vmatprep.mubr.bf16.mxu0 0
        %5665 = vmatmul.mubr.bf16.gmra.mxu0 %v5575
        %v5666 = vpop.f32.mrf.mxu0
        %v5667 = vadd.f32 0.0, %v5666
        %v5668 = vpop.f32.mrf.mxu0
        %v5669 = vpop.f32.mrf.mxu0
        %v5670 = vadd.f32 0.0, %v5669
        %v5671 = vpop.f32.mrf.mxu0
        %5672 = vmatprep.mubr.bf16.mxu0 0
        %5673 = vmatmul.mubr.bf16.gmra.mxu0 %v5578
        %v5674 = vpop.f32.mrf.mxu0
        %v5675 = vadd.f32 0.0, %v5674
        %v5676 = vpop.f32.mrf.mxu0
        %v5677 = vpop.f32.mrf.mxu0
        %v5678 = vadd.f32 0.0, %v5677
        %v5679 = vpop.f32.mrf.mxu0
        %5680 = vmatprep.mubr.bf16.mxu0 0
        %5681 = vmatmul.mubr.bf16.gmra.mxu0 %v5581
        %v5682 = vpop.f32.mrf.mxu0
        %v5683 = vadd.f32 0.0, %v5682
        %v5684 = vpop.f32.mrf.mxu0
        %v5685 = vpop.f32.mrf.mxu0
        %v5686 = vadd.f32 0.0, %v5685
        %v5687 = vpop.f32.mrf.mxu0
        %5688 = vmatprep.mubr.bf16.mxu0 0
        %5689 = vmatmul.mubr.bf16.gmra.mxu0 %v5584
        %v5690 = vpop.f32.mrf.mxu0
        %v5691 = vadd.f32 0.0, %v5690
        %v5692 = vpop.f32.mrf.mxu0
        %v5693 = vpop.f32.mrf.mxu0
        %v5694 = vadd.f32 0.0, %v5693
        %v5695 = vpop.f32.mrf.mxu0
        %5696 = vmatprep.mubr.bf16.mxu0 0
        %5697 = vmatmul.mubr.bf16.gmra.mxu0 %v5587
        %v5698 = vpop.f32.mrf.mxu0
        %v5699 = vadd.f32 0.0, %v5698
        %v5700 = vpop.f32.mrf.mxu0
        %v5701 = vpop.f32.mrf.mxu0
        %v5702 = vadd.f32 0.0, %v5701
        %v5703 = vpop.f32.mrf.mxu0
        %5704 = vmatprep.mubr.bf16.mxu0 0
        %5705 = vmatmul.mubr.bf16.gmra.mxu0 %v5590
        %v5706 = vpop.f32.mrf.mxu0
        %v5707 = vadd.f32 0.0, %v5706
        %v5708 = vpop.f32.mrf.mxu0
        %v5709 = vpop.f32.mrf.mxu0
        %v5710 = vadd.f32 0.0, %v5709
        %v5711 = vpop.f32.mrf.mxu0
        %5712 = vmatprep.mubr.bf16.mxu0 0
        %5713 = vmatmul.mubr.bf16.gmra.mxu0 %v5593
        %v5714 = vpop.f32.mrf.mxu0
        %v5715 = vadd.f32 0.0, %v5714
        %v5716 = vpop.f32.mrf.mxu0
        %v5717 = vpop.f32.mrf.mxu0
        %v5718 = vadd.f32 0.0, %v5717
        %v5719 = vpop.f32.mrf.mxu0
        %5720 = vmatprep.mubr.bf16.mxu0 0
        %5721 = vmatmul.mubr.bf16.gmra.mxu0 %v5596
        %v5722 = vpop.f32.mrf.mxu0
        %v5723 = vadd.f32 0.0, %v5722
        %v5724 = vpop.f32.mrf.mxu0
        %v5725 = vpop.f32.mrf.mxu0
        %v5726 = vadd.f32 0.0, %v5725
        %v5727 = vpop.f32.mrf.mxu0
        %5728 = vmatprep.mubr.bf16.mxu0 0
        %5729 = vmatmul.mubr.bf16.gmra.mxu0 %v5599
        %v5730 = vpop.f32.mrf.mxu0
        %v5731 = vadd.f32 0.0, %v5730
        %v5732 = vpop.f32.mrf.mxu0
        %v5733 = vpop.f32.mrf.mxu0
        %v5734 = vadd.f32 0.0, %v5733
        %v5735 = vpop.f32.mrf.mxu0
        %5736 = vmatprep.mubr.bf16.mxu0 0
        %5737 = vmatmul.mubr.bf16.gmra.mxu0 %v5602
        %v5738 = vpop.f32.mrf.mxu0
        %v5739 = vadd.f32 0.0, %v5738
        %v5740 = vpop.f32.mrf.mxu0
        %v5741 = vpop.f32.mrf.mxu0
        %v5742 = vadd.f32 0.0, %v5741
        %v5743 = vpop.f32.mrf.mxu0
        %5744 = vmatprep.mubr.bf16.mxu0 0
        %5745 = vmatmul.mubr.bf16.gmra.mxu0 %v5605
        %v5746 = vpop.f32.mrf.mxu0
        %v5747 = vadd.f32 0.0, %v5746
        %v5748 = vpop.f32.mrf.mxu0
        %v5749 = vpop.f32.mrf.mxu0
        %v5750 = vadd.f32 0.0, %v5749
        %v5751 = vpop.f32.mrf.mxu0
        %5752 = vmatprep.mubr.bf16.mxu0 0
        %5753 = vmatmul.mubr.bf16.gmra.mxu0 %v5608
        %v5754 = vpop.f32.mrf.mxu0
        %v5755 = vadd.f32 0.0, %v5754
        %v5756 = vpop.f32.mrf.mxu0
        %v5757 = vpop.f32.mrf.mxu0
        %v5758 = vadd.f32 0.0, %v5757
        %v5759 = vpop.f32.mrf.mxu0
        %5760 = vmatprep.mubr.bf16.mxu0 0
        %5761 = vmatmul.mubr.bf16.gmra.mxu0 %v5611
        %v5762 = vpop.f32.mrf.mxu0
        %v5763 = vadd.f32 0.0, %v5762
        %v5764 = vpop.f32.mrf.mxu0
        %v5765 = vpop.f32.mrf.mxu0
        %v5766 = vadd.f32 0.0, %v5765
        %v5767 = vpop.f32.mrf.mxu0
        %5768 = vmatprep.mubr.bf16.mxu0 0
        %5769 = vmatmul.mubr.bf16.gmra.mxu0 %v5614
        %v5770 = vpop.f32.mrf.mxu0
        %v5771 = vadd.f32 0.0, %v5770
        %v5772 = vpop.f32.mrf.mxu0
        %v5773 = vpop.f32.mrf.mxu0
        %v5774 = vadd.f32 0.0, %v5773
        %v5775 = vpop.f32.mrf.mxu0
        %5776 = vdwg.mxu0
        %v5777 = vadd.f32 %v5047, %v5651
        %v5778 = vadd.f32 %v5048, %v5654
        %v5779 = vadd.f32 %v5049, %v5659
        %v5780 = vadd.f32 %v5050, %v5662
        %v5781 = vadd.f32 %v5051, %v5667
        %v5782 = vadd.f32 %v5052, %v5670
        %v5783 = vadd.f32 %v5053, %v5675
        %v5784 = vadd.f32 %v5054, %v5678
        %v5785 = vadd.f32 %v5055, %v5683
        %v5786 = vadd.f32 %v5056, %v5686
        %v5787 = vadd.f32 %v5057, %v5691
        %v5788 = vadd.f32 %v5058, %v5694
        %v5789 = vadd.f32 %v5059, %v5699
        %v5790 = vadd.f32 %v5060, %v5702
        %v5791 = vadd.f32 %v5061, %v5707
        %v5792 = vadd.f32 %v5062, %v5710
        %v5793 = vadd.f32 %v5063, %v5715
        %v5794 = vadd.f32 %v5064, %v5718
        %v5795 = vadd.f32 %v5065, %v5723
        %v5796 = vadd.f32 %v5066, %v5726
        %v5797 = vadd.f32 %v5067, %v5731
        %v5798 = vadd.f32 %v5068, %v5734
        %v5799 = vadd.f32 %v5069, %v5739
        %v5800 = vadd.f32 %v5070, %v5742
        %v5801 = vadd.f32 %v5071, %v5747
        %v5802 = vadd.f32 %v5072, %v5750
        %v5803 = vadd.f32 %v5073, %v5755
        %v5804 = vadd.f32 %v5074, %v5758
        %v5805 = vadd.f32 %v5075, %v5763
        %v5806 = vadd.f32 %v5076, %v5766
        %v5807 = vadd.f32 %v5077, %v5771
        %v5808 = vadd.f32 %v5078, %v5774
        %v5809 = vld [vmem:[%s2] sm:$0x1]
        %v5811 = vlaneseq
        %v5812 = vshrl.u32 %v5811, 7
        %v5813 = vsub.s32 0, %v5812
        %v5814 = vrot.slane %v5809, %v5813
        %v5816 = vmul.f32 %v5777, %v5814
        %v5817 = vmul.f32 %v5778, %v5814
        %v5818 = vmul.f32 %v5779, %v5814
        %v5819 = vmul.f32 %v5780, %v5814
        %v5820 = vmul.f32 %v5781, %v5814
        %v5821 = vmul.f32 %v5782, %v5814
        %v5822 = vmul.f32 %v5783, %v5814
        %v5823 = vmul.f32 %v5784, %v5814
        %v5824 = vmul.f32 %v5785, %v5814
        %v5825 = vmul.f32 %v5786, %v5814
        %v5826 = vmul.f32 %v5787, %v5814
        %v5827 = vmul.f32 %v5788, %v5814
        %v5828 = vmul.f32 %v5789, %v5814
        %v5829 = vmul.f32 %v5790, %v5814
        %v5830 = vmul.f32 %v5791, %v5814
        %v5831 = vmul.f32 %v5792, %v5814
        %v5832 = vmul.f32 %v5793, %v5814
        %v5833 = vmul.f32 %v5794, %v5814
        %v5834 = vmul.f32 %v5795, %v5814
        %v5835 = vmul.f32 %v5796, %v5814
        %v5836 = vmul.f32 %v5797, %v5814
        %v5837 = vmul.f32 %v5798, %v5814
        %v5838 = vmul.f32 %v5799, %v5814
        %v5839 = vmul.f32 %v5800, %v5814
        %v5840 = vmul.f32 %v5801, %v5814
        %v5841 = vmul.f32 %v5802, %v5814
        %v5842 = vmul.f32 %v5803, %v5814
        %v5843 = vmul.f32 %v5804, %v5814
        %v5844 = vmul.f32 %v5805, %v5814
        %v5845 = vmul.f32 %v5806, %v5814
        %v5846 = vmul.f32 %v5807, %v5814
        %v5847 = vmul.f32 %v5808, %v5814
        %v5848 = vld [vmem:[%s3] sm:$0x1]
        %v5850 = vlaneseq
        %v5851 = vshrl.u32 %v5850, 7
        %v5852 = vsub.s32 0, %v5851
        %v5853 = vrot.slane %v5848, %v5852
        %v5855 = vadd.f32 %v5816, %v5853
        %v5856 = vadd.f32 %v5817, %v5853
        %v5857 = vadd.f32 %v5818, %v5853
        %v5858 = vadd.f32 %v5819, %v5853
        %v5859 = vadd.f32 %v5820, %v5853
        %v5860 = vadd.f32 %v5821, %v5853
        %v5861 = vadd.f32 %v5822, %v5853
        %v5862 = vadd.f32 %v5823, %v5853
        %v5863 = vadd.f32 %v5824, %v5853
        %v5864 = vadd.f32 %v5825, %v5853
        %v5865 = vadd.f32 %v5826, %v5853
        %v5866 = vadd.f32 %v5827, %v5853
        %v5867 = vadd.f32 %v5828, %v5853
        %v5868 = vadd.f32 %v5829, %v5853
        %v5869 = vadd.f32 %v5830, %v5853
        %v5870 = vadd.f32 %v5831, %v5853
        %v5871 = vadd.f32 %v5832, %v5853
        %v5872 = vadd.f32 %v5833, %v5853
        %v5873 = vadd.f32 %v5834, %v5853
        %v5874 = vadd.f32 %v5835, %v5853
        %v5875 = vadd.f32 %v5836, %v5853
        %v5876 = vadd.f32 %v5837, %v5853
        %v5877 = vadd.f32 %v5838, %v5853
        %v5878 = vadd.f32 %v5839, %v5853
        %v5879 = vadd.f32 %v5840, %v5853
        %v5880 = vadd.f32 %v5841, %v5853
        %v5881 = vadd.f32 %v5842, %v5853
        %v5882 = vadd.f32 %v5843, %v5853
        %v5883 = vadd.f32 %v5844, %v5853
        %v5884 = vadd.f32 %v5845, %v5853
        %v5885 = vadd.f32 %v5846, %v5853
        %v5886 = vadd.f32 %v5847, %v5853
        %v5887 = vmax.f32 %v5855, 0.0
        %v5888 = vmax.f32 %v5856, 0.0
        %v5889 = vmax.f32 %v5857, 0.0
        %v5890 = vmax.f32 %v5858, 0.0
        %v5891 = vmax.f32 %v5859, 0.0
        %v5892 = vmax.f32 %v5860, 0.0
        %v5893 = vmax.f32 %v5861, 0.0
        %v5894 = vmax.f32 %v5862, 0.0
        %v5895 = vmax.f32 %v5863, 0.0
        %v5896 = vmax.f32 %v5864, 0.0
        %v5897 = vmax.f32 %v5865, 0.0
        %v5898 = vmax.f32 %v5866, 0.0
        %v5899 = vmax.f32 %v5867, 0.0
        %v5900 = vmax.f32 %v5868, 0.0
        %v5901 = vmax.f32 %v5869, 0.0
        %v5902 = vmax.f32 %v5870, 0.0
        %v5903 = vmax.f32 %v5871, 0.0
        %v5904 = vmax.f32 %v5872, 0.0
        %v5905 = vmax.f32 %v5873, 0.0
        %v5906 = vmax.f32 %v5874, 0.0
        %v5907 = vmax.f32 %v5875, 0.0
        %v5908 = vmax.f32 %v5876, 0.0
        %v5909 = vmax.f32 %v5877, 0.0
        %v5910 = vmax.f32 %v5878, 0.0
        %v5911 = vmax.f32 %v5879, 0.0
        %v5912 = vmax.f32 %v5880, 0.0
        %v5913 = vmax.f32 %v5881, 0.0
        %v5914 = vmax.f32 %v5882, 0.0
        %v5915 = vmax.f32 %v5883, 0.0
        %v5916 = vmax.f32 %v5884, 0.0
        %v5917 = vmax.f32 %v5885, 0.0
        %v5918 = vmax.f32 %v5886, 0.0
        %v5919 = vpack.c.bf16 %v5888, %v5887
        %v5920 = vpack.c.bf16 %v5890, %v5889
        %v5921 = vpack.c.bf16 %v5892, %v5891
        %v5922 = vpack.c.bf16 %v5894, %v5893
        %v5923 = vpack.c.bf16 %v5896, %v5895
        %v5924 = vpack.c.bf16 %v5898, %v5897
        %v5925 = vpack.c.bf16 %v5900, %v5899
        %v5926 = vpack.c.bf16 %v5902, %v5901
        %v5927 = vpack.c.bf16 %v5904, %v5903
        %v5928 = vpack.c.bf16 %v5906, %v5905
        %v5929 = vpack.c.bf16 %v5908, %v5907
        %v5930 = vpack.c.bf16 %v5910, %v5909
        %v5931 = vpack.c.bf16 %v5912, %v5911
        %v5932 = vpack.c.bf16 %v5914, %v5913
        %v5933 = vpack.c.bf16 %v5916, %v5915
        %v5934 = vpack.c.bf16 %v5918, %v5917
        %v5951 = vunpack.c.l.b16 %v5919
        %v5952 = vunpack.c.h.b16 %v5919
        %v5953 = vunpack.c.l.b16 %v5920
        %v5954 = vunpack.c.h.b16 %v5920
        %v5955 = vunpack.c.l.b16 %v5921
        %v5956 = vunpack.c.h.b16 %v5921
        %v5957 = vunpack.c.l.b16 %v5922
        %v5958 = vunpack.c.h.b16 %v5922
        %v5959 = vunpack.c.l.b16 %v5923
        %v5960 = vunpack.c.h.b16 %v5923
        %v5961 = vunpack.c.l.b16 %v5924
        %v5962 = vunpack.c.h.b16 %v5924
        %v5963 = vunpack.c.l.b16 %v5925
        %v5964 = vunpack.c.h.b16 %v5925
        %v5965 = vunpack.c.l.b16 %v5926
        %v5966 = vunpack.c.h.b16 %v5926
        %v5967 = vunpack.c.l.b16 %v5927
        %v5968 = vunpack.c.h.b16 %v5927
        %v5969 = vunpack.c.l.b16 %v5928
        %v5970 = vunpack.c.h.b16 %v5928
        %v5971 = vunpack.c.l.b16 %v5929
        %v5972 = vunpack.c.h.b16 %v5929
        %v5973 = vunpack.c.l.b16 %v5930
        %v5974 = vunpack.c.h.b16 %v5930
        %v5975 = vunpack.c.l.b16 %v5931
        %v5976 = vunpack.c.h.b16 %v5931
        %v5977 = vunpack.c.l.b16 %v5932
        %v5978 = vunpack.c.h.b16 %v5932
        %v5979 = vunpack.c.l.b16 %v5933
        %v5980 = vunpack.c.h.b16 %v5933
        %v5981 = vunpack.c.l.b16 %v5934
        %v5982 = vunpack.c.h.b16 %v5934
        %v5983 = vpack.c.b16 %v5951, %v5951
        %v5984 = vpack.c.b16 %v5952, %v5952
        %v5985 = vpack.c.b16 %v5953, %v5953
        %v5986 = vpack.c.b16 %v5954, %v5954
        %v5987 = vpack.c.b16 %v5955, %v5955
        %v5988 = vpack.c.b16 %v5956, %v5956
        %v5989 = vpack.c.b16 %v5957, %v5957
        %v5990 = vpack.c.b16 %v5958, %v5958
        %v5991 = vpack.c.b16 %v5959, %v5959
        %v5992 = vpack.c.b16 %v5960, %v5960
        %v5993 = vpack.c.b16 %v5961, %v5961
        %v5994 = vpack.c.b16 %v5962, %v5962
        %v5995 = vpack.c.b16 %v5963, %v5963
        %v5996 = vpack.c.b16 %v5964, %v5964
        %v5997 = vpack.c.b16 %v5965, %v5965
        %v5998 = vpack.c.b16 %v5966, %v5966
        %v5999 = vpack.c.b16 %v5967, %v5967
        %v6000 = vpack.c.b16 %v5968, %v5968
        %v6001 = vpack.c.b16 %v5969, %v5969
        %v6002 = vpack.c.b16 %v5970, %v5970
        %v6003 = vpack.c.b16 %v5971, %v5971
        %v6004 = vpack.c.b16 %v5972, %v5972
        %v6005 = vpack.c.b16 %v5973, %v5973
        %v6006 = vpack.c.b16 %v5974, %v5974
        %v6007 = vpack.c.b16 %v5975, %v5975
        %v6008 = vpack.c.b16 %v5976, %v5976
        %v6009 = vpack.c.b16 %v5977, %v5977
        %v6010 = vpack.c.b16 %v5978, %v5978
        %v6011 = vpack.c.b16 %v5979, %v5979
        %v6012 = vpack.c.b16 %v5980, %v5980
        %v6013 = vpack.c.b16 %v5981, %v5981
        %v6014 = vpack.c.b16 %v5982, %v5982
        %s6047 = scalar_lea.vmem [#allocation3], 16
        %vm6048 = vcmask 257024
        %6049 = vst.msk [vmem:[%s6047 + $0x4] sm:$0xf] %vm6048, %v5983
        %6050 = vst.msk [vmem:[%s6047 + $0x8] sm:$0xf] %vm6048, %v5984
        %6051 = vst.msk [vmem:[%s6047 + $0x14] sm:$0xf] %vm6048, %v5985
        %6052 = vst.msk [vmem:[%s6047 + $0x18] sm:$0xf] %vm6048, %v5986
        %6053 = vst.msk [vmem:[%s6047 + $0x24] sm:$0xf] %vm6048, %v5987
        %6054 = vst.msk [vmem:[%s6047 + $0x28] sm:$0xf] %vm6048, %v5988
        %6055 = vst.msk [vmem:[%s6047 + $0x34] sm:$0xf] %vm6048, %v5989
        %6056 = vst.msk [vmem:[%s6047 + $0x38] sm:$0xf] %vm6048, %v5990
        %6057 = vst.msk [vmem:[%s6047 + $0x44] sm:$0xf] %vm6048, %v5991
        %6058 = vst.msk [vmem:[%s6047 + $0x48] sm:$0xf] %vm6048, %v5992
        %6059 = vst.msk [vmem:[%s6047 + $0x54] sm:$0xf] %vm6048, %v5993
        %6060 = vst.msk [vmem:[%s6047 + $0x58] sm:$0xf] %vm6048, %v5994
        %6061 = vst.msk [vmem:[%s6047 + $0x64] sm:$0xf] %vm6048, %v5995
        %6062 = vst.msk [vmem:[%s6047 + $0x68] sm:$0xf] %vm6048, %v5996
        %6063 = vst.msk [vmem:[%s6047 + $0x74] sm:$0xf] %vm6048, %v5997
        %6064 = vst.msk [vmem:[%s6047 + $0x78] sm:$0xf] %vm6048, %v5998
        %6065 = vst.msk [vmem:[%s6047 + $0x84] sm:$0xf] %vm6048, %v5999
        %6066 = vst.msk [vmem:[%s6047 + $0x88] sm:$0xf] %vm6048, %v6000
        %6067 = vst.msk [vmem:[%s6047 + $0x94] sm:$0xf] %vm6048, %v6001
        %6068 = vst.msk [vmem:[%s6047 + $0x98] sm:$0xf] %vm6048, %v6002
        %6069 = vst.msk [vmem:[%s6047 + $0xa4] sm:$0xf] %vm6048, %v6003
        %6070 = vst.msk [vmem:[%s6047 + $0xa8] sm:$0xf] %vm6048, %v6004
        %6071 = vst.msk [vmem:[%s6047 + $0xb4] sm:$0xf] %vm6048, %v6005
        %6072 = vst.msk [vmem:[%s6047 + $0xb8] sm:$0xf] %vm6048, %v6006
        %6073 = vst.msk [vmem:[%s6047 + $0xc4] sm:$0xf] %vm6048, %v6007
        %6074 = vst.msk [vmem:[%s6047 + $0xc8] sm:$0xf] %vm6048, %v6008
        %6075 = vst.msk [vmem:[%s6047 + $0xd4] sm:$0xf] %vm6048, %v6009
        %6076 = vst.msk [vmem:[%s6047 + $0xd8] sm:$0xf] %vm6048, %v6010
        %6077 = vst.msk [vmem:[%s6047 + $0xe4] sm:$0xf] %vm6048, %v6011
        %6078 = vst.msk [vmem:[%s6047 + $0xe8] sm:$0xf] %vm6048, %v6012
        %6079 = vst.msk [vmem:[%s6047 + $0xf4] sm:$0xf] %vm6048, %v6013
        %6080 = vst.msk [vmem:[%s6047 + $0xf8] sm:$0xf] %vm6048, %v6014
        %vm6081 = vcmask 257027
        %vm6082 = vmand %vm6081, %vm475
        %v6083 = vld [vmem:[#allocation3] sm:$0x8]
        %v6084 = vsel %vm6082, 0, %v6083
        %6085 = vst [vmem:[#allocation3] sm:$0x8] %v6084
        %6086 = vst.msk [vmem:[#allocation3 + $0x4] sm:$0xf] %vm6048, 0
        %6087 = vst.msk [vmem:[#allocation3 + $0x8] sm:$0xf] %vm6048, 0
        %vm6088 = vcmask 253952
        %vm6089 = vmand %vm6088, %vm483
        %v6090 = vld [vmem:[#allocation3 + $0xc] sm:$0x1]
        %v6091 = vsel %vm6089, 0, %v6090
        %6092 = vst [vmem:[#allocation3 + $0xc] sm:$0x1] %v6091
        %s6093 = scalar_lea.vmem [#allocation3], 272
        %v6094 = vld [vmem:[%s6093] sm:$0x8]
        %v6095 = vsel %vm6082, 0, %v6094
        %6096 = vst [vmem:[%s6093] sm:$0x8] %v6095
        %6097 = vst.msk [vmem:[%s6093 + $0x4] sm:$0xf] %vm6048, 0
        %6098 = vst.msk [vmem:[%s6093 + $0x8] sm:$0xf] %vm6048, 0
        %v6099 = vld [vmem:[%s6093 + $0xc] sm:$0x1]
        %v6100 = vsel %vm6089, 0, %v6099
        %6101 = vst [vmem:[%s6093 + $0xc] sm:$0x1] %v6100
        %v6102 = vld [vmem:[%s6047] sm:$0x8]
        %v6103 = vsel %vm6082, 0, %v6102
        %6104 = vst [vmem:[%s6047] sm:$0x8] %v6103
        %v6105 = vld [vmem:[%s6047 + $0x10] sm:$0x8]
        %v6106 = vsel %vm6082, 0, %v6105
        %6107 = vst [vmem:[%s6047 + $0x10] sm:$0x8] %v6106
        %v6108 = vld [vmem:[%s6047 + $0x20] sm:$0x8]
        %v6109 = vsel %vm6082, 0, %v6108
        %6110 = vst [vmem:[%s6047 + $0x20] sm:$0x8] %v6109
        %v6111 = vld [vmem:[%s6047 + $0x30] sm:$0x8]
        %v6112 = vsel %vm6082, 0, %v6111
        %6113 = vst [vmem:[%s6047 + $0x30] sm:$0x8] %v6112
        %v6114 = vld [vmem:[%s6047 + $0x40] sm:$0x8]
        %v6115 = vsel %vm6082, 0, %v6114
        %6116 = vst [vmem:[%s6047 + $0x40] sm:$0x8] %v6115
        %v6117 = vld [vmem:[%s6047 + $0x50] sm:$0x8]
        %v6118 = vsel %vm6082, 0, %v6117
        %6119 = vst [vmem:[%s6047 + $0x50] sm:$0x8] %v6118
        %v6120 = vld [vmem:[%s6047 + $0x60] sm:$0x8]
        %v6121 = vsel %vm6082, 0, %v6120
        %6122 = vst [vmem:[%s6047 + $0x60] sm:$0x8] %v6121
        %v6123 = vld [vmem:[%s6047 + $0x70] sm:$0x8]
        %v6124 = vsel %vm6082, 0, %v6123
        %6125 = vst [vmem:[%s6047 + $0x70] sm:$0x8] %v6124
        %v6126 = vld [vmem:[%s6047 + $0x80] sm:$0x8]
        %v6127 = vsel %vm6082, 0, %v6126
        %6128 = vst [vmem:[%s6047 + $0x80] sm:$0x8] %v6127
        %v6129 = vld [vmem:[%s6047 + $0x90] sm:$0x8]
        %v6130 = vsel %vm6082, 0, %v6129
        %6131 = vst [vmem:[%s6047 + $0x90] sm:$0x8] %v6130
        %v6132 = vld [vmem:[%s6047 + $0xa0] sm:$0x8]
        %v6133 = vsel %vm6082, 0, %v6132
        %6134 = vst [vmem:[%s6047 + $0xa0] sm:$0x8] %v6133
        %v6135 = vld [vmem:[%s6047 + $0xb0] sm:$0x8]
        %v6136 = vsel %vm6082, 0, %v6135
        %6137 = vst [vmem:[%s6047 + $0xb0] sm:$0x8] %v6136
        %v6138 = vld [vmem:[%s6047 + $0xc0] sm:$0x8]
        %v6139 = vsel %vm6082, 0, %v6138
        %6140 = vst [vmem:[%s6047 + $0xc0] sm:$0x8] %v6139
        %v6141 = vld [vmem:[%s6047 + $0xd0] sm:$0x8]
        %v6142 = vsel %vm6082, 0, %v6141
        %6143 = vst [vmem:[%s6047 + $0xd0] sm:$0x8] %v6142
        %v6144 = vld [vmem:[%s6047 + $0xe0] sm:$0x8]
        %v6145 = vsel %vm6082, 0, %v6144
        %6146 = vst [vmem:[%s6047 + $0xe0] sm:$0x8] %v6145
        %v6147 = vld [vmem:[%s6047 + $0xf0] sm:$0x8]
        %v6148 = vsel %vm6082, 0, %v6147
        %6149 = vst [vmem:[%s6047 + $0xf0] sm:$0x8] %v6148
        %v6150 = vld [vmem:[%s6047 + $0xc] sm:$0x1]
        %v6151 = vsel %vm6089, 0, %v6150
        %6152 = vst [vmem:[%s6047 + $0xc] sm:$0x1] %v6151
        %v6153 = vld [vmem:[%s6047 + $0x1c] sm:$0x1]
        %v6154 = vsel %vm6089, 0, %v6153
        %6155 = vst [vmem:[%s6047 + $0x1c] sm:$0x1] %v6154
        %v6156 = vld [vmem:[%s6047 + $0x2c] sm:$0x1]
        %v6157 = vsel %vm6089, 0, %v6156
        %6158 = vst [vmem:[%s6047 + $0x2c] sm:$0x1] %v6157
        %v6159 = vld [vmem:[%s6047 + $0x3c] sm:$0x1]
        %v6160 = vsel %vm6089, 0, %v6159
        %6161 = vst [vmem:[%s6047 + $0x3c] sm:$0x1] %v6160
        %v6162 = vld [vmem:[%s6047 + $0x4c] sm:$0x1]
        %v6163 = vsel %vm6089, 0, %v6162
        %6164 = vst [vmem:[%s6047 + $0x4c] sm:$0x1] %v6163
        %v6165 = vld [vmem:[%s6047 + $0x5c] sm:$0x1]
        %v6166 = vsel %vm6089, 0, %v6165
        %6167 = vst [vmem:[%s6047 + $0x5c] sm:$0x1] %v6166
        %v6168 = vld [vmem:[%s6047 + $0x6c] sm:$0x1]
        %v6169 = vsel %vm6089, 0, %v6168
        %6170 = vst [vmem:[%s6047 + $0x6c] sm:$0x1] %v6169
        %v6171 = vld [vmem:[%s6047 + $0x7c] sm:$0x1]
        %v6172 = vsel %vm6089, 0, %v6171
        %6173 = vst [vmem:[%s6047 + $0x7c] sm:$0x1] %v6172
        %v6174 = vld [vmem:[%s6047 + $0x8c] sm:$0x1]
        %v6175 = vsel %vm6089, 0, %v6174
        %6176 = vst [vmem:[%s6047 + $0x8c] sm:$0x1] %v6175
        %v6177 = vld [vmem:[%s6047 + $0x9c] sm:$0x1]
        %v6178 = vsel %vm6089, 0, %v6177
        %6179 = vst [vmem:[%s6047 + $0x9c] sm:$0x1] %v6178
        %v6180 = vld [vmem:[%s6047 + $0xac] sm:$0x1]
        %v6181 = vsel %vm6089, 0, %v6180
        %6182 = vst [vmem:[%s6047 + $0xac] sm:$0x1] %v6181
        %v6183 = vld [vmem:[%s6047 + $0xbc] sm:$0x1]
        %v6184 = vsel %vm6089, 0, %v6183
        %6185 = vst [vmem:[%s6047 + $0xbc] sm:$0x1] %v6184
        %v6186 = vld [vmem:[%s6047 + $0xcc] sm:$0x1]
        %v6187 = vsel %vm6089, 0, %v6186
        %6188 = vst [vmem:[%s6047 + $0xcc] sm:$0x1] %v6187
        %v6189 = vld [vmem:[%s6047 + $0xdc] sm:$0x1]
        %v6190 = vsel %vm6089, 0, %v6189
        %6191 = vst [vmem:[%s6047 + $0xdc] sm:$0x1] %v6190
        %v6192 = vld [vmem:[%s6047 + $0xec] sm:$0x1]
        %v6193 = vsel %vm6089, 0, %v6192
        %6194 = vst [vmem:[%s6047 + $0xec] sm:$0x1] %v6193
        %v6195 = vld [vmem:[%s6047 + $0xfc] sm:$0x1]
        %v6196 = vsel %vm6089, 0, %v6195
        %6197 = vst [vmem:[%s6047 + $0xfc] sm:$0x1] %v6196
        %v6198 = vld [vmem:[%s7] sm:$0xf]
        %v6199 = vld [vmem:[%s7 + $0x4] sm:$0xf]
        %v6232 = vunpack.c.l.b16 %v408
        %v6233 = vunpack.c.l.b16 %v409
        %v6234 = vunpack.c.l.b16 %v410
        %v6235 = vunpack.c.l.b16 %v411
        %v6236 = vunpack.c.l.b16 %v412
        %v6237 = vunpack.c.l.b16 %v413
        %v6238 = vunpack.c.l.b16 %v414
        %v6239 = vunpack.c.l.b16 %v415
        %v6240 = vunpack.c.l.b16 %v416
        %v6241 = vunpack.c.l.b16 %v417
        %v6242 = vunpack.c.l.b16 %v418
        %v6243 = vunpack.c.l.b16 %v419
        %v6244 = vunpack.c.l.b16 %v420
        %v6245 = vunpack.c.l.b16 %v421
        %v6246 = vunpack.c.l.b16 %v422
        %v6247 = vunpack.c.l.b16 %v423
        %v6248 = vunpack.c.l.b16 %v424
        %v6249 = vunpack.c.l.b16 %v425
        %v6250 = vunpack.c.l.b16 %v426
        %v6251 = vunpack.c.l.b16 %v427
        %v6252 = vunpack.c.l.b16 %v428
        %v6253 = vunpack.c.l.b16 %v429
        %v6254 = vunpack.c.l.b16 %v430
        %v6255 = vunpack.c.l.b16 %v431
        %v6256 = vunpack.c.l.b16 %v432
        %v6257 = vunpack.c.l.b16 %v433
        %v6258 = vunpack.c.l.b16 %v434
        %v6259 = vunpack.c.l.b16 %v435
        %v6260 = vunpack.c.l.b16 %v436
        %v6261 = vunpack.c.l.b16 %v437
        %v6262 = vunpack.c.l.b16 %v438
        %v6263 = vunpack.c.l.b16 %v439
        %v6264 = vpack.c.b16 %v6233, %v6232
        %v6265 = vpack.c.b16 %v6235, %v6234
        %v6266 = vpack.c.b16 %v6237, %v6236
        %v6267 = vpack.c.b16 %v6239, %v6238
        %v6268 = vpack.c.b16 %v6241, %v6240
        %v6269 = vpack.c.b16 %v6243, %v6242
        %v6270 = vpack.c.b16 %v6245, %v6244
        %v6271 = vpack.c.b16 %v6247, %v6246
        %v6272 = vpack.c.b16 %v6249, %v6248
        %v6273 = vpack.c.b16 %v6251, %v6250
        %v6274 = vpack.c.b16 %v6253, %v6252
        %v6275 = vpack.c.b16 %v6255, %v6254
        %v6276 = vpack.c.b16 %v6257, %v6256
        %v6277 = vpack.c.b16 %v6259, %v6258
        %v6278 = vpack.c.b16 %v6261, %v6260
        %v6279 = vpack.c.b16 %v6263, %v6262
        %v6282 = vunpack.c.l.b16 %v6198
        %v6283 = vunpack.c.l.b16 %v6199
        %v6284 = vpack.c.b16 %v6283, %v6282
        %v6287 = vsel %vm1086, %v6264, 0
        %v6290 = vsel %vm1086, %v6265, 0
        %v6293 = vsel %vm1086, %v6266, 0
        %v6296 = vsel %vm1086, %v6267, 0
        %v6299 = vsel %vm1086, %v6268, 0
        %v6302 = vsel %vm1086, %v6269, 0
        %v6305 = vsel %vm1086, %v6270, 0
        %v6308 = vsel %vm1086, %v6271, 0
        %v6311 = vsel %vm1086, %v6272, 0
        %v6314 = vsel %vm1086, %v6273, 0
        %v6317 = vsel %vm1086, %v6274, 0
        %v6320 = vsel %vm1086, %v6275, 0
        %v6323 = vsel %vm1086, %v6276, 0
        %v6326 = vsel %vm1086, %v6277, 0
        %v6329 = vsel %vm1086, %v6278, 0
        %v6332 = vsel %vm1086, %v6279, 0
        %6334 = vmatprep.subr.bf16.mxu0 0
        %6335 = vmatpush1.bf16.msra.mxu0 0
        %6336 = vmatprep.subr.bf16.mxu0 0
        %6337 = vmatpush1.bf16.msra.mxu0 0
        %6338 = vmatprep.subr.bf16.mxu0 0
        %6339 = vmatpush1.bf16.msra.mxu0 0
        %6340 = vmatprep.subr.bf16.mxu0 0
        %6341 = vmatpush1.bf16.msra.mxu0 0
        %6342 = vmatprep.subr.bf16.mxu0 0
        %6343 = vmatpush1.bf16.msra.mxu0 0
        %6344 = vmatprep.subr.bf16.mxu0 0
        %6345 = vmatpush1.bf16.msra.mxu0 0
        %6346 = vmatprep.subr.bf16.mxu0 0
        %6347 = vmatpush1.bf16.msra.mxu0 0
        %6348 = vmatprep.subr.bf16.mxu0 0
        %6349 = vmatpush1.bf16.msra.mxu0 %v6284
        %6350 = vmatprep.subr.bf16.mxu0 0
        %6351 = vmatpush2.bf16.msra.mxu0 0
        %6352 = vmatprep.subr.bf16.mxu0 0
        %6353 = vmatpush2.bf16.msra.mxu0 0
        %6354 = vmatprep.subr.bf16.mxu0 0
        %6355 = vmatpush2.bf16.msra.mxu0 0
        %6356 = vmatprep.subr.bf16.mxu0 0
        %6357 = vmatpush2.bf16.msra.mxu0 0
        %6358 = vmatprep.subr.bf16.mxu0 0
        %6359 = vmatpush2.bf16.msra.mxu0 0
        %6360 = vmatprep.subr.bf16.mxu0 0
        %6361 = vmatpush2.bf16.msra.mxu0 0
        %6362 = vmatprep.subr.bf16.mxu0 0
        %6363 = vmatpush2.bf16.msra.mxu0 0
        %6364 = vmatprep.subr.bf16.mxu0 0
        %6365 = vmatpush2.bf16.msra.mxu0 0
        %6366 = vmatprep.mubr.bf16.mxu0 0
        %6367 = vmatmul.mubr.bf16.gmra.mxu0 %v6287
        %v6368 = vpop.f32.mrf.mxu0
        %v6369 = vadd.f32 0.0, %v6368
        %v6370 = vpop.f32.mrf.mxu0
        %v6371 = vpop.f32.mrf.mxu0
        %v6372 = vadd.f32 0.0, %v6371
        %v6373 = vpop.f32.mrf.mxu0
        %6374 = vmatprep.mubr.bf16.mxu0 0
        %6375 = vmatmul.mubr.bf16.gmra.mxu0 %v6290
        %v6376 = vpop.f32.mrf.mxu0
        %v6377 = vadd.f32 0.0, %v6376
        %v6378 = vpop.f32.mrf.mxu0
        %v6379 = vpop.f32.mrf.mxu0
        %v6380 = vadd.f32 0.0, %v6379
        %v6381 = vpop.f32.mrf.mxu0
        %6382 = vmatprep.mubr.bf16.mxu0 0
        %6383 = vmatmul.mubr.bf16.gmra.mxu0 %v6293
        %v6384 = vpop.f32.mrf.mxu0
        %v6385 = vadd.f32 0.0, %v6384
        %v6386 = vpop.f32.mrf.mxu0
        %v6387 = vpop.f32.mrf.mxu0
        %v6388 = vadd.f32 0.0, %v6387
        %v6389 = vpop.f32.mrf.mxu0
        %6390 = vmatprep.mubr.bf16.mxu0 0
        %6391 = vmatmul.mubr.bf16.gmra.mxu0 %v6296
        %v6392 = vpop.f32.mrf.mxu0
        %v6393 = vadd.f32 0.0, %v6392
        %v6394 = vpop.f32.mrf.mxu0
        %v6395 = vpop.f32.mrf.mxu0
        %v6396 = vadd.f32 0.0, %v6395
        %v6397 = vpop.f32.mrf.mxu0
        %6398 = vmatprep.mubr.bf16.mxu0 0
        %6399 = vmatmul.mubr.bf16.gmra.mxu0 %v6299
        %v6400 = vpop.f32.mrf.mxu0
        %v6401 = vadd.f32 0.0, %v6400
        %v6402 = vpop.f32.mrf.mxu0
        %v6403 = vpop.f32.mrf.mxu0
        %v6404 = vadd.f32 0.0, %v6403
        %v6405 = vpop.f32.mrf.mxu0
        %6406 = vmatprep.mubr.bf16.mxu0 0
        %6407 = vmatmul.mubr.bf16.gmra.mxu0 %v6302
        %v6408 = vpop.f32.mrf.mxu0
        %v6409 = vadd.f32 0.0, %v6408
        %v6410 = vpop.f32.mrf.mxu0
        %v6411 = vpop.f32.mrf.mxu0
        %v6412 = vadd.f32 0.0, %v6411
        %v6413 = vpop.f32.mrf.mxu0
        %6414 = vmatprep.mubr.bf16.mxu0 0
        %6415 = vmatmul.mubr.bf16.gmra.mxu0 %v6305
        %v6416 = vpop.f32.mrf.mxu0
        %v6417 = vadd.f32 0.0, %v6416
        %v6418 = vpop.f32.mrf.mxu0
        %v6419 = vpop.f32.mrf.mxu0
        %v6420 = vadd.f32 0.0, %v6419
        %v6421 = vpop.f32.mrf.mxu0
        %6422 = vmatprep.mubr.bf16.mxu0 0
        %6423 = vmatmul.mubr.bf16.gmra.mxu0 %v6308
        %v6424 = vpop.f32.mrf.mxu0
        %v6425 = vadd.f32 0.0, %v6424
        %v6426 = vpop.f32.mrf.mxu0
        %v6427 = vpop.f32.mrf.mxu0
        %v6428 = vadd.f32 0.0, %v6427
        %v6429 = vpop.f32.mrf.mxu0
        %6430 = vmatprep.mubr.bf16.mxu0 0
        %6431 = vmatmul.mubr.bf16.gmra.mxu0 %v6311
        %v6432 = vpop.f32.mrf.mxu0
        %v6433 = vadd.f32 0.0, %v6432
        %v6434 = vpop.f32.mrf.mxu0
        %v6435 = vpop.f32.mrf.mxu0
        %v6436 = vadd.f32 0.0, %v6435
        %v6437 = vpop.f32.mrf.mxu0
        %6438 = vmatprep.mubr.bf16.mxu0 0
        %6439 = vmatmul.mubr.bf16.gmra.mxu0 %v6314
        %v6440 = vpop.f32.mrf.mxu0
        %v6441 = vadd.f32 0.0, %v6440
        %v6442 = vpop.f32.mrf.mxu0
        %v6443 = vpop.f32.mrf.mxu0
        %v6444 = vadd.f32 0.0, %v6443
        %v6445 = vpop.f32.mrf.mxu0
        %6446 = vmatprep.mubr.bf16.mxu0 0
        %6447 = vmatmul.mubr.bf16.gmra.mxu0 %v6317
        %v6448 = vpop.f32.mrf.mxu0
        %v6449 = vadd.f32 0.0, %v6448
        %v6450 = vpop.f32.mrf.mxu0
        %v6451 = vpop.f32.mrf.mxu0
        %v6452 = vadd.f32 0.0, %v6451
        %v6453 = vpop.f32.mrf.mxu0
        %6454 = vmatprep.mubr.bf16.mxu0 0
        %6455 = vmatmul.mubr.bf16.gmra.mxu0 %v6320
        %v6456 = vpop.f32.mrf.mxu0
        %v6457 = vadd.f32 0.0, %v6456
        %v6458 = vpop.f32.mrf.mxu0
        %v6459 = vpop.f32.mrf.mxu0
        %v6460 = vadd.f32 0.0, %v6459
        %v6461 = vpop.f32.mrf.mxu0
        %6462 = vmatprep.mubr.bf16.mxu0 0
        %6463 = vmatmul.mubr.bf16.gmra.mxu0 %v6323
        %v6464 = vpop.f32.mrf.mxu0
        %v6465 = vadd.f32 0.0, %v6464
        %v6466 = vpop.f32.mrf.mxu0
        %v6467 = vpop.f32.mrf.mxu0
        %v6468 = vadd.f32 0.0, %v6467
        %v6469 = vpop.f32.mrf.mxu0
        %6470 = vmatprep.mubr.bf16.mxu0 0
        %6471 = vmatmul.mubr.bf16.gmra.mxu0 %v6326
        %v6472 = vpop.f32.mrf.mxu0
        %v6473 = vadd.f32 0.0, %v6472
        %v6474 = vpop.f32.mrf.mxu0
        %v6475 = vpop.f32.mrf.mxu0
        %v6476 = vadd.f32 0.0, %v6475
        %v6477 = vpop.f32.mrf.mxu0
        %6478 = vmatprep.mubr.bf16.mxu0 0
        %6479 = vmatmul.mubr.bf16.gmra.mxu0 %v6329
        %v6480 = vpop.f32.mrf.mxu0
        %v6481 = vadd.f32 0.0, %v6480
        %v6482 = vpop.f32.mrf.mxu0
        %v6483 = vpop.f32.mrf.mxu0
        %v6484 = vadd.f32 0.0, %v6483
        %v6485 = vpop.f32.mrf.mxu0
        %6486 = vmatprep.mubr.bf16.mxu0 0
        %6487 = vmatmul.mubr.bf16.gmra.mxu0 %v6332
        %v6488 = vpop.f32.mrf.mxu0
        %v6489 = vadd.f32 0.0, %v6488
        %v6490 = vpop.f32.mrf.mxu0
        %v6491 = vpop.f32.mrf.mxu0
        %v6492 = vadd.f32 0.0, %v6491
        %v6493 = vpop.f32.mrf.mxu0
        %6494 = vdwg.mxu0
        %v6495 = vld [vmem:[%s8] sm:$0x1]
        %v6497 = vlaneseq
        %v6498 = vshrl.u32 %v6497, 7
        %v6499 = vsub.s32 0, %v6498
        %v6500 = vrot.slane %v6495, %v6499
        %v6502 = vmul.f32 %v6369, %v6500
        %v6503 = vmul.f32 %v6372, %v6500
        %v6504 = vmul.f32 %v6377, %v6500
        %v6505 = vmul.f32 %v6380, %v6500
        %v6506 = vmul.f32 %v6385, %v6500
        %v6507 = vmul.f32 %v6388, %v6500
        %v6508 = vmul.f32 %v6393, %v6500
        %v6509 = vmul.f32 %v6396, %v6500
        %v6510 = vmul.f32 %v6401, %v6500
        %v6511 = vmul.f32 %v6404, %v6500
        %v6512 = vmul.f32 %v6409, %v6500
        %v6513 = vmul.f32 %v6412, %v6500
        %v6514 = vmul.f32 %v6417, %v6500
        %v6515 = vmul.f32 %v6420, %v6500
        %v6516 = vmul.f32 %v6425, %v6500
        %v6517 = vmul.f32 %v6428, %v6500
        %v6518 = vmul.f32 %v6433, %v6500
        %v6519 = vmul.f32 %v6436, %v6500
        %v6520 = vmul.f32 %v6441, %v6500
        %v6521 = vmul.f32 %v6444, %v6500
        %v6522 = vmul.f32 %v6449, %v6500
        %v6523 = vmul.f32 %v6452, %v6500
        %v6524 = vmul.f32 %v6457, %v6500
        %v6525 = vmul.f32 %v6460, %v6500
        %v6526 = vmul.f32 %v6465, %v6500
        %v6527 = vmul.f32 %v6468, %v6500
        %v6528 = vmul.f32 %v6473, %v6500
        %v6529 = vmul.f32 %v6476, %v6500
        %v6530 = vmul.f32 %v6481, %v6500
        %v6531 = vmul.f32 %v6484, %v6500
        %v6532 = vmul.f32 %v6489, %v6500
        %v6533 = vmul.f32 %v6492, %v6500
        %v6534 = vld [vmem:[%s9] sm:$0x1]
        %v6536 = vlaneseq
        %v6537 = vshrl.u32 %v6536, 7
        %v6538 = vsub.s32 0, %v6537
        %v6539 = vrot.slane %v6534, %v6538
        %v6541 = vadd.f32 %v6502, %v6539
        %v6542 = vadd.f32 %v6503, %v6539
        %v6543 = vadd.f32 %v6504, %v6539
        %v6544 = vadd.f32 %v6505, %v6539
        %v6545 = vadd.f32 %v6506, %v6539
        %v6546 = vadd.f32 %v6507, %v6539
        %v6547 = vadd.f32 %v6508, %v6539
        %v6548 = vadd.f32 %v6509, %v6539
        %v6549 = vadd.f32 %v6510, %v6539
        %v6550 = vadd.f32 %v6511, %v6539
        %v6551 = vadd.f32 %v6512, %v6539
        %v6552 = vadd.f32 %v6513, %v6539
        %v6553 = vadd.f32 %v6514, %v6539
        %v6554 = vadd.f32 %v6515, %v6539
        %v6555 = vadd.f32 %v6516, %v6539
        %v6556 = vadd.f32 %v6517, %v6539
        %v6557 = vadd.f32 %v6518, %v6539
        %v6558 = vadd.f32 %v6519, %v6539
        %v6559 = vadd.f32 %v6520, %v6539
        %v6560 = vadd.f32 %v6521, %v6539
        %v6561 = vadd.f32 %v6522, %v6539
        %v6562 = vadd.f32 %v6523, %v6539
        %v6563 = vadd.f32 %v6524, %v6539
        %v6564 = vadd.f32 %v6525, %v6539
        %v6565 = vadd.f32 %v6526, %v6539
        %v6566 = vadd.f32 %v6527, %v6539
        %v6567 = vadd.f32 %v6528, %v6539
        %v6568 = vadd.f32 %v6529, %v6539
        %v6569 = vadd.f32 %v6530, %v6539
        %v6570 = vadd.f32 %v6531, %v6539
        %v6571 = vadd.f32 %v6532, %v6539
        %v6572 = vadd.f32 %v6533, %v6539
        %v6573 = vld [vmem:[#allocation3] sm:$0x8]
        %v6574 = vld [vmem:[#allocation3 + $0x4] sm:$0xf]
        %v6575 = vld [vmem:[#allocation3 + $0x8] sm:$0xf]
        %v6576 = vld [vmem:[#allocation3 + $0x10] sm:$0x8]
        %v6577 = vld [vmem:[#allocation3 + $0x14] sm:$0xf]
        %v6578 = vld [vmem:[#allocation3 + $0x18] sm:$0xf]
        %v6579 = vld [vmem:[#allocation3 + $0x20] sm:$0x8]
        %v6580 = vld [vmem:[#allocation3 + $0x24] sm:$0xf]
        %v6581 = vld [vmem:[#allocation3 + $0x28] sm:$0xf]
        %v6582 = vld [vmem:[#allocation3 + $0x30] sm:$0x8]
        %v6583 = vld [vmem:[#allocation3 + $0x34] sm:$0xf]
        %v6584 = vld [vmem:[#allocation3 + $0x38] sm:$0xf]
        %v6585 = vld [vmem:[#allocation3 + $0x40] sm:$0x8]
        %v6586 = vld [vmem:[#allocation3 + $0x44] sm:$0xf]
        %v6587 = vld [vmem:[#allocation3 + $0x48] sm:$0xf]
        %v6588 = vld [vmem:[#allocation3 + $0x50] sm:$0x8]
        %v6589 = vld [vmem:[#allocation3 + $0x54] sm:$0xf]
        %v6590 = vld [vmem:[#allocation3 + $0x58] sm:$0xf]
        %v6591 = vld [vmem:[#allocation3 + $0x60] sm:$0x8]
        %v6592 = vld [vmem:[#allocation3 + $0x64] sm:$0xf]
        %v6593 = vld [vmem:[#allocation3 + $0x68] sm:$0xf]
        %v6594 = vld [vmem:[#allocation3 + $0x70] sm:$0x8]
        %v6595 = vld [vmem:[#allocation3 + $0x74] sm:$0xf]
        %v6596 = vld [vmem:[#allocation3 + $0x78] sm:$0xf]
        %v6597 = vld [vmem:[#allocation3 + $0x80] sm:$0x8]
        %v6598 = vld [vmem:[#allocation3 + $0x84] sm:$0xf]
        %v6599 = vld [vmem:[#allocation3 + $0x88] sm:$0xf]
        %v6600 = vld [vmem:[#allocation3 + $0x90] sm:$0x8]
        %v6601 = vld [vmem:[#allocation3 + $0x94] sm:$0xf]
        %v6602 = vld [vmem:[#allocation3 + $0x98] sm:$0xf]
        %v6603 = vld [vmem:[#allocation3 + $0xa0] sm:$0x8]
        %v6604 = vld [vmem:[#allocation3 + $0xa4] sm:$0xf]
        %v6605 = vld [vmem:[#allocation3 + $0xa8] sm:$0xf]
        %v6606 = vld [vmem:[#allocation3 + $0xb0] sm:$0x8]
        %v6607 = vld [vmem:[#allocation3 + $0xb4] sm:$0xf]
        %v6608 = vld [vmem:[#allocation3 + $0xb8] sm:$0xf]
        %v6609 = vld [vmem:[#allocation3 + $0xc0] sm:$0x8]
        %v6610 = vld [vmem:[#allocation3 + $0xc4] sm:$0xf]
        %v6611 = vld [vmem:[#allocation3 + $0xc8] sm:$0xf]
        %v6612 = vld [vmem:[#allocation3 + $0xd0] sm:$0x8]
        %v6613 = vld [vmem:[#allocation3 + $0xd4] sm:$0xf]
        %v6614 = vld [vmem:[#allocation3 + $0xd8] sm:$0xf]
        %v6615 = vld [vmem:[#allocation3 + $0xe0] sm:$0x8]
        %v6616 = vld [vmem:[#allocation3 + $0xe4] sm:$0xf]
        %v6617 = vld [vmem:[#allocation3 + $0xe8] sm:$0xf]
        %v6618 = vld [vmem:[#allocation3 + $0xf0] sm:$0x8]
        %v6619 = vld [vmem:[#allocation3 + $0xf4] sm:$0xf]
        %v6620 = vld [vmem:[#allocation3 + $0xf8] sm:$0xf]
        %v6622 = vshrl.u32 %v6573, 16
        %v6624 = vrot.slane %v6622, 7
        %v6625 = vrot.slane %v6624, 4
        %v6627 = vshrl.u32 %v6574, 16
        %v6629 = vrot.slane %v6627, 7
        %v6630 = vshll.u32 %v6574, 16
        %v6632 = vor.u32 %v6629, %v6630
        %v6633 = vsel %vm642, %v6625, %v6632
        %v6634 = vrot.slane %v6629, 4
        %v6636 = vshrl.u32 %v6575, 16
        %v6638 = vrot.slane %v6636, 7
        %v6639 = vshll.u32 %v6575, 16
        %v6641 = vor.u32 %v6638, %v6639
        %v6642 = vsel %vm642, %v6634, %v6641
        %v6644 = vshrl.u32 %v6576, 16
        %v6646 = vrot.slane %v6644, 7
        %v6647 = vrot.slane %v6646, 4
        %v6649 = vshrl.u32 %v6577, 16
        %v6651 = vrot.slane %v6649, 7
        %v6652 = vshll.u32 %v6577, 16
        %v6654 = vor.u32 %v6651, %v6652
        %v6655 = vsel %vm642, %v6647, %v6654
        %v6656 = vrot.slane %v6651, 4
        %v6658 = vshrl.u32 %v6578, 16
        %v6660 = vrot.slane %v6658, 7
        %v6661 = vshll.u32 %v6578, 16
        %v6663 = vor.u32 %v6660, %v6661
        %v6664 = vsel %vm642, %v6656, %v6663
        %v6666 = vshrl.u32 %v6579, 16
        %v6668 = vrot.slane %v6666, 7
        %v6669 = vrot.slane %v6668, 4
        %v6671 = vshrl.u32 %v6580, 16
        %v6673 = vrot.slane %v6671, 7
        %v6674 = vshll.u32 %v6580, 16
        %v6676 = vor.u32 %v6673, %v6674
        %v6677 = vsel %vm642, %v6669, %v6676
        %v6678 = vrot.slane %v6673, 4
        %v6680 = vshrl.u32 %v6581, 16
        %v6682 = vrot.slane %v6680, 7
        %v6683 = vshll.u32 %v6581, 16
        %v6685 = vor.u32 %v6682, %v6683
        %v6686 = vsel %vm642, %v6678, %v6685
        %v6688 = vshrl.u32 %v6582, 16
        %v6690 = vrot.slane %v6688, 7
        %v6691 = vrot.slane %v6690, 4
        %v6693 = vshrl.u32 %v6583, 16
        %v6695 = vrot.slane %v6693, 7
        %v6696 = vshll.u32 %v6583, 16
        %v6698 = vor.u32 %v6695, %v6696
        %v6699 = vsel %vm642, %v6691, %v6698
        %v6700 = vrot.slane %v6695, 4
        %v6702 = vshrl.u32 %v6584, 16
        %v6704 = vrot.slane %v6702, 7
        %v6705 = vshll.u32 %v6584, 16
        %v6707 = vor.u32 %v6704, %v6705
        %v6708 = vsel %vm642, %v6700, %v6707
        %v6710 = vshrl.u32 %v6585, 16
        %v6712 = vrot.slane %v6710, 7
        %v6713 = vrot.slane %v6712, 4
        %v6715 = vshrl.u32 %v6586, 16
        %v6717 = vrot.slane %v6715, 7
        %v6718 = vshll.u32 %v6586, 16
        %v6720 = vor.u32 %v6717, %v6718
        %v6721 = vsel %vm642, %v6713, %v6720
        %v6722 = vrot.slane %v6717, 4
        %v6724 = vshrl.u32 %v6587, 16
        %v6726 = vrot.slane %v6724, 7
        %v6727 = vshll.u32 %v6587, 16
        %v6729 = vor.u32 %v6726, %v6727
        %v6730 = vsel %vm642, %v6722, %v6729
        %v6732 = vshrl.u32 %v6588, 16
        %v6734 = vrot.slane %v6732, 7
        %v6735 = vrot.slane %v6734, 4
        %v6737 = vshrl.u32 %v6589, 16
        %v6739 = vrot.slane %v6737, 7
        %v6740 = vshll.u32 %v6589, 16
        %v6742 = vor.u32 %v6739, %v6740
        %v6743 = vsel %vm642, %v6735, %v6742
        %v6744 = vrot.slane %v6739, 4
        %v6746 = vshrl.u32 %v6590, 16
        %v6748 = vrot.slane %v6746, 7
        %v6749 = vshll.u32 %v6590, 16
        %v6751 = vor.u32 %v6748, %v6749
        %v6752 = vsel %vm642, %v6744, %v6751
        %v6754 = vshrl.u32 %v6591, 16
        %v6756 = vrot.slane %v6754, 7
        %v6757 = vrot.slane %v6756, 4
        %v6759 = vshrl.u32 %v6592, 16
        %v6761 = vrot.slane %v6759, 7
        %v6762 = vshll.u32 %v6592, 16
        %v6764 = vor.u32 %v6761, %v6762
        %v6765 = vsel %vm642, %v6757, %v6764
        %v6766 = vrot.slane %v6761, 4
        %v6768 = vshrl.u32 %v6593, 16
        %v6770 = vrot.slane %v6768, 7
        %v6771 = vshll.u32 %v6593, 16
        %v6773 = vor.u32 %v6770, %v6771
        %v6774 = vsel %vm642, %v6766, %v6773
        %v6776 = vshrl.u32 %v6594, 16
        %v6778 = vrot.slane %v6776, 7
        %v6779 = vrot.slane %v6778, 4
        %v6781 = vshrl.u32 %v6595, 16
        %v6783 = vrot.slane %v6781, 7
        %v6784 = vshll.u32 %v6595, 16
        %v6786 = vor.u32 %v6783, %v6784
        %v6787 = vsel %vm642, %v6779, %v6786
        %v6788 = vrot.slane %v6783, 4
        %v6790 = vshrl.u32 %v6596, 16
        %v6792 = vrot.slane %v6790, 7
        %v6793 = vshll.u32 %v6596, 16
        %v6795 = vor.u32 %v6792, %v6793
        %v6796 = vsel %vm642, %v6788, %v6795
        %v6798 = vshrl.u32 %v6597, 16
        %v6800 = vrot.slane %v6798, 7
        %v6801 = vrot.slane %v6800, 4
        %v6803 = vshrl.u32 %v6598, 16
        %v6805 = vrot.slane %v6803, 7
        %v6806 = vshll.u32 %v6598, 16
        %v6808 = vor.u32 %v6805, %v6806
        %v6809 = vsel %vm642, %v6801, %v6808
        %v6810 = vrot.slane %v6805, 4
        %v6812 = vshrl.u32 %v6599, 16
        %v6814 = vrot.slane %v6812, 7
        %v6815 = vshll.u32 %v6599, 16
        %v6817 = vor.u32 %v6814, %v6815
        %v6818 = vsel %vm642, %v6810, %v6817
        %v6820 = vshrl.u32 %v6600, 16
        %v6822 = vrot.slane %v6820, 7
        %v6823 = vrot.slane %v6822, 4
        %v6825 = vshrl.u32 %v6601, 16
        %v6827 = vrot.slane %v6825, 7
        %v6828 = vshll.u32 %v6601, 16
        %v6830 = vor.u32 %v6827, %v6828
        %v6831 = vsel %vm642, %v6823, %v6830
        %v6832 = vrot.slane %v6827, 4
        %v6834 = vshrl.u32 %v6602, 16
        %v6836 = vrot.slane %v6834, 7
        %v6837 = vshll.u32 %v6602, 16
        %v6839 = vor.u32 %v6836, %v6837
        %v6840 = vsel %vm642, %v6832, %v6839
        %v6842 = vshrl.u32 %v6603, 16
        %v6844 = vrot.slane %v6842, 7
        %v6845 = vrot.slane %v6844, 4
        %v6847 = vshrl.u32 %v6604, 16
        %v6849 = vrot.slane %v6847, 7
        %v6850 = vshll.u32 %v6604, 16
        %v6852 = vor.u32 %v6849, %v6850
        %v6853 = vsel %vm642, %v6845, %v6852
        %v6854 = vrot.slane %v6849, 4
        %v6856 = vshrl.u32 %v6605, 16
        %v6858 = vrot.slane %v6856, 7
        %v6859 = vshll.u32 %v6605, 16
        %v6861 = vor.u32 %v6858, %v6859
        %v6862 = vsel %vm642, %v6854, %v6861
        %v6864 = vshrl.u32 %v6606, 16
        %v6866 = vrot.slane %v6864, 7
        %v6867 = vrot.slane %v6866, 4
        %v6869 = vshrl.u32 %v6607, 16
        %v6871 = vrot.slane %v6869, 7
        %v6872 = vshll.u32 %v6607, 16
        %v6874 = vor.u32 %v6871, %v6872
        %v6875 = vsel %vm642, %v6867, %v6874
        %v6876 = vrot.slane %v6871, 4
        %v6878 = vshrl.u32 %v6608, 16
        %v6880 = vrot.slane %v6878, 7
        %v6881 = vshll.u32 %v6608, 16
        %v6883 = vor.u32 %v6880, %v6881
        %v6884 = vsel %vm642, %v6876, %v6883
        %v6886 = vshrl.u32 %v6609, 16
        %v6888 = vrot.slane %v6886, 7
        %v6889 = vrot.slane %v6888, 4
        %v6891 = vshrl.u32 %v6610, 16
        %v6893 = vrot.slane %v6891, 7
        %v6894 = vshll.u32 %v6610, 16
        %v6896 = vor.u32 %v6893, %v6894
        %v6897 = vsel %vm642, %v6889, %v6896
        %v6898 = vrot.slane %v6893, 4
        %v6900 = vshrl.u32 %v6611, 16
        %v6902 = vrot.slane %v6900, 7
        %v6903 = vshll.u32 %v6611, 16
        %v6905 = vor.u32 %v6902, %v6903
        %v6906 = vsel %vm642, %v6898, %v6905
        %v6908 = vshrl.u32 %v6612, 16
        %v6910 = vrot.slane %v6908, 7
        %v6911 = vrot.slane %v6910, 4
        %v6913 = vshrl.u32 %v6613, 16
        %v6915 = vrot.slane %v6913, 7
        %v6916 = vshll.u32 %v6613, 16
        %v6918 = vor.u32 %v6915, %v6916
        %v6919 = vsel %vm642, %v6911, %v6918
        %v6920 = vrot.slane %v6915, 4
        %v6922 = vshrl.u32 %v6614, 16
        %v6924 = vrot.slane %v6922, 7
        %v6925 = vshll.u32 %v6614, 16
        %v6927 = vor.u32 %v6924, %v6925
        %v6928 = vsel %vm642, %v6920, %v6927
        %v6930 = vshrl.u32 %v6615, 16
        %v6932 = vrot.slane %v6930, 7
        %v6933 = vrot.slane %v6932, 4
        %v6935 = vshrl.u32 %v6616, 16
        %v6937 = vrot.slane %v6935, 7
        %v6938 = vshll.u32 %v6616, 16
        %v6940 = vor.u32 %v6937, %v6938
        %v6941 = vsel %vm642, %v6933, %v6940
        %v6942 = vrot.slane %v6937, 4
        %v6944 = vshrl.u32 %v6617, 16
        %v6946 = vrot.slane %v6944, 7
        %v6947 = vshll.u32 %v6617, 16
        %v6949 = vor.u32 %v6946, %v6947
        %v6950 = vsel %vm642, %v6942, %v6949
        %v6952 = vshrl.u32 %v6618, 16
        %v6954 = vrot.slane %v6952, 7
        %v6955 = vrot.slane %v6954, 4
        %v6957 = vshrl.u32 %v6619, 16
        %v6959 = vrot.slane %v6957, 7
        %v6960 = vshll.u32 %v6619, 16
        %v6962 = vor.u32 %v6959, %v6960
        %v6963 = vsel %vm642, %v6955, %v6962
        %v6964 = vrot.slane %v6959, 4
        %v6966 = vshrl.u32 %v6620, 16
        %v6968 = vrot.slane %v6966, 7
        %v6969 = vshll.u32 %v6620, 16
        %v6971 = vor.u32 %v6968, %v6969
        %v6972 = vsel %vm642, %v6964, %v6971
        %v6973 = vld [vmem:[#allocation9] sm:$0xf]
        %v6974 = vld [vmem:[#allocation9 + $0x4] sm:$0xf]
        %v6975 = vld [vmem:[#allocation9 + $0x8] sm:$0xf]
        %v6976 = vld [vmem:[#allocation9 + $0xc] sm:$0xf]
        %s6977 = scalar_lea.vmem [#allocation9], 16
        %v6978 = vld [vmem:[%s6977] sm:$0xf]
        %v6979 = vld [vmem:[%s6977 + $0x4] sm:$0xf]
        %v6980 = vld [vmem:[%s6977 + $0x8] sm:$0xf]
        %v6981 = vld [vmem:[%s6977 + $0xc] sm:$0xf]
        %v7014 = vunpack.c.l.b16 %v6574
        %v7015 = vunpack.c.l.b16 %v6575
        %v7016 = vunpack.c.l.b16 %v6577
        %v7017 = vunpack.c.l.b16 %v6578
        %v7018 = vunpack.c.l.b16 %v6580
        %v7019 = vunpack.c.l.b16 %v6581
        %v7020 = vunpack.c.l.b16 %v6583
        %v7021 = vunpack.c.l.b16 %v6584
        %v7022 = vunpack.c.l.b16 %v6586
        %v7023 = vunpack.c.l.b16 %v6587
        %v7024 = vunpack.c.l.b16 %v6589
        %v7025 = vunpack.c.l.b16 %v6590
        %v7026 = vunpack.c.l.b16 %v6592
        %v7027 = vunpack.c.l.b16 %v6593
        %v7028 = vunpack.c.l.b16 %v6595
        %v7029 = vunpack.c.l.b16 %v6596
        %v7030 = vunpack.c.l.b16 %v6598
        %v7031 = vunpack.c.l.b16 %v6599
        %v7032 = vunpack.c.l.b16 %v6601
        %v7033 = vunpack.c.l.b16 %v6602
        %v7034 = vunpack.c.l.b16 %v6604
        %v7035 = vunpack.c.l.b16 %v6605
        %v7036 = vunpack.c.l.b16 %v6607
        %v7037 = vunpack.c.l.b16 %v6608
        %v7038 = vunpack.c.l.b16 %v6610
        %v7039 = vunpack.c.l.b16 %v6611
        %v7040 = vunpack.c.l.b16 %v6613
        %v7041 = vunpack.c.l.b16 %v6614
        %v7042 = vunpack.c.l.b16 %v6616
        %v7043 = vunpack.c.l.b16 %v6617
        %v7044 = vunpack.c.l.b16 %v6619
        %v7045 = vunpack.c.l.b16 %v6620
        %v7046 = vpack.c.b16 %v7015, %v7014
        %v7047 = vpack.c.b16 %v7017, %v7016
        %v7048 = vpack.c.b16 %v7019, %v7018
        %v7049 = vpack.c.b16 %v7021, %v7020
        %v7050 = vpack.c.b16 %v7023, %v7022
        %v7051 = vpack.c.b16 %v7025, %v7024
        %v7052 = vpack.c.b16 %v7027, %v7026
        %v7053 = vpack.c.b16 %v7029, %v7028
        %v7054 = vpack.c.b16 %v7031, %v7030
        %v7055 = vpack.c.b16 %v7033, %v7032
        %v7056 = vpack.c.b16 %v7035, %v7034
        %v7057 = vpack.c.b16 %v7037, %v7036
        %v7058 = vpack.c.b16 %v7039, %v7038
        %v7059 = vpack.c.b16 %v7041, %v7040
        %v7060 = vpack.c.b16 %v7043, %v7042
        %v7061 = vpack.c.b16 %v7045, %v7044
        %v7066 = vunpack.c.l.b16 %v6978
        %v7067 = vunpack.c.l.b16 %v6979
        %v7068 = vunpack.c.l.b16 %v6980
        %v7069 = vunpack.c.l.b16 %v6981
        %v7070 = vpack.c.b16 %v7067, %v7066
        %v7071 = vpack.c.b16 %v7069, %v7068
        %vm7074 = vcmask 261120
        %v7076 = vsel %vm7074, %v7046, 0
        %v7079 = vsel %vm7074, %v7047, 0
        %v7082 = vsel %vm7074, %v7048, 0
        %v7085 = vsel %vm7074, %v7049, 0
        %v7088 = vsel %vm7074, %v7050, 0
        %v7091 = vsel %vm7074, %v7051, 0
        %v7094 = vsel %vm7074, %v7052, 0
        %v7097 = vsel %vm7074, %v7053, 0
        %v7100 = vsel %vm7074, %v7054, 0
        %v7103 = vsel %vm7074, %v7055, 0
        %v7106 = vsel %vm7074, %v7056, 0
        %v7109 = vsel %vm7074, %v7057, 0
        %v7112 = vsel %vm7074, %v7058, 0
        %v7115 = vsel %vm7074, %v7059, 0
        %v7118 = vsel %vm7074, %v7060, 0
        %v7121 = vsel %vm7074, %v7061, 0
        %7123 = vmatprep.subr.bf16.mxu0 0
        %7124 = vmatpush1.bf16.msra.mxu0 0
        %7125 = vmatprep.subr.bf16.mxu0 0
        %7126 = vmatpush1.bf16.msra.mxu0 0
        %7127 = vmatprep.subr.bf16.mxu0 0
        %7128 = vmatpush1.bf16.msra.mxu0 0
        %7129 = vmatprep.subr.bf16.mxu0 0
        %7130 = vmatpush1.bf16.msra.mxu0 0
        %7131 = vmatprep.subr.bf16.mxu0 0
        %7132 = vmatpush1.bf16.msra.mxu0 0
        %7133 = vmatprep.subr.bf16.mxu0 0
        %7134 = vmatpush1.bf16.msra.mxu0 0
        %7135 = vmatprep.subr.bf16.mxu0 0
        %7136 = vmatpush1.bf16.msra.mxu0 %v7071
        %7137 = vmatprep.subr.bf16.mxu0 0
        %7138 = vmatpush1.bf16.msra.mxu0 %v7070
        %7139 = vmatprep.subr.bf16.mxu0 0
        %7140 = vmatpush2.bf16.msra.mxu0 0
        %7141 = vmatprep.subr.bf16.mxu0 0
        %7142 = vmatpush2.bf16.msra.mxu0 0
        %7143 = vmatprep.subr.bf16.mxu0 0
        %7144 = vmatpush2.bf16.msra.mxu0 0
        %7145 = vmatprep.subr.bf16.mxu0 0
        %7146 = vmatpush2.bf16.msra.mxu0 0
        %7147 = vmatprep.subr.bf16.mxu0 0
        %7148 = vmatpush2.bf16.msra.mxu0 0
        %7149 = vmatprep.subr.bf16.mxu0 0
        %7150 = vmatpush2.bf16.msra.mxu0 0
        %7151 = vmatprep.subr.bf16.mxu0 0
        %7152 = vmatpush2.bf16.msra.mxu0 0
        %7153 = vmatprep.subr.bf16.mxu0 0
        %7154 = vmatpush2.bf16.msra.mxu0 0
        %7155 = vmatprep.mubr.bf16.mxu0 0
        %7156 = vmatmul.mubr.bf16.gmra.mxu0 %v7076
        %v7157 = vpop.f32.mrf.mxu0
        %v7158 = vadd.f32 0.0, %v7157
        %v7159 = vpop.f32.mrf.mxu0
        %v7160 = vpop.f32.mrf.mxu0
        %v7161 = vadd.f32 0.0, %v7160
        %v7162 = vpop.f32.mrf.mxu0
        %7163 = vmatprep.mubr.bf16.mxu0 0
        %7164 = vmatmul.mubr.bf16.gmra.mxu0 %v7079
        %v7165 = vpop.f32.mrf.mxu0
        %v7166 = vadd.f32 0.0, %v7165
        %v7167 = vpop.f32.mrf.mxu0
        %v7168 = vpop.f32.mrf.mxu0
        %v7169 = vadd.f32 0.0, %v7168
        %v7170 = vpop.f32.mrf.mxu0
        %7171 = vmatprep.mubr.bf16.mxu0 0
        %7172 = vmatmul.mubr.bf16.gmra.mxu0 %v7082
        %v7173 = vpop.f32.mrf.mxu0
        %v7174 = vadd.f32 0.0, %v7173
        %v7175 = vpop.f32.mrf.mxu0
        %v7176 = vpop.f32.mrf.mxu0
        %v7177 = vadd.f32 0.0, %v7176
        %v7178 = vpop.f32.mrf.mxu0
        %7179 = vmatprep.mubr.bf16.mxu0 0
        %7180 = vmatmul.mubr.bf16.gmra.mxu0 %v7085
        %v7181 = vpop.f32.mrf.mxu0
        %v7182 = vadd.f32 0.0, %v7181
        %v7183 = vpop.f32.mrf.mxu0
        %v7184 = vpop.f32.mrf.mxu0
        %v7185 = vadd.f32 0.0, %v7184
        %v7186 = vpop.f32.mrf.mxu0
        %7187 = vmatprep.mubr.bf16.mxu0 0
        %7188 = vmatmul.mubr.bf16.gmra.mxu0 %v7088
        %v7189 = vpop.f32.mrf.mxu0
        %v7190 = vadd.f32 0.0, %v7189
        %v7191 = vpop.f32.mrf.mxu0
        %v7192 = vpop.f32.mrf.mxu0
        %v7193 = vadd.f32 0.0, %v7192
        %v7194 = vpop.f32.mrf.mxu0
        %7195 = vmatprep.mubr.bf16.mxu0 0
        %7196 = vmatmul.mubr.bf16.gmra.mxu0 %v7091
        %v7197 = vpop.f32.mrf.mxu0
        %v7198 = vadd.f32 0.0, %v7197
        %v7199 = vpop.f32.mrf.mxu0
        %v7200 = vpop.f32.mrf.mxu0
        %v7201 = vadd.f32 0.0, %v7200
        %v7202 = vpop.f32.mrf.mxu0
        %7203 = vmatprep.mubr.bf16.mxu0 0
        %7204 = vmatmul.mubr.bf16.gmra.mxu0 %v7094
        %v7205 = vpop.f32.mrf.mxu0
        %v7206 = vadd.f32 0.0, %v7205
        %v7207 = vpop.f32.mrf.mxu0
        %v7208 = vpop.f32.mrf.mxu0
        %v7209 = vadd.f32 0.0, %v7208
        %v7210 = vpop.f32.mrf.mxu0
        %7211 = vmatprep.mubr.bf16.mxu0 0
        %7212 = vmatmul.mubr.bf16.gmra.mxu0 %v7097
        %v7213 = vpop.f32.mrf.mxu0
        %v7214 = vadd.f32 0.0, %v7213
        %v7215 = vpop.f32.mrf.mxu0
        %v7216 = vpop.f32.mrf.mxu0
        %v7217 = vadd.f32 0.0, %v7216
        %v7218 = vpop.f32.mrf.mxu0
        %7219 = vmatprep.mubr.bf16.mxu0 0
        %7220 = vmatmul.mubr.bf16.gmra.mxu0 %v7100
        %v7221 = vpop.f32.mrf.mxu0
        %v7222 = vadd.f32 0.0, %v7221
        %v7223 = vpop.f32.mrf.mxu0
        %v7224 = vpop.f32.mrf.mxu0
        %v7225 = vadd.f32 0.0, %v7224
        %v7226 = vpop.f32.mrf.mxu0
        %7227 = vmatprep.mubr.bf16.mxu0 0
        %7228 = vmatmul.mubr.bf16.gmra.mxu0 %v7103
        %v7229 = vpop.f32.mrf.mxu0
        %v7230 = vadd.f32 0.0, %v7229
        %v7231 = vpop.f32.mrf.mxu0
        %v7232 = vpop.f32.mrf.mxu0
        %v7233 = vadd.f32 0.0, %v7232
        %v7234 = vpop.f32.mrf.mxu0
        %7235 = vmatprep.mubr.bf16.mxu0 0
        %7236 = vmatmul.mubr.bf16.gmra.mxu0 %v7106
        %v7237 = vpop.f32.mrf.mxu0
        %v7238 = vadd.f32 0.0, %v7237
        %v7239 = vpop.f32.mrf.mxu0
        %v7240 = vpop.f32.mrf.mxu0
        %v7241 = vadd.f32 0.0, %v7240
        %v7242 = vpop.f32.mrf.mxu0
        %7243 = vmatprep.mubr.bf16.mxu0 0
        %7244 = vmatmul.mubr.bf16.gmra.mxu0 %v7109
        %v7245 = vpop.f32.mrf.mxu0
        %v7246 = vadd.f32 0.0, %v7245
        %v7247 = vpop.f32.mrf.mxu0
        %v7248 = vpop.f32.mrf.mxu0
        %v7249 = vadd.f32 0.0, %v7248
        %v7250 = vpop.f32.mrf.mxu0
        %7251 = vmatprep.mubr.bf16.mxu0 0
        %7252 = vmatmul.mubr.bf16.gmra.mxu0 %v7112
        %v7253 = vpop.f32.mrf.mxu0
        %v7254 = vadd.f32 0.0, %v7253
        %v7255 = vpop.f32.mrf.mxu0
        %v7256 = vpop.f32.mrf.mxu0
        %v7257 = vadd.f32 0.0, %v7256
        %v7258 = vpop.f32.mrf.mxu0
        %7259 = vmatprep.mubr.bf16.mxu0 0
        %7260 = vmatmul.mubr.bf16.gmra.mxu0 %v7115
        %v7261 = vpop.f32.mrf.mxu0
        %v7262 = vadd.f32 0.0, %v7261
        %v7263 = vpop.f32.mrf.mxu0
        %v7264 = vpop.f32.mrf.mxu0
        %v7265 = vadd.f32 0.0, %v7264
        %v7266 = vpop.f32.mrf.mxu0
        %7267 = vmatprep.mubr.bf16.mxu0 0
        %7268 = vmatmul.mubr.bf16.gmra.mxu0 %v7118
        %v7269 = vpop.f32.mrf.mxu0
        %v7270 = vadd.f32 0.0, %v7269
        %v7271 = vpop.f32.mrf.mxu0
        %v7272 = vpop.f32.mrf.mxu0
        %v7273 = vadd.f32 0.0, %v7272
        %v7274 = vpop.f32.mrf.mxu0
        %7275 = vmatprep.mubr.bf16.mxu0 0
        %7276 = vmatmul.mubr.bf16.gmra.mxu0 %v7121
        %v7277 = vpop.f32.mrf.mxu0
        %v7278 = vadd.f32 0.0, %v7277
        %v7279 = vpop.f32.mrf.mxu0
        %v7280 = vpop.f32.mrf.mxu0
        %v7281 = vadd.f32 0.0, %v7280
        %v7282 = vpop.f32.mrf.mxu0
        %7283 = vdwg.mxu0
        %v7284 = vunpack.c.l.b16 %v6633
        %v7285 = vunpack.c.l.b16 %v6642
        %v7286 = vunpack.c.l.b16 %v6655
        %v7287 = vunpack.c.l.b16 %v6664
        %v7288 = vunpack.c.l.b16 %v6677
        %v7289 = vunpack.c.l.b16 %v6686
        %v7290 = vunpack.c.l.b16 %v6699
        %v7291 = vunpack.c.l.b16 %v6708
        %v7292 = vunpack.c.l.b16 %v6721
        %v7293 = vunpack.c.l.b16 %v6730
        %v7294 = vunpack.c.l.b16 %v6743
        %v7295 = vunpack.c.l.b16 %v6752
        %v7296 = vunpack.c.l.b16 %v6765
        %v7297 = vunpack.c.l.b16 %v6774
        %v7298 = vunpack.c.l.b16 %v6787
        %v7299 = vunpack.c.l.b16 %v6796
        %v7300 = vunpack.c.l.b16 %v6809
        %v7301 = vunpack.c.l.b16 %v6818
        %v7302 = vunpack.c.l.b16 %v6831
        %v7303 = vunpack.c.l.b16 %v6840
        %v7304 = vunpack.c.l.b16 %v6853
        %v7305 = vunpack.c.l.b16 %v6862
        %v7306 = vunpack.c.l.b16 %v6875
        %v7307 = vunpack.c.l.b16 %v6884
        %v7308 = vunpack.c.l.b16 %v6897
        %v7309 = vunpack.c.l.b16 %v6906
        %v7310 = vunpack.c.l.b16 %v6919
        %v7311 = vunpack.c.l.b16 %v6928
        %v7312 = vunpack.c.l.b16 %v6941
        %v7313 = vunpack.c.l.b16 %v6950
        %v7314 = vunpack.c.l.b16 %v6963
        %v7315 = vunpack.c.l.b16 %v6972
        %v7316 = vpack.c.b16 %v7285, %v7284
        %v7317 = vpack.c.b16 %v7287, %v7286
        %v7318 = vpack.c.b16 %v7289, %v7288
        %v7319 = vpack.c.b16 %v7291, %v7290
        %v7320 = vpack.c.b16 %v7293, %v7292
        %v7321 = vpack.c.b16 %v7295, %v7294
        %v7322 = vpack.c.b16 %v7297, %v7296
        %v7323 = vpack.c.b16 %v7299, %v7298
        %v7324 = vpack.c.b16 %v7301, %v7300
        %v7325 = vpack.c.b16 %v7303, %v7302
        %v7326 = vpack.c.b16 %v7305, %v7304
        %v7327 = vpack.c.b16 %v7307, %v7306
        %v7328 = vpack.c.b16 %v7309, %v7308
        %v7329 = vpack.c.b16 %v7311, %v7310
        %v7330 = vpack.c.b16 %v7313, %v7312
        %v7331 = vpack.c.b16 %v7315, %v7314
        %v7336 = vunpack.c.l.b16 %v6973
        %v7337 = vunpack.c.l.b16 %v6974
        %v7338 = vunpack.c.l.b16 %v6975
        %v7339 = vunpack.c.l.b16 %v6976
        %v7340 = vpack.c.b16 %v7337, %v7336
        %v7341 = vpack.c.b16 %v7339, %v7338
        %v7345 = vsel %vm7074, %v7316, 0
        %v7348 = vsel %vm7074, %v7317, 0
        %v7351 = vsel %vm7074, %v7318, 0
        %v7354 = vsel %vm7074, %v7319, 0
        %v7357 = vsel %vm7074, %v7320, 0
        %v7360 = vsel %vm7074, %v7321, 0
        %v7363 = vsel %vm7074, %v7322, 0
        %v7366 = vsel %vm7074, %v7323, 0
        %v7369 = vsel %vm7074, %v7324, 0
        %v7372 = vsel %vm7074, %v7325, 0
        %v7375 = vsel %vm7074, %v7326, 0
        %v7378 = vsel %vm7074, %v7327, 0
        %v7381 = vsel %vm7074, %v7328, 0
        %v7384 = vsel %vm7074, %v7329, 0
        %v7387 = vsel %vm7074, %v7330, 0
        %v7390 = vsel %vm7074, %v7331, 0
        %7392 = vmatprep.subr.bf16.mxu0 0
        %7393 = vmatpush1.bf16.msra.mxu0 0
        %7394 = vmatprep.subr.bf16.mxu0 0
        %7395 = vmatpush1.bf16.msra.mxu0 0
        %7396 = vmatprep.subr.bf16.mxu0 0
        %7397 = vmatpush1.bf16.msra.mxu0 0
        %7398 = vmatprep.subr.bf16.mxu0 0
        %7399 = vmatpush1.bf16.msra.mxu0 0
        %7400 = vmatprep.subr.bf16.mxu0 0
        %7401 = vmatpush1.bf16.msra.mxu0 0
        %7402 = vmatprep.subr.bf16.mxu0 0
        %7403 = vmatpush1.bf16.msra.mxu0 0
        %7404 = vmatprep.subr.bf16.mxu0 0
        %7405 = vmatpush1.bf16.msra.mxu0 %v7341
        %7406 = vmatprep.subr.bf16.mxu0 0
        %7407 = vmatpush1.bf16.msra.mxu0 %v7340
        %7408 = vmatprep.subr.bf16.mxu0 0
        %7409 = vmatpush2.bf16.msra.mxu0 0
        %7410 = vmatprep.subr.bf16.mxu0 0
        %7411 = vmatpush2.bf16.msra.mxu0 0
        %7412 = vmatprep.subr.bf16.mxu0 0
        %7413 = vmatpush2.bf16.msra.mxu0 0
        %7414 = vmatprep.subr.bf16.mxu0 0
        %7415 = vmatpush2.bf16.msra.mxu0 0
        %7416 = vmatprep.subr.bf16.mxu0 0
        %7417 = vmatpush2.bf16.msra.mxu0 0
        %7418 = vmatprep.subr.bf16.mxu0 0
        %7419 = vmatpush2.bf16.msra.mxu0 0
        %7420 = vmatprep.subr.bf16.mxu0 0
        %7421 = vmatpush2.bf16.msra.mxu0 0
        %7422 = vmatprep.subr.bf16.mxu0 0
        %7423 = vmatpush2.bf16.msra.mxu0 0
        %7424 = vmatprep.mubr.bf16.mxu0 0
        %7425 = vmatmul.mubr.bf16.gmra.mxu0 %v7345
        %v7426 = vpop.f32.mrf.mxu0
        %v7427 = vadd.f32 %v7158, %v7426
        %v7428 = vpop.f32.mrf.mxu0
        %v7429 = vpop.f32.mrf.mxu0
        %v7430 = vadd.f32 %v7161, %v7429
        %v7431 = vpop.f32.mrf.mxu0
        %7432 = vmatprep.mubr.bf16.mxu0 0
        %7433 = vmatmul.mubr.bf16.gmra.mxu0 %v7348
        %v7434 = vpop.f32.mrf.mxu0
        %v7435 = vadd.f32 %v7166, %v7434
        %v7436 = vpop.f32.mrf.mxu0
        %v7437 = vpop.f32.mrf.mxu0
        %v7438 = vadd.f32 %v7169, %v7437
        %v7439 = vpop.f32.mrf.mxu0
        %7440 = vmatprep.mubr.bf16.mxu0 0
        %7441 = vmatmul.mubr.bf16.gmra.mxu0 %v7351
        %v7442 = vpop.f32.mrf.mxu0
        %v7443 = vadd.f32 %v7174, %v7442
        %v7444 = vpop.f32.mrf.mxu0
        %v7445 = vpop.f32.mrf.mxu0
        %v7446 = vadd.f32 %v7177, %v7445
        %v7447 = vpop.f32.mrf.mxu0
        %7448 = vmatprep.mubr.bf16.mxu0 0
        %7449 = vmatmul.mubr.bf16.gmra.mxu0 %v7354
        %v7450 = vpop.f32.mrf.mxu0
        %v7451 = vadd.f32 %v7182, %v7450
        %v7452 = vpop.f32.mrf.mxu0
        %v7453 = vpop.f32.mrf.mxu0
        %v7454 = vadd.f32 %v7185, %v7453
        %v7455 = vpop.f32.mrf.mxu0
        %7456 = vmatprep.mubr.bf16.mxu0 0
        %7457 = vmatmul.mubr.bf16.gmra.mxu0 %v7357
        %v7458 = vpop.f32.mrf.mxu0
        %v7459 = vadd.f32 %v7190, %v7458
        %v7460 = vpop.f32.mrf.mxu0
        %v7461 = vpop.f32.mrf.mxu0
        %v7462 = vadd.f32 %v7193, %v7461
        %v7463 = vpop.f32.mrf.mxu0
        %7464 = vmatprep.mubr.bf16.mxu0 0
        %7465 = vmatmul.mubr.bf16.gmra.mxu0 %v7360
        %v7466 = vpop.f32.mrf.mxu0
        %v7467 = vadd.f32 %v7198, %v7466
        %v7468 = vpop.f32.mrf.mxu0
        %v7469 = vpop.f32.mrf.mxu0
        %v7470 = vadd.f32 %v7201, %v7469
        %v7471 = vpop.f32.mrf.mxu0
        %7472 = vmatprep.mubr.bf16.mxu0 0
        %7473 = vmatmul.mubr.bf16.gmra.mxu0 %v7363
        %v7474 = vpop.f32.mrf.mxu0
        %v7475 = vadd.f32 %v7206, %v7474
        %v7476 = vpop.f32.mrf.mxu0
        %v7477 = vpop.f32.mrf.mxu0
        %v7478 = vadd.f32 %v7209, %v7477
        %v7479 = vpop.f32.mrf.mxu0
        %7480 = vmatprep.mubr.bf16.mxu0 0
        %7481 = vmatmul.mubr.bf16.gmra.mxu0 %v7366
        %v7482 = vpop.f32.mrf.mxu0
        %v7483 = vadd.f32 %v7214, %v7482
        %v7484 = vpop.f32.mrf.mxu0
        %v7485 = vpop.f32.mrf.mxu0
        %v7486 = vadd.f32 %v7217, %v7485
        %v7487 = vpop.f32.mrf.mxu0
        %7488 = vmatprep.mubr.bf16.mxu0 0
        %7489 = vmatmul.mubr.bf16.gmra.mxu0 %v7369
        %v7490 = vpop.f32.mrf.mxu0
        %v7491 = vadd.f32 %v7222, %v7490
        %v7492 = vpop.f32.mrf.mxu0
        %v7493 = vpop.f32.mrf.mxu0
        %v7494 = vadd.f32 %v7225, %v7493
        %v7495 = vpop.f32.mrf.mxu0
        %7496 = vmatprep.mubr.bf16.mxu0 0
        %7497 = vmatmul.mubr.bf16.gmra.mxu0 %v7372
        %v7498 = vpop.f32.mrf.mxu0
        %v7499 = vadd.f32 %v7230, %v7498
        %v7500 = vpop.f32.mrf.mxu0
        %v7501 = vpop.f32.mrf.mxu0
        %v7502 = vadd.f32 %v7233, %v7501
        %v7503 = vpop.f32.mrf.mxu0
        %7504 = vmatprep.mubr.bf16.mxu0 0
        %7505 = vmatmul.mubr.bf16.gmra.mxu0 %v7375
        %v7506 = vpop.f32.mrf.mxu0
        %v7507 = vadd.f32 %v7238, %v7506
        %v7508 = vpop.f32.mrf.mxu0
        %v7509 = vpop.f32.mrf.mxu0
        %v7510 = vadd.f32 %v7241, %v7509
        %v7511 = vpop.f32.mrf.mxu0
        %7512 = vmatprep.mubr.bf16.mxu0 0
        %7513 = vmatmul.mubr.bf16.gmra.mxu0 %v7378
        %v7514 = vpop.f32.mrf.mxu0
        %v7515 = vadd.f32 %v7246, %v7514
        %v7516 = vpop.f32.mrf.mxu0
        %v7517 = vpop.f32.mrf.mxu0
        %v7518 = vadd.f32 %v7249, %v7517
        %v7519 = vpop.f32.mrf.mxu0
        %7520 = vmatprep.mubr.bf16.mxu0 0
        %7521 = vmatmul.mubr.bf16.gmra.mxu0 %v7381
        %v7522 = vpop.f32.mrf.mxu0
        %v7523 = vadd.f32 %v7254, %v7522
        %v7524 = vpop.f32.mrf.mxu0
        %v7525 = vpop.f32.mrf.mxu0
        %v7526 = vadd.f32 %v7257, %v7525
        %v7527 = vpop.f32.mrf.mxu0
        %7528 = vmatprep.mubr.bf16.mxu0 0
        %7529 = vmatmul.mubr.bf16.gmra.mxu0 %v7384
        %v7530 = vpop.f32.mrf.mxu0
        %v7531 = vadd.f32 %v7262, %v7530
        %v7532 = vpop.f32.mrf.mxu0
        %v7533 = vpop.f32.mrf.mxu0
        %v7534 = vadd.f32 %v7265, %v7533
        %v7535 = vpop.f32.mrf.mxu0
        %7536 = vmatprep.mubr.bf16.mxu0 0
        %7537 = vmatmul.mubr.bf16.gmra.mxu0 %v7387
        %v7538 = vpop.f32.mrf.mxu0
        %v7539 = vadd.f32 %v7270, %v7538
        %v7540 = vpop.f32.mrf.mxu0
        %v7541 = vpop.f32.mrf.mxu0
        %v7542 = vadd.f32 %v7273, %v7541
        %v7543 = vpop.f32.mrf.mxu0
        %7544 = vmatprep.mubr.bf16.mxu0 0
        %7545 = vmatmul.mubr.bf16.gmra.mxu0 %v7390
        %v7546 = vpop.f32.mrf.mxu0
        %v7547 = vadd.f32 %v7278, %v7546
        %v7548 = vpop.f32.mrf.mxu0
        %v7549 = vpop.f32.mrf.mxu0
        %v7550 = vadd.f32 %v7281, %v7549
        %v7551 = vpop.f32.mrf.mxu0
        %7552 = vdwg.mxu0
        %v7553 = vld [vmem:[#allocation3 + $0x4] sm:$0xf]
        %v7554 = vld [vmem:[#allocation3 + $0x8] sm:$0xf]
        %v7555 = vld [vmem:[#allocation3 + $0xc] sm:$0x1]
        %v7556 = vld [vmem:[#allocation3 + $0x14] sm:$0xf]
        %v7557 = vld [vmem:[#allocation3 + $0x18] sm:$0xf]
        %v7558 = vld [vmem:[#allocation3 + $0x1c] sm:$0x1]
        %v7559 = vld [vmem:[#allocation3 + $0x24] sm:$0xf]
        %v7560 = vld [vmem:[#allocation3 + $0x28] sm:$0xf]
        %v7561 = vld [vmem:[#allocation3 + $0x2c] sm:$0x1]
        %v7562 = vld [vmem:[#allocation3 + $0x34] sm:$0xf]
        %v7563 = vld [vmem:[#allocation3 + $0x38] sm:$0xf]
        %v7564 = vld [vmem:[#allocation3 + $0x3c] sm:$0x1]
        %v7565 = vld [vmem:[#allocation3 + $0x44] sm:$0xf]
        %v7566 = vld [vmem:[#allocation3 + $0x48] sm:$0xf]
        %v7567 = vld [vmem:[#allocation3 + $0x4c] sm:$0x1]
        %v7568 = vld [vmem:[#allocation3 + $0x54] sm:$0xf]
        %v7569 = vld [vmem:[#allocation3 + $0x58] sm:$0xf]
        %v7570 = vld [vmem:[#allocation3 + $0x5c] sm:$0x1]
        %v7571 = vld [vmem:[#allocation3 + $0x64] sm:$0xf]
        %v7572 = vld [vmem:[#allocation3 + $0x68] sm:$0xf]
        %v7573 = vld [vmem:[#allocation3 + $0x6c] sm:$0x1]
        %v7574 = vld [vmem:[#allocation3 + $0x74] sm:$0xf]
        %v7575 = vld [vmem:[#allocation3 + $0x78] sm:$0xf]
        %v7576 = vld [vmem:[#allocation3 + $0x7c] sm:$0x1]
        %v7577 = vld [vmem:[#allocation3 + $0x84] sm:$0xf]
        %v7578 = vld [vmem:[#allocation3 + $0x88] sm:$0xf]
        %v7579 = vld [vmem:[#allocation3 + $0x8c] sm:$0x1]
        %v7580 = vld [vmem:[#allocation3 + $0x94] sm:$0xf]
        %v7581 = vld [vmem:[#allocation3 + $0x98] sm:$0xf]
        %v7582 = vld [vmem:[#allocation3 + $0x9c] sm:$0x1]
        %v7583 = vld [vmem:[#allocation3 + $0xa4] sm:$0xf]
        %v7584 = vld [vmem:[#allocation3 + $0xa8] sm:$0xf]
        %v7585 = vld [vmem:[#allocation3 + $0xac] sm:$0x1]
        %v7586 = vld [vmem:[#allocation3 + $0xb4] sm:$0xf]
        %v7587 = vld [vmem:[#allocation3 + $0xb8] sm:$0xf]
        %v7588 = vld [vmem:[#allocation3 + $0xbc] sm:$0x1]
        %v7589 = vld [vmem:[#allocation3 + $0xc4] sm:$0xf]
        %v7590 = vld [vmem:[#allocation3 + $0xc8] sm:$0xf]
        %v7591 = vld [vmem:[#allocation3 + $0xcc] sm:$0x1]
        %v7592 = vld [vmem:[#allocation3 + $0xd4] sm:$0xf]
        %v7593 = vld [vmem:[#allocation3 + $0xd8] sm:$0xf]
        %v7594 = vld [vmem:[#allocation3 + $0xdc] sm:$0x1]
        %v7595 = vld [vmem:[#allocation3 + $0xe4] sm:$0xf]
        %v7596 = vld [vmem:[#allocation3 + $0xe8] sm:$0xf]
        %v7597 = vld [vmem:[#allocation3 + $0xec] sm:$0x1]
        %v7598 = vld [vmem:[#allocation3 + $0xf4] sm:$0xf]
        %v7599 = vld [vmem:[#allocation3 + $0xf8] sm:$0xf]
        %v7600 = vld [vmem:[#allocation3 + $0xfc] sm:$0x1]
        %v7602 = vshrl.u32 %v7553, 16
        %v7604 = vrot.slane %v7602, 4
        %v7605 = vshll.u32 %v7553, 16
        %v7607 = vrot.slane %v7605, 5
        %v7608 = vor.u32 %v7604, %v7607
        %v7609 = vrot.slane %v7608, 4
        %v7611 = vshll.u32 %v7554, 16
        %v7613 = vrot.slane %v7611, 5
        %v7614 = vsel %vm1609, %v7609, %v7613
        %v7615 = vshrl.u32 %v7554, 16
        %v7617 = vrot.slane %v7615, 4
        %v7618 = vor.u32 %v7617, %v7613
        %v7619 = vrot.slane %v7618, 4
        %v7621 = vshll.u32 %v7555, 16
        %v7623 = vrot.slane %v7621, 5
        %v7624 = vsel %vm1609, %v7619, %v7623
        %v7626 = vshrl.u32 %v7556, 16
        %v7628 = vrot.slane %v7626, 4
        %v7629 = vshll.u32 %v7556, 16
        %v7631 = vrot.slane %v7629, 5
        %v7632 = vor.u32 %v7628, %v7631
        %v7633 = vrot.slane %v7632, 4
        %v7635 = vshll.u32 %v7557, 16
        %v7637 = vrot.slane %v7635, 5
        %v7638 = vsel %vm1609, %v7633, %v7637
        %v7639 = vshrl.u32 %v7557, 16
        %v7641 = vrot.slane %v7639, 4
        %v7642 = vor.u32 %v7641, %v7637
        %v7643 = vrot.slane %v7642, 4
        %v7645 = vshll.u32 %v7558, 16
        %v7647 = vrot.slane %v7645, 5
        %v7648 = vsel %vm1609, %v7643, %v7647
        %v7650 = vshrl.u32 %v7559, 16
        %v7652 = vrot.slane %v7650, 4
        %v7653 = vshll.u32 %v7559, 16
        %v7655 = vrot.slane %v7653, 5
        %v7656 = vor.u32 %v7652, %v7655
        %v7657 = vrot.slane %v7656, 4
        %v7659 = vshll.u32 %v7560, 16
        %v7661 = vrot.slane %v7659, 5
        %v7662 = vsel %vm1609, %v7657, %v7661
        %v7663 = vshrl.u32 %v7560, 16
        %v7665 = vrot.slane %v7663, 4
        %v7666 = vor.u32 %v7665, %v7661
        %v7667 = vrot.slane %v7666, 4
        %v7669 = vshll.u32 %v7561, 16
        %v7671 = vrot.slane %v7669, 5
        %v7672 = vsel %vm1609, %v7667, %v7671
        %v7674 = vshrl.u32 %v7562, 16
        %v7676 = vrot.slane %v7674, 4
        %v7677 = vshll.u32 %v7562, 16
        %v7679 = vrot.slane %v7677, 5
        %v7680 = vor.u32 %v7676, %v7679
        %v7681 = vrot.slane %v7680, 4
        %v7683 = vshll.u32 %v7563, 16
        %v7685 = vrot.slane %v7683, 5
        %v7686 = vsel %vm1609, %v7681, %v7685
        %v7687 = vshrl.u32 %v7563, 16
        %v7689 = vrot.slane %v7687, 4
        %v7690 = vor.u32 %v7689, %v7685
        %v7691 = vrot.slane %v7690, 4
        %v7693 = vshll.u32 %v7564, 16
        %v7695 = vrot.slane %v7693, 5
        %v7696 = vsel %vm1609, %v7691, %v7695
        %v7698 = vshrl.u32 %v7565, 16
        %v7700 = vrot.slane %v7698, 4
        %v7701 = vshll.u32 %v7565, 16
        %v7703 = vrot.slane %v7701, 5
        %v7704 = vor.u32 %v7700, %v7703
        %v7705 = vrot.slane %v7704, 4
        %v7707 = vshll.u32 %v7566, 16
        %v7709 = vrot.slane %v7707, 5
        %v7710 = vsel %vm1609, %v7705, %v7709
        %v7711 = vshrl.u32 %v7566, 16
        %v7713 = vrot.slane %v7711, 4
        %v7714 = vor.u32 %v7713, %v7709
        %v7715 = vrot.slane %v7714, 4
        %v7717 = vshll.u32 %v7567, 16
        %v7719 = vrot.slane %v7717, 5
        %v7720 = vsel %vm1609, %v7715, %v7719
        %v7722 = vshrl.u32 %v7568, 16
        %v7724 = vrot.slane %v7722, 4
        %v7725 = vshll.u32 %v7568, 16
        %v7727 = vrot.slane %v7725, 5
        %v7728 = vor.u32 %v7724, %v7727
        %v7729 = vrot.slane %v7728, 4
        %v7731 = vshll.u32 %v7569, 16
        %v7733 = vrot.slane %v7731, 5
        %v7734 = vsel %vm1609, %v7729, %v7733
        %v7735 = vshrl.u32 %v7569, 16
        %v7737 = vrot.slane %v7735, 4
        %v7738 = vor.u32 %v7737, %v7733
        %v7739 = vrot.slane %v7738, 4
        %v7741 = vshll.u32 %v7570, 16
        %v7743 = vrot.slane %v7741, 5
        %v7744 = vsel %vm1609, %v7739, %v7743
        %v7746 = vshrl.u32 %v7571, 16
        %v7748 = vrot.slane %v7746, 4
        %v7749 = vshll.u32 %v7571, 16
        %v7751 = vrot.slane %v7749, 5
        %v7752 = vor.u32 %v7748, %v7751
        %v7753 = vrot.slane %v7752, 4
        %v7755 = vshll.u32 %v7572, 16
        %v7757 = vrot.slane %v7755, 5
        %v7758 = vsel %vm1609, %v7753, %v7757
        %v7759 = vshrl.u32 %v7572, 16
        %v7761 = vrot.slane %v7759, 4
        %v7762 = vor.u32 %v7761, %v7757
        %v7763 = vrot.slane %v7762, 4
        %v7765 = vshll.u32 %v7573, 16
        %v7767 = vrot.slane %v7765, 5
        %v7768 = vsel %vm1609, %v7763, %v7767
        %v7770 = vshrl.u32 %v7574, 16
        %v7772 = vrot.slane %v7770, 4
        %v7773 = vshll.u32 %v7574, 16
        %v7775 = vrot.slane %v7773, 5
        %v7776 = vor.u32 %v7772, %v7775
        %v7777 = vrot.slane %v7776, 4
        %v7779 = vshll.u32 %v7575, 16
        %v7781 = vrot.slane %v7779, 5
        %v7782 = vsel %vm1609, %v7777, %v7781
        %v7783 = vshrl.u32 %v7575, 16
        %v7785 = vrot.slane %v7783, 4
        %v7786 = vor.u32 %v7785, %v7781
        %v7787 = vrot.slane %v7786, 4
        %v7789 = vshll.u32 %v7576, 16
        %v7791 = vrot.slane %v7789, 5
        %v7792 = vsel %vm1609, %v7787, %v7791
        %v7794 = vshrl.u32 %v7577, 16
        %v7796 = vrot.slane %v7794, 4
        %v7797 = vshll.u32 %v7577, 16
        %v7799 = vrot.slane %v7797, 5
        %v7800 = vor.u32 %v7796, %v7799
        %v7801 = vrot.slane %v7800, 4
        %v7803 = vshll.u32 %v7578, 16
        %v7805 = vrot.slane %v7803, 5
        %v7806 = vsel %vm1609, %v7801, %v7805
        %v7807 = vshrl.u32 %v7578, 16
        %v7809 = vrot.slane %v7807, 4
        %v7810 = vor.u32 %v7809, %v7805
        %v7811 = vrot.slane %v7810, 4
        %v7813 = vshll.u32 %v7579, 16
        %v7815 = vrot.slane %v7813, 5
        %v7816 = vsel %vm1609, %v7811, %v7815
        %v7818 = vshrl.u32 %v7580, 16
        %v7820 = vrot.slane %v7818, 4
        %v7821 = vshll.u32 %v7580, 16
        %v7823 = vrot.slane %v7821, 5
        %v7824 = vor.u32 %v7820, %v7823
        %v7825 = vrot.slane %v7824, 4
        %v7827 = vshll.u32 %v7581, 16
        %v7829 = vrot.slane %v7827, 5
        %v7830 = vsel %vm1609, %v7825, %v7829
        %v7831 = vshrl.u32 %v7581, 16
        %v7833 = vrot.slane %v7831, 4
        %v7834 = vor.u32 %v7833, %v7829
        %v7835 = vrot.slane %v7834, 4
        %v7837 = vshll.u32 %v7582, 16
        %v7839 = vrot.slane %v7837, 5
        %v7840 = vsel %vm1609, %v7835, %v7839
        %v7842 = vshrl.u32 %v7583, 16
        %v7844 = vrot.slane %v7842, 4
        %v7845 = vshll.u32 %v7583, 16
        %v7847 = vrot.slane %v7845, 5
        %v7848 = vor.u32 %v7844, %v7847
        %v7849 = vrot.slane %v7848, 4
        %v7851 = vshll.u32 %v7584, 16
        %v7853 = vrot.slane %v7851, 5
        %v7854 = vsel %vm1609, %v7849, %v7853
        %v7855 = vshrl.u32 %v7584, 16
        %v7857 = vrot.slane %v7855, 4
        %v7858 = vor.u32 %v7857, %v7853
        %v7859 = vrot.slane %v7858, 4
        %v7861 = vshll.u32 %v7585, 16
        %v7863 = vrot.slane %v7861, 5
        %v7864 = vsel %vm1609, %v7859, %v7863
        %v7866 = vshrl.u32 %v7586, 16
        %v7868 = vrot.slane %v7866, 4
        %v7869 = vshll.u32 %v7586, 16
        %v7871 = vrot.slane %v7869, 5
        %v7872 = vor.u32 %v7868, %v7871
        %v7873 = vrot.slane %v7872, 4
        %v7875 = vshll.u32 %v7587, 16
        %v7877 = vrot.slane %v7875, 5
        %v7878 = vsel %vm1609, %v7873, %v7877
        %v7879 = vshrl.u32 %v7587, 16
        %v7881 = vrot.slane %v7879, 4
        %v7882 = vor.u32 %v7881, %v7877
        %v7883 = vrot.slane %v7882, 4
        %v7885 = vshll.u32 %v7588, 16
        %v7887 = vrot.slane %v7885, 5
        %v7888 = vsel %vm1609, %v7883, %v7887
        %v7890 = vshrl.u32 %v7589, 16
        %v7892 = vrot.slane %v7890, 4
        %v7893 = vshll.u32 %v7589, 16
        %v7895 = vrot.slane %v7893, 5
        %v7896 = vor.u32 %v7892, %v7895
        %v7897 = vrot.slane %v7896, 4
        %v7899 = vshll.u32 %v7590, 16
        %v7901 = vrot.slane %v7899, 5
        %v7902 = vsel %vm1609, %v7897, %v7901
        %v7903 = vshrl.u32 %v7590, 16
        %v7905 = vrot.slane %v7903, 4
        %v7906 = vor.u32 %v7905, %v7901
        %v7907 = vrot.slane %v7906, 4
        %v7909 = vshll.u32 %v7591, 16
        %v7911 = vrot.slane %v7909, 5
        %v7912 = vsel %vm1609, %v7907, %v7911
        %v7914 = vshrl.u32 %v7592, 16
        %v7916 = vrot.slane %v7914, 4
        %v7917 = vshll.u32 %v7592, 16
        %v7919 = vrot.slane %v7917, 5
        %v7920 = vor.u32 %v7916, %v7919
        %v7921 = vrot.slane %v7920, 4
        %v7923 = vshll.u32 %v7593, 16
        %v7925 = vrot.slane %v7923, 5
        %v7926 = vsel %vm1609, %v7921, %v7925
        %v7927 = vshrl.u32 %v7593, 16
        %v7929 = vrot.slane %v7927, 4
        %v7930 = vor.u32 %v7929, %v7925
        %v7931 = vrot.slane %v7930, 4
        %v7933 = vshll.u32 %v7594, 16
        %v7935 = vrot.slane %v7933, 5
        %v7936 = vsel %vm1609, %v7931, %v7935
        %v7938 = vshrl.u32 %v7595, 16
        %v7940 = vrot.slane %v7938, 4
        %v7941 = vshll.u32 %v7595, 16
        %v7943 = vrot.slane %v7941, 5
        %v7944 = vor.u32 %v7940, %v7943
        %v7945 = vrot.slane %v7944, 4
        %v7947 = vshll.u32 %v7596, 16
        %v7949 = vrot.slane %v7947, 5
        %v7950 = vsel %vm1609, %v7945, %v7949
        %v7951 = vshrl.u32 %v7596, 16
        %v7953 = vrot.slane %v7951, 4
        %v7954 = vor.u32 %v7953, %v7949
        %v7955 = vrot.slane %v7954, 4
        %v7957 = vshll.u32 %v7597, 16
        %v7959 = vrot.slane %v7957, 5
        %v7960 = vsel %vm1609, %v7955, %v7959
        %v7962 = vshrl.u32 %v7598, 16
        %v7964 = vrot.slane %v7962, 4
        %v7965 = vshll.u32 %v7598, 16
        %v7967 = vrot.slane %v7965, 5
        %v7968 = vor.u32 %v7964, %v7967
        %v7969 = vrot.slane %v7968, 4
        %v7971 = vshll.u32 %v7599, 16
        %v7973 = vrot.slane %v7971, 5
        %v7974 = vsel %vm1609, %v7969, %v7973
        %v7975 = vshrl.u32 %v7599, 16
        %v7977 = vrot.slane %v7975, 4
        %v7978 = vor.u32 %v7977, %v7973
        %v7979 = vrot.slane %v7978, 4
        %v7981 = vshll.u32 %v7600, 16
        %v7983 = vrot.slane %v7981, 5
        %v7984 = vsel %vm1609, %v7979, %v7983
        %s7985 = scalar_lea.vmem [#allocation9], 32
        %v7986 = vld [vmem:[%s7985] sm:$0xf]
        %v7987 = vld [vmem:[%s7985 + $0x4] sm:$0xf]
        %v7988 = vld [vmem:[%s7985 + $0x8] sm:$0xf]
        %v7989 = vld [vmem:[%s7985 + $0xc] sm:$0xf]
        %v7990 = vunpack.c.l.b16 %v7614
        %v7991 = vunpack.c.l.b16 %v7624
        %v7992 = vunpack.c.l.b16 %v7638
        %v7993 = vunpack.c.l.b16 %v7648
        %v7994 = vunpack.c.l.b16 %v7662
        %v7995 = vunpack.c.l.b16 %v7672
        %v7996 = vunpack.c.l.b16 %v7686
        %v7997 = vunpack.c.l.b16 %v7696
        %v7998 = vunpack.c.l.b16 %v7710
        %v7999 = vunpack.c.l.b16 %v7720
        %v8000 = vunpack.c.l.b16 %v7734
        %v8001 = vunpack.c.l.b16 %v7744
        %v8002 = vunpack.c.l.b16 %v7758
        %v8003 = vunpack.c.l.b16 %v7768
        %v8004 = vunpack.c.l.b16 %v7782
        %v8005 = vunpack.c.l.b16 %v7792
        %v8006 = vunpack.c.l.b16 %v7806
        %v8007 = vunpack.c.l.b16 %v7816
        %v8008 = vunpack.c.l.b16 %v7830
        %v8009 = vunpack.c.l.b16 %v7840
        %v8010 = vunpack.c.l.b16 %v7854
        %v8011 = vunpack.c.l.b16 %v7864
        %v8012 = vunpack.c.l.b16 %v7878
        %v8013 = vunpack.c.l.b16 %v7888
        %v8014 = vunpack.c.l.b16 %v7902
        %v8015 = vunpack.c.l.b16 %v7912
        %v8016 = vunpack.c.l.b16 %v7926
        %v8017 = vunpack.c.l.b16 %v7936
        %v8018 = vunpack.c.l.b16 %v7950
        %v8019 = vunpack.c.l.b16 %v7960
        %v8020 = vunpack.c.l.b16 %v7974
        %v8021 = vunpack.c.l.b16 %v7984
        %v8022 = vpack.c.b16 %v7991, %v7990
        %v8023 = vpack.c.b16 %v7993, %v7992
        %v8024 = vpack.c.b16 %v7995, %v7994
        %v8025 = vpack.c.b16 %v7997, %v7996
        %v8026 = vpack.c.b16 %v7999, %v7998
        %v8027 = vpack.c.b16 %v8001, %v8000
        %v8028 = vpack.c.b16 %v8003, %v8002
        %v8029 = vpack.c.b16 %v8005, %v8004
        %v8030 = vpack.c.b16 %v8007, %v8006
        %v8031 = vpack.c.b16 %v8009, %v8008
        %v8032 = vpack.c.b16 %v8011, %v8010
        %v8033 = vpack.c.b16 %v8013, %v8012
        %v8034 = vpack.c.b16 %v8015, %v8014
        %v8035 = vpack.c.b16 %v8017, %v8016
        %v8036 = vpack.c.b16 %v8019, %v8018
        %v8037 = vpack.c.b16 %v8021, %v8020
        %v8042 = vunpack.c.l.b16 %v7986
        %v8043 = vunpack.c.l.b16 %v7987
        %v8044 = vunpack.c.l.b16 %v7988
        %v8045 = vunpack.c.l.b16 %v7989
        %v8046 = vpack.c.b16 %v8043, %v8042
        %v8047 = vpack.c.b16 %v8045, %v8044
        %v8051 = vsel %vm7074, %v8022, 0
        %v8054 = vsel %vm7074, %v8023, 0
        %v8057 = vsel %vm7074, %v8024, 0
        %v8060 = vsel %vm7074, %v8025, 0
        %v8063 = vsel %vm7074, %v8026, 0
        %v8066 = vsel %vm7074, %v8027, 0
        %v8069 = vsel %vm7074, %v8028, 0
        %v8072 = vsel %vm7074, %v8029, 0
        %v8075 = vsel %vm7074, %v8030, 0
        %v8078 = vsel %vm7074, %v8031, 0
        %v8081 = vsel %vm7074, %v8032, 0
        %v8084 = vsel %vm7074, %v8033, 0
        %v8087 = vsel %vm7074, %v8034, 0
        %v8090 = vsel %vm7074, %v8035, 0
        %v8093 = vsel %vm7074, %v8036, 0
        %v8096 = vsel %vm7074, %v8037, 0
        %8098 = vmatprep.subr.bf16.mxu0 0
        %8099 = vmatpush1.bf16.msra.mxu0 0
        %8100 = vmatprep.subr.bf16.mxu0 0
        %8101 = vmatpush1.bf16.msra.mxu0 0
        %8102 = vmatprep.subr.bf16.mxu0 0
        %8103 = vmatpush1.bf16.msra.mxu0 0
        %8104 = vmatprep.subr.bf16.mxu0 0
        %8105 = vmatpush1.bf16.msra.mxu0 0
        %8106 = vmatprep.subr.bf16.mxu0 0
        %8107 = vmatpush1.bf16.msra.mxu0 0
        %8108 = vmatprep.subr.bf16.mxu0 0
        %8109 = vmatpush1.bf16.msra.mxu0 0
        %8110 = vmatprep.subr.bf16.mxu0 0
        %8111 = vmatpush1.bf16.msra.mxu0 %v8047
        %8112 = vmatprep.subr.bf16.mxu0 0
        %8113 = vmatpush1.bf16.msra.mxu0 %v8046
        %8114 = vmatprep.subr.bf16.mxu0 0
        %8115 = vmatpush2.bf16.msra.mxu0 0
        %8116 = vmatprep.subr.bf16.mxu0 0
        %8117 = vmatpush2.bf16.msra.mxu0 0
        %8118 = vmatprep.subr.bf16.mxu0 0
        %8119 = vmatpush2.bf16.msra.mxu0 0
        %8120 = vmatprep.subr.bf16.mxu0 0
        %8121 = vmatpush2.bf16.msra.mxu0 0
        %8122 = vmatprep.subr.bf16.mxu0 0
        %8123 = vmatpush2.bf16.msra.mxu0 0
        %8124 = vmatprep.subr.bf16.mxu0 0
        %8125 = vmatpush2.bf16.msra.mxu0 0
        %8126 = vmatprep.subr.bf16.mxu0 0
        %8127 = vmatpush2.bf16.msra.mxu0 0
        %8128 = vmatprep.subr.bf16.mxu0 0
        %8129 = vmatpush2.bf16.msra.mxu0 0
        %8130 = vmatprep.mubr.bf16.mxu0 0
        %8131 = vmatmul.mubr.bf16.gmra.mxu0 %v8051
        %v8132 = vpop.f32.mrf.mxu0
        %v8133 = vadd.f32 0.0, %v8132
        %v8134 = vpop.f32.mrf.mxu0
        %v8135 = vpop.f32.mrf.mxu0
        %v8136 = vadd.f32 0.0, %v8135
        %v8137 = vpop.f32.mrf.mxu0
        %8138 = vmatprep.mubr.bf16.mxu0 0
        %8139 = vmatmul.mubr.bf16.gmra.mxu0 %v8054
        %v8140 = vpop.f32.mrf.mxu0
        %v8141 = vadd.f32 0.0, %v8140
        %v8142 = vpop.f32.mrf.mxu0
        %v8143 = vpop.f32.mrf.mxu0
        %v8144 = vadd.f32 0.0, %v8143
        %v8145 = vpop.f32.mrf.mxu0
        %8146 = vmatprep.mubr.bf16.mxu0 0
        %8147 = vmatmul.mubr.bf16.gmra.mxu0 %v8057
        %v8148 = vpop.f32.mrf.mxu0
        %v8149 = vadd.f32 0.0, %v8148
        %v8150 = vpop.f32.mrf.mxu0
        %v8151 = vpop.f32.mrf.mxu0
        %v8152 = vadd.f32 0.0, %v8151
        %v8153 = vpop.f32.mrf.mxu0
        %8154 = vmatprep.mubr.bf16.mxu0 0
        %8155 = vmatmul.mubr.bf16.gmra.mxu0 %v8060
        %v8156 = vpop.f32.mrf.mxu0
        %v8157 = vadd.f32 0.0, %v8156
        %v8158 = vpop.f32.mrf.mxu0
        %v8159 = vpop.f32.mrf.mxu0
        %v8160 = vadd.f32 0.0, %v8159
        %v8161 = vpop.f32.mrf.mxu0
        %8162 = vmatprep.mubr.bf16.mxu0 0
        %8163 = vmatmul.mubr.bf16.gmra.mxu0 %v8063
        %v8164 = vpop.f32.mrf.mxu0
        %v8165 = vadd.f32 0.0, %v8164
        %v8166 = vpop.f32.mrf.mxu0
        %v8167 = vpop.f32.mrf.mxu0
        %v8168 = vadd.f32 0.0, %v8167
        %v8169 = vpop.f32.mrf.mxu0
        %8170 = vmatprep.mubr.bf16.mxu0 0
        %8171 = vmatmul.mubr.bf16.gmra.mxu0 %v8066
        %v8172 = vpop.f32.mrf.mxu0
        %v8173 = vadd.f32 0.0, %v8172
        %v8174 = vpop.f32.mrf.mxu0
        %v8175 = vpop.f32.mrf.mxu0
        %v8176 = vadd.f32 0.0, %v8175
        %v8177 = vpop.f32.mrf.mxu0
        %8178 = vmatprep.mubr.bf16.mxu0 0
        %8179 = vmatmul.mubr.bf16.gmra.mxu0 %v8069
        %v8180 = vpop.f32.mrf.mxu0
        %v8181 = vadd.f32 0.0, %v8180
        %v8182 = vpop.f32.mrf.mxu0
        %v8183 = vpop.f32.mrf.mxu0
        %v8184 = vadd.f32 0.0, %v8183
        %v8185 = vpop.f32.mrf.mxu0
        %8186 = vmatprep.mubr.bf16.mxu0 0
        %8187 = vmatmul.mubr.bf16.gmra.mxu0 %v8072
        %v8188 = vpop.f32.mrf.mxu0
        %v8189 = vadd.f32 0.0, %v8188
        %v8190 = vpop.f32.mrf.mxu0
        %v8191 = vpop.f32.mrf.mxu0
        %v8192 = vadd.f32 0.0, %v8191
        %v8193 = vpop.f32.mrf.mxu0
        %8194 = vmatprep.mubr.bf16.mxu0 0
        %8195 = vmatmul.mubr.bf16.gmra.mxu0 %v8075
        %v8196 = vpop.f32.mrf.mxu0
        %v8197 = vadd.f32 0.0, %v8196
        %v8198 = vpop.f32.mrf.mxu0
        %v8199 = vpop.f32.mrf.mxu0
        %v8200 = vadd.f32 0.0, %v8199
        %v8201 = vpop.f32.mrf.mxu0
        %8202 = vmatprep.mubr.bf16.mxu0 0
        %8203 = vmatmul.mubr.bf16.gmra.mxu0 %v8078
        %v8204 = vpop.f32.mrf.mxu0
        %v8205 = vadd.f32 0.0, %v8204
        %v8206 = vpop.f32.mrf.mxu0
        %v8207 = vpop.f32.mrf.mxu0
        %v8208 = vadd.f32 0.0, %v8207
        %v8209 = vpop.f32.mrf.mxu0
        %8210 = vmatprep.mubr.bf16.mxu0 0
        %8211 = vmatmul.mubr.bf16.gmra.mxu0 %v8081
        %v8212 = vpop.f32.mrf.mxu0
        %v8213 = vadd.f32 0.0, %v8212
        %v8214 = vpop.f32.mrf.mxu0
        %v8215 = vpop.f32.mrf.mxu0
        %v8216 = vadd.f32 0.0, %v8215
        %v8217 = vpop.f32.mrf.mxu0
        %8218 = vmatprep.mubr.bf16.mxu0 0
        %8219 = vmatmul.mubr.bf16.gmra.mxu0 %v8084
        %v8220 = vpop.f32.mrf.mxu0
        %v8221 = vadd.f32 0.0, %v8220
        %v8222 = vpop.f32.mrf.mxu0
        %v8223 = vpop.f32.mrf.mxu0
        %v8224 = vadd.f32 0.0, %v8223
        %v8225 = vpop.f32.mrf.mxu0
        %8226 = vmatprep.mubr.bf16.mxu0 0
        %8227 = vmatmul.mubr.bf16.gmra.mxu0 %v8087
        %v8228 = vpop.f32.mrf.mxu0
        %v8229 = vadd.f32 0.0, %v8228
        %v8230 = vpop.f32.mrf.mxu0
        %v8231 = vpop.f32.mrf.mxu0
        %v8232 = vadd.f32 0.0, %v8231
        %v8233 = vpop.f32.mrf.mxu0
        %8234 = vmatprep.mubr.bf16.mxu0 0
        %8235 = vmatmul.mubr.bf16.gmra.mxu0 %v8090
        %v8236 = vpop.f32.mrf.mxu0
        %v8237 = vadd.f32 0.0, %v8236
        %v8238 = vpop.f32.mrf.mxu0
        %v8239 = vpop.f32.mrf.mxu0
        %v8240 = vadd.f32 0.0, %v8239
        %v8241 = vpop.f32.mrf.mxu0
        %8242 = vmatprep.mubr.bf16.mxu0 0
        %8243 = vmatmul.mubr.bf16.gmra.mxu0 %v8093
        %v8244 = vpop.f32.mrf.mxu0
        %v8245 = vadd.f32 0.0, %v8244
        %v8246 = vpop.f32.mrf.mxu0
        %v8247 = vpop.f32.mrf.mxu0
        %v8248 = vadd.f32 0.0, %v8247
        %v8249 = vpop.f32.mrf.mxu0
        %8250 = vmatprep.mubr.bf16.mxu0 0
        %8251 = vmatmul.mubr.bf16.gmra.mxu0 %v8096
        %v8252 = vpop.f32.mrf.mxu0
        %v8253 = vadd.f32 0.0, %v8252
        %v8254 = vpop.f32.mrf.mxu0
        %v8255 = vpop.f32.mrf.mxu0
        %v8256 = vadd.f32 0.0, %v8255
        %v8257 = vpop.f32.mrf.mxu0
        %8258 = vdwg.mxu0
        %v8259 = vadd.f32 %v7427, %v8133
        %v8260 = vadd.f32 %v7430, %v8136
        %v8261 = vadd.f32 %v7435, %v8141
        %v8262 = vadd.f32 %v7438, %v8144
        %v8263 = vadd.f32 %v7443, %v8149
        %v8264 = vadd.f32 %v7446, %v8152
        %v8265 = vadd.f32 %v7451, %v8157
        %v8266 = vadd.f32 %v7454, %v8160
        %v8267 = vadd.f32 %v7459, %v8165
        %v8268 = vadd.f32 %v7462, %v8168
        %v8269 = vadd.f32 %v7467, %v8173
        %v8270 = vadd.f32 %v7470, %v8176
        %v8271 = vadd.f32 %v7475, %v8181
        %v8272 = vadd.f32 %v7478, %v8184
        %v8273 = vadd.f32 %v7483, %v8189
        %v8274 = vadd.f32 %v7486, %v8192
        %v8275 = vadd.f32 %v7491, %v8197
        %v8276 = vadd.f32 %v7494, %v8200
        %v8277 = vadd.f32 %v7499, %v8205
        %v8278 = vadd.f32 %v7502, %v8208
        %v8279 = vadd.f32 %v7507, %v8213
        %v8280 = vadd.f32 %v7510, %v8216
        %v8281 = vadd.f32 %v7515, %v8221
        %v8282 = vadd.f32 %v7518, %v8224
        %v8283 = vadd.f32 %v7523, %v8229
        %v8284 = vadd.f32 %v7526, %v8232
        %v8285 = vadd.f32 %v7531, %v8237
        %v8286 = vadd.f32 %v7534, %v8240
        %v8287 = vadd.f32 %v7539, %v8245
        %v8288 = vadd.f32 %v7542, %v8248
        %v8289 = vadd.f32 %v7547, %v8253
        %v8290 = vadd.f32 %v7550, %v8256
        %v8291 = vld [vmem:[%s6047] sm:$0x8]
        %v8292 = vld [vmem:[%s6047 + $0x4] sm:$0xf]
        %v8293 = vld [vmem:[%s6047 + $0x8] sm:$0xf]
        %v8294 = vld [vmem:[%s6047 + $0x10] sm:$0x8]
        %v8295 = vld [vmem:[%s6047 + $0x14] sm:$0xf]
        %v8296 = vld [vmem:[%s6047 + $0x18] sm:$0xf]
        %v8297 = vld [vmem:[%s6047 + $0x20] sm:$0x8]
        %v8298 = vld [vmem:[%s6047 + $0x24] sm:$0xf]
        %v8299 = vld [vmem:[%s6047 + $0x28] sm:$0xf]
        %v8300 = vld [vmem:[%s6047 + $0x30] sm:$0x8]
        %v8301 = vld [vmem:[%s6047 + $0x34] sm:$0xf]
        %v8302 = vld [vmem:[%s6047 + $0x38] sm:$0xf]
        %v8303 = vld [vmem:[%s6047 + $0x40] sm:$0x8]
        %v8304 = vld [vmem:[%s6047 + $0x44] sm:$0xf]
        %v8305 = vld [vmem:[%s6047 + $0x48] sm:$0xf]
        %v8306 = vld [vmem:[%s6047 + $0x50] sm:$0x8]
        %v8307 = vld [vmem:[%s6047 + $0x54] sm:$0xf]
        %v8308 = vld [vmem:[%s6047 + $0x58] sm:$0xf]
        %v8309 = vld [vmem:[%s6047 + $0x60] sm:$0x8]
        %v8310 = vld [vmem:[%s6047 + $0x64] sm:$0xf]
        %v8311 = vld [vmem:[%s6047 + $0x68] sm:$0xf]
        %v8312 = vld [vmem:[%s6047 + $0x70] sm:$0x8]
        %v8313 = vld [vmem:[%s6047 + $0x74] sm:$0xf]
        %v8314 = vld [vmem:[%s6047 + $0x78] sm:$0xf]
        %v8315 = vld [vmem:[%s6047 + $0x80] sm:$0x8]
        %v8316 = vld [vmem:[%s6047 + $0x84] sm:$0xf]
        %v8317 = vld [vmem:[%s6047 + $0x88] sm:$0xf]
        %v8318 = vld [vmem:[%s6047 + $0x90] sm:$0x8]
        %v8319 = vld [vmem:[%s6047 + $0x94] sm:$0xf]
        %v8320 = vld [vmem:[%s6047 + $0x98] sm:$0xf]
        %v8321 = vld [vmem:[%s6047 + $0xa0] sm:$0x8]
        %v8322 = vld [vmem:[%s6047 + $0xa4] sm:$0xf]
        %v8323 = vld [vmem:[%s6047 + $0xa8] sm:$0xf]
        %v8324 = vld [vmem:[%s6047 + $0xb0] sm:$0x8]
        %v8325 = vld [vmem:[%s6047 + $0xb4] sm:$0xf]
        %v8326 = vld [vmem:[%s6047 + $0xb8] sm:$0xf]
        %v8327 = vld [vmem:[%s6047 + $0xc0] sm:$0x8]
        %v8328 = vld [vmem:[%s6047 + $0xc4] sm:$0xf]
        %v8329 = vld [vmem:[%s6047 + $0xc8] sm:$0xf]
        %v8330 = vld [vmem:[%s6047 + $0xd0] sm:$0x8]
        %v8331 = vld [vmem:[%s6047 + $0xd4] sm:$0xf]
        %v8332 = vld [vmem:[%s6047 + $0xd8] sm:$0xf]
        %v8333 = vld [vmem:[%s6047 + $0xe0] sm:$0x8]
        %v8334 = vld [vmem:[%s6047 + $0xe4] sm:$0xf]
        %v8335 = vld [vmem:[%s6047 + $0xe8] sm:$0xf]
        %v8336 = vld [vmem:[%s6047 + $0xf0] sm:$0x8]
        %v8337 = vld [vmem:[%s6047 + $0xf4] sm:$0xf]
        %v8338 = vld [vmem:[%s6047 + $0xf8] sm:$0xf]
        %v8340 = vshrl.u32 %v8291, 16
        %v8342 = vrot.slane %v8340, 7
        %v8343 = vrot.slane %v8342, 4
        %v8345 = vshrl.u32 %v8292, 16
        %v8347 = vrot.slane %v8345, 7
        %v8348 = vshll.u32 %v8292, 16
        %v8350 = vor.u32 %v8347, %v8348
        %v8351 = vsel %vm642, %v8343, %v8350
        %v8352 = vrot.slane %v8347, 4
        %v8354 = vshrl.u32 %v8293, 16
        %v8356 = vrot.slane %v8354, 7
        %v8357 = vshll.u32 %v8293, 16
        %v8359 = vor.u32 %v8356, %v8357
        %v8360 = vsel %vm642, %v8352, %v8359
        %v8362 = vshrl.u32 %v8294, 16
        %v8364 = vrot.slane %v8362, 7
        %v8365 = vrot.slane %v8364, 4
        %v8367 = vshrl.u32 %v8295, 16
        %v8369 = vrot.slane %v8367, 7
        %v8370 = vshll.u32 %v8295, 16
        %v8372 = vor.u32 %v8369, %v8370
        %v8373 = vsel %vm642, %v8365, %v8372
        %v8374 = vrot.slane %v8369, 4
        %v8376 = vshrl.u32 %v8296, 16
        %v8378 = vrot.slane %v8376, 7
        %v8379 = vshll.u32 %v8296, 16
        %v8381 = vor.u32 %v8378, %v8379
        %v8382 = vsel %vm642, %v8374, %v8381
        %v8384 = vshrl.u32 %v8297, 16
        %v8386 = vrot.slane %v8384, 7
        %v8387 = vrot.slane %v8386, 4
        %v8389 = vshrl.u32 %v8298, 16
        %v8391 = vrot.slane %v8389, 7
        %v8392 = vshll.u32 %v8298, 16
        %v8394 = vor.u32 %v8391, %v8392
        %v8395 = vsel %vm642, %v8387, %v8394
        %v8396 = vrot.slane %v8391, 4
        %v8398 = vshrl.u32 %v8299, 16
        %v8400 = vrot.slane %v8398, 7
        %v8401 = vshll.u32 %v8299, 16
        %v8403 = vor.u32 %v8400, %v8401
        %v8404 = vsel %vm642, %v8396, %v8403
        %v8406 = vshrl.u32 %v8300, 16
        %v8408 = vrot.slane %v8406, 7
        %v8409 = vrot.slane %v8408, 4
        %v8411 = vshrl.u32 %v8301, 16
        %v8413 = vrot.slane %v8411, 7
        %v8414 = vshll.u32 %v8301, 16
        %v8416 = vor.u32 %v8413, %v8414
        %v8417 = vsel %vm642, %v8409, %v8416
        %v8418 = vrot.slane %v8413, 4
        %v8420 = vshrl.u32 %v8302, 16
        %v8422 = vrot.slane %v8420, 7
        %v8423 = vshll.u32 %v8302, 16
        %v8425 = vor.u32 %v8422, %v8423
        %v8426 = vsel %vm642, %v8418, %v8425
        %v8428 = vshrl.u32 %v8303, 16
        %v8430 = vrot.slane %v8428, 7
        %v8431 = vrot.slane %v8430, 4
        %v8433 = vshrl.u32 %v8304, 16
        %v8435 = vrot.slane %v8433, 7
        %v8436 = vshll.u32 %v8304, 16
        %v8438 = vor.u32 %v8435, %v8436
        %v8439 = vsel %vm642, %v8431, %v8438
        %v8440 = vrot.slane %v8435, 4
        %v8442 = vshrl.u32 %v8305, 16
        %v8444 = vrot.slane %v8442, 7
        %v8445 = vshll.u32 %v8305, 16
        %v8447 = vor.u32 %v8444, %v8445
        %v8448 = vsel %vm642, %v8440, %v8447
        %v8450 = vshrl.u32 %v8306, 16
        %v8452 = vrot.slane %v8450, 7
        %v8453 = vrot.slane %v8452, 4
        %v8455 = vshrl.u32 %v8307, 16
        %v8457 = vrot.slane %v8455, 7
        %v8458 = vshll.u32 %v8307, 16
        %v8460 = vor.u32 %v8457, %v8458
        %v8461 = vsel %vm642, %v8453, %v8460
        %v8462 = vrot.slane %v8457, 4
        %v8464 = vshrl.u32 %v8308, 16
        %v8466 = vrot.slane %v8464, 7
        %v8467 = vshll.u32 %v8308, 16
        %v8469 = vor.u32 %v8466, %v8467
        %v8470 = vsel %vm642, %v8462, %v8469
        %v8472 = vshrl.u32 %v8309, 16
        %v8474 = vrot.slane %v8472, 7
        %v8475 = vrot.slane %v8474, 4
        %v8477 = vshrl.u32 %v8310, 16
        %v8479 = vrot.slane %v8477, 7
        %v8480 = vshll.u32 %v8310, 16
        %v8482 = vor.u32 %v8479, %v8480
        %v8483 = vsel %vm642, %v8475, %v8482
        %v8484 = vrot.slane %v8479, 4
        %v8486 = vshrl.u32 %v8311, 16
        %v8488 = vrot.slane %v8486, 7
        %v8489 = vshll.u32 %v8311, 16
        %v8491 = vor.u32 %v8488, %v8489
        %v8492 = vsel %vm642, %v8484, %v8491
        %v8494 = vshrl.u32 %v8312, 16
        %v8496 = vrot.slane %v8494, 7
        %v8497 = vrot.slane %v8496, 4
        %v8499 = vshrl.u32 %v8313, 16
        %v8501 = vrot.slane %v8499, 7
        %v8502 = vshll.u32 %v8313, 16
        %v8504 = vor.u32 %v8501, %v8502
        %v8505 = vsel %vm642, %v8497, %v8504
        %v8506 = vrot.slane %v8501, 4
        %v8508 = vshrl.u32 %v8314, 16
        %v8510 = vrot.slane %v8508, 7
        %v8511 = vshll.u32 %v8314, 16
        %v8513 = vor.u32 %v8510, %v8511
        %v8514 = vsel %vm642, %v8506, %v8513
        %v8516 = vshrl.u32 %v8315, 16
        %v8518 = vrot.slane %v8516, 7
        %v8519 = vrot.slane %v8518, 4
        %v8521 = vshrl.u32 %v8316, 16
        %v8523 = vrot.slane %v8521, 7
        %v8524 = vshll.u32 %v8316, 16
        %v8526 = vor.u32 %v8523, %v8524
        %v8527 = vsel %vm642, %v8519, %v8526
        %v8528 = vrot.slane %v8523, 4
        %v8530 = vshrl.u32 %v8317, 16
        %v8532 = vrot.slane %v8530, 7
        %v8533 = vshll.u32 %v8317, 16
        %v8535 = vor.u32 %v8532, %v8533
        %v8536 = vsel %vm642, %v8528, %v8535
        %v8538 = vshrl.u32 %v8318, 16
        %v8540 = vrot.slane %v8538, 7
        %v8541 = vrot.slane %v8540, 4
        %v8543 = vshrl.u32 %v8319, 16
        %v8545 = vrot.slane %v8543, 7
        %v8546 = vshll.u32 %v8319, 16
        %v8548 = vor.u32 %v8545, %v8546
        %v8549 = vsel %vm642, %v8541, %v8548
        %v8550 = vrot.slane %v8545, 4
        %v8552 = vshrl.u32 %v8320, 16
        %v8554 = vrot.slane %v8552, 7
        %v8555 = vshll.u32 %v8320, 16
        %v8557 = vor.u32 %v8554, %v8555
        %v8558 = vsel %vm642, %v8550, %v8557
        %v8560 = vshrl.u32 %v8321, 16
        %v8562 = vrot.slane %v8560, 7
        %v8563 = vrot.slane %v8562, 4
        %v8565 = vshrl.u32 %v8322, 16
        %v8567 = vrot.slane %v8565, 7
        %v8568 = vshll.u32 %v8322, 16
        %v8570 = vor.u32 %v8567, %v8568
        %v8571 = vsel %vm642, %v8563, %v8570
        %v8572 = vrot.slane %v8567, 4
        %v8574 = vshrl.u32 %v8323, 16
        %v8576 = vrot.slane %v8574, 7
        %v8577 = vshll.u32 %v8323, 16
        %v8579 = vor.u32 %v8576, %v8577
        %v8580 = vsel %vm642, %v8572, %v8579
        %v8582 = vshrl.u32 %v8324, 16
        %v8584 = vrot.slane %v8582, 7
        %v8585 = vrot.slane %v8584, 4
        %v8587 = vshrl.u32 %v8325, 16
        %v8589 = vrot.slane %v8587, 7
        %v8590 = vshll.u32 %v8325, 16
        %v8592 = vor.u32 %v8589, %v8590
        %v8593 = vsel %vm642, %v8585, %v8592
        %v8594 = vrot.slane %v8589, 4
        %v8596 = vshrl.u32 %v8326, 16
        %v8598 = vrot.slane %v8596, 7
        %v8599 = vshll.u32 %v8326, 16
        %v8601 = vor.u32 %v8598, %v8599
        %v8602 = vsel %vm642, %v8594, %v8601
        %v8604 = vshrl.u32 %v8327, 16
        %v8606 = vrot.slane %v8604, 7
        %v8607 = vrot.slane %v8606, 4
        %v8609 = vshrl.u32 %v8328, 16
        %v8611 = vrot.slane %v8609, 7
        %v8612 = vshll.u32 %v8328, 16
        %v8614 = vor.u32 %v8611, %v8612
        %v8615 = vsel %vm642, %v8607, %v8614
        %v8616 = vrot.slane %v8611, 4
        %v8618 = vshrl.u32 %v8329, 16
        %v8620 = vrot.slane %v8618, 7
        %v8621 = vshll.u32 %v8329, 16
        %v8623 = vor.u32 %v8620, %v8621
        %v8624 = vsel %vm642, %v8616, %v8623
        %v8626 = vshrl.u32 %v8330, 16
        %v8628 = vrot.slane %v8626, 7
        %v8629 = vrot.slane %v8628, 4
        %v8631 = vshrl.u32 %v8331, 16
        %v8633 = vrot.slane %v8631, 7
        %v8634 = vshll.u32 %v8331, 16
        %v8636 = vor.u32 %v8633, %v8634
        %v8637 = vsel %vm642, %v8629, %v8636
        %v8638 = vrot.slane %v8633, 4
        %v8640 = vshrl.u32 %v8332, 16
        %v8642 = vrot.slane %v8640, 7
        %v8643 = vshll.u32 %v8332, 16
        %v8645 = vor.u32 %v8642, %v8643
        %v8646 = vsel %vm642, %v8638, %v8645
        %v8648 = vshrl.u32 %v8333, 16
        %v8650 = vrot.slane %v8648, 7
        %v8651 = vrot.slane %v8650, 4
        %v8653 = vshrl.u32 %v8334, 16
        %v8655 = vrot.slane %v8653, 7
        %v8656 = vshll.u32 %v8334, 16
        %v8658 = vor.u32 %v8655, %v8656
        %v8659 = vsel %vm642, %v8651, %v8658
        %v8660 = vrot.slane %v8655, 4
        %v8662 = vshrl.u32 %v8335, 16
        %v8664 = vrot.slane %v8662, 7
        %v8665 = vshll.u32 %v8335, 16
        %v8667 = vor.u32 %v8664, %v8665
        %v8668 = vsel %vm642, %v8660, %v8667
        %v8670 = vshrl.u32 %v8336, 16
        %v8672 = vrot.slane %v8670, 7
        %v8673 = vrot.slane %v8672, 4
        %v8675 = vshrl.u32 %v8337, 16
        %v8677 = vrot.slane %v8675, 7
        %v8678 = vshll.u32 %v8337, 16
        %v8680 = vor.u32 %v8677, %v8678
        %v8681 = vsel %vm642, %v8673, %v8680
        %v8682 = vrot.slane %v8677, 4
        %v8684 = vshrl.u32 %v8338, 16
        %v8686 = vrot.slane %v8684, 7
        %v8687 = vshll.u32 %v8338, 16
        %v8689 = vor.u32 %v8686, %v8687
        %v8690 = vsel %vm642, %v8682, %v8689
        %s8691 = scalar_lea.vmem [#allocation9], 48
        %v8692 = vld [vmem:[%s8691] sm:$0xf]
        %v8693 = vld [vmem:[%s8691 + $0x4] sm:$0xf]
        %v8694 = vld [vmem:[%s8691 + $0x8] sm:$0xf]
        %v8695 = vld [vmem:[%s8691 + $0xc] sm:$0xf]
        %v8696 = vunpack.c.l.b16 %v8351
        %v8697 = vunpack.c.l.b16 %v8360
        %v8698 = vunpack.c.l.b16 %v8373
        %v8699 = vunpack.c.l.b16 %v8382
        %v8700 = vunpack.c.l.b16 %v8395
        %v8701 = vunpack.c.l.b16 %v8404
        %v8702 = vunpack.c.l.b16 %v8417
        %v8703 = vunpack.c.l.b16 %v8426
        %v8704 = vunpack.c.l.b16 %v8439
        %v8705 = vunpack.c.l.b16 %v8448
        %v8706 = vunpack.c.l.b16 %v8461
        %v8707 = vunpack.c.l.b16 %v8470
        %v8708 = vunpack.c.l.b16 %v8483
        %v8709 = vunpack.c.l.b16 %v8492
        %v8710 = vunpack.c.l.b16 %v8505
        %v8711 = vunpack.c.l.b16 %v8514
        %v8712 = vunpack.c.l.b16 %v8527
        %v8713 = vunpack.c.l.b16 %v8536
        %v8714 = vunpack.c.l.b16 %v8549
        %v8715 = vunpack.c.l.b16 %v8558
        %v8716 = vunpack.c.l.b16 %v8571
        %v8717 = vunpack.c.l.b16 %v8580
        %v8718 = vunpack.c.l.b16 %v8593
        %v8719 = vunpack.c.l.b16 %v8602
        %v8720 = vunpack.c.l.b16 %v8615
        %v8721 = vunpack.c.l.b16 %v8624
        %v8722 = vunpack.c.l.b16 %v8637
        %v8723 = vunpack.c.l.b16 %v8646
        %v8724 = vunpack.c.l.b16 %v8659
        %v8725 = vunpack.c.l.b16 %v8668
        %v8726 = vunpack.c.l.b16 %v8681
        %v8727 = vunpack.c.l.b16 %v8690
        %v8728 = vpack.c.b16 %v8697, %v8696
        %v8729 = vpack.c.b16 %v8699, %v8698
        %v8730 = vpack.c.b16 %v8701, %v8700
        %v8731 = vpack.c.b16 %v8703, %v8702
        %v8732 = vpack.c.b16 %v8705, %v8704
        %v8733 = vpack.c.b16 %v8707, %v8706
        %v8734 = vpack.c.b16 %v8709, %v8708
        %v8735 = vpack.c.b16 %v8711, %v8710
        %v8736 = vpack.c.b16 %v8713, %v8712
        %v8737 = vpack.c.b16 %v8715, %v8714
        %v8738 = vpack.c.b16 %v8717, %v8716
        %v8739 = vpack.c.b16 %v8719, %v8718
        %v8740 = vpack.c.b16 %v8721, %v8720
        %v8741 = vpack.c.b16 %v8723, %v8722
        %v8742 = vpack.c.b16 %v8725, %v8724
        %v8743 = vpack.c.b16 %v8727, %v8726
        %v8748 = vunpack.c.l.b16 %v8692
        %v8749 = vunpack.c.l.b16 %v8693
        %v8750 = vunpack.c.l.b16 %v8694
        %v8751 = vunpack.c.l.b16 %v8695
        %v8752 = vpack.c.b16 %v8749, %v8748
        %v8753 = vpack.c.b16 %v8751, %v8750
        %v8757 = vsel %vm7074, %v8728, 0
        %v8760 = vsel %vm7074, %v8729, 0
        %v8763 = vsel %vm7074, %v8730, 0
        %v8766 = vsel %vm7074, %v8731, 0
        %v8769 = vsel %vm7074, %v8732, 0
        %v8772 = vsel %vm7074, %v8733, 0
        %v8775 = vsel %vm7074, %v8734, 0
        %v8778 = vsel %vm7074, %v8735, 0
        %v8781 = vsel %vm7074, %v8736, 0
        %v8784 = vsel %vm7074, %v8737, 0
        %v8787 = vsel %vm7074, %v8738, 0
        %v8790 = vsel %vm7074, %v8739, 0
        %v8793 = vsel %vm7074, %v8740, 0
        %v8796 = vsel %vm7074, %v8741, 0
        %v8799 = vsel %vm7074, %v8742, 0
        %v8802 = vsel %vm7074, %v8743, 0
        %8804 = vmatprep.subr.bf16.mxu0 0
        %8805 = vmatpush1.bf16.msra.mxu0 0
        %8806 = vmatprep.subr.bf16.mxu0 0
        %8807 = vmatpush1.bf16.msra.mxu0 0
        %8808 = vmatprep.subr.bf16.mxu0 0
        %8809 = vmatpush1.bf16.msra.mxu0 0
        %8810 = vmatprep.subr.bf16.mxu0 0
        %8811 = vmatpush1.bf16.msra.mxu0 0
        %8812 = vmatprep.subr.bf16.mxu0 0
        %8813 = vmatpush1.bf16.msra.mxu0 0
        %8814 = vmatprep.subr.bf16.mxu0 0
        %8815 = vmatpush1.bf16.msra.mxu0 0
        %8816 = vmatprep.subr.bf16.mxu0 0
        %8817 = vmatpush1.bf16.msra.mxu0 %v8753
        %8818 = vmatprep.subr.bf16.mxu0 0
        %8819 = vmatpush1.bf16.msra.mxu0 %v8752
        %8820 = vmatprep.subr.bf16.mxu0 0
        %8821 = vmatpush2.bf16.msra.mxu0 0
        %8822 = vmatprep.subr.bf16.mxu0 0
        %8823 = vmatpush2.bf16.msra.mxu0 0
        %8824 = vmatprep.subr.bf16.mxu0 0
        %8825 = vmatpush2.bf16.msra.mxu0 0
        %8826 = vmatprep.subr.bf16.mxu0 0
        %8827 = vmatpush2.bf16.msra.mxu0 0
        %8828 = vmatprep.subr.bf16.mxu0 0
        %8829 = vmatpush2.bf16.msra.mxu0 0
        %8830 = vmatprep.subr.bf16.mxu0 0
        %8831 = vmatpush2.bf16.msra.mxu0 0
        %8832 = vmatprep.subr.bf16.mxu0 0
        %8833 = vmatpush2.bf16.msra.mxu0 0
        %8834 = vmatprep.subr.bf16.mxu0 0
        %8835 = vmatpush2.bf16.msra.mxu0 0
        %8836 = vmatprep.mubr.bf16.mxu0 0
        %8837 = vmatmul.mubr.bf16.gmra.mxu0 %v8757
        %v8838 = vpop.f32.mrf.mxu0
        %v8839 = vadd.f32 0.0, %v8838
        %v8840 = vpop.f32.mrf.mxu0
        %v8841 = vpop.f32.mrf.mxu0
        %v8842 = vadd.f32 0.0, %v8841
        %v8843 = vpop.f32.mrf.mxu0
        %8844 = vmatprep.mubr.bf16.mxu0 0
        %8845 = vmatmul.mubr.bf16.gmra.mxu0 %v8760
        %v8846 = vpop.f32.mrf.mxu0
        %v8847 = vadd.f32 0.0, %v8846
        %v8848 = vpop.f32.mrf.mxu0
        %v8849 = vpop.f32.mrf.mxu0
        %v8850 = vadd.f32 0.0, %v8849
        %v8851 = vpop.f32.mrf.mxu0
        %8852 = vmatprep.mubr.bf16.mxu0 0
        %8853 = vmatmul.mubr.bf16.gmra.mxu0 %v8763
        %v8854 = vpop.f32.mrf.mxu0
        %v8855 = vadd.f32 0.0, %v8854
        %v8856 = vpop.f32.mrf.mxu0
        %v8857 = vpop.f32.mrf.mxu0
        %v8858 = vadd.f32 0.0, %v8857
        %v8859 = vpop.f32.mrf.mxu0
        %8860 = vmatprep.mubr.bf16.mxu0 0
        %8861 = vmatmul.mubr.bf16.gmra.mxu0 %v8766
        %v8862 = vpop.f32.mrf.mxu0
        %v8863 = vadd.f32 0.0, %v8862
        %v8864 = vpop.f32.mrf.mxu0
        %v8865 = vpop.f32.mrf.mxu0
        %v8866 = vadd.f32 0.0, %v8865
        %v8867 = vpop.f32.mrf.mxu0
        %8868 = vmatprep.mubr.bf16.mxu0 0
        %8869 = vmatmul.mubr.bf16.gmra.mxu0 %v8769
        %v8870 = vpop.f32.mrf.mxu0
        %v8871 = vadd.f32 0.0, %v8870
        %v8872 = vpop.f32.mrf.mxu0
        %v8873 = vpop.f32.mrf.mxu0
        %v8874 = vadd.f32 0.0, %v8873
        %v8875 = vpop.f32.mrf.mxu0
        %8876 = vmatprep.mubr.bf16.mxu0 0
        %8877 = vmatmul.mubr.bf16.gmra.mxu0 %v8772
        %v8878 = vpop.f32.mrf.mxu0
        %v8879 = vadd.f32 0.0, %v8878
        %v8880 = vpop.f32.mrf.mxu0
        %v8881 = vpop.f32.mrf.mxu0
        %v8882 = vadd.f32 0.0, %v8881
        %v8883 = vpop.f32.mrf.mxu0
        %8884 = vmatprep.mubr.bf16.mxu0 0
        %8885 = vmatmul.mubr.bf16.gmra.mxu0 %v8775
        %v8886 = vpop.f32.mrf.mxu0
        %v8887 = vadd.f32 0.0, %v8886
        %v8888 = vpop.f32.mrf.mxu0
        %v8889 = vpop.f32.mrf.mxu0
        %v8890 = vadd.f32 0.0, %v8889
        %v8891 = vpop.f32.mrf.mxu0
        %8892 = vmatprep.mubr.bf16.mxu0 0
        %8893 = vmatmul.mubr.bf16.gmra.mxu0 %v8778
        %v8894 = vpop.f32.mrf.mxu0
        %v8895 = vadd.f32 0.0, %v8894
        %v8896 = vpop.f32.mrf.mxu0
        %v8897 = vpop.f32.mrf.mxu0
        %v8898 = vadd.f32 0.0, %v8897
        %v8899 = vpop.f32.mrf.mxu0
        %8900 = vmatprep.mubr.bf16.mxu0 0
        %8901 = vmatmul.mubr.bf16.gmra.mxu0 %v8781
        %v8902 = vpop.f32.mrf.mxu0
        %v8903 = vadd.f32 0.0, %v8902
        %v8904 = vpop.f32.mrf.mxu0
        %v8905 = vpop.f32.mrf.mxu0
        %v8906 = vadd.f32 0.0, %v8905
        %v8907 = vpop.f32.mrf.mxu0
        %8908 = vmatprep.mubr.bf16.mxu0 0
        %8909 = vmatmul.mubr.bf16.gmra.mxu0 %v8784
        %v8910 = vpop.f32.mrf.mxu0
        %v8911 = vadd.f32 0.0, %v8910
        %v8912 = vpop.f32.mrf.mxu0
        %v8913 = vpop.f32.mrf.mxu0
        %v8914 = vadd.f32 0.0, %v8913
        %v8915 = vpop.f32.mrf.mxu0
        %8916 = vmatprep.mubr.bf16.mxu0 0
        %8917 = vmatmul.mubr.bf16.gmra.mxu0 %v8787
        %v8918 = vpop.f32.mrf.mxu0
        %v8919 = vadd.f32 0.0, %v8918
        %v8920 = vpop.f32.mrf.mxu0
        %v8921 = vpop.f32.mrf.mxu0
        %v8922 = vadd.f32 0.0, %v8921
        %v8923 = vpop.f32.mrf.mxu0
        %8924 = vmatprep.mubr.bf16.mxu0 0
        %8925 = vmatmul.mubr.bf16.gmra.mxu0 %v8790
        %v8926 = vpop.f32.mrf.mxu0
        %v8927 = vadd.f32 0.0, %v8926
        %v8928 = vpop.f32.mrf.mxu0
        %v8929 = vpop.f32.mrf.mxu0
        %v8930 = vadd.f32 0.0, %v8929
        %v8931 = vpop.f32.mrf.mxu0
        %8932 = vmatprep.mubr.bf16.mxu0 0
        %8933 = vmatmul.mubr.bf16.gmra.mxu0 %v8793
        %v8934 = vpop.f32.mrf.mxu0
        %v8935 = vadd.f32 0.0, %v8934
        %v8936 = vpop.f32.mrf.mxu0
        %v8937 = vpop.f32.mrf.mxu0
        %v8938 = vadd.f32 0.0, %v8937
        %v8939 = vpop.f32.mrf.mxu0
        %8940 = vmatprep.mubr.bf16.mxu0 0
        %8941 = vmatmul.mubr.bf16.gmra.mxu0 %v8796
        %v8942 = vpop.f32.mrf.mxu0
        %v8943 = vadd.f32 0.0, %v8942
        %v8944 = vpop.f32.mrf.mxu0
        %v8945 = vpop.f32.mrf.mxu0
        %v8946 = vadd.f32 0.0, %v8945
        %v8947 = vpop.f32.mrf.mxu0
        %8948 = vmatprep.mubr.bf16.mxu0 0
        %8949 = vmatmul.mubr.bf16.gmra.mxu0 %v8799
        %v8950 = vpop.f32.mrf.mxu0
        %v8951 = vadd.f32 0.0, %v8950
        %v8952 = vpop.f32.mrf.mxu0
        %v8953 = vpop.f32.mrf.mxu0
        %v8954 = vadd.f32 0.0, %v8953
        %v8955 = vpop.f32.mrf.mxu0
        %8956 = vmatprep.mubr.bf16.mxu0 0
        %8957 = vmatmul.mubr.bf16.gmra.mxu0 %v8802
        %v8958 = vpop.f32.mrf.mxu0
        %v8959 = vadd.f32 0.0, %v8958
        %v8960 = vpop.f32.mrf.mxu0
        %v8961 = vpop.f32.mrf.mxu0
        %v8962 = vadd.f32 0.0, %v8961
        %v8963 = vpop.f32.mrf.mxu0
        %8964 = vdwg.mxu0
        %v8965 = vadd.f32 %v8259, %v8839
        %v8966 = vadd.f32 %v8260, %v8842
        %v8967 = vadd.f32 %v8261, %v8847
        %v8968 = vadd.f32 %v8262, %v8850
        %v8969 = vadd.f32 %v8263, %v8855
        %v8970 = vadd.f32 %v8264, %v8858
        %v8971 = vadd.f32 %v8265, %v8863
        %v8972 = vadd.f32 %v8266, %v8866
        %v8973 = vadd.f32 %v8267, %v8871
        %v8974 = vadd.f32 %v8268, %v8874
        %v8975 = vadd.f32 %v8269, %v8879
        %v8976 = vadd.f32 %v8270, %v8882
        %v8977 = vadd.f32 %v8271, %v8887
        %v8978 = vadd.f32 %v8272, %v8890
        %v8979 = vadd.f32 %v8273, %v8895
        %v8980 = vadd.f32 %v8274, %v8898
        %v8981 = vadd.f32 %v8275, %v8903
        %v8982 = vadd.f32 %v8276, %v8906
        %v8983 = vadd.f32 %v8277, %v8911
        %v8984 = vadd.f32 %v8278, %v8914
        %v8985 = vadd.f32 %v8279, %v8919
        %v8986 = vadd.f32 %v8280, %v8922
        %v8987 = vadd.f32 %v8281, %v8927
        %v8988 = vadd.f32 %v8282, %v8930
        %v8989 = vadd.f32 %v8283, %v8935
        %v8990 = vadd.f32 %v8284, %v8938
        %v8991 = vadd.f32 %v8285, %v8943
        %v8992 = vadd.f32 %v8286, %v8946
        %v8993 = vadd.f32 %v8287, %v8951
        %v8994 = vadd.f32 %v8288, %v8954
        %v8995 = vadd.f32 %v8289, %v8959
        %v8996 = vadd.f32 %v8290, %v8962
        %s8997 = scalar_lea.vmem [#allocation9], 64
        %v8998 = vld [vmem:[%s8997] sm:$0xf]
        %v8999 = vld [vmem:[%s8997 + $0x4] sm:$0xf]
        %v9000 = vld [vmem:[%s8997 + $0x8] sm:$0xf]
        %v9001 = vld [vmem:[%s8997 + $0xc] sm:$0xf]
        %v9034 = vunpack.c.l.b16 %v8292
        %v9035 = vunpack.c.l.b16 %v8293
        %v9036 = vunpack.c.l.b16 %v8295
        %v9037 = vunpack.c.l.b16 %v8296
        %v9038 = vunpack.c.l.b16 %v8298
        %v9039 = vunpack.c.l.b16 %v8299
        %v9040 = vunpack.c.l.b16 %v8301
        %v9041 = vunpack.c.l.b16 %v8302
        %v9042 = vunpack.c.l.b16 %v8304
        %v9043 = vunpack.c.l.b16 %v8305
        %v9044 = vunpack.c.l.b16 %v8307
        %v9045 = vunpack.c.l.b16 %v8308
        %v9046 = vunpack.c.l.b16 %v8310
        %v9047 = vunpack.c.l.b16 %v8311
        %v9048 = vunpack.c.l.b16 %v8313
        %v9049 = vunpack.c.l.b16 %v8314
        %v9050 = vunpack.c.l.b16 %v8316
        %v9051 = vunpack.c.l.b16 %v8317
        %v9052 = vunpack.c.l.b16 %v8319
        %v9053 = vunpack.c.l.b16 %v8320
        %v9054 = vunpack.c.l.b16 %v8322
        %v9055 = vunpack.c.l.b16 %v8323
        %v9056 = vunpack.c.l.b16 %v8325
        %v9057 = vunpack.c.l.b16 %v8326
        %v9058 = vunpack.c.l.b16 %v8328
        %v9059 = vunpack.c.l.b16 %v8329
        %v9060 = vunpack.c.l.b16 %v8331
        %v9061 = vunpack.c.l.b16 %v8332
        %v9062 = vunpack.c.l.b16 %v8334
        %v9063 = vunpack.c.l.b16 %v8335
        %v9064 = vunpack.c.l.b16 %v8337
        %v9065 = vunpack.c.l.b16 %v8338
        %v9066 = vpack.c.b16 %v9035, %v9034
        %v9067 = vpack.c.b16 %v9037, %v9036
        %v9068 = vpack.c.b16 %v9039, %v9038
        %v9069 = vpack.c.b16 %v9041, %v9040
        %v9070 = vpack.c.b16 %v9043, %v9042
        %v9071 = vpack.c.b16 %v9045, %v9044
        %v9072 = vpack.c.b16 %v9047, %v9046
        %v9073 = vpack.c.b16 %v9049, %v9048
        %v9074 = vpack.c.b16 %v9051, %v9050
        %v9075 = vpack.c.b16 %v9053, %v9052
        %v9076 = vpack.c.b16 %v9055, %v9054
        %v9077 = vpack.c.b16 %v9057, %v9056
        %v9078 = vpack.c.b16 %v9059, %v9058
        %v9079 = vpack.c.b16 %v9061, %v9060
        %v9080 = vpack.c.b16 %v9063, %v9062
        %v9081 = vpack.c.b16 %v9065, %v9064
        %v9086 = vunpack.c.l.b16 %v8998
        %v9087 = vunpack.c.l.b16 %v8999
        %v9088 = vunpack.c.l.b16 %v9000
        %v9089 = vunpack.c.l.b16 %v9001
        %v9090 = vpack.c.b16 %v9087, %v9086
        %v9091 = vpack.c.b16 %v9089, %v9088
        %v9095 = vsel %vm7074, %v9066, 0
        %v9098 = vsel %vm7074, %v9067, 0
        %v9101 = vsel %vm7074, %v9068, 0
        %v9104 = vsel %vm7074, %v9069, 0
        %v9107 = vsel %vm7074, %v9070, 0
        %v9110 = vsel %vm7074, %v9071, 0
        %v9113 = vsel %vm7074, %v9072, 0
        %v9116 = vsel %vm7074, %v9073, 0
        %v9119 = vsel %vm7074, %v9074, 0
        %v9122 = vsel %vm7074, %v9075, 0
        %v9125 = vsel %vm7074, %v9076, 0
        %v9128 = vsel %vm7074, %v9077, 0
        %v9131 = vsel %vm7074, %v9078, 0
        %v9134 = vsel %vm7074, %v9079, 0
        %v9137 = vsel %vm7074, %v9080, 0
        %v9140 = vsel %vm7074, %v9081, 0
        %9142 = vmatprep.subr.bf16.mxu0 0
        %9143 = vmatpush1.bf16.msra.mxu0 0
        %9144 = vmatprep.subr.bf16.mxu0 0
        %9145 = vmatpush1.bf16.msra.mxu0 0
        %9146 = vmatprep.subr.bf16.mxu0 0
        %9147 = vmatpush1.bf16.msra.mxu0 0
        %9148 = vmatprep.subr.bf16.mxu0 0
        %9149 = vmatpush1.bf16.msra.mxu0 0
        %9150 = vmatprep.subr.bf16.mxu0 0
        %9151 = vmatpush1.bf16.msra.mxu0 0
        %9152 = vmatprep.subr.bf16.mxu0 0
        %9153 = vmatpush1.bf16.msra.mxu0 0
        %9154 = vmatprep.subr.bf16.mxu0 0
        %9155 = vmatpush1.bf16.msra.mxu0 %v9091
        %9156 = vmatprep.subr.bf16.mxu0 0
        %9157 = vmatpush1.bf16.msra.mxu0 %v9090
        %9158 = vmatprep.subr.bf16.mxu0 0
        %9159 = vmatpush2.bf16.msra.mxu0 0
        %9160 = vmatprep.subr.bf16.mxu0 0
        %9161 = vmatpush2.bf16.msra.mxu0 0
        %9162 = vmatprep.subr.bf16.mxu0 0
        %9163 = vmatpush2.bf16.msra.mxu0 0
        %9164 = vmatprep.subr.bf16.mxu0 0
        %9165 = vmatpush2.bf16.msra.mxu0 0
        %9166 = vmatprep.subr.bf16.mxu0 0
        %9167 = vmatpush2.bf16.msra.mxu0 0
        %9168 = vmatprep.subr.bf16.mxu0 0
        %9169 = vmatpush2.bf16.msra.mxu0 0
        %9170 = vmatprep.subr.bf16.mxu0 0
        %9171 = vmatpush2.bf16.msra.mxu0 0
        %9172 = vmatprep.subr.bf16.mxu0 0
        %9173 = vmatpush2.bf16.msra.mxu0 0
        %9174 = vmatprep.mubr.bf16.mxu0 0
        %9175 = vmatmul.mubr.bf16.gmra.mxu0 %v9095
        %v9176 = vpop.f32.mrf.mxu0
        %v9177 = vadd.f32 0.0, %v9176
        %v9178 = vpop.f32.mrf.mxu0
        %v9179 = vpop.f32.mrf.mxu0
        %v9180 = vadd.f32 0.0, %v9179
        %v9181 = vpop.f32.mrf.mxu0
        %9182 = vmatprep.mubr.bf16.mxu0 0
        %9183 = vmatmul.mubr.bf16.gmra.mxu0 %v9098
        %v9184 = vpop.f32.mrf.mxu0
        %v9185 = vadd.f32 0.0, %v9184
        %v9186 = vpop.f32.mrf.mxu0
        %v9187 = vpop.f32.mrf.mxu0
        %v9188 = vadd.f32 0.0, %v9187
        %v9189 = vpop.f32.mrf.mxu0
        %9190 = vmatprep.mubr.bf16.mxu0 0
        %9191 = vmatmul.mubr.bf16.gmra.mxu0 %v9101
        %v9192 = vpop.f32.mrf.mxu0
        %v9193 = vadd.f32 0.0, %v9192
        %v9194 = vpop.f32.mrf.mxu0
        %v9195 = vpop.f32.mrf.mxu0
        %v9196 = vadd.f32 0.0, %v9195
        %v9197 = vpop.f32.mrf.mxu0
        %9198 = vmatprep.mubr.bf16.mxu0 0
        %9199 = vmatmul.mubr.bf16.gmra.mxu0 %v9104
        %v9200 = vpop.f32.mrf.mxu0
        %v9201 = vadd.f32 0.0, %v9200
        %v9202 = vpop.f32.mrf.mxu0
        %v9203 = vpop.f32.mrf.mxu0
        %v9204 = vadd.f32 0.0, %v9203
        %v9205 = vpop.f32.mrf.mxu0
        %9206 = vmatprep.mubr.bf16.mxu0 0
        %9207 = vmatmul.mubr.bf16.gmra.mxu0 %v9107
        %v9208 = vpop.f32.mrf.mxu0
        %v9209 = vadd.f32 0.0, %v9208
        %v9210 = vpop.f32.mrf.mxu0
        %v9211 = vpop.f32.mrf.mxu0
        %v9212 = vadd.f32 0.0, %v9211
        %v9213 = vpop.f32.mrf.mxu0
        %9214 = vmatprep.mubr.bf16.mxu0 0
        %9215 = vmatmul.mubr.bf16.gmra.mxu0 %v9110
        %v9216 = vpop.f32.mrf.mxu0
        %v9217 = vadd.f32 0.0, %v9216
        %v9218 = vpop.f32.mrf.mxu0
        %v9219 = vpop.f32.mrf.mxu0
        %v9220 = vadd.f32 0.0, %v9219
        %v9221 = vpop.f32.mrf.mxu0
        %9222 = vmatprep.mubr.bf16.mxu0 0
        %9223 = vmatmul.mubr.bf16.gmra.mxu0 %v9113
        %v9224 = vpop.f32.mrf.mxu0
        %v9225 = vadd.f32 0.0, %v9224
        %v9226 = vpop.f32.mrf.mxu0
        %v9227 = vpop.f32.mrf.mxu0
        %v9228 = vadd.f32 0.0, %v9227
        %v9229 = vpop.f32.mrf.mxu0
        %9230 = vmatprep.mubr.bf16.mxu0 0
        %9231 = vmatmul.mubr.bf16.gmra.mxu0 %v9116
        %v9232 = vpop.f32.mrf.mxu0
        %v9233 = vadd.f32 0.0, %v9232
        %v9234 = vpop.f32.mrf.mxu0
        %v9235 = vpop.f32.mrf.mxu0
        %v9236 = vadd.f32 0.0, %v9235
        %v9237 = vpop.f32.mrf.mxu0
        %9238 = vmatprep.mubr.bf16.mxu0 0
        %9239 = vmatmul.mubr.bf16.gmra.mxu0 %v9119
        %v9240 = vpop.f32.mrf.mxu0
        %v9241 = vadd.f32 0.0, %v9240
        %v9242 = vpop.f32.mrf.mxu0
        %v9243 = vpop.f32.mrf.mxu0
        %v9244 = vadd.f32 0.0, %v9243
        %v9245 = vpop.f32.mrf.mxu0
        %9246 = vmatprep.mubr.bf16.mxu0 0
        %9247 = vmatmul.mubr.bf16.gmra.mxu0 %v9122
        %v9248 = vpop.f32.mrf.mxu0
        %v9249 = vadd.f32 0.0, %v9248
        %v9250 = vpop.f32.mrf.mxu0
        %v9251 = vpop.f32.mrf.mxu0
        %v9252 = vadd.f32 0.0, %v9251
        %v9253 = vpop.f32.mrf.mxu0
        %9254 = vmatprep.mubr.bf16.mxu0 0
        %9255 = vmatmul.mubr.bf16.gmra.mxu0 %v9125
        %v9256 = vpop.f32.mrf.mxu0
        %v9257 = vadd.f32 0.0, %v9256
        %v9258 = vpop.f32.mrf.mxu0
        %v9259 = vpop.f32.mrf.mxu0
        %v9260 = vadd.f32 0.0, %v9259
        %v9261 = vpop.f32.mrf.mxu0
        %9262 = vmatprep.mubr.bf16.mxu0 0
        %9263 = vmatmul.mubr.bf16.gmra.mxu0 %v9128
        %v9264 = vpop.f32.mrf.mxu0
        %v9265 = vadd.f32 0.0, %v9264
        %v9266 = vpop.f32.mrf.mxu0
        %v9267 = vpop.f32.mrf.mxu0
        %v9268 = vadd.f32 0.0, %v9267
        %v9269 = vpop.f32.mrf.mxu0
        %9270 = vmatprep.mubr.bf16.mxu0 0
        %9271 = vmatmul.mubr.bf16.gmra.mxu0 %v9131
        %v9272 = vpop.f32.mrf.mxu0
        %v9273 = vadd.f32 0.0, %v9272
        %v9274 = vpop.f32.mrf.mxu0
        %v9275 = vpop.f32.mrf.mxu0
        %v9276 = vadd.f32 0.0, %v9275
        %v9277 = vpop.f32.mrf.mxu0
        %9278 = vmatprep.mubr.bf16.mxu0 0
        %9279 = vmatmul.mubr.bf16.gmra.mxu0 %v9134
        %v9280 = vpop.f32.mrf.mxu0
        %v9281 = vadd.f32 0.0, %v9280
        %v9282 = vpop.f32.mrf.mxu0
        %v9283 = vpop.f32.mrf.mxu0
        %v9284 = vadd.f32 0.0, %v9283
        %v9285 = vpop.f32.mrf.mxu0
        %9286 = vmatprep.mubr.bf16.mxu0 0
        %9287 = vmatmul.mubr.bf16.gmra.mxu0 %v9137
        %v9288 = vpop.f32.mrf.mxu0
        %v9289 = vadd.f32 0.0, %v9288
        %v9290 = vpop.f32.mrf.mxu0
        %v9291 = vpop.f32.mrf.mxu0
        %v9292 = vadd.f32 0.0, %v9291
        %v9293 = vpop.f32.mrf.mxu0
        %9294 = vmatprep.mubr.bf16.mxu0 0
        %9295 = vmatmul.mubr.bf16.gmra.mxu0 %v9140
        %v9296 = vpop.f32.mrf.mxu0
        %v9297 = vadd.f32 0.0, %v9296
        %v9298 = vpop.f32.mrf.mxu0
        %v9299 = vpop.f32.mrf.mxu0
        %v9300 = vadd.f32 0.0, %v9299
        %v9301 = vpop.f32.mrf.mxu0
        %9302 = vdwg.mxu0
        %v9303 = vadd.f32 %v8965, %v9177
        %v9304 = vadd.f32 %v8966, %v9180
        %v9305 = vadd.f32 %v8967, %v9185
        %v9306 = vadd.f32 %v8968, %v9188
        %v9307 = vadd.f32 %v8969, %v9193
        %v9308 = vadd.f32 %v8970, %v9196
        %v9309 = vadd.f32 %v8971, %v9201
        %v9310 = vadd.f32 %v8972, %v9204
        %v9311 = vadd.f32 %v8973, %v9209
        %v9312 = vadd.f32 %v8974, %v9212
        %v9313 = vadd.f32 %v8975, %v9217
        %v9314 = vadd.f32 %v8976, %v9220
        %v9315 = vadd.f32 %v8977, %v9225
        %v9316 = vadd.f32 %v8978, %v9228
        %v9317 = vadd.f32 %v8979, %v9233
        %v9318 = vadd.f32 %v8980, %v9236
        %v9319 = vadd.f32 %v8981, %v9241
        %v9320 = vadd.f32 %v8982, %v9244
        %v9321 = vadd.f32 %v8983, %v9249
        %v9322 = vadd.f32 %v8984, %v9252
        %v9323 = vadd.f32 %v8985, %v9257
        %v9324 = vadd.f32 %v8986, %v9260
        %v9325 = vadd.f32 %v8987, %v9265
        %v9326 = vadd.f32 %v8988, %v9268
        %v9327 = vadd.f32 %v8989, %v9273
        %v9328 = vadd.f32 %v8990, %v9276
        %v9329 = vadd.f32 %v8991, %v9281
        %v9330 = vadd.f32 %v8992, %v9284
        %v9331 = vadd.f32 %v8993, %v9289
        %v9332 = vadd.f32 %v8994, %v9292
        %v9333 = vadd.f32 %v8995, %v9297
        %v9334 = vadd.f32 %v8996, %v9300
        %v9335 = vld [vmem:[%s6047 + $0x4] sm:$0xf]
        %v9336 = vld [vmem:[%s6047 + $0x8] sm:$0xf]
        %v9337 = vld [vmem:[%s6047 + $0xc] sm:$0x1]
        %v9338 = vld [vmem:[%s6047 + $0x14] sm:$0xf]
        %v9339 = vld [vmem:[%s6047 + $0x18] sm:$0xf]
        %v9340 = vld [vmem:[%s6047 + $0x1c] sm:$0x1]
        %v9341 = vld [vmem:[%s6047 + $0x24] sm:$0xf]
        %v9342 = vld [vmem:[%s6047 + $0x28] sm:$0xf]
        %v9343 = vld [vmem:[%s6047 + $0x2c] sm:$0x1]
        %v9344 = vld [vmem:[%s6047 + $0x34] sm:$0xf]
        %v9345 = vld [vmem:[%s6047 + $0x38] sm:$0xf]
        %v9346 = vld [vmem:[%s6047 + $0x3c] sm:$0x1]
        %v9347 = vld [vmem:[%s6047 + $0x44] sm:$0xf]
        %v9348 = vld [vmem:[%s6047 + $0x48] sm:$0xf]
        %v9349 = vld [vmem:[%s6047 + $0x4c] sm:$0x1]
        %v9350 = vld [vmem:[%s6047 + $0x54] sm:$0xf]
        %v9351 = vld [vmem:[%s6047 + $0x58] sm:$0xf]
        %v9352 = vld [vmem:[%s6047 + $0x5c] sm:$0x1]
        %v9353 = vld [vmem:[%s6047 + $0x64] sm:$0xf]
        %v9354 = vld [vmem:[%s6047 + $0x68] sm:$0xf]
        %v9355 = vld [vmem:[%s6047 + $0x6c] sm:$0x1]
        %v9356 = vld [vmem:[%s6047 + $0x74] sm:$0xf]
        %v9357 = vld [vmem:[%s6047 + $0x78] sm:$0xf]
        %v9358 = vld [vmem:[%s6047 + $0x7c] sm:$0x1]
        %v9359 = vld [vmem:[%s6047 + $0x84] sm:$0xf]
        %v9360 = vld [vmem:[%s6047 + $0x88] sm:$0xf]
        %v9361 = vld [vmem:[%s6047 + $0x8c] sm:$0x1]
        %v9362 = vld [vmem:[%s6047 + $0x94] sm:$0xf]
        %v9363 = vld [vmem:[%s6047 + $0x98] sm:$0xf]
        %v9364 = vld [vmem:[%s6047 + $0x9c] sm:$0x1]
        %v9365 = vld [vmem:[%s6047 + $0xa4] sm:$0xf]
        %v9366 = vld [vmem:[%s6047 + $0xa8] sm:$0xf]
        %v9367 = vld [vmem:[%s6047 + $0xac] sm:$0x1]
        %v9368 = vld [vmem:[%s6047 + $0xb4] sm:$0xf]
        %v9369 = vld [vmem:[%s6047 + $0xb8] sm:$0xf]
        %v9370 = vld [vmem:[%s6047 + $0xbc] sm:$0x1]
        %v9371 = vld [vmem:[%s6047 + $0xc4] sm:$0xf]
        %v9372 = vld [vmem:[%s6047 + $0xc8] sm:$0xf]
        %v9373 = vld [vmem:[%s6047 + $0xcc] sm:$0x1]
        %v9374 = vld [vmem:[%s6047 + $0xd4] sm:$0xf]
        %v9375 = vld [vmem:[%s6047 + $0xd8] sm:$0xf]
        %v9376 = vld [vmem:[%s6047 + $0xdc] sm:$0x1]
        %v9377 = vld [vmem:[%s6047 + $0xe4] sm:$0xf]
        %v9378 = vld [vmem:[%s6047 + $0xe8] sm:$0xf]
        %v9379 = vld [vmem:[%s6047 + $0xec] sm:$0x1]
        %v9380 = vld [vmem:[%s6047 + $0xf4] sm:$0xf]
        %v9381 = vld [vmem:[%s6047 + $0xf8] sm:$0xf]
        %v9382 = vld [vmem:[%s6047 + $0xfc] sm:$0x1]
        %v9384 = vshrl.u32 %v9335, 16
        %v9386 = vrot.slane %v9384, 4
        %v9387 = vshll.u32 %v9335, 16
        %v9389 = vrot.slane %v9387, 5
        %v9390 = vor.u32 %v9386, %v9389
        %v9391 = vrot.slane %v9390, 4
        %v9393 = vshll.u32 %v9336, 16
        %v9395 = vrot.slane %v9393, 5
        %v9396 = vsel %vm1609, %v9391, %v9395
        %v9397 = vshrl.u32 %v9336, 16
        %v9399 = vrot.slane %v9397, 4
        %v9400 = vor.u32 %v9399, %v9395
        %v9401 = vrot.slane %v9400, 4
        %v9403 = vshll.u32 %v9337, 16
        %v9405 = vrot.slane %v9403, 5
        %v9406 = vsel %vm1609, %v9401, %v9405
        %v9408 = vshrl.u32 %v9338, 16
        %v9410 = vrot.slane %v9408, 4
        %v9411 = vshll.u32 %v9338, 16
        %v9413 = vrot.slane %v9411, 5
        %v9414 = vor.u32 %v9410, %v9413
        %v9415 = vrot.slane %v9414, 4
        %v9417 = vshll.u32 %v9339, 16
        %v9419 = vrot.slane %v9417, 5
        %v9420 = vsel %vm1609, %v9415, %v9419
        %v9421 = vshrl.u32 %v9339, 16
        %v9423 = vrot.slane %v9421, 4
        %v9424 = vor.u32 %v9423, %v9419
        %v9425 = vrot.slane %v9424, 4
        %v9427 = vshll.u32 %v9340, 16
        %v9429 = vrot.slane %v9427, 5
        %v9430 = vsel %vm1609, %v9425, %v9429
        %v9432 = vshrl.u32 %v9341, 16
        %v9434 = vrot.slane %v9432, 4
        %v9435 = vshll.u32 %v9341, 16
        %v9437 = vrot.slane %v9435, 5
        %v9438 = vor.u32 %v9434, %v9437
        %v9439 = vrot.slane %v9438, 4
        %v9441 = vshll.u32 %v9342, 16
        %v9443 = vrot.slane %v9441, 5
        %v9444 = vsel %vm1609, %v9439, %v9443
        %v9445 = vshrl.u32 %v9342, 16
        %v9447 = vrot.slane %v9445, 4
        %v9448 = vor.u32 %v9447, %v9443
        %v9449 = vrot.slane %v9448, 4
        %v9451 = vshll.u32 %v9343, 16
        %v9453 = vrot.slane %v9451, 5
        %v9454 = vsel %vm1609, %v9449, %v9453
        %v9456 = vshrl.u32 %v9344, 16
        %v9458 = vrot.slane %v9456, 4
        %v9459 = vshll.u32 %v9344, 16
        %v9461 = vrot.slane %v9459, 5
        %v9462 = vor.u32 %v9458, %v9461
        %v9463 = vrot.slane %v9462, 4
        %v9465 = vshll.u32 %v9345, 16
        %v9467 = vrot.slane %v9465, 5
        %v9468 = vsel %vm1609, %v9463, %v9467
        %v9469 = vshrl.u32 %v9345, 16
        %v9471 = vrot.slane %v9469, 4
        %v9472 = vor.u32 %v9471, %v9467
        %v9473 = vrot.slane %v9472, 4
        %v9475 = vshll.u32 %v9346, 16
        %v9477 = vrot.slane %v9475, 5
        %v9478 = vsel %vm1609, %v9473, %v9477
        %v9480 = vshrl.u32 %v9347, 16
        %v9482 = vrot.slane %v9480, 4
        %v9483 = vshll.u32 %v9347, 16
        %v9485 = vrot.slane %v9483, 5
        %v9486 = vor.u32 %v9482, %v9485
        %v9487 = vrot.slane %v9486, 4
        %v9489 = vshll.u32 %v9348, 16
        %v9491 = vrot.slane %v9489, 5
        %v9492 = vsel %vm1609, %v9487, %v9491
        %v9493 = vshrl.u32 %v9348, 16
        %v9495 = vrot.slane %v9493, 4
        %v9496 = vor.u32 %v9495, %v9491
        %v9497 = vrot.slane %v9496, 4
        %v9499 = vshll.u32 %v9349, 16
        %v9501 = vrot.slane %v9499, 5
        %v9502 = vsel %vm1609, %v9497, %v9501
        %v9504 = vshrl.u32 %v9350, 16
        %v9506 = vrot.slane %v9504, 4
        %v9507 = vshll.u32 %v9350, 16
        %v9509 = vrot.slane %v9507, 5
        %v9510 = vor.u32 %v9506, %v9509
        %v9511 = vrot.slane %v9510, 4
        %v9513 = vshll.u32 %v9351, 16
        %v9515 = vrot.slane %v9513, 5
        %v9516 = vsel %vm1609, %v9511, %v9515
        %v9517 = vshrl.u32 %v9351, 16
        %v9519 = vrot.slane %v9517, 4
        %v9520 = vor.u32 %v9519, %v9515
        %v9521 = vrot.slane %v9520, 4
        %v9523 = vshll.u32 %v9352, 16
        %v9525 = vrot.slane %v9523, 5
        %v9526 = vsel %vm1609, %v9521, %v9525
        %v9528 = vshrl.u32 %v9353, 16
        %v9530 = vrot.slane %v9528, 4
        %v9531 = vshll.u32 %v9353, 16
        %v9533 = vrot.slane %v9531, 5
        %v9534 = vor.u32 %v9530, %v9533
        %v9535 = vrot.slane %v9534, 4
        %v9537 = vshll.u32 %v9354, 16
        %v9539 = vrot.slane %v9537, 5
        %v9540 = vsel %vm1609, %v9535, %v9539
        %v9541 = vshrl.u32 %v9354, 16
        %v9543 = vrot.slane %v9541, 4
        %v9544 = vor.u32 %v9543, %v9539
        %v9545 = vrot.slane %v9544, 4
        %v9547 = vshll.u32 %v9355, 16
        %v9549 = vrot.slane %v9547, 5
        %v9550 = vsel %vm1609, %v9545, %v9549
        %v9552 = vshrl.u32 %v9356, 16
        %v9554 = vrot.slane %v9552, 4
        %v9555 = vshll.u32 %v9356, 16
        %v9557 = vrot.slane %v9555, 5
        %v9558 = vor.u32 %v9554, %v9557
        %v9559 = vrot.slane %v9558, 4
        %v9561 = vshll.u32 %v9357, 16
        %v9563 = vrot.slane %v9561, 5
        %v9564 = vsel %vm1609, %v9559, %v9563
        %v9565 = vshrl.u32 %v9357, 16
        %v9567 = vrot.slane %v9565, 4
        %v9568 = vor.u32 %v9567, %v9563
        %v9569 = vrot.slane %v9568, 4
        %v9571 = vshll.u32 %v9358, 16
        %v9573 = vrot.slane %v9571, 5
        %v9574 = vsel %vm1609, %v9569, %v9573
        %v9576 = vshrl.u32 %v9359, 16
        %v9578 = vrot.slane %v9576, 4
        %v9579 = vshll.u32 %v9359, 16
        %v9581 = vrot.slane %v9579, 5
        %v9582 = vor.u32 %v9578, %v9581
        %v9583 = vrot.slane %v9582, 4
        %v9585 = vshll.u32 %v9360, 16
        %v9587 = vrot.slane %v9585, 5
        %v9588 = vsel %vm1609, %v9583, %v9587
        %v9589 = vshrl.u32 %v9360, 16
        %v9591 = vrot.slane %v9589, 4
        %v9592 = vor.u32 %v9591, %v9587
        %v9593 = vrot.slane %v9592, 4
        %v9595 = vshll.u32 %v9361, 16
        %v9597 = vrot.slane %v9595, 5
        %v9598 = vsel %vm1609, %v9593, %v9597
        %v9600 = vshrl.u32 %v9362, 16
        %v9602 = vrot.slane %v9600, 4
        %v9603 = vshll.u32 %v9362, 16
        %v9605 = vrot.slane %v9603, 5
        %v9606 = vor.u32 %v9602, %v9605
        %v9607 = vrot.slane %v9606, 4
        %v9609 = vshll.u32 %v9363, 16
        %v9611 = vrot.slane %v9609, 5
        %v9612 = vsel %vm1609, %v9607, %v9611
        %v9613 = vshrl.u32 %v9363, 16
        %v9615 = vrot.slane %v9613, 4
        %v9616 = vor.u32 %v9615, %v9611
        %v9617 = vrot.slane %v9616, 4
        %v9619 = vshll.u32 %v9364, 16
        %v9621 = vrot.slane %v9619, 5
        %v9622 = vsel %vm1609, %v9617, %v9621
        %v9624 = vshrl.u32 %v9365, 16
        %v9626 = vrot.slane %v9624, 4
        %v9627 = vshll.u32 %v9365, 16
        %v9629 = vrot.slane %v9627, 5
        %v9630 = vor.u32 %v9626, %v9629
        %v9631 = vrot.slane %v9630, 4
        %v9633 = vshll.u32 %v9366, 16
        %v9635 = vrot.slane %v9633, 5
        %v9636 = vsel %vm1609, %v9631, %v9635
        %v9637 = vshrl.u32 %v9366, 16
        %v9639 = vrot.slane %v9637, 4
        %v9640 = vor.u32 %v9639, %v9635
        %v9641 = vrot.slane %v9640, 4
        %v9643 = vshll.u32 %v9367, 16
        %v9645 = vrot.slane %v9643, 5
        %v9646 = vsel %vm1609, %v9641, %v9645
        %v9648 = vshrl.u32 %v9368, 16
        %v9650 = vrot.slane %v9648, 4
        %v9651 = vshll.u32 %v9368, 16
        %v9653 = vrot.slane %v9651, 5
        %v9654 = vor.u32 %v9650, %v9653
        %v9655 = vrot.slane %v9654, 4
        %v9657 = vshll.u32 %v9369, 16
        %v9659 = vrot.slane %v9657, 5
        %v9660 = vsel %vm1609, %v9655, %v9659
        %v9661 = vshrl.u32 %v9369, 16
        %v9663 = vrot.slane %v9661, 4
        %v9664 = vor.u32 %v9663, %v9659
        %v9665 = vrot.slane %v9664, 4
        %v9667 = vshll.u32 %v9370, 16
        %v9669 = vrot.slane %v9667, 5
        %v9670 = vsel %vm1609, %v9665, %v9669
        %v9672 = vshrl.u32 %v9371, 16
        %v9674 = vrot.slane %v9672, 4
        %v9675 = vshll.u32 %v9371, 16
        %v9677 = vrot.slane %v9675, 5
        %v9678 = vor.u32 %v9674, %v9677
        %v9679 = vrot.slane %v9678, 4
        %v9681 = vshll.u32 %v9372, 16
        %v9683 = vrot.slane %v9681, 5
        %v9684 = vsel %vm1609, %v9679, %v9683
        %v9685 = vshrl.u32 %v9372, 16
        %v9687 = vrot.slane %v9685, 4
        %v9688 = vor.u32 %v9687, %v9683
        %v9689 = vrot.slane %v9688, 4
        %v9691 = vshll.u32 %v9373, 16
        %v9693 = vrot.slane %v9691, 5
        %v9694 = vsel %vm1609, %v9689, %v9693
        %v9696 = vshrl.u32 %v9374, 16
        %v9698 = vrot.slane %v9696, 4
        %v9699 = vshll.u32 %v9374, 16
        %v9701 = vrot.slane %v9699, 5
        %v9702 = vor.u32 %v9698, %v9701
        %v9703 = vrot.slane %v9702, 4
        %v9705 = vshll.u32 %v9375, 16
        %v9707 = vrot.slane %v9705, 5
        %v9708 = vsel %vm1609, %v9703, %v9707
        %v9709 = vshrl.u32 %v9375, 16
        %v9711 = vrot.slane %v9709, 4
        %v9712 = vor.u32 %v9711, %v9707
        %v9713 = vrot.slane %v9712, 4
        %v9715 = vshll.u32 %v9376, 16
        %v9717 = vrot.slane %v9715, 5
        %v9718 = vsel %vm1609, %v9713, %v9717
        %v9720 = vshrl.u32 %v9377, 16
        %v9722 = vrot.slane %v9720, 4
        %v9723 = vshll.u32 %v9377, 16
        %v9725 = vrot.slane %v9723, 5
        %v9726 = vor.u32 %v9722, %v9725
        %v9727 = vrot.slane %v9726, 4
        %v9729 = vshll.u32 %v9378, 16
        %v9731 = vrot.slane %v9729, 5
        %v9732 = vsel %vm1609, %v9727, %v9731
        %v9733 = vshrl.u32 %v9378, 16
        %v9735 = vrot.slane %v9733, 4
        %v9736 = vor.u32 %v9735, %v9731
        %v9737 = vrot.slane %v9736, 4
        %v9739 = vshll.u32 %v9379, 16
        %v9741 = vrot.slane %v9739, 5
        %v9742 = vsel %vm1609, %v9737, %v9741
        %v9744 = vshrl.u32 %v9380, 16
        %v9746 = vrot.slane %v9744, 4
        %v9747 = vshll.u32 %v9380, 16
        %v9749 = vrot.slane %v9747, 5
        %v9750 = vor.u32 %v9746, %v9749
        %v9751 = vrot.slane %v9750, 4
        %v9753 = vshll.u32 %v9381, 16
        %v9755 = vrot.slane %v9753, 5
        %v9756 = vsel %vm1609, %v9751, %v9755
        %v9757 = vshrl.u32 %v9381, 16
        %v9759 = vrot.slane %v9757, 4
        %v9760 = vor.u32 %v9759, %v9755
        %v9761 = vrot.slane %v9760, 4
        %v9763 = vshll.u32 %v9382, 16
        %v9765 = vrot.slane %v9763, 5
        %v9766 = vsel %vm1609, %v9761, %v9765
        %s9767 = scalar_lea.vmem [#allocation9], 80
        %v9768 = vld [vmem:[%s9767] sm:$0xf]
        %v9769 = vld [vmem:[%s9767 + $0x4] sm:$0xf]
        %v9770 = vld [vmem:[%s9767 + $0x8] sm:$0xf]
        %v9771 = vld [vmem:[%s9767 + $0xc] sm:$0xf]
        %v9772 = vunpack.c.l.b16 %v9396
        %v9773 = vunpack.c.l.b16 %v9406
        %v9774 = vunpack.c.l.b16 %v9420
        %v9775 = vunpack.c.l.b16 %v9430
        %v9776 = vunpack.c.l.b16 %v9444
        %v9777 = vunpack.c.l.b16 %v9454
        %v9778 = vunpack.c.l.b16 %v9468
        %v9779 = vunpack.c.l.b16 %v9478
        %v9780 = vunpack.c.l.b16 %v9492
        %v9781 = vunpack.c.l.b16 %v9502
        %v9782 = vunpack.c.l.b16 %v9516
        %v9783 = vunpack.c.l.b16 %v9526
        %v9784 = vunpack.c.l.b16 %v9540
        %v9785 = vunpack.c.l.b16 %v9550
        %v9786 = vunpack.c.l.b16 %v9564
        %v9787 = vunpack.c.l.b16 %v9574
        %v9788 = vunpack.c.l.b16 %v9588
        %v9789 = vunpack.c.l.b16 %v9598
        %v9790 = vunpack.c.l.b16 %v9612
        %v9791 = vunpack.c.l.b16 %v9622
        %v9792 = vunpack.c.l.b16 %v9636
        %v9793 = vunpack.c.l.b16 %v9646
        %v9794 = vunpack.c.l.b16 %v9660
        %v9795 = vunpack.c.l.b16 %v9670
        %v9796 = vunpack.c.l.b16 %v9684
        %v9797 = vunpack.c.l.b16 %v9694
        %v9798 = vunpack.c.l.b16 %v9708
        %v9799 = vunpack.c.l.b16 %v9718
        %v9800 = vunpack.c.l.b16 %v9732
        %v9801 = vunpack.c.l.b16 %v9742
        %v9802 = vunpack.c.l.b16 %v9756
        %v9803 = vunpack.c.l.b16 %v9766
        %v9804 = vpack.c.b16 %v9773, %v9772
        %v9805 = vpack.c.b16 %v9775, %v9774
        %v9806 = vpack.c.b16 %v9777, %v9776
        %v9807 = vpack.c.b16 %v9779, %v9778
        %v9808 = vpack.c.b16 %v9781, %v9780
        %v9809 = vpack.c.b16 %v9783, %v9782
        %v9810 = vpack.c.b16 %v9785, %v9784
        %v9811 = vpack.c.b16 %v9787, %v9786
        %v9812 = vpack.c.b16 %v9789, %v9788
        %v9813 = vpack.c.b16 %v9791, %v9790
        %v9814 = vpack.c.b16 %v9793, %v9792
        %v9815 = vpack.c.b16 %v9795, %v9794
        %v9816 = vpack.c.b16 %v9797, %v9796
        %v9817 = vpack.c.b16 %v9799, %v9798
        %v9818 = vpack.c.b16 %v9801, %v9800
        %v9819 = vpack.c.b16 %v9803, %v9802
        %v9824 = vunpack.c.l.b16 %v9768
        %v9825 = vunpack.c.l.b16 %v9769
        %v9826 = vunpack.c.l.b16 %v9770
        %v9827 = vunpack.c.l.b16 %v9771
        %v9828 = vpack.c.b16 %v9825, %v9824
        %v9829 = vpack.c.b16 %v9827, %v9826
        %v9833 = vsel %vm7074, %v9804, 0
        %v9836 = vsel %vm7074, %v9805, 0
        %v9839 = vsel %vm7074, %v9806, 0
        %v9842 = vsel %vm7074, %v9807, 0
        %v9845 = vsel %vm7074, %v9808, 0
        %v9848 = vsel %vm7074, %v9809, 0
        %v9851 = vsel %vm7074, %v9810, 0
        %v9854 = vsel %vm7074, %v9811, 0
        %v9857 = vsel %vm7074, %v9812, 0
        %v9860 = vsel %vm7074, %v9813, 0
        %v9863 = vsel %vm7074, %v9814, 0
        %v9866 = vsel %vm7074, %v9815, 0
        %v9869 = vsel %vm7074, %v9816, 0
        %v9872 = vsel %vm7074, %v9817, 0
        %v9875 = vsel %vm7074, %v9818, 0
        %v9878 = vsel %vm7074, %v9819, 0
        %9880 = vmatprep.subr.bf16.mxu0 0
        %9881 = vmatpush1.bf16.msra.mxu0 0
        %9882 = vmatprep.subr.bf16.mxu0 0
        %9883 = vmatpush1.bf16.msra.mxu0 0
        %9884 = vmatprep.subr.bf16.mxu0 0
        %9885 = vmatpush1.bf16.msra.mxu0 0
        %9886 = vmatprep.subr.bf16.mxu0 0
        %9887 = vmatpush1.bf16.msra.mxu0 0
        %9888 = vmatprep.subr.bf16.mxu0 0
        %9889 = vmatpush1.bf16.msra.mxu0 0
        %9890 = vmatprep.subr.bf16.mxu0 0
        %9891 = vmatpush1.bf16.msra.mxu0 0
        %9892 = vmatprep.subr.bf16.mxu0 0
        %9893 = vmatpush1.bf16.msra.mxu0 %v9829
        %9894 = vmatprep.subr.bf16.mxu0 0
        %9895 = vmatpush1.bf16.msra.mxu0 %v9828
        %9896 = vmatprep.subr.bf16.mxu0 0
        %9897 = vmatpush2.bf16.msra.mxu0 0
        %9898 = vmatprep.subr.bf16.mxu0 0
        %9899 = vmatpush2.bf16.msra.mxu0 0
        %9900 = vmatprep.subr.bf16.mxu0 0
        %9901 = vmatpush2.bf16.msra.mxu0 0
        %9902 = vmatprep.subr.bf16.mxu0 0
        %9903 = vmatpush2.bf16.msra.mxu0 0
        %9904 = vmatprep.subr.bf16.mxu0 0
        %9905 = vmatpush2.bf16.msra.mxu0 0
        %9906 = vmatprep.subr.bf16.mxu0 0
        %9907 = vmatpush2.bf16.msra.mxu0 0
        %9908 = vmatprep.subr.bf16.mxu0 0
        %9909 = vmatpush2.bf16.msra.mxu0 0
        %9910 = vmatprep.subr.bf16.mxu0 0
        %9911 = vmatpush2.bf16.msra.mxu0 0
        %9912 = vmatprep.mubr.bf16.mxu0 0
        %9913 = vmatmul.mubr.bf16.gmra.mxu0 %v9833
        %v9914 = vpop.f32.mrf.mxu0
        %v9915 = vadd.f32 0.0, %v9914
        %v9916 = vpop.f32.mrf.mxu0
        %v9917 = vpop.f32.mrf.mxu0
        %v9918 = vadd.f32 0.0, %v9917
        %v9919 = vpop.f32.mrf.mxu0
        %9920 = vmatprep.mubr.bf16.mxu0 0
        %9921 = vmatmul.mubr.bf16.gmra.mxu0 %v9836
        %v9922 = vpop.f32.mrf.mxu0
        %v9923 = vadd.f32 0.0, %v9922
        %v9924 = vpop.f32.mrf.mxu0
        %v9925 = vpop.f32.mrf.mxu0
        %v9926 = vadd.f32 0.0, %v9925
        %v9927 = vpop.f32.mrf.mxu0
        %9928 = vmatprep.mubr.bf16.mxu0 0
        %9929 = vmatmul.mubr.bf16.gmra.mxu0 %v9839
        %v9930 = vpop.f32.mrf.mxu0
        %v9931 = vadd.f32 0.0, %v9930
        %v9932 = vpop.f32.mrf.mxu0
        %v9933 = vpop.f32.mrf.mxu0
        %v9934 = vadd.f32 0.0, %v9933
        %v9935 = vpop.f32.mrf.mxu0
        %9936 = vmatprep.mubr.bf16.mxu0 0
        %9937 = vmatmul.mubr.bf16.gmra.mxu0 %v9842
        %v9938 = vpop.f32.mrf.mxu0
        %v9939 = vadd.f32 0.0, %v9938
        %v9940 = vpop.f32.mrf.mxu0
        %v9941 = vpop.f32.mrf.mxu0
        %v9942 = vadd.f32 0.0, %v9941
        %v9943 = vpop.f32.mrf.mxu0
        %9944 = vmatprep.mubr.bf16.mxu0 0
        %9945 = vmatmul.mubr.bf16.gmra.mxu0 %v9845
        %v9946 = vpop.f32.mrf.mxu0
        %v9947 = vadd.f32 0.0, %v9946
        %v9948 = vpop.f32.mrf.mxu0
        %v9949 = vpop.f32.mrf.mxu0
        %v9950 = vadd.f32 0.0, %v9949
        %v9951 = vpop.f32.mrf.mxu0
        %9952 = vmatprep.mubr.bf16.mxu0 0
        %9953 = vmatmul.mubr.bf16.gmra.mxu0 %v9848
        %v9954 = vpop.f32.mrf.mxu0
        %v9955 = vadd.f32 0.0, %v9954
        %v9956 = vpop.f32.mrf.mxu0
        %v9957 = vpop.f32.mrf.mxu0
        %v9958 = vadd.f32 0.0, %v9957
        %v9959 = vpop.f32.mrf.mxu0
        %9960 = vmatprep.mubr.bf16.mxu0 0
        %9961 = vmatmul.mubr.bf16.gmra.mxu0 %v9851
        %v9962 = vpop.f32.mrf.mxu0
        %v9963 = vadd.f32 0.0, %v9962
        %v9964 = vpop.f32.mrf.mxu0
        %v9965 = vpop.f32.mrf.mxu0
        %v9966 = vadd.f32 0.0, %v9965
        %v9967 = vpop.f32.mrf.mxu0
        %9968 = vmatprep.mubr.bf16.mxu0 0
        %9969 = vmatmul.mubr.bf16.gmra.mxu0 %v9854
        %v9970 = vpop.f32.mrf.mxu0
        %v9971 = vadd.f32 0.0, %v9970
        %v9972 = vpop.f32.mrf.mxu0
        %v9973 = vpop.f32.mrf.mxu0
        %v9974 = vadd.f32 0.0, %v9973
        %v9975 = vpop.f32.mrf.mxu0
        %9976 = vmatprep.mubr.bf16.mxu0 0
        %9977 = vmatmul.mubr.bf16.gmra.mxu0 %v9857
        %v9978 = vpop.f32.mrf.mxu0
        %v9979 = vadd.f32 0.0, %v9978
        %v9980 = vpop.f32.mrf.mxu0
        %v9981 = vpop.f32.mrf.mxu0
        %v9982 = vadd.f32 0.0, %v9981
        %v9983 = vpop.f32.mrf.mxu0
        %9984 = vmatprep.mubr.bf16.mxu0 0
        %9985 = vmatmul.mubr.bf16.gmra.mxu0 %v9860
        %v9986 = vpop.f32.mrf.mxu0
        %v9987 = vadd.f32 0.0, %v9986
        %v9988 = vpop.f32.mrf.mxu0
        %v9989 = vpop.f32.mrf.mxu0
        %v9990 = vadd.f32 0.0, %v9989
        %v9991 = vpop.f32.mrf.mxu0
        %9992 = vmatprep.mubr.bf16.mxu0 0
        %9993 = vmatmul.mubr.bf16.gmra.mxu0 %v9863
        %v9994 = vpop.f32.mrf.mxu0
        %v9995 = vadd.f32 0.0, %v9994
        %v9996 = vpop.f32.mrf.mxu0
        %v9997 = vpop.f32.mrf.mxu0
        %v9998 = vadd.f32 0.0, %v9997
        %v9999 = vpop.f32.mrf.mxu0
        %10000 = vmatprep.mubr.bf16.mxu0 0
        %10001 = vmatmul.mubr.bf16.gmra.mxu0 %v9866
        %v10002 = vpop.f32.mrf.mxu0
        %v10003 = vadd.f32 0.0, %v10002
        %v10004 = vpop.f32.mrf.mxu0
        %v10005 = vpop.f32.mrf.mxu0
        %v10006 = vadd.f32 0.0, %v10005
        %v10007 = vpop.f32.mrf.mxu0
        %10008 = vmatprep.mubr.bf16.mxu0 0
        %10009 = vmatmul.mubr.bf16.gmra.mxu0 %v9869
        %v10010 = vpop.f32.mrf.mxu0
        %v10011 = vadd.f32 0.0, %v10010
        %v10012 = vpop.f32.mrf.mxu0
        %v10013 = vpop.f32.mrf.mxu0
        %v10014 = vadd.f32 0.0, %v10013
        %v10015 = vpop.f32.mrf.mxu0
        %10016 = vmatprep.mubr.bf16.mxu0 0
        %10017 = vmatmul.mubr.bf16.gmra.mxu0 %v9872
        %v10018 = vpop.f32.mrf.mxu0
        %v10019 = vadd.f32 0.0, %v10018
        %v10020 = vpop.f32.mrf.mxu0
        %v10021 = vpop.f32.mrf.mxu0
        %v10022 = vadd.f32 0.0, %v10021
        %v10023 = vpop.f32.mrf.mxu0
        %10024 = vmatprep.mubr.bf16.mxu0 0
        %10025 = vmatmul.mubr.bf16.gmra.mxu0 %v9875
        %v10026 = vpop.f32.mrf.mxu0
        %v10027 = vadd.f32 0.0, %v10026
        %v10028 = vpop.f32.mrf.mxu0
        %v10029 = vpop.f32.mrf.mxu0
        %v10030 = vadd.f32 0.0, %v10029
        %v10031 = vpop.f32.mrf.mxu0
        %10032 = vmatprep.mubr.bf16.mxu0 0
        %10033 = vmatmul.mubr.bf16.gmra.mxu0 %v9878
        %v10034 = vpop.f32.mrf.mxu0
        %v10035 = vadd.f32 0.0, %v10034
        %v10036 = vpop.f32.mrf.mxu0
        %v10037 = vpop.f32.mrf.mxu0
        %v10038 = vadd.f32 0.0, %v10037
        %v10039 = vpop.f32.mrf.mxu0
        %10040 = vdwg.mxu0
        %v10041 = vadd.f32 %v9303, %v9915
        %v10042 = vadd.f32 %v9304, %v9918
        %v10043 = vadd.f32 %v9305, %v9923
        %v10044 = vadd.f32 %v9306, %v9926
        %v10045 = vadd.f32 %v9307, %v9931
        %v10046 = vadd.f32 %v9308, %v9934
        %v10047 = vadd.f32 %v9309, %v9939
        %v10048 = vadd.f32 %v9310, %v9942
        %v10049 = vadd.f32 %v9311, %v9947
        %v10050 = vadd.f32 %v9312, %v9950
        %v10051 = vadd.f32 %v9313, %v9955
        %v10052 = vadd.f32 %v9314, %v9958
        %v10053 = vadd.f32 %v9315, %v9963
        %v10054 = vadd.f32 %v9316, %v9966
        %v10055 = vadd.f32 %v9317, %v9971
        %v10056 = vadd.f32 %v9318, %v9974
        %v10057 = vadd.f32 %v9319, %v9979
        %v10058 = vadd.f32 %v9320, %v9982
        %v10059 = vadd.f32 %v9321, %v9987
        %v10060 = vadd.f32 %v9322, %v9990
        %v10061 = vadd.f32 %v9323, %v9995
        %v10062 = vadd.f32 %v9324, %v9998
        %v10063 = vadd.f32 %v9325, %v10003
        %v10064 = vadd.f32 %v9326, %v10006
        %v10065 = vadd.f32 %v9327, %v10011
        %v10066 = vadd.f32 %v9328, %v10014
        %v10067 = vadd.f32 %v9329, %v10019
        %v10068 = vadd.f32 %v9330, %v10022
        %v10069 = vadd.f32 %v9331, %v10027
        %v10070 = vadd.f32 %v9332, %v10030
        %v10071 = vadd.f32 %v9333, %v10035
        %v10072 = vadd.f32 %v9334, %v10038
        %s10073 = scalar_lea.vmem [#allocation3], 32
        %v10074 = vld [vmem:[%s10073] sm:$0x8]
        %v10075 = vld [vmem:[%s10073 + $0x4] sm:$0xf]
        %v10076 = vld [vmem:[%s10073 + $0x8] sm:$0xf]
        %v10077 = vld [vmem:[%s10073 + $0x10] sm:$0x8]
        %v10078 = vld [vmem:[%s10073 + $0x14] sm:$0xf]
        %v10079 = vld [vmem:[%s10073 + $0x18] sm:$0xf]
        %v10080 = vld [vmem:[%s10073 + $0x20] sm:$0x8]
        %v10081 = vld [vmem:[%s10073 + $0x24] sm:$0xf]
        %v10082 = vld [vmem:[%s10073 + $0x28] sm:$0xf]
        %v10083 = vld [vmem:[%s10073 + $0x30] sm:$0x8]
        %v10084 = vld [vmem:[%s10073 + $0x34] sm:$0xf]
        %v10085 = vld [vmem:[%s10073 + $0x38] sm:$0xf]
        %v10086 = vld [vmem:[%s10073 + $0x40] sm:$0x8]
        %v10087 = vld [vmem:[%s10073 + $0x44] sm:$0xf]
        %v10088 = vld [vmem:[%s10073 + $0x48] sm:$0xf]
        %v10089 = vld [vmem:[%s10073 + $0x50] sm:$0x8]
        %v10090 = vld [vmem:[%s10073 + $0x54] sm:$0xf]
        %v10091 = vld [vmem:[%s10073 + $0x58] sm:$0xf]
        %v10092 = vld [vmem:[%s10073 + $0x60] sm:$0x8]
        %v10093 = vld [vmem:[%s10073 + $0x64] sm:$0xf]
        %v10094 = vld [vmem:[%s10073 + $0x68] sm:$0xf]
        %v10095 = vld [vmem:[%s10073 + $0x70] sm:$0x8]
        %v10096 = vld [vmem:[%s10073 + $0x74] sm:$0xf]
        %v10097 = vld [vmem:[%s10073 + $0x78] sm:$0xf]
        %v10098 = vld [vmem:[%s10073 + $0x80] sm:$0x8]
        %v10099 = vld [vmem:[%s10073 + $0x84] sm:$0xf]
        %v10100 = vld [vmem:[%s10073 + $0x88] sm:$0xf]
        %v10101 = vld [vmem:[%s10073 + $0x90] sm:$0x8]
        %v10102 = vld [vmem:[%s10073 + $0x94] sm:$0xf]
        %v10103 = vld [vmem:[%s10073 + $0x98] sm:$0xf]
        %v10104 = vld [vmem:[%s10073 + $0xa0] sm:$0x8]
        %v10105 = vld [vmem:[%s10073 + $0xa4] sm:$0xf]
        %v10106 = vld [vmem:[%s10073 + $0xa8] sm:$0xf]
        %v10107 = vld [vmem:[%s10073 + $0xb0] sm:$0x8]
        %v10108 = vld [vmem:[%s10073 + $0xb4] sm:$0xf]
        %v10109 = vld [vmem:[%s10073 + $0xb8] sm:$0xf]
        %v10110 = vld [vmem:[%s10073 + $0xc0] sm:$0x8]
        %v10111 = vld [vmem:[%s10073 + $0xc4] sm:$0xf]
        %v10112 = vld [vmem:[%s10073 + $0xc8] sm:$0xf]
        %v10113 = vld [vmem:[%s10073 + $0xd0] sm:$0x8]
        %v10114 = vld [vmem:[%s10073 + $0xd4] sm:$0xf]
        %v10115 = vld [vmem:[%s10073 + $0xd8] sm:$0xf]
        %v10116 = vld [vmem:[%s10073 + $0xe0] sm:$0x8]
        %v10117 = vld [vmem:[%s10073 + $0xe4] sm:$0xf]
        %v10118 = vld [vmem:[%s10073 + $0xe8] sm:$0xf]
        %v10119 = vld [vmem:[%s10073 + $0xf0] sm:$0x8]
        %v10120 = vld [vmem:[%s10073 + $0xf4] sm:$0xf]
        %v10121 = vld [vmem:[%s10073 + $0xf8] sm:$0xf]
        %v10123 = vshrl.u32 %v10074, 16
        %v10125 = vrot.slane %v10123, 7
        %v10126 = vrot.slane %v10125, 4
        %v10128 = vshrl.u32 %v10075, 16
        %v10130 = vrot.slane %v10128, 7
        %v10131 = vshll.u32 %v10075, 16
        %v10133 = vor.u32 %v10130, %v10131
        %v10134 = vsel %vm642, %v10126, %v10133
        %v10135 = vrot.slane %v10130, 4
        %v10137 = vshrl.u32 %v10076, 16
        %v10139 = vrot.slane %v10137, 7
        %v10140 = vshll.u32 %v10076, 16
        %v10142 = vor.u32 %v10139, %v10140
        %v10143 = vsel %vm642, %v10135, %v10142
        %v10145 = vshrl.u32 %v10077, 16
        %v10147 = vrot.slane %v10145, 7
        %v10148 = vrot.slane %v10147, 4
        %v10150 = vshrl.u32 %v10078, 16
        %v10152 = vrot.slane %v10150, 7
        %v10153 = vshll.u32 %v10078, 16
        %v10155 = vor.u32 %v10152, %v10153
        %v10156 = vsel %vm642, %v10148, %v10155
        %v10157 = vrot.slane %v10152, 4
        %v10159 = vshrl.u32 %v10079, 16
        %v10161 = vrot.slane %v10159, 7
        %v10162 = vshll.u32 %v10079, 16
        %v10164 = vor.u32 %v10161, %v10162
        %v10165 = vsel %vm642, %v10157, %v10164
        %v10167 = vshrl.u32 %v10080, 16
        %v10169 = vrot.slane %v10167, 7
        %v10170 = vrot.slane %v10169, 4
        %v10172 = vshrl.u32 %v10081, 16
        %v10174 = vrot.slane %v10172, 7
        %v10175 = vshll.u32 %v10081, 16
        %v10177 = vor.u32 %v10174, %v10175
        %v10178 = vsel %vm642, %v10170, %v10177
        %v10179 = vrot.slane %v10174, 4
        %v10181 = vshrl.u32 %v10082, 16
        %v10183 = vrot.slane %v10181, 7
        %v10184 = vshll.u32 %v10082, 16
        %v10186 = vor.u32 %v10183, %v10184
        %v10187 = vsel %vm642, %v10179, %v10186
        %v10189 = vshrl.u32 %v10083, 16
        %v10191 = vrot.slane %v10189, 7
        %v10192 = vrot.slane %v10191, 4
        %v10194 = vshrl.u32 %v10084, 16
        %v10196 = vrot.slane %v10194, 7
        %v10197 = vshll.u32 %v10084, 16
        %v10199 = vor.u32 %v10196, %v10197
        %v10200 = vsel %vm642, %v10192, %v10199
        %v10201 = vrot.slane %v10196, 4
        %v10203 = vshrl.u32 %v10085, 16
        %v10205 = vrot.slane %v10203, 7
        %v10206 = vshll.u32 %v10085, 16
        %v10208 = vor.u32 %v10205, %v10206
        %v10209 = vsel %vm642, %v10201, %v10208
        %v10211 = vshrl.u32 %v10086, 16
        %v10213 = vrot.slane %v10211, 7
        %v10214 = vrot.slane %v10213, 4
        %v10216 = vshrl.u32 %v10087, 16
        %v10218 = vrot.slane %v10216, 7
        %v10219 = vshll.u32 %v10087, 16
        %v10221 = vor.u32 %v10218, %v10219
        %v10222 = vsel %vm642, %v10214, %v10221
        %v10223 = vrot.slane %v10218, 4
        %v10225 = vshrl.u32 %v10088, 16
        %v10227 = vrot.slane %v10225, 7
        %v10228 = vshll.u32 %v10088, 16
        %v10230 = vor.u32 %v10227, %v10228
        %v10231 = vsel %vm642, %v10223, %v10230
        %v10233 = vshrl.u32 %v10089, 16
        %v10235 = vrot.slane %v10233, 7
        %v10236 = vrot.slane %v10235, 4
        %v10238 = vshrl.u32 %v10090, 16
        %v10240 = vrot.slane %v10238, 7
        %v10241 = vshll.u32 %v10090, 16
        %v10243 = vor.u32 %v10240, %v10241
        %v10244 = vsel %vm642, %v10236, %v10243
        %v10245 = vrot.slane %v10240, 4
        %v10247 = vshrl.u32 %v10091, 16
        %v10249 = vrot.slane %v10247, 7
        %v10250 = vshll.u32 %v10091, 16
        %v10252 = vor.u32 %v10249, %v10250
        %v10253 = vsel %vm642, %v10245, %v10252
        %v10255 = vshrl.u32 %v10092, 16
        %v10257 = vrot.slane %v10255, 7
        %v10258 = vrot.slane %v10257, 4
        %v10260 = vshrl.u32 %v10093, 16
        %v10262 = vrot.slane %v10260, 7
        %v10263 = vshll.u32 %v10093, 16
        %v10265 = vor.u32 %v10262, %v10263
        %v10266 = vsel %vm642, %v10258, %v10265
        %v10267 = vrot.slane %v10262, 4
        %v10269 = vshrl.u32 %v10094, 16
        %v10271 = vrot.slane %v10269, 7
        %v10272 = vshll.u32 %v10094, 16
        %v10274 = vor.u32 %v10271, %v10272
        %v10275 = vsel %vm642, %v10267, %v10274
        %v10277 = vshrl.u32 %v10095, 16
        %v10279 = vrot.slane %v10277, 7
        %v10280 = vrot.slane %v10279, 4
        %v10282 = vshrl.u32 %v10096, 16
        %v10284 = vrot.slane %v10282, 7
        %v10285 = vshll.u32 %v10096, 16
        %v10287 = vor.u32 %v10284, %v10285
        %v10288 = vsel %vm642, %v10280, %v10287
        %v10289 = vrot.slane %v10284, 4
        %v10291 = vshrl.u32 %v10097, 16
        %v10293 = vrot.slane %v10291, 7
        %v10294 = vshll.u32 %v10097, 16
        %v10296 = vor.u32 %v10293, %v10294
        %v10297 = vsel %vm642, %v10289, %v10296
        %v10299 = vshrl.u32 %v10098, 16
        %v10301 = vrot.slane %v10299, 7
        %v10302 = vrot.slane %v10301, 4
        %v10304 = vshrl.u32 %v10099, 16
        %v10306 = vrot.slane %v10304, 7
        %v10307 = vshll.u32 %v10099, 16
        %v10309 = vor.u32 %v10306, %v10307
        %v10310 = vsel %vm642, %v10302, %v10309
        %v10311 = vrot.slane %v10306, 4
        %v10313 = vshrl.u32 %v10100, 16
        %v10315 = vrot.slane %v10313, 7
        %v10316 = vshll.u32 %v10100, 16
        %v10318 = vor.u32 %v10315, %v10316
        %v10319 = vsel %vm642, %v10311, %v10318
        %v10321 = vshrl.u32 %v10101, 16
        %v10323 = vrot.slane %v10321, 7
        %v10324 = vrot.slane %v10323, 4
        %v10326 = vshrl.u32 %v10102, 16
        %v10328 = vrot.slane %v10326, 7
        %v10329 = vshll.u32 %v10102, 16
        %v10331 = vor.u32 %v10328, %v10329
        %v10332 = vsel %vm642, %v10324, %v10331
        %v10333 = vrot.slane %v10328, 4
        %v10335 = vshrl.u32 %v10103, 16
        %v10337 = vrot.slane %v10335, 7
        %v10338 = vshll.u32 %v10103, 16
        %v10340 = vor.u32 %v10337, %v10338
        %v10341 = vsel %vm642, %v10333, %v10340
        %v10343 = vshrl.u32 %v10104, 16
        %v10345 = vrot.slane %v10343, 7
        %v10346 = vrot.slane %v10345, 4
        %v10348 = vshrl.u32 %v10105, 16
        %v10350 = vrot.slane %v10348, 7
        %v10351 = vshll.u32 %v10105, 16
        %v10353 = vor.u32 %v10350, %v10351
        %v10354 = vsel %vm642, %v10346, %v10353
        %v10355 = vrot.slane %v10350, 4
        %v10357 = vshrl.u32 %v10106, 16
        %v10359 = vrot.slane %v10357, 7
        %v10360 = vshll.u32 %v10106, 16
        %v10362 = vor.u32 %v10359, %v10360
        %v10363 = vsel %vm642, %v10355, %v10362
        %v10365 = vshrl.u32 %v10107, 16
        %v10367 = vrot.slane %v10365, 7
        %v10368 = vrot.slane %v10367, 4
        %v10370 = vshrl.u32 %v10108, 16
        %v10372 = vrot.slane %v10370, 7
        %v10373 = vshll.u32 %v10108, 16
        %v10375 = vor.u32 %v10372, %v10373
        %v10376 = vsel %vm642, %v10368, %v10375
        %v10377 = vrot.slane %v10372, 4
        %v10379 = vshrl.u32 %v10109, 16
        %v10381 = vrot.slane %v10379, 7
        %v10382 = vshll.u32 %v10109, 16
        %v10384 = vor.u32 %v10381, %v10382
        %v10385 = vsel %vm642, %v10377, %v10384
        %v10387 = vshrl.u32 %v10110, 16
        %v10389 = vrot.slane %v10387, 7
        %v10390 = vrot.slane %v10389, 4
        %v10392 = vshrl.u32 %v10111, 16
        %v10394 = vrot.slane %v10392, 7
        %v10395 = vshll.u32 %v10111, 16
        %v10397 = vor.u32 %v10394, %v10395
        %v10398 = vsel %vm642, %v10390, %v10397
        %v10399 = vrot.slane %v10394, 4
        %v10401 = vshrl.u32 %v10112, 16
        %v10403 = vrot.slane %v10401, 7
        %v10404 = vshll.u32 %v10112, 16
        %v10406 = vor.u32 %v10403, %v10404
        %v10407 = vsel %vm642, %v10399, %v10406
        %v10409 = vshrl.u32 %v10113, 16
        %v10411 = vrot.slane %v10409, 7
        %v10412 = vrot.slane %v10411, 4
        %v10414 = vshrl.u32 %v10114, 16
        %v10416 = vrot.slane %v10414, 7
        %v10417 = vshll.u32 %v10114, 16
        %v10419 = vor.u32 %v10416, %v10417
        %v10420 = vsel %vm642, %v10412, %v10419
        %v10421 = vrot.slane %v10416, 4
        %v10423 = vshrl.u32 %v10115, 16
        %v10425 = vrot.slane %v10423, 7
        %v10426 = vshll.u32 %v10115, 16
        %v10428 = vor.u32 %v10425, %v10426
        %v10429 = vsel %vm642, %v10421, %v10428
        %v10431 = vshrl.u32 %v10116, 16
        %v10433 = vrot.slane %v10431, 7
        %v10434 = vrot.slane %v10433, 4
        %v10436 = vshrl.u32 %v10117, 16
        %v10438 = vrot.slane %v10436, 7
        %v10439 = vshll.u32 %v10117, 16
        %v10441 = vor.u32 %v10438, %v10439
        %v10442 = vsel %vm642, %v10434, %v10441
        %v10443 = vrot.slane %v10438, 4
        %v10445 = vshrl.u32 %v10118, 16
        %v10447 = vrot.slane %v10445, 7
        %v10448 = vshll.u32 %v10118, 16
        %v10450 = vor.u32 %v10447, %v10448
        %v10451 = vsel %vm642, %v10443, %v10450
        %v10453 = vshrl.u32 %v10119, 16
        %v10455 = vrot.slane %v10453, 7
        %v10456 = vrot.slane %v10455, 4
        %v10458 = vshrl.u32 %v10120, 16
        %v10460 = vrot.slane %v10458, 7
        %v10461 = vshll.u32 %v10120, 16
        %v10463 = vor.u32 %v10460, %v10461
        %v10464 = vsel %vm642, %v10456, %v10463
        %v10465 = vrot.slane %v10460, 4
        %v10467 = vshrl.u32 %v10121, 16
        %v10469 = vrot.slane %v10467, 7
        %v10470 = vshll.u32 %v10121, 16
        %v10472 = vor.u32 %v10469, %v10470
        %v10473 = vsel %vm642, %v10465, %v10472
        %s10474 = scalar_lea.vmem [#allocation9], 96
        %v10475 = vld [vmem:[%s10474] sm:$0xf]
        %v10476 = vld [vmem:[%s10474 + $0x4] sm:$0xf]
        %v10477 = vld [vmem:[%s10474 + $0x8] sm:$0xf]
        %v10478 = vld [vmem:[%s10474 + $0xc] sm:$0xf]
        %v10479 = vunpack.c.l.b16 %v10134
        %v10480 = vunpack.c.l.b16 %v10143
        %v10481 = vunpack.c.l.b16 %v10156
        %v10482 = vunpack.c.l.b16 %v10165
        %v10483 = vunpack.c.l.b16 %v10178
        %v10484 = vunpack.c.l.b16 %v10187
        %v10485 = vunpack.c.l.b16 %v10200
        %v10486 = vunpack.c.l.b16 %v10209
        %v10487 = vunpack.c.l.b16 %v10222
        %v10488 = vunpack.c.l.b16 %v10231
        %v10489 = vunpack.c.l.b16 %v10244
        %v10490 = vunpack.c.l.b16 %v10253
        %v10491 = vunpack.c.l.b16 %v10266
        %v10492 = vunpack.c.l.b16 %v10275
        %v10493 = vunpack.c.l.b16 %v10288
        %v10494 = vunpack.c.l.b16 %v10297
        %v10495 = vunpack.c.l.b16 %v10310
        %v10496 = vunpack.c.l.b16 %v10319
        %v10497 = vunpack.c.l.b16 %v10332
        %v10498 = vunpack.c.l.b16 %v10341
        %v10499 = vunpack.c.l.b16 %v10354
        %v10500 = vunpack.c.l.b16 %v10363
        %v10501 = vunpack.c.l.b16 %v10376
        %v10502 = vunpack.c.l.b16 %v10385
        %v10503 = vunpack.c.l.b16 %v10398
        %v10504 = vunpack.c.l.b16 %v10407
        %v10505 = vunpack.c.l.b16 %v10420
        %v10506 = vunpack.c.l.b16 %v10429
        %v10507 = vunpack.c.l.b16 %v10442
        %v10508 = vunpack.c.l.b16 %v10451
        %v10509 = vunpack.c.l.b16 %v10464
        %v10510 = vunpack.c.l.b16 %v10473
        %v10511 = vpack.c.b16 %v10480, %v10479
        %v10512 = vpack.c.b16 %v10482, %v10481
        %v10513 = vpack.c.b16 %v10484, %v10483
        %v10514 = vpack.c.b16 %v10486, %v10485
        %v10515 = vpack.c.b16 %v10488, %v10487
        %v10516 = vpack.c.b16 %v10490, %v10489
        %v10517 = vpack.c.b16 %v10492, %v10491
        %v10518 = vpack.c.b16 %v10494, %v10493
        %v10519 = vpack.c.b16 %v10496, %v10495
        %v10520 = vpack.c.b16 %v10498, %v10497
        %v10521 = vpack.c.b16 %v10500, %v10499
        %v10522 = vpack.c.b16 %v10502, %v10501
        %v10523 = vpack.c.b16 %v10504, %v10503
        %v10524 = vpack.c.b16 %v10506, %v10505
        %v10525 = vpack.c.b16 %v10508, %v10507
        %v10526 = vpack.c.b16 %v10510, %v10509
        %v10531 = vunpack.c.l.b16 %v10475
        %v10532 = vunpack.c.l.b16 %v10476
        %v10533 = vunpack.c.l.b16 %v10477
        %v10534 = vunpack.c.l.b16 %v10478
        %v10535 = vpack.c.b16 %v10532, %v10531
        %v10536 = vpack.c.b16 %v10534, %v10533
        %v10540 = vsel %vm7074, %v10511, 0
        %v10543 = vsel %vm7074, %v10512, 0
        %v10546 = vsel %vm7074, %v10513, 0
        %v10549 = vsel %vm7074, %v10514, 0
        %v10552 = vsel %vm7074, %v10515, 0
        %v10555 = vsel %vm7074, %v10516, 0
        %v10558 = vsel %vm7074, %v10517, 0
        %v10561 = vsel %vm7074, %v10518, 0
        %v10564 = vsel %vm7074, %v10519, 0
        %v10567 = vsel %vm7074, %v10520, 0
        %v10570 = vsel %vm7074, %v10521, 0
        %v10573 = vsel %vm7074, %v10522, 0
        %v10576 = vsel %vm7074, %v10523, 0
        %v10579 = vsel %vm7074, %v10524, 0
        %v10582 = vsel %vm7074, %v10525, 0
        %v10585 = vsel %vm7074, %v10526, 0
        %10587 = vmatprep.subr.bf16.mxu0 0
        %10588 = vmatpush1.bf16.msra.mxu0 0
        %10589 = vmatprep.subr.bf16.mxu0 0
        %10590 = vmatpush1.bf16.msra.mxu0 0
        %10591 = vmatprep.subr.bf16.mxu0 0
        %10592 = vmatpush1.bf16.msra.mxu0 0
        %10593 = vmatprep.subr.bf16.mxu0 0
        %10594 = vmatpush1.bf16.msra.mxu0 0
        %10595 = vmatprep.subr.bf16.mxu0 0
        %10596 = vmatpush1.bf16.msra.mxu0 0
        %10597 = vmatprep.subr.bf16.mxu0 0
        %10598 = vmatpush1.bf16.msra.mxu0 0
        %10599 = vmatprep.subr.bf16.mxu0 0
        %10600 = vmatpush1.bf16.msra.mxu0 %v10536
        %10601 = vmatprep.subr.bf16.mxu0 0
        %10602 = vmatpush1.bf16.msra.mxu0 %v10535
        %10603 = vmatprep.subr.bf16.mxu0 0
        %10604 = vmatpush2.bf16.msra.mxu0 0
        %10605 = vmatprep.subr.bf16.mxu0 0
        %10606 = vmatpush2.bf16.msra.mxu0 0
        %10607 = vmatprep.subr.bf16.mxu0 0
        %10608 = vmatpush2.bf16.msra.mxu0 0
        %10609 = vmatprep.subr.bf16.mxu0 0
        %10610 = vmatpush2.bf16.msra.mxu0 0
        %10611 = vmatprep.subr.bf16.mxu0 0
        %10612 = vmatpush2.bf16.msra.mxu0 0
        %10613 = vmatprep.subr.bf16.mxu0 0
        %10614 = vmatpush2.bf16.msra.mxu0 0
        %10615 = vmatprep.subr.bf16.mxu0 0
        %10616 = vmatpush2.bf16.msra.mxu0 0
        %10617 = vmatprep.subr.bf16.mxu0 0
        %10618 = vmatpush2.bf16.msra.mxu0 0
        %10619 = vmatprep.mubr.bf16.mxu0 0
        %10620 = vmatmul.mubr.bf16.gmra.mxu0 %v10540
        %v10621 = vpop.f32.mrf.mxu0
        %v10622 = vadd.f32 0.0, %v10621
        %v10623 = vpop.f32.mrf.mxu0
        %v10624 = vpop.f32.mrf.mxu0
        %v10625 = vadd.f32 0.0, %v10624
        %v10626 = vpop.f32.mrf.mxu0
        %10627 = vmatprep.mubr.bf16.mxu0 0
        %10628 = vmatmul.mubr.bf16.gmra.mxu0 %v10543
        %v10629 = vpop.f32.mrf.mxu0
        %v10630 = vadd.f32 0.0, %v10629
        %v10631 = vpop.f32.mrf.mxu0
        %v10632 = vpop.f32.mrf.mxu0
        %v10633 = vadd.f32 0.0, %v10632
        %v10634 = vpop.f32.mrf.mxu0
        %10635 = vmatprep.mubr.bf16.mxu0 0
        %10636 = vmatmul.mubr.bf16.gmra.mxu0 %v10546
        %v10637 = vpop.f32.mrf.mxu0
        %v10638 = vadd.f32 0.0, %v10637
        %v10639 = vpop.f32.mrf.mxu0
        %v10640 = vpop.f32.mrf.mxu0
        %v10641 = vadd.f32 0.0, %v10640
        %v10642 = vpop.f32.mrf.mxu0
        %10643 = vmatprep.mubr.bf16.mxu0 0
        %10644 = vmatmul.mubr.bf16.gmra.mxu0 %v10549
        %v10645 = vpop.f32.mrf.mxu0
        %v10646 = vadd.f32 0.0, %v10645
        %v10647 = vpop.f32.mrf.mxu0
        %v10648 = vpop.f32.mrf.mxu0
        %v10649 = vadd.f32 0.0, %v10648
        %v10650 = vpop.f32.mrf.mxu0
        %10651 = vmatprep.mubr.bf16.mxu0 0
        %10652 = vmatmul.mubr.bf16.gmra.mxu0 %v10552
        %v10653 = vpop.f32.mrf.mxu0
        %v10654 = vadd.f32 0.0, %v10653
        %v10655 = vpop.f32.mrf.mxu0
        %v10656 = vpop.f32.mrf.mxu0
        %v10657 = vadd.f32 0.0, %v10656
        %v10658 = vpop.f32.mrf.mxu0
        %10659 = vmatprep.mubr.bf16.mxu0 0
        %10660 = vmatmul.mubr.bf16.gmra.mxu0 %v10555
        %v10661 = vpop.f32.mrf.mxu0
        %v10662 = vadd.f32 0.0, %v10661
        %v10663 = vpop.f32.mrf.mxu0
        %v10664 = vpop.f32.mrf.mxu0
        %v10665 = vadd.f32 0.0, %v10664
        %v10666 = vpop.f32.mrf.mxu0
        %10667 = vmatprep.mubr.bf16.mxu0 0
        %10668 = vmatmul.mubr.bf16.gmra.mxu0 %v10558
        %v10669 = vpop.f32.mrf.mxu0
        %v10670 = vadd.f32 0.0, %v10669
        %v10671 = vpop.f32.mrf.mxu0
        %v10672 = vpop.f32.mrf.mxu0
        %v10673 = vadd.f32 0.0, %v10672
        %v10674 = vpop.f32.mrf.mxu0
        %10675 = vmatprep.mubr.bf16.mxu0 0
        %10676 = vmatmul.mubr.bf16.gmra.mxu0 %v10561
        %v10677 = vpop.f32.mrf.mxu0
        %v10678 = vadd.f32 0.0, %v10677
        %v10679 = vpop.f32.mrf.mxu0
        %v10680 = vpop.f32.mrf.mxu0
        %v10681 = vadd.f32 0.0, %v10680
        %v10682 = vpop.f32.mrf.mxu0
        %10683 = vmatprep.mubr.bf16.mxu0 0
        %10684 = vmatmul.mubr.bf16.gmra.mxu0 %v10564
        %v10685 = vpop.f32.mrf.mxu0
        %v10686 = vadd.f32 0.0, %v10685
        %v10687 = vpop.f32.mrf.mxu0
        %v10688 = vpop.f32.mrf.mxu0
        %v10689 = vadd.f32 0.0, %v10688
        %v10690 = vpop.f32.mrf.mxu0
        %10691 = vmatprep.mubr.bf16.mxu0 0
        %10692 = vmatmul.mubr.bf16.gmra.mxu0 %v10567
        %v10693 = vpop.f32.mrf.mxu0
        %v10694 = vadd.f32 0.0, %v10693
        %v10695 = vpop.f32.mrf.mxu0
        %v10696 = vpop.f32.mrf.mxu0
        %v10697 = vadd.f32 0.0, %v10696
        %v10698 = vpop.f32.mrf.mxu0
        %10699 = vmatprep.mubr.bf16.mxu0 0
        %10700 = vmatmul.mubr.bf16.gmra.mxu0 %v10570
        %v10701 = vpop.f32.mrf.mxu0
        %v10702 = vadd.f32 0.0, %v10701
        %v10703 = vpop.f32.mrf.mxu0
        %v10704 = vpop.f32.mrf.mxu0
        %v10705 = vadd.f32 0.0, %v10704
        %v10706 = vpop.f32.mrf.mxu0
        %10707 = vmatprep.mubr.bf16.mxu0 0
        %10708 = vmatmul.mubr.bf16.gmra.mxu0 %v10573
        %v10709 = vpop.f32.mrf.mxu0
        %v10710 = vadd.f32 0.0, %v10709
        %v10711 = vpop.f32.mrf.mxu0
        %v10712 = vpop.f32.mrf.mxu0
        %v10713 = vadd.f32 0.0, %v10712
        %v10714 = vpop.f32.mrf.mxu0
        %10715 = vmatprep.mubr.bf16.mxu0 0
        %10716 = vmatmul.mubr.bf16.gmra.mxu0 %v10576
        %v10717 = vpop.f32.mrf.mxu0
        %v10718 = vadd.f32 0.0, %v10717
        %v10719 = vpop.f32.mrf.mxu0
        %v10720 = vpop.f32.mrf.mxu0
        %v10721 = vadd.f32 0.0, %v10720
        %v10722 = vpop.f32.mrf.mxu0
        %10723 = vmatprep.mubr.bf16.mxu0 0
        %10724 = vmatmul.mubr.bf16.gmra.mxu0 %v10579
        %v10725 = vpop.f32.mrf.mxu0
        %v10726 = vadd.f32 0.0, %v10725
        %v10727 = vpop.f32.mrf.mxu0
        %v10728 = vpop.f32.mrf.mxu0
        %v10729 = vadd.f32 0.0, %v10728
        %v10730 = vpop.f32.mrf.mxu0
        %10731 = vmatprep.mubr.bf16.mxu0 0
        %10732 = vmatmul.mubr.bf16.gmra.mxu0 %v10582
        %v10733 = vpop.f32.mrf.mxu0
        %v10734 = vadd.f32 0.0, %v10733
        %v10735 = vpop.f32.mrf.mxu0
        %v10736 = vpop.f32.mrf.mxu0
        %v10737 = vadd.f32 0.0, %v10736
        %v10738 = vpop.f32.mrf.mxu0
        %10739 = vmatprep.mubr.bf16.mxu0 0
        %10740 = vmatmul.mubr.bf16.gmra.mxu0 %v10585
        %v10741 = vpop.f32.mrf.mxu0
        %v10742 = vadd.f32 0.0, %v10741
        %v10743 = vpop.f32.mrf.mxu0
        %v10744 = vpop.f32.mrf.mxu0
        %v10745 = vadd.f32 0.0, %v10744
        %v10746 = vpop.f32.mrf.mxu0
        %10747 = vdwg.mxu0
        %v10748 = vadd.f32 %v10041, %v10622
        %v10749 = vadd.f32 %v10042, %v10625
        %v10750 = vadd.f32 %v10043, %v10630
        %v10751 = vadd.f32 %v10044, %v10633
        %v10752 = vadd.f32 %v10045, %v10638
        %v10753 = vadd.f32 %v10046, %v10641
        %v10754 = vadd.f32 %v10047, %v10646
        %v10755 = vadd.f32 %v10048, %v10649
        %v10756 = vadd.f32 %v10049, %v10654
        %v10757 = vadd.f32 %v10050, %v10657
        %v10758 = vadd.f32 %v10051, %v10662
        %v10759 = vadd.f32 %v10052, %v10665
        %v10760 = vadd.f32 %v10053, %v10670
        %v10761 = vadd.f32 %v10054, %v10673
        %v10762 = vadd.f32 %v10055, %v10678
        %v10763 = vadd.f32 %v10056, %v10681
        %v10764 = vadd.f32 %v10057, %v10686
        %v10765 = vadd.f32 %v10058, %v10689
        %v10766 = vadd.f32 %v10059, %v10694
        %v10767 = vadd.f32 %v10060, %v10697
        %v10768 = vadd.f32 %v10061, %v10702
        %v10769 = vadd.f32 %v10062, %v10705
        %v10770 = vadd.f32 %v10063, %v10710
        %v10771 = vadd.f32 %v10064, %v10713
        %v10772 = vadd.f32 %v10065, %v10718
        %v10773 = vadd.f32 %v10066, %v10721
        %v10774 = vadd.f32 %v10067, %v10726
        %v10775 = vadd.f32 %v10068, %v10729
        %v10776 = vadd.f32 %v10069, %v10734
        %v10777 = vadd.f32 %v10070, %v10737
        %v10778 = vadd.f32 %v10071, %v10742
        %v10779 = vadd.f32 %v10072, %v10745
        %s10780 = scalar_lea.vmem [#allocation9], 112
        %v10781 = vld [vmem:[%s10780] sm:$0xf]
        %v10782 = vld [vmem:[%s10780 + $0x4] sm:$0xf]
        %v10783 = vld [vmem:[%s10780 + $0x8] sm:$0xf]
        %v10784 = vld [vmem:[%s10780 + $0xc] sm:$0xf]
        %v10817 = vunpack.c.l.b16 %v10075
        %v10818 = vunpack.c.l.b16 %v10076
        %v10819 = vunpack.c.l.b16 %v10078
        %v10820 = vunpack.c.l.b16 %v10079
        %v10821 = vunpack.c.l.b16 %v10081
        %v10822 = vunpack.c.l.b16 %v10082
        %v10823 = vunpack.c.l.b16 %v10084
        %v10824 = vunpack.c.l.b16 %v10085
        %v10825 = vunpack.c.l.b16 %v10087
        %v10826 = vunpack.c.l.b16 %v10088
        %v10827 = vunpack.c.l.b16 %v10090
        %v10828 = vunpack.c.l.b16 %v10091
        %v10829 = vunpack.c.l.b16 %v10093
        %v10830 = vunpack.c.l.b16 %v10094
        %v10831 = vunpack.c.l.b16 %v10096
        %v10832 = vunpack.c.l.b16 %v10097
        %v10833 = vunpack.c.l.b16 %v10099
        %v10834 = vunpack.c.l.b16 %v10100
        %v10835 = vunpack.c.l.b16 %v10102
        %v10836 = vunpack.c.l.b16 %v10103
        %v10837 = vunpack.c.l.b16 %v10105
        %v10838 = vunpack.c.l.b16 %v10106
        %v10839 = vunpack.c.l.b16 %v10108
        %v10840 = vunpack.c.l.b16 %v10109
        %v10841 = vunpack.c.l.b16 %v10111
        %v10842 = vunpack.c.l.b16 %v10112
        %v10843 = vunpack.c.l.b16 %v10114
        %v10844 = vunpack.c.l.b16 %v10115
        %v10845 = vunpack.c.l.b16 %v10117
        %v10846 = vunpack.c.l.b16 %v10118
        %v10847 = vunpack.c.l.b16 %v10120
        %v10848 = vunpack.c.l.b16 %v10121
        %v10849 = vpack.c.b16 %v10818, %v10817
        %v10850 = vpack.c.b16 %v10820, %v10819
        %v10851 = vpack.c.b16 %v10822, %v10821
        %v10852 = vpack.c.b16 %v10824, %v10823
        %v10853 = vpack.c.b16 %v10826, %v10825
        %v10854 = vpack.c.b16 %v10828, %v10827
        %v10855 = vpack.c.b16 %v10830, %v10829
        %v10856 = vpack.c.b16 %v10832, %v10831
        %v10857 = vpack.c.b16 %v10834, %v10833
        %v10858 = vpack.c.b16 %v10836, %v10835
        %v10859 = vpack.c.b16 %v10838, %v10837
        %v10860 = vpack.c.b16 %v10840, %v10839
        %v10861 = vpack.c.b16 %v10842, %v10841
        %v10862 = vpack.c.b16 %v10844, %v10843
        %v10863 = vpack.c.b16 %v10846, %v10845
        %v10864 = vpack.c.b16 %v10848, %v10847
        %v10869 = vunpack.c.l.b16 %v10781
        %v10870 = vunpack.c.l.b16 %v10782
        %v10871 = vunpack.c.l.b16 %v10783
        %v10872 = vunpack.c.l.b16 %v10784
        %v10873 = vpack.c.b16 %v10870, %v10869
        %v10874 = vpack.c.b16 %v10872, %v10871
        %v10878 = vsel %vm7074, %v10849, 0
        %v10881 = vsel %vm7074, %v10850, 0
        %v10884 = vsel %vm7074, %v10851, 0
        %v10887 = vsel %vm7074, %v10852, 0
        %v10890 = vsel %vm7074, %v10853, 0
        %v10893 = vsel %vm7074, %v10854, 0
        %v10896 = vsel %vm7074, %v10855, 0
        %v10899 = vsel %vm7074, %v10856, 0
        %v10902 = vsel %vm7074, %v10857, 0
        %v10905 = vsel %vm7074, %v10858, 0
        %v10908 = vsel %vm7074, %v10859, 0
        %v10911 = vsel %vm7074, %v10860, 0
        %v10914 = vsel %vm7074, %v10861, 0
        %v10917 = vsel %vm7074, %v10862, 0
        %v10920 = vsel %vm7074, %v10863, 0
        %v10923 = vsel %vm7074, %v10864, 0
        %10925 = vmatprep.subr.bf16.mxu0 0
        %10926 = vmatpush1.bf16.msra.mxu0 0
        %10927 = vmatprep.subr.bf16.mxu0 0
        %10928 = vmatpush1.bf16.msra.mxu0 0
        %10929 = vmatprep.subr.bf16.mxu0 0
        %10930 = vmatpush1.bf16.msra.mxu0 0
        %10931 = vmatprep.subr.bf16.mxu0 0
        %10932 = vmatpush1.bf16.msra.mxu0 0
        %10933 = vmatprep.subr.bf16.mxu0 0
        %10934 = vmatpush1.bf16.msra.mxu0 0
        %10935 = vmatprep.subr.bf16.mxu0 0
        %10936 = vmatpush1.bf16.msra.mxu0 0
        %10937 = vmatprep.subr.bf16.mxu0 0
        %10938 = vmatpush1.bf16.msra.mxu0 %v10874
        %10939 = vmatprep.subr.bf16.mxu0 0
        %10940 = vmatpush1.bf16.msra.mxu0 %v10873
        %10941 = vmatprep.subr.bf16.mxu0 0
        %10942 = vmatpush2.bf16.msra.mxu0 0
        %10943 = vmatprep.subr.bf16.mxu0 0
        %10944 = vmatpush2.bf16.msra.mxu0 0
        %10945 = vmatprep.subr.bf16.mxu0 0
        %10946 = vmatpush2.bf16.msra.mxu0 0
        %10947 = vmatprep.subr.bf16.mxu0 0
        %10948 = vmatpush2.bf16.msra.mxu0 0
        %10949 = vmatprep.subr.bf16.mxu0 0
        %10950 = vmatpush2.bf16.msra.mxu0 0
        %10951 = vmatprep.subr.bf16.mxu0 0
        %10952 = vmatpush2.bf16.msra.mxu0 0
        %10953 = vmatprep.subr.bf16.mxu0 0
        %10954 = vmatpush2.bf16.msra.mxu0 0
        %10955 = vmatprep.subr.bf16.mxu0 0
        %10956 = vmatpush2.bf16.msra.mxu0 0
        %10957 = vmatprep.mubr.bf16.mxu0 0
        %10958 = vmatmul.mubr.bf16.gmra.mxu0 %v10878
        %v10959 = vpop.f32.mrf.mxu0
        %v10960 = vadd.f32 0.0, %v10959
        %v10961 = vpop.f32.mrf.mxu0
        %v10962 = vpop.f32.mrf.mxu0
        %v10963 = vadd.f32 0.0, %v10962
        %v10964 = vpop.f32.mrf.mxu0
        %10965 = vmatprep.mubr.bf16.mxu0 0
        %10966 = vmatmul.mubr.bf16.gmra.mxu0 %v10881
        %v10967 = vpop.f32.mrf.mxu0
        %v10968 = vadd.f32 0.0, %v10967
        %v10969 = vpop.f32.mrf.mxu0
        %v10970 = vpop.f32.mrf.mxu0
        %v10971 = vadd.f32 0.0, %v10970
        %v10972 = vpop.f32.mrf.mxu0
        %10973 = vmatprep.mubr.bf16.mxu0 0
        %10974 = vmatmul.mubr.bf16.gmra.mxu0 %v10884
        %v10975 = vpop.f32.mrf.mxu0
        %v10976 = vadd.f32 0.0, %v10975
        %v10977 = vpop.f32.mrf.mxu0
        %v10978 = vpop.f32.mrf.mxu0
        %v10979 = vadd.f32 0.0, %v10978
        %v10980 = vpop.f32.mrf.mxu0
        %10981 = vmatprep.mubr.bf16.mxu0 0
        %10982 = vmatmul.mubr.bf16.gmra.mxu0 %v10887
        %v10983 = vpop.f32.mrf.mxu0
        %v10984 = vadd.f32 0.0, %v10983
        %v10985 = vpop.f32.mrf.mxu0
        %v10986 = vpop.f32.mrf.mxu0
        %v10987 = vadd.f32 0.0, %v10986
        %v10988 = vpop.f32.mrf.mxu0
        %10989 = vmatprep.mubr.bf16.mxu0 0
        %10990 = vmatmul.mubr.bf16.gmra.mxu0 %v10890
        %v10991 = vpop.f32.mrf.mxu0
        %v10992 = vadd.f32 0.0, %v10991
        %v10993 = vpop.f32.mrf.mxu0
        %v10994 = vpop.f32.mrf.mxu0
        %v10995 = vadd.f32 0.0, %v10994
        %v10996 = vpop.f32.mrf.mxu0
        %10997 = vmatprep.mubr.bf16.mxu0 0
        %10998 = vmatmul.mubr.bf16.gmra.mxu0 %v10893
        %v10999 = vpop.f32.mrf.mxu0
        %v11000 = vadd.f32 0.0, %v10999
        %v11001 = vpop.f32.mrf.mxu0
        %v11002 = vpop.f32.mrf.mxu0
        %v11003 = vadd.f32 0.0, %v11002
        %v11004 = vpop.f32.mrf.mxu0
        %11005 = vmatprep.mubr.bf16.mxu0 0
        %11006 = vmatmul.mubr.bf16.gmra.mxu0 %v10896
        %v11007 = vpop.f32.mrf.mxu0
        %v11008 = vadd.f32 0.0, %v11007
        %v11009 = vpop.f32.mrf.mxu0
        %v11010 = vpop.f32.mrf.mxu0
        %v11011 = vadd.f32 0.0, %v11010
        %v11012 = vpop.f32.mrf.mxu0
        %11013 = vmatprep.mubr.bf16.mxu0 0
        %11014 = vmatmul.mubr.bf16.gmra.mxu0 %v10899
        %v11015 = vpop.f32.mrf.mxu0
        %v11016 = vadd.f32 0.0, %v11015
        %v11017 = vpop.f32.mrf.mxu0
        %v11018 = vpop.f32.mrf.mxu0
        %v11019 = vadd.f32 0.0, %v11018
        %v11020 = vpop.f32.mrf.mxu0
        %11021 = vmatprep.mubr.bf16.mxu0 0
        %11022 = vmatmul.mubr.bf16.gmra.mxu0 %v10902
        %v11023 = vpop.f32.mrf.mxu0
        %v11024 = vadd.f32 0.0, %v11023
        %v11025 = vpop.f32.mrf.mxu0
        %v11026 = vpop.f32.mrf.mxu0
        %v11027 = vadd.f32 0.0, %v11026
        %v11028 = vpop.f32.mrf.mxu0
        %11029 = vmatprep.mubr.bf16.mxu0 0
        %11030 = vmatmul.mubr.bf16.gmra.mxu0 %v10905
        %v11031 = vpop.f32.mrf.mxu0
        %v11032 = vadd.f32 0.0, %v11031
        %v11033 = vpop.f32.mrf.mxu0
        %v11034 = vpop.f32.mrf.mxu0
        %v11035 = vadd.f32 0.0, %v11034
        %v11036 = vpop.f32.mrf.mxu0
        %11037 = vmatprep.mubr.bf16.mxu0 0
        %11038 = vmatmul.mubr.bf16.gmra.mxu0 %v10908
        %v11039 = vpop.f32.mrf.mxu0
        %v11040 = vadd.f32 0.0, %v11039
        %v11041 = vpop.f32.mrf.mxu0
        %v11042 = vpop.f32.mrf.mxu0
        %v11043 = vadd.f32 0.0, %v11042
        %v11044 = vpop.f32.mrf.mxu0
        %11045 = vmatprep.mubr.bf16.mxu0 0
        %11046 = vmatmul.mubr.bf16.gmra.mxu0 %v10911
        %v11047 = vpop.f32.mrf.mxu0
        %v11048 = vadd.f32 0.0, %v11047
        %v11049 = vpop.f32.mrf.mxu0
        %v11050 = vpop.f32.mrf.mxu0
        %v11051 = vadd.f32 0.0, %v11050
        %v11052 = vpop.f32.mrf.mxu0
        %11053 = vmatprep.mubr.bf16.mxu0 0
        %11054 = vmatmul.mubr.bf16.gmra.mxu0 %v10914
        %v11055 = vpop.f32.mrf.mxu0
        %v11056 = vadd.f32 0.0, %v11055
        %v11057 = vpop.f32.mrf.mxu0
        %v11058 = vpop.f32.mrf.mxu0
        %v11059 = vadd.f32 0.0, %v11058
        %v11060 = vpop.f32.mrf.mxu0
        %11061 = vmatprep.mubr.bf16.mxu0 0
        %11062 = vmatmul.mubr.bf16.gmra.mxu0 %v10917
        %v11063 = vpop.f32.mrf.mxu0
        %v11064 = vadd.f32 0.0, %v11063
        %v11065 = vpop.f32.mrf.mxu0
        %v11066 = vpop.f32.mrf.mxu0
        %v11067 = vadd.f32 0.0, %v11066
        %v11068 = vpop.f32.mrf.mxu0
        %11069 = vmatprep.mubr.bf16.mxu0 0
        %11070 = vmatmul.mubr.bf16.gmra.mxu0 %v10920
        %v11071 = vpop.f32.mrf.mxu0
        %v11072 = vadd.f32 0.0, %v11071
        %v11073 = vpop.f32.mrf.mxu0
        %v11074 = vpop.f32.mrf.mxu0
        %v11075 = vadd.f32 0.0, %v11074
        %v11076 = vpop.f32.mrf.mxu0
        %11077 = vmatprep.mubr.bf16.mxu0 0
        %11078 = vmatmul.mubr.bf16.gmra.mxu0 %v10923
        %v11079 = vpop.f32.mrf.mxu0
        %v11080 = vadd.f32 0.0, %v11079
        %v11081 = vpop.f32.mrf.mxu0
        %v11082 = vpop.f32.mrf.mxu0
        %v11083 = vadd.f32 0.0, %v11082
        %v11084 = vpop.f32.mrf.mxu0
        %11085 = vdwg.mxu0
        %v11086 = vadd.f32 %v10748, %v10960
        %v11087 = vadd.f32 %v10749, %v10963
        %v11088 = vadd.f32 %v10750, %v10968
        %v11089 = vadd.f32 %v10751, %v10971
        %v11090 = vadd.f32 %v10752, %v10976
        %v11091 = vadd.f32 %v10753, %v10979
        %v11092 = vadd.f32 %v10754, %v10984
        %v11093 = vadd.f32 %v10755, %v10987
        %v11094 = vadd.f32 %v10756, %v10992
        %v11095 = vadd.f32 %v10757, %v10995
        %v11096 = vadd.f32 %v10758, %v11000
        %v11097 = vadd.f32 %v10759, %v11003
        %v11098 = vadd.f32 %v10760, %v11008
        %v11099 = vadd.f32 %v10761, %v11011
        %v11100 = vadd.f32 %v10762, %v11016
        %v11101 = vadd.f32 %v10763, %v11019
        %v11102 = vadd.f32 %v10764, %v11024
        %v11103 = vadd.f32 %v10765, %v11027
        %v11104 = vadd.f32 %v10766, %v11032
        %v11105 = vadd.f32 %v10767, %v11035
        %v11106 = vadd.f32 %v10768, %v11040
        %v11107 = vadd.f32 %v10769, %v11043
        %v11108 = vadd.f32 %v10770, %v11048
        %v11109 = vadd.f32 %v10771, %v11051
        %v11110 = vadd.f32 %v10772, %v11056
        %v11111 = vadd.f32 %v10773, %v11059
        %v11112 = vadd.f32 %v10774, %v11064
        %v11113 = vadd.f32 %v10775, %v11067
        %v11114 = vadd.f32 %v10776, %v11072
        %v11115 = vadd.f32 %v10777, %v11075
        %v11116 = vadd.f32 %v10778, %v11080
        %v11117 = vadd.f32 %v10779, %v11083
        %v11118 = vld [vmem:[%s10073 + $0x4] sm:$0xf]
        %v11119 = vld [vmem:[%s10073 + $0x8] sm:$0xf]
        %v11120 = vld [vmem:[%s10073 + $0xc] sm:$0x1]
        %v11121 = vld [vmem:[%s10073 + $0x14] sm:$0xf]
        %v11122 = vld [vmem:[%s10073 + $0x18] sm:$0xf]
        %v11123 = vld [vmem:[%s10073 + $0x1c] sm:$0x1]
        %v11124 = vld [vmem:[%s10073 + $0x24] sm:$0xf]
        %v11125 = vld [vmem:[%s10073 + $0x28] sm:$0xf]
        %v11126 = vld [vmem:[%s10073 + $0x2c] sm:$0x1]
        %v11127 = vld [vmem:[%s10073 + $0x34] sm:$0xf]
        %v11128 = vld [vmem:[%s10073 + $0x38] sm:$0xf]
        %v11129 = vld [vmem:[%s10073 + $0x3c] sm:$0x1]
        %v11130 = vld [vmem:[%s10073 + $0x44] sm:$0xf]
        %v11131 = vld [vmem:[%s10073 + $0x48] sm:$0xf]
        %v11132 = vld [vmem:[%s10073 + $0x4c] sm:$0x1]
        %v11133 = vld [vmem:[%s10073 + $0x54] sm:$0xf]
        %v11134 = vld [vmem:[%s10073 + $0x58] sm:$0xf]
        %v11135 = vld [vmem:[%s10073 + $0x5c] sm:$0x1]
        %v11136 = vld [vmem:[%s10073 + $0x64] sm:$0xf]
        %v11137 = vld [vmem:[%s10073 + $0x68] sm:$0xf]
        %v11138 = vld [vmem:[%s10073 + $0x6c] sm:$0x1]
        %v11139 = vld [vmem:[%s10073 + $0x74] sm:$0xf]
        %v11140 = vld [vmem:[%s10073 + $0x78] sm:$0xf]
        %v11141 = vld [vmem:[%s10073 + $0x7c] sm:$0x1]
        %v11142 = vld [vmem:[%s10073 + $0x84] sm:$0xf]
        %v11143 = vld [vmem:[%s10073 + $0x88] sm:$0xf]
        %v11144 = vld [vmem:[%s10073 + $0x8c] sm:$0x1]
        %v11145 = vld [vmem:[%s10073 + $0x94] sm:$0xf]
        %v11146 = vld [vmem:[%s10073 + $0x98] sm:$0xf]
        %v11147 = vld [vmem:[%s10073 + $0x9c] sm:$0x1]
        %v11148 = vld [vmem:[%s10073 + $0xa4] sm:$0xf]
        %v11149 = vld [vmem:[%s10073 + $0xa8] sm:$0xf]
        %v11150 = vld [vmem:[%s10073 + $0xac] sm:$0x1]
        %v11151 = vld [vmem:[%s10073 + $0xb4] sm:$0xf]
        %v11152 = vld [vmem:[%s10073 + $0xb8] sm:$0xf]
        %v11153 = vld [vmem:[%s10073 + $0xbc] sm:$0x1]
        %v11154 = vld [vmem:[%s10073 + $0xc4] sm:$0xf]
        %v11155 = vld [vmem:[%s10073 + $0xc8] sm:$0xf]
        %v11156 = vld [vmem:[%s10073 + $0xcc] sm:$0x1]
        %v11157 = vld [vmem:[%s10073 + $0xd4] sm:$0xf]
        %v11158 = vld [vmem:[%s10073 + $0xd8] sm:$0xf]
        %v11159 = vld [vmem:[%s10073 + $0xdc] sm:$0x1]
        %v11160 = vld [vmem:[%s10073 + $0xe4] sm:$0xf]
        %v11161 = vld [vmem:[%s10073 + $0xe8] sm:$0xf]
        %v11162 = vld [vmem:[%s10073 + $0xec] sm:$0x1]
        %v11163 = vld [vmem:[%s10073 + $0xf4] sm:$0xf]
        %v11164 = vld [vmem:[%s10073 + $0xf8] sm:$0xf]
        %v11165 = vld [vmem:[%s10073 + $0xfc] sm:$0x1]
        %v11167 = vshrl.u32 %v11118, 16
        %v11169 = vrot.slane %v11167, 4
        %v11170 = vshll.u32 %v11118, 16
        %v11172 = vrot.slane %v11170, 5
        %v11173 = vor.u32 %v11169, %v11172
        %v11174 = vrot.slane %v11173, 4
        %v11176 = vshll.u32 %v11119, 16
        %v11178 = vrot.slane %v11176, 5
        %v11179 = vsel %vm1609, %v11174, %v11178
        %v11180 = vshrl.u32 %v11119, 16
        %v11182 = vrot.slane %v11180, 4
        %v11183 = vor.u32 %v11182, %v11178
        %v11184 = vrot.slane %v11183, 4
        %v11186 = vshll.u32 %v11120, 16
        %v11188 = vrot.slane %v11186, 5
        %v11189 = vsel %vm1609, %v11184, %v11188
        %v11191 = vshrl.u32 %v11121, 16
        %v11193 = vrot.slane %v11191, 4
        %v11194 = vshll.u32 %v11121, 16
        %v11196 = vrot.slane %v11194, 5
        %v11197 = vor.u32 %v11193, %v11196
        %v11198 = vrot.slane %v11197, 4
        %v11200 = vshll.u32 %v11122, 16
        %v11202 = vrot.slane %v11200, 5
        %v11203 = vsel %vm1609, %v11198, %v11202
        %v11204 = vshrl.u32 %v11122, 16
        %v11206 = vrot.slane %v11204, 4
        %v11207 = vor.u32 %v11206, %v11202
        %v11208 = vrot.slane %v11207, 4
        %v11210 = vshll.u32 %v11123, 16
        %v11212 = vrot.slane %v11210, 5
        %v11213 = vsel %vm1609, %v11208, %v11212
        %v11215 = vshrl.u32 %v11124, 16
        %v11217 = vrot.slane %v11215, 4
        %v11218 = vshll.u32 %v11124, 16
        %v11220 = vrot.slane %v11218, 5
        %v11221 = vor.u32 %v11217, %v11220
        %v11222 = vrot.slane %v11221, 4
        %v11224 = vshll.u32 %v11125, 16
        %v11226 = vrot.slane %v11224, 5
        %v11227 = vsel %vm1609, %v11222, %v11226
        %v11228 = vshrl.u32 %v11125, 16
        %v11230 = vrot.slane %v11228, 4
        %v11231 = vor.u32 %v11230, %v11226
        %v11232 = vrot.slane %v11231, 4
        %v11234 = vshll.u32 %v11126, 16
        %v11236 = vrot.slane %v11234, 5
        %v11237 = vsel %vm1609, %v11232, %v11236
        %v11239 = vshrl.u32 %v11127, 16
        %v11241 = vrot.slane %v11239, 4
        %v11242 = vshll.u32 %v11127, 16
        %v11244 = vrot.slane %v11242, 5
        %v11245 = vor.u32 %v11241, %v11244
        %v11246 = vrot.slane %v11245, 4
        %v11248 = vshll.u32 %v11128, 16
        %v11250 = vrot.slane %v11248, 5
        %v11251 = vsel %vm1609, %v11246, %v11250
        %v11252 = vshrl.u32 %v11128, 16
        %v11254 = vrot.slane %v11252, 4
        %v11255 = vor.u32 %v11254, %v11250
        %v11256 = vrot.slane %v11255, 4
        %v11258 = vshll.u32 %v11129, 16
        %v11260 = vrot.slane %v11258, 5
        %v11261 = vsel %vm1609, %v11256, %v11260
        %v11263 = vshrl.u32 %v11130, 16
        %v11265 = vrot.slane %v11263, 4
        %v11266 = vshll.u32 %v11130, 16
        %v11268 = vrot.slane %v11266, 5
        %v11269 = vor.u32 %v11265, %v11268
        %v11270 = vrot.slane %v11269, 4
        %v11272 = vshll.u32 %v11131, 16
        %v11274 = vrot.slane %v11272, 5
        %v11275 = vsel %vm1609, %v11270, %v11274
        %v11276 = vshrl.u32 %v11131, 16
        %v11278 = vrot.slane %v11276, 4
        %v11279 = vor.u32 %v11278, %v11274
        %v11280 = vrot.slane %v11279, 4
        %v11282 = vshll.u32 %v11132, 16
        %v11284 = vrot.slane %v11282, 5
        %v11285 = vsel %vm1609, %v11280, %v11284
        %v11287 = vshrl.u32 %v11133, 16
        %v11289 = vrot.slane %v11287, 4
        %v11290 = vshll.u32 %v11133, 16
        %v11292 = vrot.slane %v11290, 5
        %v11293 = vor.u32 %v11289, %v11292
        %v11294 = vrot.slane %v11293, 4
        %v11296 = vshll.u32 %v11134, 16
        %v11298 = vrot.slane %v11296, 5
        %v11299 = vsel %vm1609, %v11294, %v11298
        %v11300 = vshrl.u32 %v11134, 16
        %v11302 = vrot.slane %v11300, 4
        %v11303 = vor.u32 %v11302, %v11298
        %v11304 = vrot.slane %v11303, 4
        %v11306 = vshll.u32 %v11135, 16
        %v11308 = vrot.slane %v11306, 5
        %v11309 = vsel %vm1609, %v11304, %v11308
        %v11311 = vshrl.u32 %v11136, 16
        %v11313 = vrot.slane %v11311, 4
        %v11314 = vshll.u32 %v11136, 16
        %v11316 = vrot.slane %v11314, 5
        %v11317 = vor.u32 %v11313, %v11316
        %v11318 = vrot.slane %v11317, 4
        %v11320 = vshll.u32 %v11137, 16
        %v11322 = vrot.slane %v11320, 5
        %v11323 = vsel %vm1609, %v11318, %v11322
        %v11324 = vshrl.u32 %v11137, 16
        %v11326 = vrot.slane %v11324, 4
        %v11327 = vor.u32 %v11326, %v11322
        %v11328 = vrot.slane %v11327, 4
        %v11330 = vshll.u32 %v11138, 16
        %v11332 = vrot.slane %v11330, 5
        %v11333 = vsel %vm1609, %v11328, %v11332
        %v11335 = vshrl.u32 %v11139, 16
        %v11337 = vrot.slane %v11335, 4
        %v11338 = vshll.u32 %v11139, 16
        %v11340 = vrot.slane %v11338, 5
        %v11341 = vor.u32 %v11337, %v11340
        %v11342 = vrot.slane %v11341, 4
        %v11344 = vshll.u32 %v11140, 16
        %v11346 = vrot.slane %v11344, 5
        %v11347 = vsel %vm1609, %v11342, %v11346
        %v11348 = vshrl.u32 %v11140, 16
        %v11350 = vrot.slane %v11348, 4
        %v11351 = vor.u32 %v11350, %v11346
        %v11352 = vrot.slane %v11351, 4
        %v11354 = vshll.u32 %v11141, 16
        %v11356 = vrot.slane %v11354, 5
        %v11357 = vsel %vm1609, %v11352, %v11356
        %v11359 = vshrl.u32 %v11142, 16
        %v11361 = vrot.slane %v11359, 4
        %v11362 = vshll.u32 %v11142, 16
        %v11364 = vrot.slane %v11362, 5
        %v11365 = vor.u32 %v11361, %v11364
        %v11366 = vrot.slane %v11365, 4
        %v11368 = vshll.u32 %v11143, 16
        %v11370 = vrot.slane %v11368, 5
        %v11371 = vsel %vm1609, %v11366, %v11370
        %v11372 = vshrl.u32 %v11143, 16
        %v11374 = vrot.slane %v11372, 4
        %v11375 = vor.u32 %v11374, %v11370
        %v11376 = vrot.slane %v11375, 4
        %v11378 = vshll.u32 %v11144, 16
        %v11380 = vrot.slane %v11378, 5
        %v11381 = vsel %vm1609, %v11376, %v11380
        %v11383 = vshrl.u32 %v11145, 16
        %v11385 = vrot.slane %v11383, 4
        %v11386 = vshll.u32 %v11145, 16
        %v11388 = vrot.slane %v11386, 5
        %v11389 = vor.u32 %v11385, %v11388
        %v11390 = vrot.slane %v11389, 4
        %v11392 = vshll.u32 %v11146, 16
        %v11394 = vrot.slane %v11392, 5
        %v11395 = vsel %vm1609, %v11390, %v11394
        %v11396 = vshrl.u32 %v11146, 16
        %v11398 = vrot.slane %v11396, 4
        %v11399 = vor.u32 %v11398, %v11394
        %v11400 = vrot.slane %v11399, 4
        %v11402 = vshll.u32 %v11147, 16
        %v11404 = vrot.slane %v11402, 5
        %v11405 = vsel %vm1609, %v11400, %v11404
        %v11407 = vshrl.u32 %v11148, 16
        %v11409 = vrot.slane %v11407, 4
        %v11410 = vshll.u32 %v11148, 16
        %v11412 = vrot.slane %v11410, 5
        %v11413 = vor.u32 %v11409, %v11412
        %v11414 = vrot.slane %v11413, 4
        %v11416 = vshll.u32 %v11149, 16
        %v11418 = vrot.slane %v11416, 5
        %v11419 = vsel %vm1609, %v11414, %v11418
        %v11420 = vshrl.u32 %v11149, 16
        %v11422 = vrot.slane %v11420, 4
        %v11423 = vor.u32 %v11422, %v11418
        %v11424 = vrot.slane %v11423, 4
        %v11426 = vshll.u32 %v11150, 16
        %v11428 = vrot.slane %v11426, 5
        %v11429 = vsel %vm1609, %v11424, %v11428
        %v11431 = vshrl.u32 %v11151, 16
        %v11433 = vrot.slane %v11431, 4
        %v11434 = vshll.u32 %v11151, 16
        %v11436 = vrot.slane %v11434, 5
        %v11437 = vor.u32 %v11433, %v11436
        %v11438 = vrot.slane %v11437, 4
        %v11440 = vshll.u32 %v11152, 16
        %v11442 = vrot.slane %v11440, 5
        %v11443 = vsel %vm1609, %v11438, %v11442
        %v11444 = vshrl.u32 %v11152, 16
        %v11446 = vrot.slane %v11444, 4
        %v11447 = vor.u32 %v11446, %v11442
        %v11448 = vrot.slane %v11447, 4
        %v11450 = vshll.u32 %v11153, 16
        %v11452 = vrot.slane %v11450, 5
        %v11453 = vsel %vm1609, %v11448, %v11452
        %v11455 = vshrl.u32 %v11154, 16
        %v11457 = vrot.slane %v11455, 4
        %v11458 = vshll.u32 %v11154, 16
        %v11460 = vrot.slane %v11458, 5
        %v11461 = vor.u32 %v11457, %v11460
        %v11462 = vrot.slane %v11461, 4
        %v11464 = vshll.u32 %v11155, 16
        %v11466 = vrot.slane %v11464, 5
        %v11467 = vsel %vm1609, %v11462, %v11466
        %v11468 = vshrl.u32 %v11155, 16
        %v11470 = vrot.slane %v11468, 4
        %v11471 = vor.u32 %v11470, %v11466
        %v11472 = vrot.slane %v11471, 4
        %v11474 = vshll.u32 %v11156, 16
        %v11476 = vrot.slane %v11474, 5
        %v11477 = vsel %vm1609, %v11472, %v11476
        %v11479 = vshrl.u32 %v11157, 16
        %v11481 = vrot.slane %v11479, 4
        %v11482 = vshll.u32 %v11157, 16
        %v11484 = vrot.slane %v11482, 5
        %v11485 = vor.u32 %v11481, %v11484
        %v11486 = vrot.slane %v11485, 4
        %v11488 = vshll.u32 %v11158, 16
        %v11490 = vrot.slane %v11488, 5
        %v11491 = vsel %vm1609, %v11486, %v11490
        %v11492 = vshrl.u32 %v11158, 16
        %v11494 = vrot.slane %v11492, 4
        %v11495 = vor.u32 %v11494, %v11490
        %v11496 = vrot.slane %v11495, 4
        %v11498 = vshll.u32 %v11159, 16
        %v11500 = vrot.slane %v11498, 5
        %v11501 = vsel %vm1609, %v11496, %v11500
        %v11503 = vshrl.u32 %v11160, 16
        %v11505 = vrot.slane %v11503, 4
        %v11506 = vshll.u32 %v11160, 16
        %v11508 = vrot.slane %v11506, 5
        %v11509 = vor.u32 %v11505, %v11508
        %v11510 = vrot.slane %v11509, 4
        %v11512 = vshll.u32 %v11161, 16
        %v11514 = vrot.slane %v11512, 5
        %v11515 = vsel %vm1609, %v11510, %v11514
        %v11516 = vshrl.u32 %v11161, 16
        %v11518 = vrot.slane %v11516, 4
        %v11519 = vor.u32 %v11518, %v11514
        %v11520 = vrot.slane %v11519, 4
        %v11522 = vshll.u32 %v11162, 16
        %v11524 = vrot.slane %v11522, 5
        %v11525 = vsel %vm1609, %v11520, %v11524
        %v11527 = vshrl.u32 %v11163, 16
        %v11529 = vrot.slane %v11527, 4
        %v11530 = vshll.u32 %v11163, 16
        %v11532 = vrot.slane %v11530, 5
        %v11533 = vor.u32 %v11529, %v11532
        %v11534 = vrot.slane %v11533, 4
        %v11536 = vshll.u32 %v11164, 16
        %v11538 = vrot.slane %v11536, 5
        %v11539 = vsel %vm1609, %v11534, %v11538
        %v11540 = vshrl.u32 %v11164, 16
        %v11542 = vrot.slane %v11540, 4
        %v11543 = vor.u32 %v11542, %v11538
        %v11544 = vrot.slane %v11543, 4
        %v11546 = vshll.u32 %v11165, 16
        %v11548 = vrot.slane %v11546, 5
        %v11549 = vsel %vm1609, %v11544, %v11548
        %s11550 = scalar_lea.vmem [#allocation9], 128
        %v11551 = vld [vmem:[%s11550] sm:$0xf]
        %v11552 = vld [vmem:[%s11550 + $0x4] sm:$0xf]
        %v11553 = vld [vmem:[%s11550 + $0x8] sm:$0xf]
        %v11554 = vld [vmem:[%s11550 + $0xc] sm:$0xf]
        %v11555 = vunpack.c.l.b16 %v11179
        %v11556 = vunpack.c.l.b16 %v11189
        %v11557 = vunpack.c.l.b16 %v11203
        %v11558 = vunpack.c.l.b16 %v11213
        %v11559 = vunpack.c.l.b16 %v11227
        %v11560 = vunpack.c.l.b16 %v11237
        %v11561 = vunpack.c.l.b16 %v11251
        %v11562 = vunpack.c.l.b16 %v11261
        %v11563 = vunpack.c.l.b16 %v11275
        %v11564 = vunpack.c.l.b16 %v11285
        %v11565 = vunpack.c.l.b16 %v11299
        %v11566 = vunpack.c.l.b16 %v11309
        %v11567 = vunpack.c.l.b16 %v11323
        %v11568 = vunpack.c.l.b16 %v11333
        %v11569 = vunpack.c.l.b16 %v11347
        %v11570 = vunpack.c.l.b16 %v11357
        %v11571 = vunpack.c.l.b16 %v11371
        %v11572 = vunpack.c.l.b16 %v11381
        %v11573 = vunpack.c.l.b16 %v11395
        %v11574 = vunpack.c.l.b16 %v11405
        %v11575 = vunpack.c.l.b16 %v11419
        %v11576 = vunpack.c.l.b16 %v11429
        %v11577 = vunpack.c.l.b16 %v11443
        %v11578 = vunpack.c.l.b16 %v11453
        %v11579 = vunpack.c.l.b16 %v11467
        %v11580 = vunpack.c.l.b16 %v11477
        %v11581 = vunpack.c.l.b16 %v11491
        %v11582 = vunpack.c.l.b16 %v11501
        %v11583 = vunpack.c.l.b16 %v11515
        %v11584 = vunpack.c.l.b16 %v11525
        %v11585 = vunpack.c.l.b16 %v11539
        %v11586 = vunpack.c.l.b16 %v11549
        %v11587 = vpack.c.b16 %v11556, %v11555
        %v11588 = vpack.c.b16 %v11558, %v11557
        %v11589 = vpack.c.b16 %v11560, %v11559
        %v11590 = vpack.c.b16 %v11562, %v11561
        %v11591 = vpack.c.b16 %v11564, %v11563
        %v11592 = vpack.c.b16 %v11566, %v11565
        %v11593 = vpack.c.b16 %v11568, %v11567
        %v11594 = vpack.c.b16 %v11570, %v11569
        %v11595 = vpack.c.b16 %v11572, %v11571
        %v11596 = vpack.c.b16 %v11574, %v11573
        %v11597 = vpack.c.b16 %v11576, %v11575
        %v11598 = vpack.c.b16 %v11578, %v11577
        %v11599 = vpack.c.b16 %v11580, %v11579
        %v11600 = vpack.c.b16 %v11582, %v11581
        %v11601 = vpack.c.b16 %v11584, %v11583
        %v11602 = vpack.c.b16 %v11586, %v11585
        %v11607 = vunpack.c.l.b16 %v11551
        %v11608 = vunpack.c.l.b16 %v11552
        %v11609 = vunpack.c.l.b16 %v11553
        %v11610 = vunpack.c.l.b16 %v11554
        %v11611 = vpack.c.b16 %v11608, %v11607
        %v11612 = vpack.c.b16 %v11610, %v11609
        %v11616 = vsel %vm7074, %v11587, 0
        %v11619 = vsel %vm7074, %v11588, 0
        %v11622 = vsel %vm7074, %v11589, 0
        %v11625 = vsel %vm7074, %v11590, 0
        %v11628 = vsel %vm7074, %v11591, 0
        %v11631 = vsel %vm7074, %v11592, 0
        %v11634 = vsel %vm7074, %v11593, 0
        %v11637 = vsel %vm7074, %v11594, 0
        %v11640 = vsel %vm7074, %v11595, 0
        %v11643 = vsel %vm7074, %v11596, 0
        %v11646 = vsel %vm7074, %v11597, 0
        %v11649 = vsel %vm7074, %v11598, 0
        %v11652 = vsel %vm7074, %v11599, 0
        %v11655 = vsel %vm7074, %v11600, 0
        %v11658 = vsel %vm7074, %v11601, 0
        %v11661 = vsel %vm7074, %v11602, 0
        %11663 = vmatprep.subr.bf16.mxu0 0
        %11664 = vmatpush1.bf16.msra.mxu0 0
        %11665 = vmatprep.subr.bf16.mxu0 0
        %11666 = vmatpush1.bf16.msra.mxu0 0
        %11667 = vmatprep.subr.bf16.mxu0 0
        %11668 = vmatpush1.bf16.msra.mxu0 0
        %11669 = vmatprep.subr.bf16.mxu0 0
        %11670 = vmatpush1.bf16.msra.mxu0 0
        %11671 = vmatprep.subr.bf16.mxu0 0
        %11672 = vmatpush1.bf16.msra.mxu0 0
        %11673 = vmatprep.subr.bf16.mxu0 0
        %11674 = vmatpush1.bf16.msra.mxu0 0
        %11675 = vmatprep.subr.bf16.mxu0 0
        %11676 = vmatpush1.bf16.msra.mxu0 %v11612
        %11677 = vmatprep.subr.bf16.mxu0 0
        %11678 = vmatpush1.bf16.msra.mxu0 %v11611
        %11679 = vmatprep.subr.bf16.mxu0 0
        %11680 = vmatpush2.bf16.msra.mxu0 0
        %11681 = vmatprep.subr.bf16.mxu0 0
        %11682 = vmatpush2.bf16.msra.mxu0 0
        %11683 = vmatprep.subr.bf16.mxu0 0
        %11684 = vmatpush2.bf16.msra.mxu0 0
        %11685 = vmatprep.subr.bf16.mxu0 0
        %11686 = vmatpush2.bf16.msra.mxu0 0
        %11687 = vmatprep.subr.bf16.mxu0 0
        %11688 = vmatpush2.bf16.msra.mxu0 0
        %11689 = vmatprep.subr.bf16.mxu0 0
        %11690 = vmatpush2.bf16.msra.mxu0 0
        %11691 = vmatprep.subr.bf16.mxu0 0
        %11692 = vmatpush2.bf16.msra.mxu0 0
        %11693 = vmatprep.subr.bf16.mxu0 0
        %11694 = vmatpush2.bf16.msra.mxu0 0
        %11695 = vmatprep.mubr.bf16.mxu0 0
        %11696 = vmatmul.mubr.bf16.gmra.mxu0 %v11616
        %v11697 = vpop.f32.mrf.mxu0
        %v11698 = vadd.f32 0.0, %v11697
        %v11699 = vpop.f32.mrf.mxu0
        %v11700 = vpop.f32.mrf.mxu0
        %v11701 = vadd.f32 0.0, %v11700
        %v11702 = vpop.f32.mrf.mxu0
        %11703 = vmatprep.mubr.bf16.mxu0 0
        %11704 = vmatmul.mubr.bf16.gmra.mxu0 %v11619
        %v11705 = vpop.f32.mrf.mxu0
        %v11706 = vadd.f32 0.0, %v11705
        %v11707 = vpop.f32.mrf.mxu0
        %v11708 = vpop.f32.mrf.mxu0
        %v11709 = vadd.f32 0.0, %v11708
        %v11710 = vpop.f32.mrf.mxu0
        %11711 = vmatprep.mubr.bf16.mxu0 0
        %11712 = vmatmul.mubr.bf16.gmra.mxu0 %v11622
        %v11713 = vpop.f32.mrf.mxu0
        %v11714 = vadd.f32 0.0, %v11713
        %v11715 = vpop.f32.mrf.mxu0
        %v11716 = vpop.f32.mrf.mxu0
        %v11717 = vadd.f32 0.0, %v11716
        %v11718 = vpop.f32.mrf.mxu0
        %11719 = vmatprep.mubr.bf16.mxu0 0
        %11720 = vmatmul.mubr.bf16.gmra.mxu0 %v11625
        %v11721 = vpop.f32.mrf.mxu0
        %v11722 = vadd.f32 0.0, %v11721
        %v11723 = vpop.f32.mrf.mxu0
        %v11724 = vpop.f32.mrf.mxu0
        %v11725 = vadd.f32 0.0, %v11724
        %v11726 = vpop.f32.mrf.mxu0
        %11727 = vmatprep.mubr.bf16.mxu0 0
        %11728 = vmatmul.mubr.bf16.gmra.mxu0 %v11628
        %v11729 = vpop.f32.mrf.mxu0
        %v11730 = vadd.f32 0.0, %v11729
        %v11731 = vpop.f32.mrf.mxu0
        %v11732 = vpop.f32.mrf.mxu0
        %v11733 = vadd.f32 0.0, %v11732
        %v11734 = vpop.f32.mrf.mxu0
        %11735 = vmatprep.mubr.bf16.mxu0 0
        %11736 = vmatmul.mubr.bf16.gmra.mxu0 %v11631
        %v11737 = vpop.f32.mrf.mxu0
        %v11738 = vadd.f32 0.0, %v11737
        %v11739 = vpop.f32.mrf.mxu0
        %v11740 = vpop.f32.mrf.mxu0
        %v11741 = vadd.f32 0.0, %v11740
        %v11742 = vpop.f32.mrf.mxu0
        %11743 = vmatprep.mubr.bf16.mxu0 0
        %11744 = vmatmul.mubr.bf16.gmra.mxu0 %v11634
        %v11745 = vpop.f32.mrf.mxu0
        %v11746 = vadd.f32 0.0, %v11745
        %v11747 = vpop.f32.mrf.mxu0
        %v11748 = vpop.f32.mrf.mxu0
        %v11749 = vadd.f32 0.0, %v11748
        %v11750 = vpop.f32.mrf.mxu0
        %11751 = vmatprep.mubr.bf16.mxu0 0
        %11752 = vmatmul.mubr.bf16.gmra.mxu0 %v11637
        %v11753 = vpop.f32.mrf.mxu0
        %v11754 = vadd.f32 0.0, %v11753
        %v11755 = vpop.f32.mrf.mxu0
        %v11756 = vpop.f32.mrf.mxu0
        %v11757 = vadd.f32 0.0, %v11756
        %v11758 = vpop.f32.mrf.mxu0
        %11759 = vmatprep.mubr.bf16.mxu0 0
        %11760 = vmatmul.mubr.bf16.gmra.mxu0 %v11640
        %v11761 = vpop.f32.mrf.mxu0
        %v11762 = vadd.f32 0.0, %v11761
        %v11763 = vpop.f32.mrf.mxu0
        %v11764 = vpop.f32.mrf.mxu0
        %v11765 = vadd.f32 0.0, %v11764
        %v11766 = vpop.f32.mrf.mxu0
        %11767 = vmatprep.mubr.bf16.mxu0 0
        %11768 = vmatmul.mubr.bf16.gmra.mxu0 %v11643
        %v11769 = vpop.f32.mrf.mxu0
        %v11770 = vadd.f32 0.0, %v11769
        %v11771 = vpop.f32.mrf.mxu0
        %v11772 = vpop.f32.mrf.mxu0
        %v11773 = vadd.f32 0.0, %v11772
        %v11774 = vpop.f32.mrf.mxu0
        %11775 = vmatprep.mubr.bf16.mxu0 0
        %11776 = vmatmul.mubr.bf16.gmra.mxu0 %v11646
        %v11777 = vpop.f32.mrf.mxu0
        %v11778 = vadd.f32 0.0, %v11777
        %v11779 = vpop.f32.mrf.mxu0
        %v11780 = vpop.f32.mrf.mxu0
        %v11781 = vadd.f32 0.0, %v11780
        %v11782 = vpop.f32.mrf.mxu0
        %11783 = vmatprep.mubr.bf16.mxu0 0
        %11784 = vmatmul.mubr.bf16.gmra.mxu0 %v11649
        %v11785 = vpop.f32.mrf.mxu0
        %v11786 = vadd.f32 0.0, %v11785
        %v11787 = vpop.f32.mrf.mxu0
        %v11788 = vpop.f32.mrf.mxu0
        %v11789 = vadd.f32 0.0, %v11788
        %v11790 = vpop.f32.mrf.mxu0
        %11791 = vmatprep.mubr.bf16.mxu0 0
        %11792 = vmatmul.mubr.bf16.gmra.mxu0 %v11652
        %v11793 = vpop.f32.mrf.mxu0
        %v11794 = vadd.f32 0.0, %v11793
        %v11795 = vpop.f32.mrf.mxu0
        %v11796 = vpop.f32.mrf.mxu0
        %v11797 = vadd.f32 0.0, %v11796
        %v11798 = vpop.f32.mrf.mxu0
        %11799 = vmatprep.mubr.bf16.mxu0 0
        %11800 = vmatmul.mubr.bf16.gmra.mxu0 %v11655
        %v11801 = vpop.f32.mrf.mxu0
        %v11802 = vadd.f32 0.0, %v11801
        %v11803 = vpop.f32.mrf.mxu0
        %v11804 = vpop.f32.mrf.mxu0
        %v11805 = vadd.f32 0.0, %v11804
        %v11806 = vpop.f32.mrf.mxu0
        %11807 = vmatprep.mubr.bf16.mxu0 0
        %11808 = vmatmul.mubr.bf16.gmra.mxu0 %v11658
        %v11809 = vpop.f32.mrf.mxu0
        %v11810 = vadd.f32 0.0, %v11809
        %v11811 = vpop.f32.mrf.mxu0
        %v11812 = vpop.f32.mrf.mxu0
        %v11813 = vadd.f32 0.0, %v11812
        %v11814 = vpop.f32.mrf.mxu0
        %11815 = vmatprep.mubr.bf16.mxu0 0
        %11816 = vmatmul.mubr.bf16.gmra.mxu0 %v11661
        %v11817 = vpop.f32.mrf.mxu0
        %v11818 = vadd.f32 0.0, %v11817
        %v11819 = vpop.f32.mrf.mxu0
        %v11820 = vpop.f32.mrf.mxu0
        %v11821 = vadd.f32 0.0, %v11820
        %v11822 = vpop.f32.mrf.mxu0
        %11823 = vdwg.mxu0
        %v11824 = vadd.f32 %v11086, %v11698
        %v11825 = vadd.f32 %v11087, %v11701
        %v11826 = vadd.f32 %v11088, %v11706
        %v11827 = vadd.f32 %v11089, %v11709
        %v11828 = vadd.f32 %v11090, %v11714
        %v11829 = vadd.f32 %v11091, %v11717
        %v11830 = vadd.f32 %v11092, %v11722
        %v11831 = vadd.f32 %v11093, %v11725
        %v11832 = vadd.f32 %v11094, %v11730
        %v11833 = vadd.f32 %v11095, %v11733
        %v11834 = vadd.f32 %v11096, %v11738
        %v11835 = vadd.f32 %v11097, %v11741
        %v11836 = vadd.f32 %v11098, %v11746
        %v11837 = vadd.f32 %v11099, %v11749
        %v11838 = vadd.f32 %v11100, %v11754
        %v11839 = vadd.f32 %v11101, %v11757
        %v11840 = vadd.f32 %v11102, %v11762
        %v11841 = vadd.f32 %v11103, %v11765
        %v11842 = vadd.f32 %v11104, %v11770
        %v11843 = vadd.f32 %v11105, %v11773
        %v11844 = vadd.f32 %v11106, %v11778
        %v11845 = vadd.f32 %v11107, %v11781
        %v11846 = vadd.f32 %v11108, %v11786
        %v11847 = vadd.f32 %v11109, %v11789
        %v11848 = vadd.f32 %v11110, %v11794
        %v11849 = vadd.f32 %v11111, %v11797
        %v11850 = vadd.f32 %v11112, %v11802
        %v11851 = vadd.f32 %v11113, %v11805
        %v11852 = vadd.f32 %v11114, %v11810
        %v11853 = vadd.f32 %v11115, %v11813
        %v11854 = vadd.f32 %v11116, %v11818
        %v11855 = vadd.f32 %v11117, %v11821
        %v11856 = vld [vmem:[%s5] sm:$0x1]
        %v11858 = vlaneseq
        %v11859 = vshrl.u32 %v11858, 7
        %v11860 = vsub.s32 0, %v11859
        %v11861 = vrot.slane %v11856, %v11860
        %v11863 = vmul.f32 %v11824, %v11861
        %v11864 = vmul.f32 %v11825, %v11861
        %v11865 = vmul.f32 %v11826, %v11861
        %v11866 = vmul.f32 %v11827, %v11861
        %v11867 = vmul.f32 %v11828, %v11861
        %v11868 = vmul.f32 %v11829, %v11861
        %v11869 = vmul.f32 %v11830, %v11861
        %v11870 = vmul.f32 %v11831, %v11861
        %v11871 = vmul.f32 %v11832, %v11861
        %v11872 = vmul.f32 %v11833, %v11861
        %v11873 = vmul.f32 %v11834, %v11861
        %v11874 = vmul.f32 %v11835, %v11861
        %v11875 = vmul.f32 %v11836, %v11861
        %v11876 = vmul.f32 %v11837, %v11861
        %v11877 = vmul.f32 %v11838, %v11861
        %v11878 = vmul.f32 %v11839, %v11861
        %v11879 = vmul.f32 %v11840, %v11861
        %v11880 = vmul.f32 %v11841, %v11861
        %v11881 = vmul.f32 %v11842, %v11861
        %v11882 = vmul.f32 %v11843, %v11861
        %v11883 = vmul.f32 %v11844, %v11861
        %v11884 = vmul.f32 %v11845, %v11861
        %v11885 = vmul.f32 %v11846, %v11861
        %v11886 = vmul.f32 %v11847, %v11861
        %v11887 = vmul.f32 %v11848, %v11861
        %v11888 = vmul.f32 %v11849, %v11861
        %v11889 = vmul.f32 %v11850, %v11861
        %v11890 = vmul.f32 %v11851, %v11861
        %v11891 = vmul.f32 %v11852, %v11861
        %v11892 = vmul.f32 %v11853, %v11861
        %v11893 = vmul.f32 %v11854, %v11861
        %v11894 = vmul.f32 %v11855, %v11861
        %v11895 = vld [vmem:[%s6] sm:$0x1]
        %v11897 = vlaneseq
        %v11898 = vshrl.u32 %v11897, 7
        %v11899 = vsub.s32 0, %v11898
        %v11900 = vrot.slane %v11895, %v11899
        %v11902 = vadd.f32 %v11863, %v11900
        %v11903 = vadd.f32 %v11864, %v11900
        %v11904 = vadd.f32 %v11865, %v11900
        %v11905 = vadd.f32 %v11866, %v11900
        %v11906 = vadd.f32 %v11867, %v11900
        %v11907 = vadd.f32 %v11868, %v11900
        %v11908 = vadd.f32 %v11869, %v11900
        %v11909 = vadd.f32 %v11870, %v11900
        %v11910 = vadd.f32 %v11871, %v11900
        %v11911 = vadd.f32 %v11872, %v11900
        %v11912 = vadd.f32 %v11873, %v11900
        %v11913 = vadd.f32 %v11874, %v11900
        %v11914 = vadd.f32 %v11875, %v11900
        %v11915 = vadd.f32 %v11876, %v11900
        %v11916 = vadd.f32 %v11877, %v11900
        %v11917 = vadd.f32 %v11878, %v11900
        %v11918 = vadd.f32 %v11879, %v11900
        %v11919 = vadd.f32 %v11880, %v11900
        %v11920 = vadd.f32 %v11881, %v11900
        %v11921 = vadd.f32 %v11882, %v11900
        %v11922 = vadd.f32 %v11883, %v11900
        %v11923 = vadd.f32 %v11884, %v11900
        %v11924 = vadd.f32 %v11885, %v11900
        %v11925 = vadd.f32 %v11886, %v11900
        %v11926 = vadd.f32 %v11887, %v11900
        %v11927 = vadd.f32 %v11888, %v11900
        %v11928 = vadd.f32 %v11889, %v11900
        %v11929 = vadd.f32 %v11890, %v11900
        %v11930 = vadd.f32 %v11891, %v11900
        %v11931 = vadd.f32 %v11892, %v11900
        %v11932 = vadd.f32 %v11893, %v11900
        %v11933 = vadd.f32 %v11894, %v11900
        %v11934 = vadd.f32 %v11902, %v6541
        %v11935 = vadd.f32 %v11903, %v6542
        %v11936 = vadd.f32 %v11904, %v6543
        %v11937 = vadd.f32 %v11905, %v6544
        %v11938 = vadd.f32 %v11906, %v6545
        %v11939 = vadd.f32 %v11907, %v6546
        %v11940 = vadd.f32 %v11908, %v6547
        %v11941 = vadd.f32 %v11909, %v6548
        %v11942 = vadd.f32 %v11910, %v6549
        %v11943 = vadd.f32 %v11911, %v6550
        %v11944 = vadd.f32 %v11912, %v6551
        %v11945 = vadd.f32 %v11913, %v6552
        %v11946 = vadd.f32 %v11914, %v6553
        %v11947 = vadd.f32 %v11915, %v6554
        %v11948 = vadd.f32 %v11916, %v6555
        %v11949 = vadd.f32 %v11917, %v6556
        %v11950 = vadd.f32 %v11918, %v6557
        %v11951 = vadd.f32 %v11919, %v6558
        %v11952 = vadd.f32 %v11920, %v6559
        %v11953 = vadd.f32 %v11921, %v6560
        %v11954 = vadd.f32 %v11922, %v6561
        %v11955 = vadd.f32 %v11923, %v6562
        %v11956 = vadd.f32 %v11924, %v6563
        %v11957 = vadd.f32 %v11925, %v6564
        %v11958 = vadd.f32 %v11926, %v6565
        %v11959 = vadd.f32 %v11927, %v6566
        %v11960 = vadd.f32 %v11928, %v6567
        %v11961 = vadd.f32 %v11929, %v6568
        %v11962 = vadd.f32 %v11930, %v6569
        %v11963 = vadd.f32 %v11931, %v6570
        %v11964 = vadd.f32 %v11932, %v6571
        %v11965 = vadd.f32 %v11933, %v6572
        %v11966 = vmax.f32 %v11934, 0.0
        %v11967 = vmax.f32 %v11935, 0.0
        %v11968 = vmax.f32 %v11936, 0.0
        %v11969 = vmax.f32 %v11937, 0.0
        %v11970 = vmax.f32 %v11938, 0.0
        %v11971 = vmax.f32 %v11939, 0.0
        %v11972 = vmax.f32 %v11940, 0.0
        %v11973 = vmax.f32 %v11941, 0.0
        %v11974 = vmax.f32 %v11942, 0.0
        %v11975 = vmax.f32 %v11943, 0.0
        %v11976 = vmax.f32 %v11944, 0.0
        %v11977 = vmax.f32 %v11945, 0.0
        %v11978 = vmax.f32 %v11946, 0.0
        %v11979 = vmax.f32 %v11947, 0.0
        %v11980 = vmax.f32 %v11948, 0.0
        %v11981 = vmax.f32 %v11949, 0.0
        %v11982 = vmax.f32 %v11950, 0.0
        %v11983 = vmax.f32 %v11951, 0.0
        %v11984 = vmax.f32 %v11952, 0.0
        %v11985 = vmax.f32 %v11953, 0.0
        %v11986 = vmax.f32 %v11954, 0.0
        %v11987 = vmax.f32 %v11955, 0.0
        %v11988 = vmax.f32 %v11956, 0.0
        %v11989 = vmax.f32 %v11957, 0.0
        %v11990 = vmax.f32 %v11958, 0.0
        %v11991 = vmax.f32 %v11959, 0.0
        %v11992 = vmax.f32 %v11960, 0.0
        %v11993 = vmax.f32 %v11961, 0.0
        %v11994 = vmax.f32 %v11962, 0.0
        %v11995 = vmax.f32 %v11963, 0.0
        %v11996 = vmax.f32 %v11964, 0.0
        %v11997 = vmax.f32 %v11965, 0.0
        %v11998 = vpack.c.bf16 %v11967, %v11966
        %v11999 = vpack.c.bf16 %v11969, %v11968
        %v12000 = vpack.c.bf16 %v11971, %v11970
        %v12001 = vpack.c.bf16 %v11973, %v11972
        %v12002 = vpack.c.bf16 %v11975, %v11974
        %v12003 = vpack.c.bf16 %v11977, %v11976
        %v12004 = vpack.c.bf16 %v11979, %v11978
        %v12005 = vpack.c.bf16 %v11981, %v11980
        %v12006 = vpack.c.bf16 %v11983, %v11982
        %v12007 = vpack.c.bf16 %v11985, %v11984
        %v12008 = vpack.c.bf16 %v11987, %v11986
        %v12009 = vpack.c.bf16 %v11989, %v11988
        %v12010 = vpack.c.bf16 %v11991, %v11990
        %v12011 = vpack.c.bf16 %v11993, %v11992
        %v12012 = vpack.c.bf16 %v11995, %v11994
        %v12013 = vpack.c.bf16 %v11997, %v11996
        %v12030 = vunpack.c.l.b16 %v11998
        %v12031 = vunpack.c.h.b16 %v11998
        %v12032 = vunpack.c.l.b16 %v11999
        %v12033 = vunpack.c.h.b16 %v11999
        %v12034 = vunpack.c.l.b16 %v12000
        %v12035 = vunpack.c.h.b16 %v12000
        %v12036 = vunpack.c.l.b16 %v12001
        %v12037 = vunpack.c.h.b16 %v12001
        %v12038 = vunpack.c.l.b16 %v12002
        %v12039 = vunpack.c.h.b16 %v12002
        %v12040 = vunpack.c.l.b16 %v12003
        %v12041 = vunpack.c.h.b16 %v12003
        %v12042 = vunpack.c.l.b16 %v12004
        %v12043 = vunpack.c.h.b16 %v12004
        %v12044 = vunpack.c.l.b16 %v12005
        %v12045 = vunpack.c.h.b16 %v12005
        %v12046 = vunpack.c.l.b16 %v12006
        %v12047 = vunpack.c.h.b16 %v12006
        %v12048 = vunpack.c.l.b16 %v12007
        %v12049 = vunpack.c.h.b16 %v12007
        %v12050 = vunpack.c.l.b16 %v12008
        %v12051 = vunpack.c.h.b16 %v12008
        %v12052 = vunpack.c.l.b16 %v12009
        %v12053 = vunpack.c.h.b16 %v12009
        %v12054 = vunpack.c.l.b16 %v12010
        %v12055 = vunpack.c.h.b16 %v12010
        %v12056 = vunpack.c.l.b16 %v12011
        %v12057 = vunpack.c.h.b16 %v12011
        %v12058 = vunpack.c.l.b16 %v12012
        %v12059 = vunpack.c.h.b16 %v12012
        %v12060 = vunpack.c.l.b16 %v12013
        %v12061 = vunpack.c.h.b16 %v12013
        %v12062 = vpack.c.b16 %v12030, %v12030
        %v12063 = vpack.c.b16 %v12031, %v12031
        %v12064 = vpack.c.b16 %v12032, %v12032
        %v12065 = vpack.c.b16 %v12033, %v12033
        %v12066 = vpack.c.b16 %v12034, %v12034
        %v12067 = vpack.c.b16 %v12035, %v12035
        %v12068 = vpack.c.b16 %v12036, %v12036
        %v12069 = vpack.c.b16 %v12037, %v12037
        %v12070 = vpack.c.b16 %v12038, %v12038
        %v12071 = vpack.c.b16 %v12039, %v12039
        %v12072 = vpack.c.b16 %v12040, %v12040
        %v12073 = vpack.c.b16 %v12041, %v12041
        %v12074 = vpack.c.b16 %v12042, %v12042
        %v12075 = vpack.c.b16 %v12043, %v12043
        %v12076 = vpack.c.b16 %v12044, %v12044
        %v12077 = vpack.c.b16 %v12045, %v12045
        %v12078 = vpack.c.b16 %v12046, %v12046
        %v12079 = vpack.c.b16 %v12047, %v12047
        %v12080 = vpack.c.b16 %v12048, %v12048
        %v12081 = vpack.c.b16 %v12049, %v12049
        %v12082 = vpack.c.b16 %v12050, %v12050
        %v12083 = vpack.c.b16 %v12051, %v12051
        %v12084 = vpack.c.b16 %v12052, %v12052
        %v12085 = vpack.c.b16 %v12053, %v12053
        %v12086 = vpack.c.b16 %v12054, %v12054
        %v12087 = vpack.c.b16 %v12055, %v12055
        %v12088 = vpack.c.b16 %v12056, %v12056
        %v12089 = vpack.c.b16 %v12057, %v12057
        %v12090 = vpack.c.b16 %v12058, %v12058
        %v12091 = vpack.c.b16 %v12059, %v12059
        %v12092 = vpack.c.b16 %v12060, %v12060
        %v12093 = vpack.c.b16 %v12061, %v12061
        %12126 = vst.msk [vmem:[%s406] sm:$0xf] %vm6048, %v12062
        %12127 = vst.msk [vmem:[%s406 + $0x4] sm:$0xf] %vm6048, %v12063
        %12128 = vst.msk [vmem:[%s406 + $0x8] sm:$0xf] %vm6048, %v12064
        %12129 = vst.msk [vmem:[%s406 + $0xc] sm:$0xf] %vm6048, %v12065
        %12130 = vst.msk [vmem:[%s406 + $0x10] sm:$0xf] %vm6048, %v12066
        %12131 = vst.msk [vmem:[%s406 + $0x14] sm:$0xf] %vm6048, %v12067
        %12132 = vst.msk [vmem:[%s406 + $0x18] sm:$0xf] %vm6048, %v12068
        %12133 = vst.msk [vmem:[%s406 + $0x1c] sm:$0xf] %vm6048, %v12069
        %12134 = vst.msk [vmem:[%s406 + $0x20] sm:$0xf] %vm6048, %v12070
        %12135 = vst.msk [vmem:[%s406 + $0x24] sm:$0xf] %vm6048, %v12071
        %12136 = vst.msk [vmem:[%s406 + $0x28] sm:$0xf] %vm6048, %v12072
        %12137 = vst.msk [vmem:[%s406 + $0x2c] sm:$0xf] %vm6048, %v12073
        %12138 = vst.msk [vmem:[%s406 + $0x30] sm:$0xf] %vm6048, %v12074
        %12139 = vst.msk [vmem:[%s406 + $0x34] sm:$0xf] %vm6048, %v12075
        %12140 = vst.msk [vmem:[%s406 + $0x38] sm:$0xf] %vm6048, %v12076
        %12141 = vst.msk [vmem:[%s406 + $0x3c] sm:$0xf] %vm6048, %v12077
        %12142 = vst.msk [vmem:[%s406 + $0x40] sm:$0xf] %vm6048, %v12078
        %12143 = vst.msk [vmem:[%s406 + $0x44] sm:$0xf] %vm6048, %v12079
        %12144 = vst.msk [vmem:[%s406 + $0x48] sm:$0xf] %vm6048, %v12080
        %12145 = vst.msk [vmem:[%s406 + $0x4c] sm:$0xf] %vm6048, %v12081
        %12146 = vst.msk [vmem:[%s406 + $0x50] sm:$0xf] %vm6048, %v12082
        %12147 = vst.msk [vmem:[%s406 + $0x54] sm:$0xf] %vm6048, %v12083
        %12148 = vst.msk [vmem:[%s406 + $0x58] sm:$0xf] %vm6048, %v12084
        %12149 = vst.msk [vmem:[%s406 + $0x5c] sm:$0xf] %vm6048, %v12085
        %12150 = vst.msk [vmem:[%s406 + $0x60] sm:$0xf] %vm6048, %v12086
        %12151 = vst.msk [vmem:[%s406 + $0x64] sm:$0xf] %vm6048, %v12087
        %12152 = vst.msk [vmem:[%s406 + $0x68] sm:$0xf] %vm6048, %v12088
        %12153 = vst.msk [vmem:[%s406 + $0x6c] sm:$0xf] %vm6048, %v12089
        %12154 = vst.msk [vmem:[%s406 + $0x70] sm:$0xf] %vm6048, %v12090
        %12155 = vst.msk [vmem:[%s406 + $0x74] sm:$0xf] %vm6048, %v12091
        %12156 = vst.msk [vmem:[%s406 + $0x78] sm:$0xf] %vm6048, %v12092
        %12157 = vst.msk [vmem:[%s406 + $0x7c] sm:$0xf] %vm6048, %v12093
        %s12158 = sand.u32 %s251, 1
        %s12159 = scalar_lea.sflag [#allocation6], %s12158
        %s12160 = sand.u32 %s251, 1
        %s12161 = smul.addr %s12160, 128
        %s12162 = scalar_lea.vmem [#allocation10], %s12161
        // Predicated region
        $region73: #{p4_basic_block_pallas.1} parent=59 // pred_check
          %p12163 = pneg %p261
        $region74: #{p4_basic_block_pallas.1} parent=59 // pred_check_branch
          %12165 = sbr.rel (%p12163) target = $region76
        $region75: #{p4_basic_block_pallas.1} parent=59 // pred_region
          %s12167 = ssub.s32 2048, 2048
          %12168 = vsyncadd %s12159, %s12167
          %s12169 = smul.addr %s28, 32
          %s12170 = smul.addr %s12169, 64
          %s12171 = scalar_lea.hbm %s10, %s12170
          %s12172 = sshll.u32 %s12162, 4
          %s12173 = int_to_ptr.vmem [resolvable:$true] %s12172
          %12178 = dma.vmem_to_hbm [thread:$0]  %s12173, 2048, %s12171, %s12159, 64, 64, 4
        $region76: #{p4_basic_block_pallas.1} parent=59 // pred_fallthru
          _
      $region60: #{p4_basic_block_pallas.1} parent=5 // pred_fallthru
        _
      %p12179 = scmp.le.s32.totalorder 2, %s23
      // Predicated region
      $region77: #{p4_basic_block_pallas.1} parent=5 // pred_check
        %p12180 = pneg %p12179
      $region78: #{p4_basic_block_pallas.1} parent=5 // pred_check_branch
        %12182 = sbr.rel (%p12180) target = $region80
      $region79: #{p4_basic_block_pallas.1} parent=5 // pred_region
        %s12183 = ssub.s32 %s23, 2
        // Predicated region
        $region81: #{p4_basic_block_pallas.1} parent=79 // pred_check
          %p12184 = pneg %p267
        $region82: #{p4_basic_block_pallas.1} parent=79 // pred_check_branch
          %12186 = sbr.rel (%p12184) target = $region84
        $region83: #{p4_basic_block_pallas.1} parent=79 // pred_region
          %s12187 = sand.u32 %s252, 1
          %s12188 = scalar_lea.sflag [#allocation6], %s12187
          %s12189 = sand.u32 %s252, 1
          %s12190 = smul.addr %s12189, 128
          %s12191 = scalar_lea.vmem [#allocation10], %s12190
          %12192 = dma.done %s12188, 2048
        $region84: #{p4_basic_block_pallas.1} parent=79 // pred_fallthru
          _
      $region80: #{p4_basic_block_pallas.1} parent=5 // pred_fallthru
        _
    $region6: #{p4_basic_block_pallas.1} parent=1 // loop_footer
      %s27 = sadd.s32 1, %s23
    $region7: #{p4_basic_block_pallas.1} parent=1 // loop_footer_branch
      %22 = sbr.rel target = $region3
    $region8: #{p4_basic_block_pallas.1} parent=1 // loop_exit
      _
    %12193 = vsyncpa [#allocation5], 1
    %s12194 = scalar_lea.sflag [#allocation5], 1
    %12195 = vsyncpa %s12194, 1
    %12196 = vsyncpa [#allocation8], 1
    %12197 = vsyncpa [#allocation6], 1
    %s12198 = scalar_lea.sflag [#allocation6], 1
    %12199 = vsyncpa %s12198, 1

</llo_original>
